<compile_context>
chip_gen: v5e
topology: v5e:2x2
jax: 0.10.0
libtpu: 0.0.40
codegen_flags: <defaults>
</compile_context>

<pallas_src>
import functools

import jax
import jax.numpy as jnp
from jax import lax
from jax.experimental import pallas as pl
from jax.experimental.pallas import tpu as pltpu

EXPANSION = 2


# ----------------------------- Pallas kernel ---------------------------------

def _chain_kernel(x_ref, s1_ref, b1_ref, w1_ref, cb1_ref,
                  w2_ref, cb2_ref, w3_ref, cb3_ref, o_ref, pad_ref, *, H, W):
    """One residual chain. grid = (batch, num_blocks); the residual stream lives
    in the VMEM-resident output block across the (inner, 'arbitrary') block axis."""
    P = w1_ref.shape[2]
    k = pl.program_id(1)

    # Seed the residual stream with the input at the first block of the chain.
    @pl.when(k == 0)
    def _init():
        o_ref[...] = x_ref[...]

    x = o_ref[0]                                     # (H*W, C) f32 residual stream

    # BN1 affine + ReLU (f32), then 1x1 conv (BN2 folded into w1/cb1) + ReLU.
    h1 = jnp.maximum(x * s1_ref[0] + b1_ref[0], 0.0)
    h2 = jnp.dot(h1.astype(jnp.bfloat16), w1_ref[0],
                 preferred_element_type=jnp.float32) + cb1_ref[0]
    h2 = jnp.maximum(h2, 0.0)                        # (H*W, P) f32

    # 3x3 'SAME' conv (BN3 folded into w2/cb2) as 9 shifted K=P matmuls on a
    # zero-padded VMEM-resident copy of h2 -- no im2col tensor in HBM.
    pad_ref[...] = jnp.zeros(pad_ref.shape, pad_ref.dtype)
    pad_ref[pl.ds(1, H), pl.ds(1, W), :] = h2.reshape(H, W, P)

    w2_all = w2_ref[0]                               # (9, P, P) bf16
    acc = jnp.zeros((H * W, P), jnp.float32)
    for dy in range(3):
        for dx in range(3):
            win = pad_ref[pl.ds(dy, H), pl.ds(dx, W), :].reshape(H * W, P)
            acc = acc + jnp.dot(win.astype(jnp.bfloat16), w2_all[3 * dy + dx],
                                preferred_element_type=jnp.float32)
    h3 = jnp.maximum(acc + cb2_ref[0], 0.0)          # (H*W, P) f32

    # 1x1 conv back to C and residual add (f32).
    out = x + jnp.dot(h3.astype(jnp.bfloat16), w3_ref[0],
                      preferred_element_type=jnp.float32) + cb3_ref[0]
    o_ref[0] = out


def chain_apply(x, cp):
    """Apply one residual chain (num_blocks bottlenecks). x: (B, H, W, C) f32."""
    B, H, W, C = x.shape
    nb, _, P = cp['w1'].shape
    xf = x.reshape(B, H * W, C)

    xmap = lambda b, k: (b, 0, 0)     # activation block: per-batch, resident over k
    wmap = lambda b, k: (k, 0, 0)     # per-block parameters
    w2map = lambda b, k: (k, 0, 0, 0)

    out = pl.pallas_call(
        functools.partial(_chain_kernel, H=H, W=W),
        out_shape=jax.ShapeDtypeStruct((B, H * W, C), jnp.float32),
        grid=(B, nb),
        in_specs=[
            pl.BlockSpec((1, H * W, C), xmap),   # x
            pl.BlockSpec((1, 1, C), wmap),       # s1 (BN1 scale)
            pl.BlockSpec((1, 1, C), wmap),       # b1 (BN1 bias)
            pl.BlockSpec((1, C, P), wmap),       # w1 (bf16, BN2 folded)
            pl.BlockSpec((1, 1, P), wmap),       # cb1 (BN2 folded)
            pl.BlockSpec((1, 9, P, P), w2map),   # w2 (bf16, BN3 folded)
            pl.BlockSpec((1, 1, P), wmap),       # cb2 (BN3 folded)
            pl.BlockSpec((1, P, C), wmap),       # w3 (bf16)
            pl.BlockSpec((1, 1, C), wmap),       # cb3
        ],
        out_specs=pl.BlockSpec((1, H * W, C), xmap),
        scratch_shapes=[pltpu.VMEM((H + 2, W + 2, P), jnp.float32)],
        compiler_params=pltpu.CompilerParams(
            dimension_semantics=("parallel", "arbitrary"),
            vmem_limit_bytes=32 * 1024 * 1024),
    )(xf, cp['s1'], cp['b1'], cp['w1'], cp['cb1'],
      cp['w2'], cp['cb2'], cp['w3'], cp['cb3'])
    return out.reshape(B, H, W, C)


# --------------------- pooling / upsample glue (XLA-fused) -------------------

def _maxpool2x2(x):
    B, H, W, C = x.shape
    return x.reshape(B, H // 2, 2, W // 2, 2, C).max(axis=(2, 4))


def _upsample2x(x):
    B, h, w, C = x.shape
    return jnp.broadcast_to(x[:, :, None, :, None, :],
                            (B, h, 2, w, 2, C)).reshape(B, 2 * h, 2 * w, C)


# ----------------------------- hourglass forward -----------------------------

def _hg_forward(n, x, hg):
    lvl = hg[n - 1]
    up1 = chain_apply(x, lvl[0])
    low1 = _maxpool2x2(x)
    low1 = chain_apply(low1, lvl[1])
    low2 = _hg_forward(n - 1, low1, hg) if n > 1 else chain_apply(low1, lvl[3])
    low3 = chain_apply(low2, lvl[2])
    return up1 + _upsample2x(low3)


def hourglass_apply(x_nchw, hg_prepped, depth):
    B, C, H, W = x_nchw.shape
    assert H % (1 << depth) == 0 and W % (1 << depth) == 0, \
        "spatial dims must be divisible by 2**depth"
    x = jnp.transpose(x_nchw, (0, 2, 3, 1))
    out = _hg_forward(depth, x, hg_prepped)
    return jnp.transpose(out, (0, 3, 1, 2))


# ----------------------------- parameter init --------------------------------

def _init_block_params(key, cin, planes):
    P = planes
    ks = jax.random.split(key, 12)

    def rnd(k, shape, scale):
        return scale * jax.random.normal(k, shape, jnp.float32)

    return dict(
        s1=1.0 + 0.1 * jax.random.normal(ks[0], (1, cin), jnp.float32),
        b1=rnd(ks[1], (1, cin), 0.1),
        w1=rnd(ks[2], (cin, P), 0.5),
        cb1=rnd(ks[3], (1, P), 0.1),
        s2=1.0 + 0.1 * jax.random.normal(ks[4], (1, P), jnp.float32),
        b2=rnd(ks[5], (1, P), 0.1),
        w2=rnd(ks[6], (3, 3, P, P), 0.3),   # HWIO
        cb2=rnd(ks[7], (1, P), 0.1),
        s3=1.0 + 0.1 * jax.random.normal(ks[8], (1, P), jnp.float32),
        b3=rnd(ks[9], (1, P), 0.1),
        w3=rnd(ks[10], (P, cin), 0.3),
        cb3=rnd(ks[11], (1, cin), 0.1),
    )


def init_hourglass_params(key, planes, depth, num_blocks):
    cin = planes * EXPANSION
    hg = []
    for i in range(depth):
        n_chains = 4 if i == 0 else 3
        chains = []
        for _ in range(n_chains):
            blocks = []
            for _ in range(num_blocks):
                key, sub = jax.random.split(key)
                blocks.append(_init_block_params(sub, cin, planes))
            chains.append(blocks)
        hg.append(chains)
    return hg


def prep_hourglass_params(hg_raw):
    """One-time host-side prep: fold post-conv BN affines into the conv weights,
    stack blocks of a chain along a leading axis, store weights in bf16."""
    def prep_chain(blocks):
        P = blocks[0]['w1'].shape[1]

        def stk(fn):
            return jnp.stack([fn(b) for b in blocks], axis=0)

        return dict(
            s1=stk(lambda b: b['s1']),
            b1=stk(lambda b: b['b1']),
            w1=stk(lambda b: (b['w1'] * b['s2']).astype(jnp.bfloat16)),
            cb1=stk(lambda b: b['cb1'] * b['s2'] + b['b2']),
            w2=stk(lambda b: (b['w2'] * b['s3'][0]).reshape(9, P, P).astype(jnp.bfloat16)),
            cb2=stk(lambda b: b['cb2'] * b['s3'] + b['b3']),
            w3=stk(lambda b: b['w3'].astype(jnp.bfloat16)),
            cb3=stk(lambda b: b['cb3']),
        )

    return [[prep_chain(chain) for chain in level] for level in hg_raw]


# ----------------------------- references ------------------------------------

def ref_forward_bf16(x_nchw, hg_prepped, depth):
    """Plain-XLA reference with the kernel's exact numerics (same folded bf16
    weights, f32 accumulation/residual) -- tight structural check."""
    bf16 = jnp.bfloat16

    def block(xi, cp, k):
        B, H, W, C = xi.shape
        P = cp['w1'].shape[2]
        xf = xi.reshape(B * H * W, C)
        h1 = jnp.maximum(xf * cp['s1'][k] + cp['b1'][k], 0.0)
        h2 = jnp.dot(h1.astype(bf16), cp['w1'][k],
                     preferred_element_type=jnp.float32) + cp['cb1'][k]
        h2 = jnp.maximum(h2, 0.0).reshape(B, H, W, P)
        conv = lax.conv_general_dilated(
            h2.astype(bf16), cp['w2'][k].reshape(3, 3, P, P), (1, 1), 'SAME',
            dimension_numbers=('NHWC', 'HWIO', 'NHWC'),
            preferred_element_type=jnp.float32)
        h3 = jnp.maximum(conv.reshape(B * H * W, P) + cp['cb2'][k], 0.0)
        out = xf + jnp.dot(h3.astype(bf16), cp['w3'][k],
                           preferred_element_type=jnp.float32) + cp['cb3'][k]
        return out.reshape(B, H, W, C)

    def chain(xi, cp):
        for k in range(cp['w1'].shape[0]):
            xi = block(xi, cp, k)
        return xi

    def rec(n, xi):
        lvl = hg_prepped[n - 1]
        up1 = chain(xi, lvl[0])
        low1 = _maxpool2x2(xi)
        low1 = chain(low1, lvl[1])
        low2 = rec(n - 1, low1) if n > 1 else chain(low1, lvl[3])
        low3 = chain(low2, lvl[2])
        return up1 + _upsample2x(low3)

    x = jnp.transpose(x_nchw, (0, 2, 3, 1))
    return jnp.transpose(rec(depth, x), (0, 3, 1, 2))


def _ref_block_f32(x_img, p):
    h = jnp.maximum(x_img * p['s1'][0] + p['b1'][0], 0.0)
    h = jnp.einsum('bhwc,cp->bhwp', h, p['w1'],
                   precision=lax.Precision.HIGHEST) + p['cb1'][0]
    h = jnp.maximum(h * p['s2'][0] + p['b2'][0], 0.0)
    h = lax.conv_general_dilated(h, p['w2'], (1, 1), 'SAME',
                                 dimension_numbers=('NHWC', 'HWIO', 'NHWC'),
                                 precision=lax.Precision.HIGHEST) + p['cb2'][0]
    h = jnp.maximum(h * p['s3'][0] + p['b3'][0], 0.0)
    h = jnp.einsum('bhwp,pc->bhwc', h, p['w3'],
                   precision=lax.Precision.HIGHEST) + p['cb3'][0]
    return x_img + h


def ref_forward_f32(x_nchw, hg_raw, depth):
    """Full-f32, unfolded-BN reference mirroring the original PyTorch module."""
    def chain(xi, blocks):
        for p in blocks:
            xi = _ref_block_f32(xi, p)
        return xi

    def rec(n, xi):
        lvl = hg_raw[n - 1]
        up1 = chain(xi, lvl[0])
        low1 = _maxpool2x2(xi)
        low1 = chain(low1, lvl[1])
        low2 = rec(n - 1, low1) if n > 1 else chain(low1, lvl[3])
        low3 = chain(low2, lvl[2])
        return up1 + _upsample2x(low3)

    x = jnp.transpose(x_nchw, (0, 2, 3, 1))
    return jnp.transpose(rec(depth, x), (0, 3, 1, 2))


# ----------------------------------- main -------------------------------------

if __name__ == "__main__":
    planes, depth, num_blocks = 4, 2, 1
    B, H, W = 2, 16, 16
    C = planes * EXPANSION  # 8

    key = jax.random.PRNGKey(0)
    k_x, k_p = jax.random.split(key)
    x = jax.random.normal(k_x, (B, C, H, W), jnp.float32)   # NCHW like PyTorch
    hg_raw = init_hourglass_params(k_p, planes, depth, num_blocks)
    hg_prepped = prep_hourglass_params(hg_raw)               # fold BN, stack, bf16 weights

    fwd = jax.jit(hourglass_apply, static_argnums=2)
    out = jax.block_until_ready(fwd(x, hg_prepped, depth))
    assert out.shape == (B, C, H, W), out.shape

    # Tight check: identical numerics (folded bf16 weights, f32 accumulation) via XLA.
    ref_b = ref_forward_bf16(x, hg_prepped, depth)
    err_b = float(jnp.max(jnp.abs(out - ref_b)))
    assert err_b < 2e-3, f"mismatch vs matched-numerics reference: {err_b}"

    # Loose sanity check vs the original-module math in full f32 (bf16 drift only).
    ref_f = ref_forward_f32(x, hg_raw, depth)
    err_f = float(jnp.max(jnp.abs(out - ref_f)))
    tol_f = 1e-1 * (1.0 + float(jnp.max(jnp.abs(ref_f))))
    assert err_f < tol_f, f"mismatch vs f32 reference: {err_f} (tol {tol_f})"

    print("KERNEL_OK")
</pallas_src>

<mosaic_0001>
module attributes {stable_mosaic.version = 11 : i64} {
  func.func @_chain_kernel(%arg0: i32, %arg1: i32, %arg2: memref<1x256x8xf32, #tpu.memory_space<vmem>>, %arg3: memref<1x1x8xf32, #tpu.memory_space<vmem>>, %arg4: memref<1x1x8xf32, #tpu.memory_space<vmem>>, %arg5: memref<1x8x4xbf16, #tpu.memory_space<vmem>>, %arg6: memref<1x1x4xf32, #tpu.memory_space<vmem>>, %arg7: memref<1x9x4x4xbf16, #tpu.memory_space<vmem>>, %arg8: memref<1x1x4xf32, #tpu.memory_space<vmem>>, %arg9: memref<1x4x8xbf16, #tpu.memory_space<vmem>>, %arg10: memref<1x1x8xf32, #tpu.memory_space<vmem>>, %arg11: memref<1x256x8xf32, #tpu.memory_space<vmem>>, %arg12: memref<18x18x4xf32, #tpu.memory_space<vmem>>) attributes {dimension_semantics = [#tpu.dimension_semantics<parallel>, #tpu.dimension_semantics<arbitrary>], iteration_bounds = array<i64: 2, 1>, scalar_prefetch = 0 : i64, scratch_operands = 1 : i64, tpu.core_type = #tpu.core_type<tc>, window_params = [{transform_indices = @transform_0, window_bounds = array<i64: 1, 256, 8>}, {transform_indices = @transform_1, window_bounds = array<i64: 1, 1, 8>}, {transform_indices = @transform_2, window_bounds = array<i64: 1, 1, 8>}, {transform_indices = @transform_3, window_bounds = array<i64: 1, 8, 4>}, {transform_indices = @transform_4, window_bounds = array<i64: 1, 1, 4>}, {transform_indices = @transform_5, window_bounds = array<i64: 1, 9, 4, 4>}, {transform_indices = @transform_6, window_bounds = array<i64: 1, 1, 4>}, {transform_indices = @transform_7, window_bounds = array<i64: 1, 4, 8>}, {transform_indices = @transform_8, window_bounds = array<i64: 1, 1, 8>}, {transform_indices = @transform_9, window_bounds = array<i64: 1, 256, 8>}]} {
    %c0_i32 = arith.constant 0 : i32
    %0 = arith.cmpi eq, %arg1, %c0_i32 : i32
    %1 = arith.extui %0 : i1 to i32
    %c0_i32_0 = arith.constant 0 : i32
    %2 = arith.cmpi ne, %1, %c0_i32_0 : i32
    scf.if %2 {
      %c0_77 = arith.constant 0 : index
      %c0_78 = arith.constant 0 : index
      %c0_79 = arith.constant 0 : index
      %113 = vector.load %arg2[%c0_77, %c0_78, %c0_79] : memref<1x256x8xf32, #tpu.memory_space<vmem>>, vector<1x256x8xf32>
      %c0_80 = arith.constant 0 : index
      %c0_81 = arith.constant 0 : index
      %c0_82 = arith.constant 0 : index
      %114 = vector.load %arg11[%c0_80, %c0_81, %c0_82] : memref<1x256x8xf32, #tpu.memory_space<vmem>>, vector<1x256x8xf32>
      tpu.vector_store %arg11[%c0_80, %c0_81, %c0_82], %113 {strides = array<i32>} : memref<1x256x8xf32, #tpu.memory_space<vmem>>, vector<1x256x8xf32>,
    } else {
    }
    %c0 = arith.constant 0 : index
    %c0_1 = arith.constant 0 : index
    %c0_2 = arith.constant 0 : index
    %3 = vector.load %arg11[%c0, %c0_1, %c0_2] : memref<1x256x8xf32, #tpu.memory_space<vmem>>, vector<1x256x8xf32>
    %4 = vector.shape_cast %3 : vector<1x256x8xf32> to vector<256x8xf32>
    %c0_3 = arith.constant 0 : index
    %c0_4 = arith.constant 0 : index
    %c0_5 = arith.constant 0 : index
    %5 = vector.load %arg3[%c0_3, %c0_4, %c0_5] : memref<1x1x8xf32, #tpu.memory_space<vmem>>, vector<1x1x8xf32>
    %6 = vector.shape_cast %5 : vector<1x1x8xf32> to vector<1x8xf32>
    %7 = vector.broadcast %6 : vector<1x8xf32> to vector<256x8xf32>
    %8 = arith.mulf %4, %7 : vector<256x8xf32>
    %c0_6 = arith.constant 0 : index
    %c0_7 = arith.constant 0 : index
    %c0_8 = arith.constant 0 : index
    %9 = vector.load %arg4[%c0_6, %c0_7, %c0_8] : memref<1x1x8xf32, #tpu.memory_space<vmem>>, vector<1x1x8xf32>
    %10 = vector.shape_cast %9 : vector<1x1x8xf32> to vector<1x8xf32>
    %11 = vector.broadcast %10 : vector<1x8xf32> to vector<256x8xf32>
    %12 = arith.addf %8, %11 : vector<256x8xf32>
    %cst = arith.constant 0.000000e+00 : f32
    %13 = vector.broadcast %cst : f32 to vector<256x8xf32>
    %14 = arith.maximumf %12, %13 : vector<256x8xf32>
    %15 = arith.truncf %14 : vector<256x8xf32> to vector<256x8xbf16>
    %c0_9 = arith.constant 0 : index
    %c0_10 = arith.constant 0 : index
    %c0_11 = arith.constant 0 : index
    %16 = vector.load %arg5[%c0_9, %c0_10, %c0_11] : memref<1x8x4xbf16, #tpu.memory_space<vmem>>, vector<1x8x4xbf16>
    %17 = vector.shape_cast %16 : vector<1x8x4xbf16> to vector<8x4xbf16>
    %cst_12 = arith.constant dense<0.000000e+00> : vector<256x4xf32>
    %18 = tpu.matmul %15, %17, %cst_12 {dimension_numbers = #tpu.dot_dimension_numbers<[1], [0], [0], [1], [0, 0, 1, 1], [], []>} : vector<256x8xbf16>, vector<8x4xbf16>, vector<256x4xf32> -> vector<256x4xf32>
    %c0_13 = arith.constant 0 : index
    %c0_14 = arith.constant 0 : index
    %c0_15 = arith.constant 0 : index
    %19 = vector.load %arg6[%c0_13, %c0_14, %c0_15] : memref<1x1x4xf32, #tpu.memory_space<vmem>>, vector<1x1x4xf32>
    %20 = vector.shape_cast %19 : vector<1x1x4xf32> to vector<1x4xf32>
    %21 = vector.broadcast %20 : vector<1x4xf32> to vector<256x4xf32>
    %22 = arith.addf %18, %21 : vector<256x4xf32>
    %cst_16 = arith.constant 0.000000e+00 : f32
    %23 = vector.broadcast %cst_16 : f32 to vector<256x4xf32>
    %24 = arith.maximumf %22, %23 : vector<256x4xf32>
    %cst_17 = arith.constant 0.000000e+00 : f32
    %25 = vector.broadcast %cst_17 : f32 to vector<18x18x4xf32>
    %c0_18 = arith.constant 0 : index
    %c0_19 = arith.constant 0 : index
    %c0_20 = arith.constant 0 : index
    %26 = vector.load %arg12[%c0_18, %c0_19, %c0_20] : memref<18x18x4xf32, #tpu.memory_space<vmem>>, vector<18x18x4xf32>
    tpu.vector_store %arg12[%c0_18, %c0_19, %c0_20], %25 {strides = array<i32>} : memref<18x18x4xf32, #tpu.memory_space<vmem>>, vector<18x18x4xf32>,
    %27 = vector.shape_cast %24 : vector<256x4xf32> to vector<16x16x4xf32>
    %c1 = arith.constant 1 : index
    %c1_21 = arith.constant 1 : index
    %c0_22 = arith.constant 0 : index
    %28 = vector.load %arg12[%c1, %c1_21, %c0_22] : memref<18x18x4xf32, #tpu.memory_space<vmem>>, vector<16x16x4xf32>
    tpu.vector_store %arg12[%c1, %c1_21, %c0_22], %27 {strides = array<i32>} : memref<18x18x4xf32, #tpu.memory_space<vmem>>, vector<16x16x4xf32>,
    %c0_23 = arith.constant 0 : index
    %c0_24 = arith.constant 0 : index
    %c0_25 = arith.constant 0 : index
    %c0_26 = arith.constant 0 : index
    %29 = vector.load %arg7[%c0_23, %c0_24, %c0_25, %c0_26] : memref<1x9x4x4xbf16, #tpu.memory_space<vmem>>, vector<1x9x4x4xbf16>
    %30 = vector.shape_cast %29 : vector<1x9x4x4xbf16> to vector<9x4x4xbf16>
    %cst_27 = arith.constant 0.000000e+00 : f32
    %31 = vector.broadcast %cst_27 : f32 to vector<256x4xf32>
    %c0_28 = arith.constant 0 : index
    %c0_29 = arith.constant 0 : index
    %c0_30 = arith.constant 0 : index
    %32 = vector.load %arg12[%c0_28, %c0_29, %c0_30] : memref<18x18x4xf32, #tpu.memory_space<vmem>>, vector<16x16x4xf32>
    %33 = vector.shape_cast %32 : vector<16x16x4xf32> to vector<256x4xf32>
    %34 = arith.truncf %33 : vector<256x4xf32> to vector<256x4xbf16>
    %35 = vector.extract_strided_slice %30 {offsets = [0, 0, 0], sizes = [1, 4, 4], strides = [1, 1, 1]} : vector<9x4x4xbf16> to vector<1x4x4xbf16>
    %36 = vector.shape_cast %35 : vector<1x4x4xbf16> to vector<4x4xbf16>
    %cst_31 = arith.constant dense<0.000000e+00> : vector<256x4xf32>
    %37 = tpu.matmul %34, %36, %cst_31 {dimension_numbers = #tpu.dot_dimension_numbers<[1], [0], [0], [1], [0, 0, 1, 1], [], []>} : vector<256x4xbf16>, vector<4x4xbf16>, vector<256x4xf32> -> vector<256x4xf32>
    %38 = arith.addf %31, %37 : vector<256x4xf32>
    %c0_32 = arith.constant 0 : index
    %c1_33 = arith.constant 1 : index
    %c0_34 = arith.constant 0 : index
    %39 = vector.load %arg12[%c0_32, %c1_33, %c0_34] : memref<18x18x4xf32, #tpu.memory_space<vmem>>, vector<16x16x4xf32>
    %40 = vector.shape_cast %39 : vector<16x16x4xf32> to vector<256x4xf32>
    %41 = arith.truncf %40 : vector<256x4xf32> to vector<256x4xbf16>
    %42 = vector.extract_strided_slice %30 {offsets = [1, 0, 0], sizes = [1, 4, 4], strides = [1, 1, 1]} : vector<9x4x4xbf16> to vector<1x4x4xbf16>
    %43 = vector.shape_cast %42 : vector<1x4x4xbf16> to vector<4x4xbf16>
    %cst_35 = arith.constant dense<0.000000e+00> : vector<256x4xf32>
    %44 = tpu.matmul %41, %43, %cst_35 {dimension_numbers = #tpu.dot_dimension_numbers<[1], [0], [0], [1], [0, 0, 1, 1], [], []>} : vector<256x4xbf16>, vector<4x4xbf16>, vector<256x4xf32> -> vector<256x4xf32>
    %45 = arith.addf %38, %44 : vector<256x4xf32>
    %c0_36 = arith.constant 0 : index
    %c2 = arith.constant 2 : index
    %c0_37 = arith.constant 0 : index
    %46 = vector.load %arg12[%c0_36, %c2, %c0_37] : memref<18x18x4xf32, #tpu.memory_space<vmem>>, vector<16x16x4xf32>
    %47 = vector.shape_cast %46 : vector<16x16x4xf32> to vector<256x4xf32>
    %48 = arith.truncf %47 : vector<256x4xf32> to vector<256x4xbf16>
    %49 = vector.extract_strided_slice %30 {offsets = [2, 0, 0], sizes = [1, 4, 4], strides = [1, 1, 1]} : vector<9x4x4xbf16> to vector<1x4x4xbf16>
    %50 = vector.shape_cast %49 : vector<1x4x4xbf16> to vector<4x4xbf16>
    %cst_38 = arith.constant dense<0.000000e+00> : vector<256x4xf32>
    %51 = tpu.matmul %48, %50, %cst_38 {dimension_numbers = #tpu.dot_dimension_numbers<[1], [0], [0], [1], [0, 0, 1, 1], [], []>} : vector<256x4xbf16>, vector<4x4xbf16>, vector<256x4xf32> -> vector<256x4xf32>
    %52 = arith.addf %45, %51 : vector<256x4xf32>
    %c1_39 = arith.constant 1 : index
    %c0_40 = arith.constant 0 : index
    %c0_41 = arith.constant 0 : index
    %53 = vector.load %arg12[%c1_39, %c0_40, %c0_41] : memref<18x18x4xf32, #tpu.memory_space<vmem>>, vector<16x16x4xf32>
    %54 = vector.shape_cast %53 : vector<16x16x4xf32> to vector<256x4xf32>
    %55 = arith.truncf %54 : vector<256x4xf32> to vector<256x4xbf16>
    %56 = vector.extract_strided_slice %30 {offsets = [3, 0, 0], sizes = [1, 4, 4], strides = [1, 1, 1]} : vector<9x4x4xbf16> to vector<1x4x4xbf16>
    %57 = vector.shape_cast %56 : vector<1x4x4xbf16> to vector<4x4xbf16>
    %cst_42 = arith.constant dense<0.000000e+00> : vector<256x4xf32>
    %58 = tpu.matmul %55, %57, %cst_42 {dimension_numbers = #tpu.dot_dimension_numbers<[1], [0], [0], [1], [0, 0, 1, 1], [], []>} : vector<256x4xbf16>, vector<4x4xbf16>, vector<256x4xf32> -> vector<256x4xf32>
    %59 = arith.addf %52, %58 : vector<256x4xf32>
    %c1_43 = arith.constant 1 : index
    %c1_44 = arith.constant 1 : index
    %c0_45 = arith.constant 0 : index
    %60 = vector.load %arg12[%c1_43, %c1_44, %c0_45] : memref<18x18x4xf32, #tpu.memory_space<vmem>>, vector<16x16x4xf32>
    %61 = vector.shape_cast %60 : vector<16x16x4xf32> to vector<256x4xf32>
    %62 = arith.truncf %61 : vector<256x4xf32> to vector<256x4xbf16>
    %63 = vector.extract_strided_slice %30 {offsets = [4, 0, 0], sizes = [1, 4, 4], strides = [1, 1, 1]} : vector<9x4x4xbf16> to vector<1x4x4xbf16>
    %64 = vector.shape_cast %63 : vector<1x4x4xbf16> to vector<4x4xbf16>
    %cst_46 = arith.constant dense<0.000000e+00> : vector<256x4xf32>
    %65 = tpu.matmul %62, %64, %cst_46 {dimension_numbers = #tpu.dot_dimension_numbers<[1], [0], [0], [1], [0, 0, 1, 1], [], []>} : vector<256x4xbf16>, vector<4x4xbf16>, vector<256x4xf32> -> vector<256x4xf32>
    %66 = arith.addf %59, %65 : vector<256x4xf32>
    %c1_47 = arith.constant 1 : index
    %c2_48 = arith.constant 2 : index
    %c0_49 = arith.constant 0 : index
    %67 = vector.load %arg12[%c1_47, %c2_48, %c0_49] : memref<18x18x4xf32, #tpu.memory_space<vmem>>, vector<16x16x4xf32>
    %68 = vector.shape_cast %67 : vector<16x16x4xf32> to vector<256x4xf32>
    %69 = arith.truncf %68 : vector<256x4xf32> to vector<256x4xbf16>
    %70 = vector.extract_strided_slice %30 {offsets = [5, 0, 0], sizes = [1, 4, 4], strides = [1, 1, 1]} : vector<9x4x4xbf16> to vector<1x4x4xbf16>
    %71 = vector.shape_cast %70 : vector<1x4x4xbf16> to vector<4x4xbf16>
    %cst_50 = arith.constant dense<0.000000e+00> : vector<256x4xf32>
    %72 = tpu.matmul %69, %71, %cst_50 {dimension_numbers = #tpu.dot_dimension_numbers<[1], [0], [0], [1], [0, 0, 1, 1], [], []>} : vector<256x4xbf16>, vector<4x4xbf16>, vector<256x4xf32> -> vector<256x4xf32>
    %73 = arith.addf %66, %72 : vector<256x4xf32>
    %c2_51 = arith.constant 2 : index
    %c0_52 = arith.constant 0 : index
    %c0_53 = arith.constant 0 : index
    %74 = vector.load %arg12[%c2_51, %c0_52, %c0_53] : memref<18x18x4xf32, #tpu.memory_space<vmem>>, vector<16x16x4xf32>
    %75 = vector.shape_cast %74 : vector<16x16x4xf32> to vector<256x4xf32>
    %76 = arith.truncf %75 : vector<256x4xf32> to vector<256x4xbf16>
    %77 = vector.extract_strided_slice %30 {offsets = [6, 0, 0], sizes = [1, 4, 4], strides = [1, 1, 1]} : vector<9x4x4xbf16> to vector<1x4x4xbf16>
    %78 = vector.shape_cast %77 : vector<1x4x4xbf16> to vector<4x4xbf16>
    %cst_54 = arith.constant dense<0.000000e+00> : vector<256x4xf32>
    %79 = tpu.matmul %76, %78, %cst_54 {dimension_numbers = #tpu.dot_dimension_numbers<[1], [0], [0], [1], [0, 0, 1, 1], [], []>} : vector<256x4xbf16>, vector<4x4xbf16>, vector<256x4xf32> -> vector<256x4xf32>
    %80 = arith.addf %73, %79 : vector<256x4xf32>
    %c2_55 = arith.constant 2 : index
    %c1_56 = arith.constant 1 : index
    %c0_57 = arith.constant 0 : index
    %81 = vector.load %arg12[%c2_55, %c1_56, %c0_57] : memref<18x18x4xf32, #tpu.memory_space<vmem>>, vector<16x16x4xf32>
    %82 = vector.shape_cast %81 : vector<16x16x4xf32> to vector<256x4xf32>
    %83 = arith.truncf %82 : vector<256x4xf32> to vector<256x4xbf16>
    %84 = vector.extract_strided_slice %30 {offsets = [7, 0, 0], sizes = [1, 4, 4], strides = [1, 1, 1]} : vector<9x4x4xbf16> to vector<1x4x4xbf16>
    %85 = vector.shape_cast %84 : vector<1x4x4xbf16> to vector<4x4xbf16>
    %cst_58 = arith.constant dense<0.000000e+00> : vector<256x4xf32>
    %86 = tpu.matmul %83, %85, %cst_58 {dimension_numbers = #tpu.dot_dimension_numbers<[1], [0], [0], [1], [0, 0, 1, 1], [], []>} : vector<256x4xbf16>, vector<4x4xbf16>, vector<256x4xf32> -> vector<256x4xf32>
    %87 = arith.addf %80, %86 : vector<256x4xf32>
    %c2_59 = arith.constant 2 : index
    %c2_60 = arith.constant 2 : index
    %c0_61 = arith.constant 0 : index
    %88 = vector.load %arg12[%c2_59, %c2_60, %c0_61] : memref<18x18x4xf32, #tpu.memory_space<vmem>>, vector<16x16x4xf32>
    %89 = vector.shape_cast %88 : vector<16x16x4xf32> to vector<256x4xf32>
    %90 = arith.truncf %89 : vector<256x4xf32> to vector<256x4xbf16>
    %91 = vector.extract_strided_slice %30 {offsets = [8, 0, 0], sizes = [1, 4, 4], strides = [1, 1, 1]} : vector<9x4x4xbf16> to vector<1x4x4xbf16>
    %92 = vector.shape_cast %91 : vector<1x4x4xbf16> to vector<4x4xbf16>
    %cst_62 = arith.constant dense<0.000000e+00> : vector<256x4xf32>
    %93 = tpu.matmul %90, %92, %cst_62 {dimension_numbers = #tpu.dot_dimension_numbers<[1], [0], [0], [1], [0, 0, 1, 1], [], []>} : vector<256x4xbf16>, vector<4x4xbf16>, vector<256x4xf32> -> vector<256x4xf32>
    %94 = arith.addf %87, %93 : vector<256x4xf32>
    %c0_63 = arith.constant 0 : index
    %c0_64 = arith.constant 0 : index
    %c0_65 = arith.constant 0 : index
    %95 = vector.load %arg8[%c0_63, %c0_64, %c0_65] : memref<1x1x4xf32, #tpu.memory_space<vmem>>, vector<1x1x4xf32>
    %96 = vector.shape_cast %95 : vector<1x1x4xf32> to vector<1x4xf32>
    %97 = vector.broadcast %96 : vector<1x4xf32> to vector<256x4xf32>
    %98 = arith.addf %94, %97 : vector<256x4xf32>
    %cst_66 = arith.constant 0.000000e+00 : f32
    %99 = vector.broadcast %cst_66 : f32 to vector<256x4xf32>
    %100 = arith.maximumf %98, %99 : vector<256x4xf32>
    %101 = arith.truncf %100 : vector<256x4xf32> to vector<256x4xbf16>
    %c0_67 = arith.constant 0 : index
    %c0_68 = arith.constant 0 : index
    %c0_69 = arith.constant 0 : index
    %102 = vector.load %arg9[%c0_67, %c0_68, %c0_69] : memref<1x4x8xbf16, #tpu.memory_space<vmem>>, vector<1x4x8xbf16>
    %103 = vector.shape_cast %102 : vector<1x4x8xbf16> to vector<4x8xbf16>
    %cst_70 = arith.constant dense<0.000000e+00> : vector<256x8xf32>
    %104 = tpu.matmul %101, %103, %cst_70 {dimension_numbers = #tpu.dot_dimension_numbers<[1], [0], [0], [1], [0, 0, 1, 1], [], []>} : vector<256x4xbf16>, vector<4x8xbf16>, vector<256x8xf32> -> vector<256x8xf32>
    %105 = arith.addf %4, %104 : vector<256x8xf32>
    %c0_71 = arith.constant 0 : index
    %c0_72 = arith.constant 0 : index
    %c0_73 = arith.constant 0 : index
    %106 = vector.load %arg10[%c0_71, %c0_72, %c0_73] : memref<1x1x8xf32, #tpu.memory_space<vmem>>, vector<1x1x8xf32>
    %107 = vector.shape_cast %106 : vector<1x1x8xf32> to vector<1x8xf32>
    %108 = vector.broadcast %107 : vector<1x8xf32> to vector<256x8xf32>
    %109 = arith.addf %105, %108 : vector<256x8xf32>
    %c0_74 = arith.constant 0 : index
    %c0_75 = arith.constant 0 : index
    %c0_76 = arith.constant 0 : index
    %110 = vector.load %arg11[%c0_74, %c0_75, %c0_76] : memref<1x256x8xf32, #tpu.memory_space<vmem>>, vector<1x256x8xf32>
    %111 = vector.shape_cast %110 : vector<1x256x8xf32> to vector<256x8xf32>
    %112 = vector.shape_cast %109 : vector<256x8xf32> to vector<1x256x8xf32>
    tpu.vector_store %arg11[%c0_74, %c0_75, %c0_76], %112 {strides = array<i32>} : memref<1x256x8xf32, #tpu.memory_space<vmem>>, vector<1x256x8xf32>,
    return
  }
  func.func @transform_0(%arg0: i32, %arg1: i32) -> (i32, i32, i32) {
    %c0_i32 = arith.constant 0 : i32
    %c0_i32_0 = arith.constant 0 : i32
    %c0_i32_1 = arith.constant 0 : i32
    return %arg0, %c0_i32, %c0_i32_0 : i32, i32, i32
  }
  func.func @transform_1(%arg0: i32, %arg1: i32) -> (i32, i32, i32) {
    %c0_i32 = arith.constant 0 : i32
    %c0_i32_0 = arith.constant 0 : i32
    %c0_i32_1 = arith.constant 0 : i32
    return %arg1, %c0_i32, %c0_i32_0 : i32, i32, i32
  }
  func.func @transform_2(%arg0: i32, %arg1: i32) -> (i32, i32, i32) {
    %c0_i32 = arith.constant 0 : i32
    %c0_i32_0 = arith.constant 0 : i32
    %c0_i32_1 = arith.constant 0 : i32
    return %arg1, %c0_i32, %c0_i32_0 : i32, i32, i32
  }
  func.func @transform_3(%arg0: i32, %arg1: i32) -> (i32, i32, i32) {
    %c0_i32 = arith.constant 0 : i32
    %c0_i32_0 = arith.constant 0 : i32
    %c0_i32_1 = arith.constant 0 : i32
    return %arg1, %c0_i32, %c0_i32_0 : i32, i32, i32
  }
  func.func @transform_4(%arg0: i32, %arg1: i32) -> (i32, i32, i32) {
    %c0_i32 = arith.constant 0 : i32
    %c0_i32_0 = arith.constant 0 : i32
    %c0_i32_1 = arith.constant 0 : i32
    return %arg1, %c0_i32, %c0_i32_0 : i32, i32, i32
  }
  func.func @transform_5(%arg0: i32, %arg1: i32) -> (i32, i32, i32, i32) {
    %c0_i32 = arith.constant 0 : i32
    %c0_i32_0 = arith.constant 0 : i32
    %c0_i32_1 = arith.constant 0 : i32
    %c0_i32_2 = arith.constant 0 : i32
    return %arg1, %c0_i32, %c0_i32_0, %c0_i32_1 : i32, i32, i32, i32
  }
  func.func @transform_6(%arg0: i32, %arg1: i32) -> (i32, i32, i32) {
    %c0_i32 = arith.constant 0 : i32
    %c0_i32_0 = arith.constant 0 : i32
    %c0_i32_1 = arith.constant 0 : i32
    return %arg1, %c0_i32, %c0_i32_0 : i32, i32, i32
  }
  func.func @transform_7(%arg0: i32, %arg1: i32) -> (i32, i32, i32) {
    %c0_i32 = arith.constant 0 : i32
    %c0_i32_0 = arith.constant 0 : i32
    %c0_i32_1 = arith.constant 0 : i32
    return %arg1, %c0_i32, %c0_i32_0 : i32, i32, i32
  }
  func.func @transform_8(%arg0: i32, %arg1: i32) -> (i32, i32, i32) {
    %c0_i32 = arith.constant 0 : i32
    %c0_i32_0 = arith.constant 0 : i32
    %c0_i32_1 = arith.constant 0 : i32
    return %arg1, %c0_i32, %c0_i32_0 : i32, i32, i32
  }
  func.func @transform_9(%arg0: i32, %arg1: i32) -> (i32, i32, i32) {
    %c0_i32 = arith.constant 0 : i32
    %c0_i32_0 = arith.constant 0 : i32
    %c0_i32_1 = arith.constant 0 : i32
    return %arg0, %c0_i32, %c0_i32_0 : i32, i32, i32
  }
}

module attributes {stable_mosaic.version = 11 : i64} {
  func.func @_chain_kernel(%arg0: i32, %arg1: i32, %arg2: memref<1x64x8xf32, #tpu.memory_space<vmem>>, %arg3: memref<1x1x8xf32, #tpu.memory_space<vmem>>, %arg4: memref<1x1x8xf32, #tpu.memory_space<vmem>>, %arg5: memref<1x8x4xbf16, #tpu.memory_space<vmem>>, %arg6: memref<1x1x4xf32, #tpu.memory_space<vmem>>, %arg7: memref<1x9x4x4xbf16, #tpu.memory_space<vmem>>, %arg8: memref<1x1x4xf32, #tpu.memory_space<vmem>>, %arg9: memref<1x4x8xbf16, #tpu.memory_space<vmem>>, %arg10: memref<1x1x8xf32, #tpu.memory_space<vmem>>, %arg11: memref<1x64x8xf32, #tpu.memory_space<vmem>>, %arg12: memref<10x10x4xf32, #tpu.memory_space<vmem>>) attributes {dimension_semantics = [#tpu.dimension_semantics<parallel>, #tpu.dimension_semantics<arbitrary>], iteration_bounds = array<i64: 2, 1>, scalar_prefetch = 0 : i64, scratch_operands = 1 : i64, tpu.core_type = #tpu.core_type<tc>, window_params = [{transform_indices = @transform_0, window_bounds = array<i64: 1, 64, 8>}, {transform_indices = @transform_1, window_bounds = array<i64: 1, 1, 8>}, {transform_indices = @transform_2, window_bounds = array<i64: 1, 1, 8>}, {transform_indices = @transform_3, window_bounds = array<i64: 1, 8, 4>}, {transform_indices = @transform_4, window_bounds = array<i64: 1, 1, 4>}, {transform_indices = @transform_5, window_bounds = array<i64: 1, 9, 4, 4>}, {transform_indices = @transform_6, window_bounds = array<i64: 1, 1, 4>}, {transform_indices = @transform_7, window_bounds = array<i64: 1, 4, 8>}, {transform_indices = @transform_8, window_bounds = array<i64: 1, 1, 8>}, {transform_indices = @transform_9, window_bounds = array<i64: 1, 64, 8>}]} {
    %c0_i32 = arith.constant 0 : i32
    %0 = arith.cmpi eq, %arg1, %c0_i32 : i32
    %1 = arith.extui %0 : i1 to i32
    %c0_i32_0 = arith.constant 0 : i32
    %2 = arith.cmpi ne, %1, %c0_i32_0 : i32
    scf.if %2 {
      %c0_77 = arith.constant 0 : index
      %c0_78 = arith.constant 0 : index
      %c0_79 = arith.constant 0 : index
      %113 = vector.load %arg2[%c0_77, %c0_78, %c0_79] : memref<1x64x8xf32, #tpu.memory_space<vmem>>, vector<1x64x8xf32>
      %c0_80 = arith.constant 0 : index
      %c0_81 = arith.constant 0 : index
      %c0_82 = arith.constant 0 : index
      %114 = vector.load %arg11[%c0_80, %c0_81, %c0_82] : memref<1x64x8xf32, #tpu.memory_space<vmem>>, vector<1x64x8xf32>
      tpu.vector_store %arg11[%c0_80, %c0_81, %c0_82], %113 {strides = array<i32>} : memref<1x64x8xf32, #tpu.memory_space<vmem>>, vector<1x64x8xf32>,
    } else {
    }
    %c0 = arith.constant 0 : index
    %c0_1 = arith.constant 0 : index
    %c0_2 = arith.constant 0 : index
    %3 = vector.load %arg11[%c0, %c0_1, %c0_2] : memref<1x64x8xf32, #tpu.memory_space<vmem>>, vector<1x64x8xf32>
    %4 = vector.shape_cast %3 : vector<1x64x8xf32> to vector<64x8xf32>
    %c0_3 = arith.constant 0 : index
    %c0_4 = arith.constant 0 : index
    %c0_5 = arith.constant 0 : index
    %5 = vector.load %arg3[%c0_3, %c0_4, %c0_5] : memref<1x1x8xf32, #tpu.memory_space<vmem>>, vector<1x1x8xf32>
    %6 = vector.shape_cast %5 : vector<1x1x8xf32> to vector<1x8xf32>
    %7 = vector.broadcast %6 : vector<1x8xf32> to vector<64x8xf32>
    %8 = arith.mulf %4, %7 : vector<64x8xf32>
    %c0_6 = arith.constant 0 : index
    %c0_7 = arith.constant 0 : index
    %c0_8 = arith.constant 0 : index
    %9 = vector.load %arg4[%c0_6, %c0_7, %c0_8] : memref<1x1x8xf32, #tpu.memory_space<vmem>>, vector<1x1x8xf32>
    %10 = vector.shape_cast %9 : vector<1x1x8xf32> to vector<1x8xf32>
    %11 = vector.broadcast %10 : vector<1x8xf32> to vector<64x8xf32>
    %12 = arith.addf %8, %11 : vector<64x8xf32>
    %cst = arith.constant 0.000000e+00 : f32
    %13 = vector.broadcast %cst : f32 to vector<64x8xf32>
    %14 = arith.maximumf %12, %13 : vector<64x8xf32>
    %15 = arith.truncf %14 : vector<64x8xf32> to vector<64x8xbf16>
    %c0_9 = arith.constant 0 : index
    %c0_10 = arith.constant 0 : index
    %c0_11 = arith.constant 0 : index
    %16 = vector.load %arg5[%c0_9, %c0_10, %c0_11] : memref<1x8x4xbf16, #tpu.memory_space<vmem>>, vector<1x8x4xbf16>
    %17 = vector.shape_cast %16 : vector<1x8x4xbf16> to vector<8x4xbf16>
    %cst_12 = arith.constant dense<0.000000e+00> : vector<64x4xf32>
    %18 = tpu.matmul %15, %17, %cst_12 {dimension_numbers = #tpu.dot_dimension_numbers<[1], [0], [0], [1], [0, 0, 1, 1], [], []>} : vector<64x8xbf16>, vector<8x4xbf16>, vector<64x4xf32> -> vector<64x4xf32>
    %c0_13 = arith.constant 0 : index
    %c0_14 = arith.constant 0 : index
    %c0_15 = arith.constant 0 : index
    %19 = vector.load %arg6[%c0_13, %c0_14, %c0_15] : memref<1x1x4xf32, #tpu.memory_space<vmem>>, vector<1x1x4xf32>
    %20 = vector.shape_cast %19 : vector<1x1x4xf32> to vector<1x4xf32>
    %21 = vector.broadcast %20 : vector<1x4xf32> to vector<64x4xf32>
    %22 = arith.addf %18, %21 : vector<64x4xf32>
    %cst_16 = arith.constant 0.000000e+00 : f32
    %23 = vector.broadcast %cst_16 : f32 to vector<64x4xf32>
    %24 = arith.maximumf %22, %23 : vector<64x4xf32>
    %cst_17 = arith.constant 0.000000e+00 : f32
    %25 = vector.broadcast %cst_17 : f32 to vector<10x10x4xf32>
    %c0_18 = arith.constant 0 : index
    %c0_19 = arith.constant 0 : index
    %c0_20 = arith.constant 0 : index
    %26 = vector.load %arg12[%c0_18, %c0_19, %c0_20] : memref<10x10x4xf32, #tpu.memory_space<vmem>>, vector<10x10x4xf32>
    tpu.vector_store %arg12[%c0_18, %c0_19, %c0_20], %25 {strides = array<i32>} : memref<10x10x4xf32, #tpu.memory_space<vmem>>, vector<10x10x4xf32>,
    %27 = vector.shape_cast %24 : vector<64x4xf32> to vector<8x8x4xf32>
    %c1 = arith.constant 1 : index
    %c1_21 = arith.constant 1 : index
    %c0_22 = arith.constant 0 : index
    %28 = vector.load %arg12[%c1, %c1_21, %c0_22] : memref<10x10x4xf32, #tpu.memory_space<vmem>>, vector<8x8x4xf32>
    tpu.vector_store %arg12[%c1, %c1_21, %c0_22], %27 {strides = array<i32>} : memref<10x10x4xf32, #tpu.memory_space<vmem>>, vector<8x8x4xf32>,
    %c0_23 = arith.constant 0 : index
    %c0_24 = arith.constant 0 : index
    %c0_25 = arith.constant 0 : index
    %c0_26 = arith.constant 0 : index
    %29 = vector.load %arg7[%c0_23, %c0_24, %c0_25, %c0_26] : memref<1x9x4x4xbf16, #tpu.memory_space<vmem>>, vector<1x9x4x4xbf16>
    %30 = vector.shape_cast %29 : vector<1x9x4x4xbf16> to vector<9x4x4xbf16>
    %cst_27 = arith.constant 0.000000e+00 : f32
    %31 = vector.broadcast %cst_27 : f32 to vector<64x4xf32>
    %c0_28 = arith.constant 0 : index
    %c0_29 = arith.constant 0 : index
    %c0_30 = arith.constant 0 : index
    %32 = vector.load %arg12[%c0_28, %c0_29, %c0_30] : memref<10x10x4xf32, #tpu.memory_space<vmem>>, vector<8x8x4xf32>
    %33 = vector.shape_cast %32 : vector<8x8x4xf32> to vector<64x4xf32>
    %34 = arith.truncf %33 : vector<64x4xf32> to vector<64x4xbf16>
    %35 = vector.extract_strided_slice %30 {offsets = [0, 0, 0], sizes = [1, 4, 4], strides = [1, 1, 1]} : vector<9x4x4xbf16> to vector<1x4x4xbf16>
    %36 = vector.shape_cast %35 : vector<1x4x4xbf16> to vector<4x4xbf16>
    %cst_31 = arith.constant dense<0.000000e+00> : vector<64x4xf32>
    %37 = tpu.matmul %34, %36, %cst_31 {dimension_numbers = #tpu.dot_dimension_numbers<[1], [0], [0], [1], [0, 0, 1, 1], [], []>} : vector<64x4xbf16>, vector<4x4xbf16>, vector<64x4xf32> -> vector<64x4xf32>
    %38 = arith.addf %31, %37 : vector<64x4xf32>
    %c0_32 = arith.constant 0 : index
    %c1_33 = arith.constant 1 : index
    %c0_34 = arith.constant 0 : index
    %39 = vector.load %arg12[%c0_32, %c1_33, %c0_34] : memref<10x10x4xf32, #tpu.memory_space<vmem>>, vector<8x8x4xf32>
    %40 = vector.shape_cast %39 : vector<8x8x4xf32> to vector<64x4xf32>
    %41 = arith.truncf %40 : vector<64x4xf32> to vector<64x4xbf16>
    %42 = vector.extract_strided_slice %30 {offsets = [1, 0, 0], sizes = [1, 4, 4], strides = [1, 1, 1]} : vector<9x4x4xbf16> to vector<1x4x4xbf16>
    %43 = vector.shape_cast %42 : vector<1x4x4xbf16> to vector<4x4xbf16>
    %cst_35 = arith.constant dense<0.000000e+00> : vector<64x4xf32>
    %44 = tpu.matmul %41, %43, %cst_35 {dimension_numbers = #tpu.dot_dimension_numbers<[1], [0], [0], [1], [0, 0, 1, 1], [], []>} : vector<64x4xbf16>, vector<4x4xbf16>, vector<64x4xf32> -> vector<64x4xf32>
    %45 = arith.addf %38, %44 : vector<64x4xf32>
    %c0_36 = arith.constant 0 : index
    %c2 = arith.constant 2 : index
    %c0_37 = arith.constant 0 : index
    %46 = vector.load %arg12[%c0_36, %c2, %c0_37] : memref<10x10x4xf32, #tpu.memory_space<vmem>>, vector<8x8x4xf32>
    %47 = vector.shape_cast %46 : vector<8x8x4xf32> to vector<64x4xf32>
    %48 = arith.truncf %47 : vector<64x4xf32> to vector<64x4xbf16>
    %49 = vector.extract_strided_slice %30 {offsets = [2, 0, 0], sizes = [1, 4, 4], strides = [1, 1, 1]} : vector<9x4x4xbf16> to vector<1x4x4xbf16>
    %50 = vector.shape_cast %49 : vector<1x4x4xbf16> to vector<4x4xbf16>
    %cst_38 = arith.constant dense<0.000000e+00> : vector<64x4xf32>
    %51 = tpu.matmul %48, %50, %cst_38 {dimension_numbers = #tpu.dot_dimension_numbers<[1], [0], [0], [1], [0, 0, 1, 1], [], []>} : vector<64x4xbf16>, vector<4x4xbf16>, vector<64x4xf32> -> vector<64x4xf32>
    %52 = arith.addf %45, %51 : vector<64x4xf32>
    %c1_39 = arith.constant 1 : index
    %c0_40 = arith.constant 0 : index
    %c0_41 = arith.constant 0 : index
    %53 = vector.load %arg12[%c1_39, %c0_40, %c0_41] : memref<10x10x4xf32, #tpu.memory_space<vmem>>, vector<8x8x4xf32>
    %54 = vector.shape_cast %53 : vector<8x8x4xf32> to vector<64x4xf32>
    %55 = arith.truncf %54 : vector<64x4xf32> to vector<64x4xbf16>
    %56 = vector.extract_strided_slice %30 {offsets = [3, 0, 0], sizes = [1, 4, 4], strides = [1, 1, 1]} : vector<9x4x4xbf16> to vector<1x4x4xbf16>
    %57 = vector.shape_cast %56 : vector<1x4x4xbf16> to vector<4x4xbf16>
    %cst_42 = arith.constant dense<0.000000e+00> : vector<64x4xf32>
    %58 = tpu.matmul %55, %57, %cst_42 {dimension_numbers = #tpu.dot_dimension_numbers<[1], [0], [0], [1], [0, 0, 1, 1], [], []>} : vector<64x4xbf16>, vector<4x4xbf16>, vector<64x4xf32> -> vector<64x4xf32>
    %59 = arith.addf %52, %58 : vector<64x4xf32>
    %c1_43 = arith.constant 1 : index
    %c1_44 = arith.constant 1 : index
    %c0_45 = arith.constant 0 : index
    %60 = vector.load %arg12[%c1_43, %c1_44, %c0_45] : memref<10x10x4xf32, #tpu.memory_space<vmem>>, vector<8x8x4xf32>
    %61 = vector.shape_cast %60 : vector<8x8x4xf32> to vector<64x4xf32>
    %62 = arith.truncf %61 : vector<64x4xf32> to vector<64x4xbf16>
    %63 = vector.extract_strided_slice %30 {offsets = [4, 0, 0], sizes = [1, 4, 4], strides = [1, 1, 1]} : vector<9x4x4xbf16> to vector<1x4x4xbf16>
    %64 = vector.shape_cast %63 : vector<1x4x4xbf16> to vector<4x4xbf16>
    %cst_46 = arith.constant dense<0.000000e+00> : vector<64x4xf32>
    %65 = tpu.matmul %62, %64, %cst_46 {dimension_numbers = #tpu.dot_dimension_numbers<[1], [0], [0], [1], [0, 0, 1, 1], [], []>} : vector<64x4xbf16>, vector<4x4xbf16>, vector<64x4xf32> -> vector<64x4xf32>
    %66 = arith.addf %59, %65 : vector<64x4xf32>
    %c1_47 = arith.constant 1 : index
    %c2_48 = arith.constant 2 : index
    %c0_49 = arith.constant 0 : index
    %67 = vector.load %arg12[%c1_47, %c2_48, %c0_49] : memref<10x10x4xf32, #tpu.memory_space<vmem>>, vector<8x8x4xf32>
    %68 = vector.shape_cast %67 : vector<8x8x4xf32> to vector<64x4xf32>
    %69 = arith.truncf %68 : vector<64x4xf32> to vector<64x4xbf16>
    %70 = vector.extract_strided_slice %30 {offsets = [5, 0, 0], sizes = [1, 4, 4], strides = [1, 1, 1]} : vector<9x4x4xbf16> to vector<1x4x4xbf16>
    %71 = vector.shape_cast %70 : vector<1x4x4xbf16> to vector<4x4xbf16>
    %cst_50 = arith.constant dense<0.000000e+00> : vector<64x4xf32>
    %72 = tpu.matmul %69, %71, %cst_50 {dimension_numbers = #tpu.dot_dimension_numbers<[1], [0], [0], [1], [0, 0, 1, 1], [], []>} : vector<64x4xbf16>, vector<4x4xbf16>, vector<64x4xf32> -> vector<64x4xf32>
    %73 = arith.addf %66, %72 : vector<64x4xf32>
    %c2_51 = arith.constant 2 : index
    %c0_52 = arith.constant 0 : index
    %c0_53 = arith.constant 0 : index
    %74 = vector.load %arg12[%c2_51, %c0_52, %c0_53] : memref<10x10x4xf32, #tpu.memory_space<vmem>>, vector<8x8x4xf32>
    %75 = vector.shape_cast %74 : vector<8x8x4xf32> to vector<64x4xf32>
    %76 = arith.truncf %75 : vector<64x4xf32> to vector<64x4xbf16>
    %77 = vector.extract_strided_slice %30 {offsets = [6, 0, 0], sizes = [1, 4, 4], strides = [1, 1, 1]} : vector<9x4x4xbf16> to vector<1x4x4xbf16>
    %78 = vector.shape_cast %77 : vector<1x4x4xbf16> to vector<4x4xbf16>
    %cst_54 = arith.constant dense<0.000000e+00> : vector<64x4xf32>
    %79 = tpu.matmul %76, %78, %cst_54 {dimension_numbers = #tpu.dot_dimension_numbers<[1], [0], [0], [1], [0, 0, 1, 1], [], []>} : vector<64x4xbf16>, vector<4x4xbf16>, vector<64x4xf32> -> vector<64x4xf32>
    %80 = arith.addf %73, %79 : vector<64x4xf32>
    %c2_55 = arith.constant 2 : index
    %c1_56 = arith.constant 1 : index
    %c0_57 = arith.constant 0 : index
    %81 = vector.load %arg12[%c2_55, %c1_56, %c0_57] : memref<10x10x4xf32, #tpu.memory_space<vmem>>, vector<8x8x4xf32>
    %82 = vector.shape_cast %81 : vector<8x8x4xf32> to vector<64x4xf32>
    %83 = arith.truncf %82 : vector<64x4xf32> to vector<64x4xbf16>
    %84 = vector.extract_strided_slice %30 {offsets = [7, 0, 0], sizes = [1, 4, 4], strides = [1, 1, 1]} : vector<9x4x4xbf16> to vector<1x4x4xbf16>
    %85 = vector.shape_cast %84 : vector<1x4x4xbf16> to vector<4x4xbf16>
    %cst_58 = arith.constant dense<0.000000e+00> : vector<64x4xf32>
    %86 = tpu.matmul %83, %85, %cst_58 {dimension_numbers = #tpu.dot_dimension_numbers<[1], [0], [0], [1], [0, 0, 1, 1], [], []>} : vector<64x4xbf16>, vector<4x4xbf16>, vector<64x4xf32> -> vector<64x4xf32>
    %87 = arith.addf %80, %86 : vector<64x4xf32>
    %c2_59 = arith.constant 2 : index
    %c2_60 = arith.constant 2 : index
    %c0_61 = arith.constant 0 : index
    %88 = vector.load %arg12[%c2_59, %c2_60, %c0_61] : memref<10x10x4xf32, #tpu.memory_space<vmem>>, vector<8x8x4xf32>
    %89 = vector.shape_cast %88 : vector<8x8x4xf32> to vector<64x4xf32>
    %90 = arith.truncf %89 : vector<64x4xf32> to vector<64x4xbf16>
    %91 = vector.extract_strided_slice %30 {offsets = [8, 0, 0], sizes = [1, 4, 4], strides = [1, 1, 1]} : vector<9x4x4xbf16> to vector<1x4x4xbf16>
    %92 = vector.shape_cast %91 : vector<1x4x4xbf16> to vector<4x4xbf16>
    %cst_62 = arith.constant dense<0.000000e+00> : vector<64x4xf32>
    %93 = tpu.matmul %90, %92, %cst_62 {dimension_numbers = #tpu.dot_dimension_numbers<[1], [0], [0], [1], [0, 0, 1, 1], [], []>} : vector<64x4xbf16>, vector<4x4xbf16>, vector<64x4xf32> -> vector<64x4xf32>
    %94 = arith.addf %87, %93 : vector<64x4xf32>
    %c0_63 = arith.constant 0 : index
    %c0_64 = arith.constant 0 : index
    %c0_65 = arith.constant 0 : index
    %95 = vector.load %arg8[%c0_63, %c0_64, %c0_65] : memref<1x1x4xf32, #tpu.memory_space<vmem>>, vector<1x1x4xf32>
    %96 = vector.shape_cast %95 : vector<1x1x4xf32> to vector<1x4xf32>
    %97 = vector.broadcast %96 : vector<1x4xf32> to vector<64x4xf32>
    %98 = arith.addf %94, %97 : vector<64x4xf32>
    %cst_66 = arith.constant 0.000000e+00 : f32
    %99 = vector.broadcast %cst_66 : f32 to vector<64x4xf32>
    %100 = arith.maximumf %98, %99 : vector<64x4xf32>
    %101 = arith.truncf %100 : vector<64x4xf32> to vector<64x4xbf16>
    %c0_67 = arith.constant 0 : index
    %c0_68 = arith.constant 0 : index
    %c0_69 = arith.constant 0 : index
    %102 = vector.load %arg9[%c0_67, %c0_68, %c0_69] : memref<1x4x8xbf16, #tpu.memory_space<vmem>>, vector<1x4x8xbf16>
    %103 = vector.shape_cast %102 : vector<1x4x8xbf16> to vector<4x8xbf16>
    %cst_70 = arith.constant dense<0.000000e+00> : vector<64x8xf32>
    %104 = tpu.matmul %101, %103, %cst_70 {dimension_numbers = #tpu.dot_dimension_numbers<[1], [0], [0], [1], [0, 0, 1, 1], [], []>} : vector<64x4xbf16>, vector<4x8xbf16>, vector<64x8xf32> -> vector<64x8xf32>
    %105 = arith.addf %4, %104 : vector<64x8xf32>
    %c0_71 = arith.constant 0 : index
    %c0_72 = arith.constant 0 : index
    %c0_73 = arith.constant 0 : index
    %106 = vector.load %arg10[%c0_71, %c0_72, %c0_73] : memref<1x1x8xf32, #tpu.memory_space<vmem>>, vector<1x1x8xf32>
    %107 = vector.shape_cast %106 : vector<1x1x8xf32> to vector<1x8xf32>
    %108 = vector.broadcast %107 : vector<1x8xf32> to vector<64x8xf32>
    %109 = arith.addf %105, %108 : vector<64x8xf32>
    %c0_74 = arith.constant 0 : index
    %c0_75 = arith.constant 0 : index
    %c0_76 = arith.constant 0 : index
    %110 = vector.load %arg11[%c0_74, %c0_75, %c0_76] : memref<1x64x8xf32, #tpu.memory_space<vmem>>, vector<1x64x8xf32>
    %111 = vector.shape_cast %110 : vector<1x64x8xf32> to vector<64x8xf32>
    %112 = vector.shape_cast %109 : vector<64x8xf32> to vector<1x64x8xf32>
    tpu.vector_store %arg11[%c0_74, %c0_75, %c0_76], %112 {strides = array<i32>} : memref<1x64x8xf32, #tpu.memory_space<vmem>>, vector<1x64x8xf32>,
    return
  }
  func.func @transform_0(%arg0: i32, %arg1: i32) -> (i32, i32, i32) {
    %c0_i32 = arith.constant 0 : i32
    %c0_i32_0 = arith.constant 0 : i32
    %c0_i32_1 = arith.constant 0 : i32
    return %arg0, %c0_i32, %c0_i32_0 : i32, i32, i32
  }
  func.func @transform_1(%arg0: i32, %arg1: i32) -> (i32, i32, i32) {
    %c0_i32 = arith.constant 0 : i32
    %c0_i32_0 = arith.constant 0 : i32
    %c0_i32_1 = arith.constant 0 : i32
    return %arg1, %c0_i32, %c0_i32_0 : i32, i32, i32
  }
  func.func @transform_2(%arg0: i32, %arg1: i32) -> (i32, i32, i32) {
    %c0_i32 = arith.constant 0 : i32
    %c0_i32_0 = arith.constant 0 : i32
    %c0_i32_1 = arith.constant 0 : i32
    return %arg1, %c0_i32, %c0_i32_0 : i32, i32, i32
  }
  func.func @transform_3(%arg0: i32, %arg1: i32) -> (i32, i32, i32) {
    %c0_i32 = arith.constant 0 : i32
    %c0_i32_0 = arith.constant 0 : i32
    %c0_i32_1 = arith.constant 0 : i32
    return %arg1, %c0_i32, %c0_i32_0 : i32, i32, i32
  }
  func.func @transform_4(%arg0: i32, %arg1: i32) -> (i32, i32, i32) {
    %c0_i32 = arith.constant 0 : i32
    %c0_i32_0 = arith.constant 0 : i32
    %c0_i32_1 = arith.constant 0 : i32
    return %arg1, %c0_i32, %c0_i32_0 : i32, i32, i32
  }
  func.func @transform_5(%arg0: i32, %arg1: i32) -> (i32, i32, i32, i32) {
    %c0_i32 = arith.constant 0 : i32
    %c0_i32_0 = arith.constant 0 : i32
    %c0_i32_1 = arith.constant 0 : i32
    %c0_i32_2 = arith.constant 0 : i32
    return %arg1, %c0_i32, %c0_i32_0, %c0_i32_1 : i32, i32, i32, i32
  }
  func.func @transform_6(%arg0: i32, %arg1: i32) -> (i32, i32, i32) {
    %c0_i32 = arith.constant 0 : i32
    %c0_i32_0 = arith.constant 0 : i32
    %c0_i32_1 = arith.constant 0 : i32
    return %arg1, %c0_i32, %c0_i32_0 : i32, i32, i32
  }
  func.func @transform_7(%arg0: i32, %arg1: i32) -> (i32, i32, i32) {
    %c0_i32 = arith.constant 0 : i32
    %c0_i32_0 = arith.constant 0 : i32
    %c0_i32_1 = arith.constant 0 : i32
    return %arg1, %c0_i32, %c0_i32_0 : i32, i32, i32
  }
  func.func @transform_8(%arg0: i32, %arg1: i32) -> (i32, i32, i32) {
    %c0_i32 = arith.constant 0 : i32
    %c0_i32_0 = arith.constant 0 : i32
    %c0_i32_1 = arith.constant 0 : i32
    return %arg1, %c0_i32, %c0_i32_0 : i32, i32, i32
  }
  func.func @transform_9(%arg0: i32, %arg1: i32) -> (i32, i32, i32) {
    %c0_i32 = arith.constant 0 : i32
    %c0_i32_0 = arith.constant 0 : i32
    %c0_i32_1 = arith.constant 0 : i32
    return %arg0, %c0_i32, %c0_i32_0 : i32, i32, i32
  }
}

module attributes {stable_mosaic.version = 11 : i64} {
  func.func @_chain_kernel(%arg0: i32, %arg1: i32, %arg2: memref<1x16x8xf32, #tpu.memory_space<vmem>>, %arg3: memref<1x1x8xf32, #tpu.memory_space<vmem>>, %arg4: memref<1x1x8xf32, #tpu.memory_space<vmem>>, %arg5: memref<1x8x4xbf16, #tpu.memory_space<vmem>>, %arg6: memref<1x1x4xf32, #tpu.memory_space<vmem>>, %arg7: memref<1x9x4x4xbf16, #tpu.memory_space<vmem>>, %arg8: memref<1x1x4xf32, #tpu.memory_space<vmem>>, %arg9: memref<1x4x8xbf16, #tpu.memory_space<vmem>>, %arg10: memref<1x1x8xf32, #tpu.memory_space<vmem>>, %arg11: memref<1x16x8xf32, #tpu.memory_space<vmem>>, %arg12: memref<6x6x4xf32, #tpu.memory_space<vmem>>) attributes {dimension_semantics = [#tpu.dimension_semantics<parallel>, #tpu.dimension_semantics<arbitrary>], iteration_bounds = array<i64: 2, 1>, scalar_prefetch = 0 : i64, scratch_operands = 1 : i64, tpu.core_type = #tpu.core_type<tc>, window_params = [{transform_indices = @transform_0, window_bounds = array<i64: 1, 16, 8>}, {transform_indices = @transform_1, window_bounds = array<i64: 1, 1, 8>}, {transform_indices = @transform_2, window_bounds = array<i64: 1, 1, 8>}, {transform_indices = @transform_3, window_bounds = array<i64: 1, 8, 4>}, {transform_indices = @transform_4, window_bounds = array<i64: 1, 1, 4>}, {transform_indices = @transform_5, window_bounds = array<i64: 1, 9, 4, 4>}, {transform_indices = @transform_6, window_bounds = array<i64: 1, 1, 4>}, {transform_indices = @transform_7, window_bounds = array<i64: 1, 4, 8>}, {transform_indices = @transform_8, window_bounds = array<i64: 1, 1, 8>}, {transform_indices = @transform_9, window_bounds = array<i64: 1, 16, 8>}]} {
    %c0_i32 = arith.constant 0 : i32
    %0 = arith.cmpi eq, %arg1, %c0_i32 : i32
    %1 = arith.extui %0 : i1 to i32
    %c0_i32_0 = arith.constant 0 : i32
    %2 = arith.cmpi ne, %1, %c0_i32_0 : i32
    scf.if %2 {
      %c0_77 = arith.constant 0 : index
      %c0_78 = arith.constant 0 : index
      %c0_79 = arith.constant 0 : index
      %113 = vector.load %arg2[%c0_77, %c0_78, %c0_79] : memref<1x16x8xf32, #tpu.memory_space<vmem>>, vector<1x16x8xf32>
      %c0_80 = arith.constant 0 : index
      %c0_81 = arith.constant 0 : index
      %c0_82 = arith.constant 0 : index
      %114 = vector.load %arg11[%c0_80, %c0_81, %c0_82] : memref<1x16x8xf32, #tpu.memory_space<vmem>>, vector<1x16x8xf32>
      tpu.vector_store %arg11[%c0_80, %c0_81, %c0_82], %113 {strides = array<i32>} : memref<1x16x8xf32, #tpu.memory_space<vmem>>, vector<1x16x8xf32>,
    } else {
    }
    %c0 = arith.constant 0 : index
    %c0_1 = arith.constant 0 : index
    %c0_2 = arith.constant 0 : index
    %3 = vector.load %arg11[%c0, %c0_1, %c0_2] : memref<1x16x8xf32, #tpu.memory_space<vmem>>, vector<1x16x8xf32>
    %4 = vector.shape_cast %3 : vector<1x16x8xf32> to vector<16x8xf32>
    %c0_3 = arith.constant 0 : index
    %c0_4 = arith.constant 0 : index
    %c0_5 = arith.constant 0 : index
    %5 = vector.load %arg3[%c0_3, %c0_4, %c0_5] : memref<1x1x8xf32, #tpu.memory_space<vmem>>, vector<1x1x8xf32>
    %6 = vector.shape_cast %5 : vector<1x1x8xf32> to vector<1x8xf32>
    %7 = vector.broadcast %6 : vector<1x8xf32> to vector<16x8xf32>
    %8 = arith.mulf %4, %7 : vector<16x8xf32>
    %c0_6 = arith.constant 0 : index
    %c0_7 = arith.constant 0 : index
    %c0_8 = arith.constant 0 : index
    %9 = vector.load %arg4[%c0_6, %c0_7, %c0_8] : memref<1x1x8xf32, #tpu.memory_space<vmem>>, vector<1x1x8xf32>
    %10 = vector.shape_cast %9 : vector<1x1x8xf32> to vector<1x8xf32>
    %11 = vector.broadcast %10 : vector<1x8xf32> to vector<16x8xf32>
    %12 = arith.addf %8, %11 : vector<16x8xf32>
    %cst = arith.constant 0.000000e+00 : f32
    %13 = vector.broadcast %cst : f32 to vector<16x8xf32>
    %14 = arith.maximumf %12, %13 : vector<16x8xf32>
    %15 = arith.truncf %14 : vector<16x8xf32> to vector<16x8xbf16>
    %c0_9 = arith.constant 0 : index
    %c0_10 = arith.constant 0 : index
    %c0_11 = arith.constant 0 : index
    %16 = vector.load %arg5[%c0_9, %c0_10, %c0_11] : memref<1x8x4xbf16, #tpu.memory_space<vmem>>, vector<1x8x4xbf16>
    %17 = vector.shape_cast %16 : vector<1x8x4xbf16> to vector<8x4xbf16>
    %cst_12 = arith.constant dense<0.000000e+00> : vector<16x4xf32>
    %18 = tpu.matmul %15, %17, %cst_12 {dimension_numbers = #tpu.dot_dimension_numbers<[1], [0], [0], [1], [0, 0, 1, 1], [], []>} : vector<16x8xbf16>, vector<8x4xbf16>, vector<16x4xf32> -> vector<16x4xf32>
    %c0_13 = arith.constant 0 : index
    %c0_14 = arith.constant 0 : index
    %c0_15 = arith.constant 0 : index
    %19 = vector.load %arg6[%c0_13, %c0_14, %c0_15] : memref<1x1x4xf32, #tpu.memory_space<vmem>>, vector<1x1x4xf32>
    %20 = vector.shape_cast %19 : vector<1x1x4xf32> to vector<1x4xf32>
    %21 = vector.broadcast %20 : vector<1x4xf32> to vector<16x4xf32>
    %22 = arith.addf %18, %21 : vector<16x4xf32>
    %cst_16 = arith.constant 0.000000e+00 : f32
    %23 = vector.broadcast %cst_16 : f32 to vector<16x4xf32>
    %24 = arith.maximumf %22, %23 : vector<16x4xf32>
    %cst_17 = arith.constant 0.000000e+00 : f32
    %25 = vector.broadcast %cst_17 : f32 to vector<6x6x4xf32>
    %c0_18 = arith.constant 0 : index
    %c0_19 = arith.constant 0 : index
    %c0_20 = arith.constant 0 : index
    %26 = vector.load %arg12[%c0_18, %c0_19, %c0_20] : memref<6x6x4xf32, #tpu.memory_space<vmem>>, vector<6x6x4xf32>
    tpu.vector_store %arg12[%c0_18, %c0_19, %c0_20], %25 {strides = array<i32>} : memref<6x6x4xf32, #tpu.memory_space<vmem>>, vector<6x6x4xf32>,
    %27 = vector.shape_cast %24 : vector<16x4xf32> to vector<4x4x4xf32>
    %c1 = arith.constant 1 : index
    %c1_21 = arith.constant 1 : index
    %c0_22 = arith.constant 0 : index
    %28 = vector.load %arg12[%c1, %c1_21, %c0_22] : memref<6x6x4xf32, #tpu.memory_space<vmem>>, vector<4x4x4xf32>
    tpu.vector_store %arg12[%c1, %c1_21, %c0_22], %27 {strides = array<i32>} : memref<6x6x4xf32, #tpu.memory_space<vmem>>, vector<4x4x4xf32>,
    %c0_23 = arith.constant 0 : index
    %c0_24 = arith.constant 0 : index
    %c0_25 = arith.constant 0 : index
    %c0_26 = arith.constant 0 : index
    %29 = vector.load %arg7[%c0_23, %c0_24, %c0_25, %c0_26] : memref<1x9x4x4xbf16, #tpu.memory_space<vmem>>, vector<1x9x4x4xbf16>
    %30 = vector.shape_cast %29 : vector<1x9x4x4xbf16> to vector<9x4x4xbf16>
    %cst_27 = arith.constant 0.000000e+00 : f32
    %31 = vector.broadcast %cst_27 : f32 to vector<16x4xf32>
    %c0_28 = arith.constant 0 : index
    %c0_29 = arith.constant 0 : index
    %c0_30 = arith.constant 0 : index
    %32 = vector.load %arg12[%c0_28, %c0_29, %c0_30] : memref<6x6x4xf32, #tpu.memory_space<vmem>>, vector<4x4x4xf32>
    %33 = vector.shape_cast %32 : vector<4x4x4xf32> to vector<16x4xf32>
    %34 = arith.truncf %33 : vector<16x4xf32> to vector<16x4xbf16>
    %35 = vector.extract_strided_slice %30 {offsets = [0, 0, 0], sizes = [1, 4, 4], strides = [1, 1, 1]} : vector<9x4x4xbf16> to vector<1x4x4xbf16>
    %36 = vector.shape_cast %35 : vector<1x4x4xbf16> to vector<4x4xbf16>
    %cst_31 = arith.constant dense<0.000000e+00> : vector<16x4xf32>
    %37 = tpu.matmul %34, %36, %cst_31 {dimension_numbers = #tpu.dot_dimension_numbers<[1], [0], [0], [1], [0, 0, 1, 1], [], []>} : vector<16x4xbf16>, vector<4x4xbf16>, vector<16x4xf32> -> vector<16x4xf32>
    %38 = arith.addf %31, %37 : vector<16x4xf32>
    %c0_32 = arith.constant 0 : index
    %c1_33 = arith.constant 1 : index
    %c0_34 = arith.constant 0 : index
    %39 = vector.load %arg12[%c0_32, %c1_33, %c0_34] : memref<6x6x4xf32, #tpu.memory_space<vmem>>, vector<4x4x4xf32>
    %40 = vector.shape_cast %39 : vector<4x4x4xf32> to vector<16x4xf32>
    %41 = arith.truncf %40 : vector<16x4xf32> to vector<16x4xbf16>
    %42 = vector.extract_strided_slice %30 {offsets = [1, 0, 0], sizes = [1, 4, 4], strides = [1, 1, 1]} : vector<9x4x4xbf16> to vector<1x4x4xbf16>
    %43 = vector.shape_cast %42 : vector<1x4x4xbf16> to vector<4x4xbf16>
    %cst_35 = arith.constant dense<0.000000e+00> : vector<16x4xf32>
    %44 = tpu.matmul %41, %43, %cst_35 {dimension_numbers = #tpu.dot_dimension_numbers<[1], [0], [0], [1], [0, 0, 1, 1], [], []>} : vector<16x4xbf16>, vector<4x4xbf16>, vector<16x4xf32> -> vector<16x4xf32>
    %45 = arith.addf %38, %44 : vector<16x4xf32>
    %c0_36 = arith.constant 0 : index
    %c2 = arith.constant 2 : index
    %c0_37 = arith.constant 0 : index
    %46 = vector.load %arg12[%c0_36, %c2, %c0_37] : memref<6x6x4xf32, #tpu.memory_space<vmem>>, vector<4x4x4xf32>
    %47 = vector.shape_cast %46 : vector<4x4x4xf32> to vector<16x4xf32>
    %48 = arith.truncf %47 : vector<16x4xf32> to vector<16x4xbf16>
    %49 = vector.extract_strided_slice %30 {offsets = [2, 0, 0], sizes = [1, 4, 4], strides = [1, 1, 1]} : vector<9x4x4xbf16> to vector<1x4x4xbf16>
    %50 = vector.shape_cast %49 : vector<1x4x4xbf16> to vector<4x4xbf16>
    %cst_38 = arith.constant dense<0.000000e+00> : vector<16x4xf32>
    %51 = tpu.matmul %48, %50, %cst_38 {dimension_numbers = #tpu.dot_dimension_numbers<[1], [0], [0], [1], [0, 0, 1, 1], [], []>} : vector<16x4xbf16>, vector<4x4xbf16>, vector<16x4xf32> -> vector<16x4xf32>
    %52 = arith.addf %45, %51 : vector<16x4xf32>
    %c1_39 = arith.constant 1 : index
    %c0_40 = arith.constant 0 : index
    %c0_41 = arith.constant 0 : index
    %53 = vector.load %arg12[%c1_39, %c0_40, %c0_41] : memref<6x6x4xf32, #tpu.memory_space<vmem>>, vector<4x4x4xf32>
    %54 = vector.shape_cast %53 : vector<4x4x4xf32> to vector<16x4xf32>
    %55 = arith.truncf %54 : vector<16x4xf32> to vector<16x4xbf16>
    %56 = vector.extract_strided_slice %30 {offsets = [3, 0, 0], sizes = [1, 4, 4], strides = [1, 1, 1]} : vector<9x4x4xbf16> to vector<1x4x4xbf16>
    %57 = vector.shape_cast %56 : vector<1x4x4xbf16> to vector<4x4xbf16>
    %cst_42 = arith.constant dense<0.000000e+00> : vector<16x4xf32>
    %58 = tpu.matmul %55, %57, %cst_42 {dimension_numbers = #tpu.dot_dimension_numbers<[1], [0], [0], [1], [0, 0, 1, 1], [], []>} : vector<16x4xbf16>, vector<4x4xbf16>, vector<16x4xf32> -> vector<16x4xf32>
    %59 = arith.addf %52, %58 : vector<16x4xf32>
    %c1_43 = arith.constant 1 : index
    %c1_44 = arith.constant 1 : index
    %c0_45 = arith.constant 0 : index
    %60 = vector.load %arg12[%c1_43, %c1_44, %c0_45] : memref<6x6x4xf32, #tpu.memory_space<vmem>>, vector<4x4x4xf32>
    %61 = vector.shape_cast %60 : vector<4x4x4xf32> to vector<16x4xf32>
    %62 = arith.truncf %61 : vector<16x4xf32> to vector<16x4xbf16>
    %63 = vector.extract_strided_slice %30 {offsets = [4, 0, 0], sizes = [1, 4, 4], strides = [1, 1, 1]} : vector<9x4x4xbf16> to vector<1x4x4xbf16>
    %64 = vector.shape_cast %63 : vector<1x4x4xbf16> to vector<4x4xbf16>
    %cst_46 = arith.constant dense<0.000000e+00> : vector<16x4xf32>
    %65 = tpu.matmul %62, %64, %cst_46 {dimension_numbers = #tpu.dot_dimension_numbers<[1], [0], [0], [1], [0, 0, 1, 1], [], []>} : vector<16x4xbf16>, vector<4x4xbf16>, vector<16x4xf32> -> vector<16x4xf32>
    %66 = arith.addf %59, %65 : vector<16x4xf32>
    %c1_47 = arith.constant 1 : index
    %c2_48 = arith.constant 2 : index
    %c0_49 = arith.constant 0 : index
    %67 = vector.load %arg12[%c1_47, %c2_48, %c0_49] : memref<6x6x4xf32, #tpu.memory_space<vmem>>, vector<4x4x4xf32>
    %68 = vector.shape_cast %67 : vector<4x4x4xf32> to vector<16x4xf32>
    %69 = arith.truncf %68 : vector<16x4xf32> to vector<16x4xbf16>
    %70 = vector.extract_strided_slice %30 {offsets = [5, 0, 0], sizes = [1, 4, 4], strides = [1, 1, 1]} : vector<9x4x4xbf16> to vector<1x4x4xbf16>
    %71 = vector.shape_cast %70 : vector<1x4x4xbf16> to vector<4x4xbf16>
    %cst_50 = arith.constant dense<0.000000e+00> : vector<16x4xf32>
    %72 = tpu.matmul %69, %71, %cst_50 {dimension_numbers = #tpu.dot_dimension_numbers<[1], [0], [0], [1], [0, 0, 1, 1], [], []>} : vector<16x4xbf16>, vector<4x4xbf16>, vector<16x4xf32> -> vector<16x4xf32>
    %73 = arith.addf %66, %72 : vector<16x4xf32>
    %c2_51 = arith.constant 2 : index
    %c0_52 = arith.constant 0 : index
    %c0_53 = arith.constant 0 : index
    %74 = vector.load %arg12[%c2_51, %c0_52, %c0_53] : memref<6x6x4xf32, #tpu.memory_space<vmem>>, vector<4x4x4xf32>
    %75 = vector.shape_cast %74 : vector<4x4x4xf32> to vector<16x4xf32>
    %76 = arith.truncf %75 : vector<16x4xf32> to vector<16x4xbf16>
    %77 = vector.extract_strided_slice %30 {offsets = [6, 0, 0], sizes = [1, 4, 4], strides = [1, 1, 1]} : vector<9x4x4xbf16> to vector<1x4x4xbf16>
    %78 = vector.shape_cast %77 : vector<1x4x4xbf16> to vector<4x4xbf16>
    %cst_54 = arith.constant dense<0.000000e+00> : vector<16x4xf32>
    %79 = tpu.matmul %76, %78, %cst_54 {dimension_numbers = #tpu.dot_dimension_numbers<[1], [0], [0], [1], [0, 0, 1, 1], [], []>} : vector<16x4xbf16>, vector<4x4xbf16>, vector<16x4xf32> -> vector<16x4xf32>
    %80 = arith.addf %73, %79 : vector<16x4xf32>
    %c2_55 = arith.constant 2 : index
    %c1_56 = arith.constant 1 : index
    %c0_57 = arith.constant 0 : index
    %81 = vector.load %arg12[%c2_55, %c1_56, %c0_57] : memref<6x6x4xf32, #tpu.memory_space<vmem>>, vector<4x4x4xf32>
    %82 = vector.shape_cast %81 : vector<4x4x4xf32> to vector<16x4xf32>
    %83 = arith.truncf %82 : vector<16x4xf32> to vector<16x4xbf16>
    %84 = vector.extract_strided_slice %30 {offsets = [7, 0, 0], sizes = [1, 4, 4], strides = [1, 1, 1]} : vector<9x4x4xbf16> to vector<1x4x4xbf16>
    %85 = vector.shape_cast %84 : vector<1x4x4xbf16> to vector<4x4xbf16>
    %cst_58 = arith.constant dense<0.000000e+00> : vector<16x4xf32>
    %86 = tpu.matmul %83, %85, %cst_58 {dimension_numbers = #tpu.dot_dimension_numbers<[1], [0], [0], [1], [0, 0, 1, 1], [], []>} : vector<16x4xbf16>, vector<4x4xbf16>, vector<16x4xf32> -> vector<16x4xf32>
    %87 = arith.addf %80, %86 : vector<16x4xf32>
    %c2_59 = arith.constant 2 : index
    %c2_60 = arith.constant 2 : index
    %c0_61 = arith.constant 0 : index
    %88 = vector.load %arg12[%c2_59, %c2_60, %c0_61] : memref<6x6x4xf32, #tpu.memory_space<vmem>>, vector<4x4x4xf32>
    %89 = vector.shape_cast %88 : vector<4x4x4xf32> to vector<16x4xf32>
    %90 = arith.truncf %89 : vector<16x4xf32> to vector<16x4xbf16>
    %91 = vector.extract_strided_slice %30 {offsets = [8, 0, 0], sizes = [1, 4, 4], strides = [1, 1, 1]} : vector<9x4x4xbf16> to vector<1x4x4xbf16>
    %92 = vector.shape_cast %91 : vector<1x4x4xbf16> to vector<4x4xbf16>
    %cst_62 = arith.constant dense<0.000000e+00> : vector<16x4xf32>
    %93 = tpu.matmul %90, %92, %cst_62 {dimension_numbers = #tpu.dot_dimension_numbers<[1], [0], [0], [1], [0, 0, 1, 1], [], []>} : vector<16x4xbf16>, vector<4x4xbf16>, vector<16x4xf32> -> vector<16x4xf32>
    %94 = arith.addf %87, %93 : vector<16x4xf32>
    %c0_63 = arith.constant 0 : index
    %c0_64 = arith.constant 0 : index
    %c0_65 = arith.constant 0 : index
    %95 = vector.load %arg8[%c0_63, %c0_64, %c0_65] : memref<1x1x4xf32, #tpu.memory_space<vmem>>, vector<1x1x4xf32>
    %96 = vector.shape_cast %95 : vector<1x1x4xf32> to vector<1x4xf32>
    %97 = vector.broadcast %96 : vector<1x4xf32> to vector<16x4xf32>
    %98 = arith.addf %94, %97 : vector<16x4xf32>
    %cst_66 = arith.constant 0.000000e+00 : f32
    %99 = vector.broadcast %cst_66 : f32 to vector<16x4xf32>
    %100 = arith.maximumf %98, %99 : vector<16x4xf32>
    %101 = arith.truncf %100 : vector<16x4xf32> to vector<16x4xbf16>
    %c0_67 = arith.constant 0 : index
    %c0_68 = arith.constant 0 : index
    %c0_69 = arith.constant 0 : index
    %102 = vector.load %arg9[%c0_67, %c0_68, %c0_69] : memref<1x4x8xbf16, #tpu.memory_space<vmem>>, vector<1x4x8xbf16>
    %103 = vector.shape_cast %102 : vector<1x4x8xbf16> to vector<4x8xbf16>
    %cst_70 = arith.constant dense<0.000000e+00> : vector<16x8xf32>
    %104 = tpu.matmul %101, %103, %cst_70 {dimension_numbers = #tpu.dot_dimension_numbers<[1], [0], [0], [1], [0, 0, 1, 1], [], []>} : vector<16x4xbf16>, vector<4x8xbf16>, vector<16x8xf32> -> vector<16x8xf32>
    %105 = arith.addf %4, %104 : vector<16x8xf32>
    %c0_71 = arith.constant 0 : index
    %c0_72 = arith.constant 0 : index
    %c0_73 = arith.constant 0 : index
    %106 = vector.load %arg10[%c0_71, %c0_72, %c0_73] : memref<1x1x8xf32, #tpu.memory_space<vmem>>, vector<1x1x8xf32>
    %107 = vector.shape_cast %106 : vector<1x1x8xf32> to vector<1x8xf32>
    %108 = vector.broadcast %107 : vector<1x8xf32> to vector<16x8xf32>
    %109 = arith.addf %105, %108 : vector<16x8xf32>
    %c0_74 = arith.constant 0 : index
    %c0_75 = arith.constant 0 : index
    %c0_76 = arith.constant 0 : index
    %110 = vector.load %arg11[%c0_74, %c0_75, %c0_76] : memref<1x16x8xf32, #tpu.memory_space<vmem>>, vector<1x16x8xf32>
    %111 = vector.shape_cast %110 : vector<1x16x8xf32> to vector<16x8xf32>
    %112 = vector.shape_cast %109 : vector<16x8xf32> to vector<1x16x8xf32>
    tpu.vector_store %arg11[%c0_74, %c0_75, %c0_76], %112 {strides = array<i32>} : memref<1x16x8xf32, #tpu.memory_space<vmem>>, vector<1x16x8xf32>,
    return
  }
  func.func @transform_0(%arg0: i32, %arg1: i32) -> (i32, i32, i32) {
    %c0_i32 = arith.constant 0 : i32
    %c0_i32_0 = arith.constant 0 : i32
    %c0_i32_1 = arith.constant 0 : i32
    return %arg0, %c0_i32, %c0_i32_0 : i32, i32, i32
  }
  func.func @transform_1(%arg0: i32, %arg1: i32) -> (i32, i32, i32) {
    %c0_i32 = arith.constant 0 : i32
    %c0_i32_0 = arith.constant 0 : i32
    %c0_i32_1 = arith.constant 0 : i32
    return %arg1, %c0_i32, %c0_i32_0 : i32, i32, i32
  }
  func.func @transform_2(%arg0: i32, %arg1: i32) -> (i32, i32, i32) {
    %c0_i32 = arith.constant 0 : i32
    %c0_i32_0 = arith.constant 0 : i32
    %c0_i32_1 = arith.constant 0 : i32
    return %arg1, %c0_i32, %c0_i32_0 : i32, i32, i32
  }
  func.func @transform_3(%arg0: i32, %arg1: i32) -> (i32, i32, i32) {
    %c0_i32 = arith.constant 0 : i32
    %c0_i32_0 = arith.constant 0 : i32
    %c0_i32_1 = arith.constant 0 : i32
    return %arg1, %c0_i32, %c0_i32_0 : i32, i32, i32
  }
  func.func @transform_4(%arg0: i32, %arg1: i32) -> (i32, i32, i32) {
    %c0_i32 = arith.constant 0 : i32
    %c0_i32_0 = arith.constant 0 : i32
    %c0_i32_1 = arith.constant 0 : i32
    return %arg1, %c0_i32, %c0_i32_0 : i32, i32, i32
  }
  func.func @transform_5(%arg0: i32, %arg1: i32) -> (i32, i32, i32, i32) {
    %c0_i32 = arith.constant 0 : i32
    %c0_i32_0 = arith.constant 0 : i32
    %c0_i32_1 = arith.constant 0 : i32
    %c0_i32_2 = arith.constant 0 : i32
    return %arg1, %c0_i32, %c0_i32_0, %c0_i32_1 : i32, i32, i32, i32
  }
  func.func @transform_6(%arg0: i32, %arg1: i32) -> (i32, i32, i32) {
    %c0_i32 = arith.constant 0 : i32
    %c0_i32_0 = arith.constant 0 : i32
    %c0_i32_1 = arith.constant 0 : i32
    return %arg1, %c0_i32, %c0_i32_0 : i32, i32, i32
  }
  func.func @transform_7(%arg0: i32, %arg1: i32) -> (i32, i32, i32) {
    %c0_i32 = arith.constant 0 : i32
    %c0_i32_0 = arith.constant 0 : i32
    %c0_i32_1 = arith.constant 0 : i32
    return %arg1, %c0_i32, %c0_i32_0 : i32, i32, i32
  }
  func.func @transform_8(%arg0: i32, %arg1: i32) -> (i32, i32, i32) {
    %c0_i32 = arith.constant 0 : i32
    %c0_i32_0 = arith.constant 0 : i32
    %c0_i32_1 = arith.constant 0 : i32
    return %arg1, %c0_i32, %c0_i32_0 : i32, i32, i32
  }
  func.func @transform_9(%arg0: i32, %arg1: i32) -> (i32, i32, i32) {
    %c0_i32 = arith.constant 0 : i32
    %c0_i32_0 = arith.constant 0 : i32
    %c0_i32_1 = arith.constant 0 : i32
    return %arg0, %c0_i32, %c0_i32_0 : i32, i32, i32
  }
}

</mosaic_0001>

<llo_original>
// kernel: hourglass_apply.8
$region0: #{hourglass_apply.8}
  #allocation0 [shape = 'u32[]', space=smem, size = 0x4, offset = 0x4, fixed_abs, tag = 'smem constant byte address 0x4 - core index']
  #allocation1 [shape = 'u32[72,128]{1,0:T(1,128)}', space=vmem, size = 0x9000, scoped, tag = 'internal scratch']
  #allocation2 [shape = 'f32[10,10,4]{2,1,0:T(8,128)}', space=vmem, size = 0x14000, scoped, tag = 'scratch operand']
  %s0 = inlined_call_operand.vmem [shape: f32[2,64,8], index: 0, kind: input, shape index: {}]
  %s1 = inlined_call_operand.vmem [shape: f32[1,1,8], index: 1, kind: input, shape index: {}]
  %s2 = inlined_call_operand.vmem [shape: f32[1,1,8], index: 2, kind: input, shape index: {}]
  %s3 = inlined_call_operand.vmem [shape: bf16[1,8,4], index: 3, kind: input, shape index: {}]
  %s4 = inlined_call_operand.vmem [shape: f32[1,1,4], index: 4, kind: input, shape index: {}]
  %s5 = inlined_call_operand.vmem [shape: bf16[1,9,4,4], index: 5, kind: input, shape index: {}]
  %s6 = inlined_call_operand.vmem [shape: f32[1,1,4], index: 6, kind: input, shape index: {}]
  %s7 = inlined_call_operand.vmem [shape: bf16[1,4,8], index: 7, kind: input, shape index: {}]
  %s8 = inlined_call_operand.vmem [shape: f32[1,1,8], index: 8, kind: input, shape index: {}]
  %s9 = inlined_call_operand.vmem [shape: f32[2,64,8], index: 9, kind: output, shape index: {}]
  %s10 = sld [smem:[#allocation0]]
  $region73: #{hourglass_apply.8} parent=0
    _
  %s12 = ssub.s32 1, %s10
  %s13 = scalar_select 0, %s12, %s10
  loop: start=0, step=1, limit=4
  $region2: #{hourglass_apply.8} parent=0 // loop_pre_header
    _
  $region3: #{hourglass_apply.8} parent=0 // loop_header
    %s15 = sphi 0, %s19
    %p16 = scmp.ge.s32.totalorder %s15, 4
    %s22 = sphi 0, %s34
    %s23 = sphi 0, %s30
    %s24 = sphi 0, %s22
    %s25 = sphi 0, %s23
    %s26 = sphi 0, %s24
    %s27 = sphi 0, %s25
    %s37 = sphi 0, %s39
    %s40 = sphi 0, %s37
    %s41 = sphi 0, %s40
    %s57 = sphi 0, %s41
    %s63 = sphi 0, %s65
    %s66 = sphi 0, %s63
    %s67 = sphi 0, %s66
    %s83 = sphi 0, %s67
    %s89 = sphi 0, %s91
    %s92 = sphi 0, %s89
    %s93 = sphi 0, %s92
    %s109 = sphi 0, %s93
    %s115 = sphi 0, %s117
    %s118 = sphi 0, %s115
    %s119 = sphi 0, %s118
    %s135 = sphi 0, %s119
    %s141 = sphi 0, %s143
    %s144 = sphi 0, %s141
    %s145 = sphi 0, %s144
    %s161 = sphi 0, %s145
    %s167 = sphi 0, %s169
    %s170 = sphi 0, %s167
    %s171 = sphi 0, %s170
    %s187 = sphi 0, %s171
    %s193 = sphi 0, %s195
    %s196 = sphi 0, %s193
    %s197 = sphi 0, %s196
    %s213 = sphi 0, %s197
    %s219 = sphi 0, %s221
    %s222 = sphi 0, %s219
    %s223 = sphi 0, %s222
    %s239 = sphi 0, %s223
    %s245 = sphi 0, %s247
    %s248 = sphi 0, %s245
    %s249 = sphi 0, %s248
    %s265 = sphi 0, %s249
    %s271 = sphi 0, %s273
    %s274 = sphi 0, %s271
    %s275 = sphi 0, %s274
    %s291 = sphi 0, %s275
  $region4: #{hourglass_apply.8} parent=0 // loop_header_branch
    %18 = sbr.rel (%p16) target = $region8
  $region5: #{hourglass_apply.8} parent=0 // loop_body
    %s20 = ssub.s32 %s15, 1
    %s21 = ssub.s32 %s15, 2
    %s28 = sadd.s32 1, %s23
    %p29 = scmp.ge.s32.totalorder %s28, 1
    %s30 = scalar_select %p29, 0, %s28
    %s31 = sadd.s32 1, %s22
    %s32 = scalar_select %p29, %s31, %s22
    %p33 = scmp.ge.s32.totalorder %s32, 2
    %s34 = scalar_select %p33, 0, %s32
    %s35 = ssub.s32 %s22, %s34
    %p36 = scmp.eq.s32.totalorder %s35, 0
    %s38 = sadd.s32 %s37, 1
    %s39 = scalar_select %p36, %s37, %s38
    %p42 = pneg %p36
    %p43 = scmp.eq.s32.totalorder %s15, 1
    %p44 = por %p42, %p43
    %p45 = scmp.ne.s32.totalorder %s37, %s40
    %p46 = scmp.eq.s32.totalorder %s15, 0
    %p47 = por %p45, %p46
    %p48 = scmp.ne.s32.totalorder %s37, %s40
    %p49 = scmp.eq.s32.totalorder %s20, 1
    %p50 = por %p48, %p49
    %p51 = scmp.ne.s32.totalorder %s40, %s41
    %p52 = scmp.eq.s32.totalorder %s20, 0
    %p53 = por %p51, %p52
    %p54 = scmp.ne.s32.totalorder %s40, %s41
    %p55 = scmp.eq.s32.totalorder %s21, 1
    %p56 = por %p54, %p55
    %p58 = scmp.ne.s32.totalorder %s41, %s57
    %p59 = scmp.eq.s32.totalorder %s21, 0
    %p60 = por %p58, %p59
    %s61 = ssub.s32 %s23, %s30
    %p62 = scmp.eq.s32.totalorder %s61, 0
    %s64 = sadd.s32 %s63, 1
    %s65 = scalar_select %p62, %s63, %s64
    %p68 = pneg %p62
    %p69 = scmp.eq.s32.totalorder %s15, 1
    %p70 = por %p68, %p69
    %p71 = scmp.ne.s32.totalorder %s63, %s66
    %p72 = scmp.eq.s32.totalorder %s15, 0
    %p73 = por %p71, %p72
    %p74 = scmp.ne.s32.totalorder %s63, %s66
    %p75 = scmp.eq.s32.totalorder %s20, 1
    %p76 = por %p74, %p75
    %p77 = scmp.ne.s32.totalorder %s66, %s67
    %p78 = scmp.eq.s32.totalorder %s20, 0
    %p79 = por %p77, %p78
    %p80 = scmp.ne.s32.totalorder %s66, %s67
    %p81 = scmp.eq.s32.totalorder %s21, 1
    %p82 = por %p80, %p81
    %p84 = scmp.ne.s32.totalorder %s67, %s83
    %p85 = scmp.eq.s32.totalorder %s21, 0
    %p86 = por %p84, %p85
    %s87 = ssub.s32 %s23, %s30
    %p88 = scmp.eq.s32.totalorder %s87, 0
    %s90 = sadd.s32 %s89, 1
    %s91 = scalar_select %p88, %s89, %s90
    %p94 = pneg %p88
    %p95 = scmp.eq.s32.totalorder %s15, 1
    %p96 = por %p94, %p95
    %p97 = scmp.ne.s32.totalorder %s89, %s92
    %p98 = scmp.eq.s32.totalorder %s15, 0
    %p99 = por %p97, %p98
    %p100 = scmp.ne.s32.totalorder %s89, %s92
    %p101 = scmp.eq.s32.totalorder %s20, 1
    %p102 = por %p100, %p101
    %p103 = scmp.ne.s32.totalorder %s92, %s93
    %p104 = scmp.eq.s32.totalorder %s20, 0
    %p105 = por %p103, %p104
    %p106 = scmp.ne.s32.totalorder %s92, %s93
    %p107 = scmp.eq.s32.totalorder %s21, 1
    %p108 = por %p106, %p107
    %p110 = scmp.ne.s32.totalorder %s93, %s109
    %p111 = scmp.eq.s32.totalorder %s21, 0
    %p112 = por %p110, %p111
    %s113 = ssub.s32 %s23, %s30
    %p114 = scmp.eq.s32.totalorder %s113, 0
    %s116 = sadd.s32 %s115, 1
    %s117 = scalar_select %p114, %s115, %s116
    %p120 = pneg %p114
    %p121 = scmp.eq.s32.totalorder %s15, 1
    %p122 = por %p120, %p121
    %p123 = scmp.ne.s32.totalorder %s115, %s118
    %p124 = scmp.eq.s32.totalorder %s15, 0
    %p125 = por %p123, %p124
    %p126 = scmp.ne.s32.totalorder %s115, %s118
    %p127 = scmp.eq.s32.totalorder %s20, 1
    %p128 = por %p126, %p127
    %p129 = scmp.ne.s32.totalorder %s118, %s119
    %p130 = scmp.eq.s32.totalorder %s20, 0
    %p131 = por %p129, %p130
    %p132 = scmp.ne.s32.totalorder %s118, %s119
    %p133 = scmp.eq.s32.totalorder %s21, 1
    %p134 = por %p132, %p133
    %p136 = scmp.ne.s32.totalorder %s119, %s135
    %p137 = scmp.eq.s32.totalorder %s21, 0
    %p138 = por %p136, %p137
    %s139 = ssub.s32 %s23, %s30
    %p140 = scmp.eq.s32.totalorder %s139, 0
    %s142 = sadd.s32 %s141, 1
    %s143 = scalar_select %p140, %s141, %s142
    %p146 = pneg %p140
    %p147 = scmp.eq.s32.totalorder %s15, 1
    %p148 = por %p146, %p147
    %p149 = scmp.ne.s32.totalorder %s141, %s144
    %p150 = scmp.eq.s32.totalorder %s15, 0
    %p151 = por %p149, %p150
    %p152 = scmp.ne.s32.totalorder %s141, %s144
    %p153 = scmp.eq.s32.totalorder %s20, 1
    %p154 = por %p152, %p153
    %p155 = scmp.ne.s32.totalorder %s144, %s145
    %p156 = scmp.eq.s32.totalorder %s20, 0
    %p157 = por %p155, %p156
    %p158 = scmp.ne.s32.totalorder %s144, %s145
    %p159 = scmp.eq.s32.totalorder %s21, 1
    %p160 = por %p158, %p159
    %p162 = scmp.ne.s32.totalorder %s145, %s161
    %p163 = scmp.eq.s32.totalorder %s21, 0
    %p164 = por %p162, %p163
    %s165 = ssub.s32 %s23, %s30
    %p166 = scmp.eq.s32.totalorder %s165, 0
    %s168 = sadd.s32 %s167, 1
    %s169 = scalar_select %p166, %s167, %s168
    %p172 = pneg %p166
    %p173 = scmp.eq.s32.totalorder %s15, 1
    %p174 = por %p172, %p173
    %p175 = scmp.ne.s32.totalorder %s167, %s170
    %p176 = scmp.eq.s32.totalorder %s15, 0
    %p177 = por %p175, %p176
    %p178 = scmp.ne.s32.totalorder %s167, %s170
    %p179 = scmp.eq.s32.totalorder %s20, 1
    %p180 = por %p178, %p179
    %p181 = scmp.ne.s32.totalorder %s170, %s171
    %p182 = scmp.eq.s32.totalorder %s20, 0
    %p183 = por %p181, %p182
    %p184 = scmp.ne.s32.totalorder %s170, %s171
    %p185 = scmp.eq.s32.totalorder %s21, 1
    %p186 = por %p184, %p185
    %p188 = scmp.ne.s32.totalorder %s171, %s187
    %p189 = scmp.eq.s32.totalorder %s21, 0
    %p190 = por %p188, %p189
    %s191 = ssub.s32 %s23, %s30
    %p192 = scmp.eq.s32.totalorder %s191, 0
    %s194 = sadd.s32 %s193, 1
    %s195 = scalar_select %p192, %s193, %s194
    %p198 = pneg %p192
    %p199 = scmp.eq.s32.totalorder %s15, 1
    %p200 = por %p198, %p199
    %p201 = scmp.ne.s32.totalorder %s193, %s196
    %p202 = scmp.eq.s32.totalorder %s15, 0
    %p203 = por %p201, %p202
    %p204 = scmp.ne.s32.totalorder %s193, %s196
    %p205 = scmp.eq.s32.totalorder %s20, 1
    %p206 = por %p204, %p205
    %p207 = scmp.ne.s32.totalorder %s196, %s197
    %p208 = scmp.eq.s32.totalorder %s20, 0
    %p209 = por %p207, %p208
    %p210 = scmp.ne.s32.totalorder %s196, %s197
    %p211 = scmp.eq.s32.totalorder %s21, 1
    %p212 = por %p210, %p211
    %p214 = scmp.ne.s32.totalorder %s197, %s213
    %p215 = scmp.eq.s32.totalorder %s21, 0
    %p216 = por %p214, %p215
    %s217 = ssub.s32 %s23, %s30
    %p218 = scmp.eq.s32.totalorder %s217, 0
    %s220 = sadd.s32 %s219, 1
    %s221 = scalar_select %p218, %s219, %s220
    %p224 = pneg %p218
    %p225 = scmp.eq.s32.totalorder %s15, 1
    %p226 = por %p224, %p225
    %p227 = scmp.ne.s32.totalorder %s219, %s222
    %p228 = scmp.eq.s32.totalorder %s15, 0
    %p229 = por %p227, %p228
    %p230 = scmp.ne.s32.totalorder %s219, %s222
    %p231 = scmp.eq.s32.totalorder %s20, 1
    %p232 = por %p230, %p231
    %p233 = scmp.ne.s32.totalorder %s222, %s223
    %p234 = scmp.eq.s32.totalorder %s20, 0
    %p235 = por %p233, %p234
    %p236 = scmp.ne.s32.totalorder %s222, %s223
    %p237 = scmp.eq.s32.totalorder %s21, 1
    %p238 = por %p236, %p237
    %p240 = scmp.ne.s32.totalorder %s223, %s239
    %p241 = scmp.eq.s32.totalorder %s21, 0
    %p242 = por %p240, %p241
    %s243 = ssub.s32 %s23, %s30
    %p244 = scmp.eq.s32.totalorder %s243, 0
    %s246 = sadd.s32 %s245, 1
    %s247 = scalar_select %p244, %s245, %s246
    %p250 = pneg %p244
    %p251 = scmp.eq.s32.totalorder %s15, 1
    %p252 = por %p250, %p251
    %p253 = scmp.ne.s32.totalorder %s245, %s248
    %p254 = scmp.eq.s32.totalorder %s15, 0
    %p255 = por %p253, %p254
    %p256 = scmp.ne.s32.totalorder %s245, %s248
    %p257 = scmp.eq.s32.totalorder %s20, 1
    %p258 = por %p256, %p257
    %p259 = scmp.ne.s32.totalorder %s248, %s249
    %p260 = scmp.eq.s32.totalorder %s20, 0
    %p261 = por %p259, %p260
    %p262 = scmp.ne.s32.totalorder %s248, %s249
    %p263 = scmp.eq.s32.totalorder %s21, 1
    %p264 = por %p262, %p263
    %p266 = scmp.ne.s32.totalorder %s249, %s265
    %p267 = scmp.eq.s32.totalorder %s21, 0
    %p268 = por %p266, %p267
    %s269 = ssub.s32 %s22, %s34
    %p270 = scmp.eq.s32.totalorder %s269, 0
    %s272 = sadd.s32 %s271, 1
    %s273 = scalar_select %p270, %s271, %s272
    %p276 = pneg %p270
    %p277 = scmp.eq.s32.totalorder %s15, 1
    %p278 = por %p276, %p277
    %p279 = scmp.ne.s32.totalorder %s271, %s274
    %p280 = scmp.eq.s32.totalorder %s15, 0
    %p281 = por %p279, %p280
    %p282 = scmp.ne.s32.totalorder %s271, %s274
    %p283 = scmp.eq.s32.totalorder %s20, 1
    %p284 = por %p282, %p283
    %p285 = scmp.ne.s32.totalorder %s274, %s275
    %p286 = scmp.eq.s32.totalorder %s20, 0
    %p287 = por %p285, %p286
    %p288 = scmp.ne.s32.totalorder %s274, %s275
    %p289 = scmp.eq.s32.totalorder %s21, 1
    %p290 = por %p288, %p289
    %p292 = scmp.ne.s32.totalorder %s275, %s291
    %p293 = scmp.eq.s32.totalorder %s21, 0
    %p294 = por %p292, %p293
    %p295 = scmp.le.s32.totalorder 1, %s15
    %p296 = scmp.lt.s32.totalorder %s15, 3
    %p297 = pnand %p295, %p296
    %p298 = pneg %p297
    // Predicated region
    $region9: #{hourglass_apply.8} parent=5 // pred_check
      _
    $region10: #{hourglass_apply.8} parent=5 // pred_check_branch
      %300 = sbr.rel (%p297) target = $region12
    $region11: #{hourglass_apply.8} parent=5 // pred_region
      %s301 = ssub.s32 %s15, 1
      // Predicated region
      $region13: #{hourglass_apply.8} parent=11 // pred_check
        %p302 = pneg %p79
      $region14: #{hourglass_apply.8} parent=11 // pred_check_branch
        %304 = sbr.rel (%p302) target = $region16
      $region15: #{hourglass_apply.8} parent=11 // pred_region
        %p305 = scmp.lt.s32.totalorder %s25, 0
        %s306 = scalar_select %p305, %s25, 0
        %s307 = scalar_lea.vmem %s1, %s306
      $region16: #{hourglass_apply.8} parent=11 // pred_fallthru
        _
      // Predicated region
      $region17: #{hourglass_apply.8} parent=11 // pred_check
        %p308 = pneg %p105
      $region18: #{hourglass_apply.8} parent=11 // pred_check_branch
        %310 = sbr.rel (%p308) target = $region20
      $region19: #{hourglass_apply.8} parent=11 // pred_region
        %p311 = scmp.lt.s32.totalorder %s25, 0
        %s312 = scalar_select %p311, %s25, 0
        %s313 = scalar_lea.vmem %s2, %s312
      $region20: #{hourglass_apply.8} parent=11 // pred_fallthru
        _
      // Predicated region
      $region21: #{hourglass_apply.8} parent=11 // pred_check
        %p314 = pneg %p131
      $region22: #{hourglass_apply.8} parent=11 // pred_check_branch
        %316 = sbr.rel (%p314) target = $region24
      $region23: #{hourglass_apply.8} parent=11 // pred_region
        %p317 = scmp.lt.s32.totalorder %s25, 0
        %s318 = scalar_select %p317, %s25, 0
        %s319 = smul.addr %s318, 4
        %s320 = scalar_lea.vmem %s3, %s319
      $region24: #{hourglass_apply.8} parent=11 // pred_fallthru
        _
      // Predicated region
      $region25: #{hourglass_apply.8} parent=11 // pred_check
        %p321 = pneg %p157
      $region26: #{hourglass_apply.8} parent=11 // pred_check_branch
        %323 = sbr.rel (%p321) target = $region28
      $region27: #{hourglass_apply.8} parent=11 // pred_region
        %p324 = scmp.lt.s32.totalorder %s25, 0
        %s325 = scalar_select %p324, %s25, 0
        %s326 = scalar_lea.vmem %s4, %s325
      $region28: #{hourglass_apply.8} parent=11 // pred_fallthru
        _
      // Predicated region
      $region29: #{hourglass_apply.8} parent=11 // pred_check
        %p327 = pneg %p183
      $region30: #{hourglass_apply.8} parent=11 // pred_check_branch
        %329 = sbr.rel (%p327) target = $region32
      $region31: #{hourglass_apply.8} parent=11 // pred_region
        %p330 = scmp.lt.s32.totalorder %s25, 0
        %s331 = scalar_select %p330, %s25, 0
        %s332 = smul.addr %s331, 9
        %s333 = smul.addr %s332, 2
        %s334 = scalar_lea.vmem %s5, %s333
      $region32: #{hourglass_apply.8} parent=11 // pred_fallthru
        _
      // Predicated region
      $region33: #{hourglass_apply.8} parent=11 // pred_check
        %p335 = pneg %p209
      $region34: #{hourglass_apply.8} parent=11 // pred_check_branch
        %337 = sbr.rel (%p335) target = $region36
      $region35: #{hourglass_apply.8} parent=11 // pred_region
        %p338 = scmp.lt.s32.totalorder %s25, 0
        %s339 = scalar_select %p338, %s25, 0
        %s340 = scalar_lea.vmem %s6, %s339
      $region36: #{hourglass_apply.8} parent=11 // pred_fallthru
        _
      // Predicated region
      $region37: #{hourglass_apply.8} parent=11 // pred_check
        %p341 = pneg %p235
      $region38: #{hourglass_apply.8} parent=11 // pred_check_branch
        %343 = sbr.rel (%p341) target = $region40
      $region39: #{hourglass_apply.8} parent=11 // pred_region
        %p344 = scmp.lt.s32.totalorder %s25, 0
        %s345 = scalar_select %p344, %s25, 0
        %s346 = smul.addr %s345, 2
        %s347 = scalar_lea.vmem %s7, %s346
      $region40: #{hourglass_apply.8} parent=11 // pred_fallthru
        _
      // Predicated region
      $region41: #{hourglass_apply.8} parent=11 // pred_check
        %p348 = pneg %p261
      $region42: #{hourglass_apply.8} parent=11 // pred_check_branch
        %350 = sbr.rel (%p348) target = $region44
      $region43: #{hourglass_apply.8} parent=11 // pred_region
        %p351 = scmp.lt.s32.totalorder %s25, 0
        %s352 = scalar_select %p351, %s25, 0
        %s353 = scalar_lea.vmem %s8, %s352
      $region44: #{hourglass_apply.8} parent=11 // pred_fallthru
        _
    $region12: #{hourglass_apply.8} parent=5 // pred_fallthru
      _
    %p354 = scmp.lt.s32.totalorder %s15, 2
    // Predicated region
    $region45: #{hourglass_apply.8} parent=5 // pred_check
      %p355 = pneg %p354
    $region46: #{hourglass_apply.8} parent=5 // pred_check_branch
      %357 = sbr.rel (%p355) target = $region48
    $region47: #{hourglass_apply.8} parent=5 // pred_region
      // Predicated region
      $region49: #{hourglass_apply.8} parent=47 // pred_check
        %p358 = pneg %p47
      $region50: #{hourglass_apply.8} parent=47 // pred_check_branch
        %360 = sbr.rel (%p358) target = $region52
      $region51: #{hourglass_apply.8} parent=47 // pred_region
        %p361 = scmp.lt.s32.totalorder %s22, 1
        %s362 = scalar_select %p361, %s22, 1
        %s363 = smul.addr %s362, 8
        %s364 = smul.addr %s363, 8
        %s365 = scalar_lea.vmem %s0, %s364
      $region52: #{hourglass_apply.8} parent=47 // pred_fallthru
        _
    $region48: #{hourglass_apply.8} parent=5 // pred_fallthru
      _
    %p366 = scmp.le.s32.totalorder 1, %s15
    %p367 = scmp.lt.s32.totalorder %s15, 3
    %p368 = pnand %p366, %p367
    %p369 = pneg %p368
    // Predicated region
    $region53: #{hourglass_apply.8} parent=5 // pred_check
      _
    $region54: #{hourglass_apply.8} parent=5 // pred_check_branch
      %371 = sbr.rel (%p368) target = $region56
    $region55: #{hourglass_apply.8} parent=5 // pred_region
      %s372 = ssub.s32 %s15, 1
      %p373 = scmp.lt.s32.totalorder %s24, 1
      %s374 = scalar_select %p373, %s24, 1
      %s375 = smul.addr %s374, 8
      %s376 = smul.addr %s375, 8
      %s377 = scalar_lea.vmem %s0, %s376
      %p378 = pneg %p53
      %p379 = pneg %p50
      %p380 = scmp.lt.s32.totalorder %s25, 0
      %s381 = scalar_select %p380, %s25, 0
      %s382 = scalar_lea.vmem %s1, %s381
      %p383 = pneg %p79
      %p384 = pneg %p76
      %p385 = scmp.lt.s32.totalorder %s25, 0
      %s386 = scalar_select %p385, %s25, 0
      %s387 = scalar_lea.vmem %s2, %s386
      %p388 = pneg %p105
      %p389 = pneg %p102
      %p390 = scmp.lt.s32.totalorder %s25, 0
      %s391 = scalar_select %p390, %s25, 0
      %s392 = smul.addr %s391, 4
      %s393 = scalar_lea.vmem %s3, %s392
      %p394 = pneg %p131
      %p395 = pneg %p128
      %p396 = scmp.lt.s32.totalorder %s25, 0
      %s397 = scalar_select %p396, %s25, 0
      %s398 = scalar_lea.vmem %s4, %s397
      %p399 = pneg %p157
      %p400 = pneg %p154
      %p401 = scmp.lt.s32.totalorder %s25, 0
      %s402 = scalar_select %p401, %s25, 0
      %s403 = smul.addr %s402, 9
      %s404 = smul.addr %s403, 2
      %s405 = scalar_lea.vmem %s5, %s404
      %p406 = pneg %p183
      %p407 = pneg %p180
      %p408 = scmp.lt.s32.totalorder %s25, 0
      %s409 = scalar_select %p408, %s25, 0
      %s410 = scalar_lea.vmem %s6, %s409
      %p411 = pneg %p209
      %p412 = pneg %p206
      %p413 = scmp.lt.s32.totalorder %s25, 0
      %s414 = scalar_select %p413, %s25, 0
      %s415 = smul.addr %s414, 2
      %s416 = scalar_lea.vmem %s7, %s415
      %p417 = pneg %p235
      %p418 = pneg %p232
      %p419 = scmp.lt.s32.totalorder %s25, 0
      %s420 = scalar_select %p419, %s25, 0
      %s421 = scalar_lea.vmem %s8, %s420
      %p422 = pneg %p261
      %p423 = pneg %p258
      %p424 = pneg %p287
      %p425 = pneg %p284
      %p426 = scmp.lt.s32.totalorder %s24, 1
      %s427 = scalar_select %p426, %s24, 1
      %s428 = smul.addr %s427, 8
      %s429 = smul.addr %s428, 8
      %s430 = scalar_lea.vmem %s9, %s429
      %p431 = scmp.lt.s32.totalorder %s24, 1
      %s432 = scalar_select %p431, %s24, 1
      %s433 = smul.addr %s432, 8
      %s434 = smul.addr %s433, 8
      %s435 = scalar_lea.vmem %s0, %s434
      %p436 = scmp.lt.s32.totalorder %s25, 0
      %s437 = scalar_select %p436, %s25, 0
      %s438 = scalar_lea.vmem %s1, %s437
      %p439 = scmp.lt.s32.totalorder %s25, 0
      %s440 = scalar_select %p439, %s25, 0
      %s441 = scalar_lea.vmem %s2, %s440
      %p442 = scmp.lt.s32.totalorder %s25, 0
      %s443 = scalar_select %p442, %s25, 0
      %s444 = smul.addr %s443, 4
      %s445 = scalar_lea.vmem %s3, %s444
      %p446 = scmp.lt.s32.totalorder %s25, 0
      %s447 = scalar_select %p446, %s25, 0
      %s448 = scalar_lea.vmem %s4, %s447
      %p449 = scmp.lt.s32.totalorder %s25, 0
      %s450 = scalar_select %p449, %s25, 0
      %s451 = smul.addr %s450, 9
      %s452 = smul.addr %s451, 2
      %s453 = scalar_lea.vmem %s5, %s452
      %p454 = scmp.lt.s32.totalorder %s25, 0
      %s455 = scalar_select %p454, %s25, 0
      %s456 = scalar_lea.vmem %s6, %s455
      %p457 = scmp.lt.s32.totalorder %s25, 0
      %s458 = scalar_select %p457, %s25, 0
      %s459 = smul.addr %s458, 2
      %s460 = scalar_lea.vmem %s7, %s459
      %p461 = scmp.lt.s32.totalorder %s25, 0
      %s462 = scalar_select %p461, %s25, 0
      %s463 = scalar_lea.vmem %s8, %s462
      %p464 = scmp.lt.s32.totalorder %s24, 1
      %s465 = scalar_select %p464, %s24, 1
      %s466 = smul.addr %s465, 8
      %s467 = smul.addr %s466, 8
      %s468 = scalar_lea.vmem %s9, %s467
      %p470 = scmp.eq.s32.totalorder %s25, 0
      // Predicated region
      $region57: #{hourglass_apply.8} parent=55 // pred_check
        %p471 = pneg %p470
      $region58: #{hourglass_apply.8} parent=55 // pred_check_branch
        %473 = sbr.rel (%p471) target = $region60
      $region59: #{hourglass_apply.8} parent=55 // pred_region
        %v474 = vld [vmem:[%s435] sm:$0xff]
        %v475 = vld [vmem:[%s435 + $0x8] sm:$0xff]
        %v476 = vld [vmem:[%s435 + $0x10] sm:$0xff]
        %v477 = vld [vmem:[%s435 + $0x18] sm:$0xff]
        %v478 = vld [vmem:[%s435 + $0x20] sm:$0xff]
        %v479 = vld [vmem:[%s435 + $0x28] sm:$0xff]
        %v480 = vld [vmem:[%s435 + $0x30] sm:$0xff]
        %v481 = vld [vmem:[%s435 + $0x38] sm:$0xff]
        %vm482 = vcmask 64512
        %483 = vst.msk [vmem:[%s468] sm:$0xff] %vm482, %v474
        %484 = vst.msk [vmem:[%s468 + $0x8] sm:$0xff] %vm482, %v475
        %485 = vst.msk [vmem:[%s468 + $0x10] sm:$0xff] %vm482, %v476
        %486 = vst.msk [vmem:[%s468 + $0x18] sm:$0xff] %vm482, %v477
        %487 = vst.msk [vmem:[%s468 + $0x20] sm:$0xff] %vm482, %v478
        %488 = vst.msk [vmem:[%s468 + $0x28] sm:$0xff] %vm482, %v479
        %489 = vst.msk [vmem:[%s468 + $0x30] sm:$0xff] %vm482, %v480
        %490 = vst.msk [vmem:[%s468 + $0x38] sm:$0xff] %vm482, %v481
      $region60: #{hourglass_apply.8} parent=55 // pred_fallthru
        _
      %v491 = vld [vmem:[%s468] sm:$0xff]
      %v492 = vld [vmem:[%s468 + $0x8] sm:$0xff]
      %v493 = vld [vmem:[%s468 + $0x10] sm:$0xff]
      %v494 = vld [vmem:[%s468 + $0x18] sm:$0xff]
      %v495 = vld [vmem:[%s468 + $0x20] sm:$0xff]
      %v496 = vld [vmem:[%s468 + $0x28] sm:$0xff]
      %v497 = vld [vmem:[%s468 + $0x30] sm:$0xff]
      %v498 = vld [vmem:[%s468 + $0x38] sm:$0xff]
      %v499 = vld [vmem:[%s438] sm:$0x1]
      %v501 = vperm.slane %v499, 0
      %v503 = vmul.f32 %v491, %v501
      %v504 = vmul.f32 %v492, %v501
      %v505 = vmul.f32 %v493, %v501
      %v506 = vmul.f32 %v494, %v501
      %v507 = vmul.f32 %v495, %v501
      %v508 = vmul.f32 %v496, %v501
      %v509 = vmul.f32 %v497, %v501
      %v510 = vmul.f32 %v498, %v501
      %v511 = vld [vmem:[%s441] sm:$0x1]
      %v513 = vperm.slane %v511, 0
      %v515 = vadd.f32 %v503, %v513
      %v516 = vadd.f32 %v504, %v513
      %v517 = vadd.f32 %v505, %v513
      %v518 = vadd.f32 %v506, %v513
      %v519 = vadd.f32 %v507, %v513
      %v520 = vadd.f32 %v508, %v513
      %v521 = vadd.f32 %v509, %v513
      %v522 = vadd.f32 %v510, %v513
      %v523 = vmax.f32 %v515, 0.0
      %v524 = vmax.f32 %v516, 0.0
      %v525 = vmax.f32 %v517, 0.0
      %v526 = vmax.f32 %v518, 0.0
      %v527 = vmax.f32 %v519, 0.0
      %v528 = vmax.f32 %v520, 0.0
      %v529 = vmax.f32 %v521, 0.0
      %v530 = vmax.f32 %v522, 0.0
      %v531 = vpack.c.bf16 %v524, %v523
      %v532 = vpack.c.bf16 %v526, %v525
      %v533 = vpack.c.bf16 %v528, %v527
      %v534 = vpack.c.bf16 %v530, %v529
      %v535 = vld [vmem:[%s445] sm:$0xf]
      %v536 = vld [vmem:[%s448] sm:$0x1]
      %v538 = vperm.slane %v536, 0
      %vm540 = vcmask 64512
      %v542 = vsel %vm540, %v531, 0
      %v545 = vsel %vm540, %v532, 0
      %v548 = vsel %vm540, %v533, 0
      %v551 = vsel %vm540, %v534, 0
      %vm553 = vcmask 1043456
      %v555 = vsel %vm553, %v535, 0
      %557 = vmatpush.bf16.msra.mxu0 0
      %558 = vmatpush.bf16.msra.mxu0 0
      %559 = vmatpush.bf16.msra.mxu0 0
      %560 = vmatpush.bf16.msra.mxu0 0
      %561 = vmatpush.bf16.msra.mxu0 0
      %562 = vmatpush.bf16.msra.mxu0 0
      %563 = vmatpush.bf16.msra.mxu0 0
      %564 = vmatpush.bf16.msra.mxu0 %v555
      %565 = vmatmul.bf16.gmra.mxu0 %v542
      %v566 = vpop.f32.mrf.mxu0
      %v567 = vadd.f32 %v538, %v566
      %v568 = vpop.f32.mrf.mxu0
      %v569 = vadd.f32 %v538, %v568
      %570 = vmatmul.bf16.gmra.mxu0 %v545
      %v571 = vpop.f32.mrf.mxu0
      %v572 = vadd.f32 %v538, %v571
      %v573 = vpop.f32.mrf.mxu0
      %v574 = vadd.f32 %v538, %v573
      %575 = vmatmul.bf16.gmra.mxu0 %v548
      %v576 = vpop.f32.mrf.mxu0
      %v577 = vadd.f32 %v538, %v576
      %v578 = vpop.f32.mrf.mxu0
      %v579 = vadd.f32 %v538, %v578
      %580 = vmatmul.bf16.gmra.mxu0 %v551
      %v581 = vpop.f32.mrf.mxu0
      %v582 = vadd.f32 %v538, %v581
      %v583 = vpop.f32.mrf.mxu0
      %v584 = vadd.f32 %v538, %v583
      %585 = vdwg.mxu0
      %v586 = vmax.f32 %v567, 0.0
      %v587 = vmax.f32 %v569, 0.0
      %v588 = vmax.f32 %v572, 0.0
      %v589 = vmax.f32 %v574, 0.0
      %v590 = vmax.f32 %v577, 0.0
      %v591 = vmax.f32 %v579, 0.0
      %v592 = vmax.f32 %v582, 0.0
      %v593 = vmax.f32 %v584, 0.0
      %vm594 = vcmask 31744
      %595 = vst.msk [vmem:[#allocation2] sm:$0xff] %vm594, 0.0
      %vm596 = vcmask 25600
      %597 = vst.msk [vmem:[#allocation2 + $0x8] sm:$0x3] %vm596, 0.0
      %598 = vst.msk [vmem:[#allocation2 + $0x10] sm:$0xff] %vm594, 0.0
      %599 = vst.msk [vmem:[#allocation2 + $0x18] sm:$0x3] %vm596, 0.0
      %600 = vst.msk [vmem:[#allocation2 + $0x20] sm:$0xff] %vm594, 0.0
      %601 = vst.msk [vmem:[#allocation2 + $0x28] sm:$0x3] %vm596, 0.0
      %602 = vst.msk [vmem:[#allocation2 + $0x30] sm:$0xff] %vm594, 0.0
      %603 = vst.msk [vmem:[#allocation2 + $0x38] sm:$0x3] %vm596, 0.0
      %604 = vst.msk [vmem:[#allocation2 + $0x40] sm:$0xff] %vm594, 0.0
      %605 = vst.msk [vmem:[#allocation2 + $0x48] sm:$0x3] %vm596, 0.0
      %606 = vst.msk [vmem:[#allocation2 + $0x50] sm:$0xff] %vm594, 0.0
      %607 = vst.msk [vmem:[#allocation2 + $0x58] sm:$0x3] %vm596, 0.0
      %608 = vst.msk [vmem:[#allocation2 + $0x60] sm:$0xff] %vm594, 0.0
      %609 = vst.msk [vmem:[#allocation2 + $0x68] sm:$0x3] %vm596, 0.0
      %610 = vst.msk [vmem:[#allocation2 + $0x70] sm:$0xff] %vm594, 0.0
      %611 = vst.msk [vmem:[#allocation2 + $0x78] sm:$0x3] %vm596, 0.0
      %612 = vst.msk [vmem:[#allocation2 + $0x80] sm:$0xff] %vm594, 0.0
      %613 = vst.msk [vmem:[#allocation2 + $0x88] sm:$0x3] %vm596, 0.0
      %614 = vst.msk [vmem:[#allocation2 + $0x90] sm:$0xff] %vm594, 0.0
      %615 = vst.msk [vmem:[#allocation2 + $0x98] sm:$0x3] %vm596, 0.0
      %s616 = scalar_lea.vmem [#allocation2], 16
      %617 = vst.msk [vmem:[%s616 + $0x1] sm:$0xff] %vm594, %v586
      %618 = vst.msk [vmem:[%s616 + $0x11] sm:$0xff] %vm594, %v587
      %619 = vst.msk [vmem:[%s616 + $0x21] sm:$0xff] %vm594, %v588
      %620 = vst.msk [vmem:[%s616 + $0x31] sm:$0xff] %vm594, %v589
      %621 = vst.msk [vmem:[%s616 + $0x41] sm:$0xff] %vm594, %v590
      %622 = vst.msk [vmem:[%s616 + $0x51] sm:$0xff] %vm594, %v591
      %623 = vst.msk [vmem:[%s616 + $0x61] sm:$0xff] %vm594, %v592
      %624 = vst.msk [vmem:[%s616 + $0x71] sm:$0xff] %vm594, %v593
      %v625 = vld [vmem:[%s453] sm:$0x3]
      %v626 = vld [vmem:[%s453 + $0x2] sm:$0x3]
      %v627 = vld [vmem:[%s453 + $0x4] sm:$0x3]
      %v628 = vld [vmem:[%s453 + $0x6] sm:$0x3]
      %v629 = vld [vmem:[%s453 + $0x8] sm:$0x3]
      %v630 = vld [vmem:[%s453 + $0xa] sm:$0x3]
      %v631 = vld [vmem:[%s453 + $0xc] sm:$0x3]
      %v632 = vld [vmem:[%s453 + $0xe] sm:$0x3]
      %v633 = vld [vmem:[%s453 + $0x10] sm:$0x3]
      %v634 = vld [vmem:[#allocation2] sm:$0xff]
      %v635 = vld [vmem:[#allocation2 + $0x10] sm:$0xff]
      %v636 = vld [vmem:[#allocation2 + $0x20] sm:$0xff]
      %v637 = vld [vmem:[#allocation2 + $0x30] sm:$0xff]
      %v638 = vld [vmem:[#allocation2 + $0x40] sm:$0xff]
      %v639 = vld [vmem:[#allocation2 + $0x50] sm:$0xff]
      %v640 = vld [vmem:[#allocation2 + $0x60] sm:$0xff]
      %v641 = vld [vmem:[#allocation2 + $0x70] sm:$0xff]
      %v642 = vpack.c.bf16 %v635, %v634
      %v643 = vpack.c.bf16 %v637, %v636
      %v644 = vpack.c.bf16 %v639, %v638
      %v645 = vpack.c.bf16 %v641, %v640
      %v646 = vld [vmem:[#allocation2 + $0x1] sm:$0xff]
      %v647 = vld [vmem:[#allocation2 + $0x11] sm:$0xff]
      %v648 = vld [vmem:[#allocation2 + $0x21] sm:$0xff]
      %v649 = vld [vmem:[#allocation2 + $0x31] sm:$0xff]
      %v650 = vld [vmem:[#allocation2 + $0x41] sm:$0xff]
      %v651 = vld [vmem:[#allocation2 + $0x51] sm:$0xff]
      %v652 = vld [vmem:[#allocation2 + $0x61] sm:$0xff]
      %v653 = vld [vmem:[#allocation2 + $0x71] sm:$0xff]
      %v654 = vpack.c.bf16 %v647, %v646
      %v655 = vpack.c.bf16 %v649, %v648
      %v656 = vpack.c.bf16 %v651, %v650
      %v657 = vpack.c.bf16 %v653, %v652
      %v659 = vsel %vm594, %v654, 0
      %v662 = vsel %vm594, %v655, 0
      %v665 = vsel %vm594, %v656, 0
      %v668 = vsel %vm594, %v657, 0
      %vm670 = vcmask 1041408
      %v672 = vsel %vm670, %v626, 0
      %674 = vmatpush.bf16.msra.mxu0 0
      %675 = vmatpush.bf16.msra.mxu0 0
      %676 = vmatpush.bf16.msra.mxu0 0
      %677 = vmatpush.bf16.msra.mxu0 0
      %678 = vmatpush.bf16.msra.mxu0 0
      %679 = vmatpush.bf16.msra.mxu0 0
      %680 = vmatpush.bf16.msra.mxu0 0
      %681 = vmatpush.bf16.msra.mxu0 %v672
      %682 = vmatmul.bf16.gmra.mxu0 %v659
      %v683 = vpop.f32.mrf.mxu0
      %v684 = vadd.f32 0.0, %v683
      %v685 = vpop.f32.mrf.mxu0
      %v686 = vadd.f32 0.0, %v685
      %687 = vmatmul.bf16.gmra.mxu0 %v662
      %v688 = vpop.f32.mrf.mxu0
      %v689 = vadd.f32 0.0, %v688
      %v690 = vpop.f32.mrf.mxu0
      %v691 = vadd.f32 0.0, %v690
      %692 = vmatmul.bf16.gmra.mxu0 %v665
      %v693 = vpop.f32.mrf.mxu0
      %v694 = vadd.f32 0.0, %v693
      %v695 = vpop.f32.mrf.mxu0
      %v696 = vadd.f32 0.0, %v695
      %697 = vmatmul.bf16.gmra.mxu0 %v668
      %v698 = vpop.f32.mrf.mxu0
      %v699 = vadd.f32 0.0, %v698
      %v700 = vpop.f32.mrf.mxu0
      %v701 = vadd.f32 0.0, %v700
      %702 = vdwg.mxu0
      %v704 = vsel %vm594, %v642, 0
      %v707 = vsel %vm594, %v643, 0
      %v710 = vsel %vm594, %v644, 0
      %v713 = vsel %vm594, %v645, 0
      %v716 = vsel %vm670, %v625, 0
      %718 = vmatpush.bf16.msra.mxu0 0
      %719 = vmatpush.bf16.msra.mxu0 0
      %720 = vmatpush.bf16.msra.mxu0 0
      %721 = vmatpush.bf16.msra.mxu0 0
      %722 = vmatpush.bf16.msra.mxu0 0
      %723 = vmatpush.bf16.msra.mxu0 0
      %724 = vmatpush.bf16.msra.mxu0 0
      %725 = vmatpush.bf16.msra.mxu0 %v716
      %726 = vmatmul.bf16.gmra.mxu0 %v704
      %v727 = vpop.f32.mrf.mxu0
      %v728 = vadd.f32 %v684, %v727
      %v729 = vpop.f32.mrf.mxu0
      %v730 = vadd.f32 %v686, %v729
      %731 = vmatmul.bf16.gmra.mxu0 %v707
      %v732 = vpop.f32.mrf.mxu0
      %v733 = vadd.f32 %v689, %v732
      %v734 = vpop.f32.mrf.mxu0
      %v735 = vadd.f32 %v691, %v734
      %736 = vmatmul.bf16.gmra.mxu0 %v710
      %v737 = vpop.f32.mrf.mxu0
      %v738 = vadd.f32 %v694, %v737
      %v739 = vpop.f32.mrf.mxu0
      %v740 = vadd.f32 %v696, %v739
      %741 = vmatmul.bf16.gmra.mxu0 %v713
      %v742 = vpop.f32.mrf.mxu0
      %v743 = vadd.f32 %v699, %v742
      %v744 = vpop.f32.mrf.mxu0
      %v745 = vadd.f32 %v701, %v744
      %746 = vdwg.mxu0
      %v747 = vld [vmem:[#allocation2 + $0x2] sm:$0xff]
      %v748 = vld [vmem:[#allocation2 + $0x12] sm:$0xff]
      %v749 = vld [vmem:[#allocation2 + $0x22] sm:$0xff]
      %v750 = vld [vmem:[#allocation2 + $0x32] sm:$0xff]
      %v751 = vld [vmem:[#allocation2 + $0x42] sm:$0xff]
      %v752 = vld [vmem:[#allocation2 + $0x52] sm:$0xff]
      %v753 = vld [vmem:[#allocation2 + $0x62] sm:$0xff]
      %v754 = vld [vmem:[#allocation2 + $0x72] sm:$0xff]
      %v755 = vpack.c.bf16 %v748, %v747
      %v756 = vpack.c.bf16 %v750, %v749
      %v757 = vpack.c.bf16 %v752, %v751
      %v758 = vpack.c.bf16 %v754, %v753
      %v760 = vsel %vm594, %v755, 0
      %v763 = vsel %vm594, %v756, 0
      %v766 = vsel %vm594, %v757, 0
      %v769 = vsel %vm594, %v758, 0
      %v772 = vsel %vm670, %v627, 0
      %774 = vmatpush.bf16.msra.mxu0 0
      %775 = vmatpush.bf16.msra.mxu0 0
      %776 = vmatpush.bf16.msra.mxu0 0
      %777 = vmatpush.bf16.msra.mxu0 0
      %778 = vmatpush.bf16.msra.mxu0 0
      %779 = vmatpush.bf16.msra.mxu0 0
      %780 = vmatpush.bf16.msra.mxu0 0
      %781 = vmatpush.bf16.msra.mxu0 %v772
      %782 = vmatmul.bf16.gmra.mxu0 %v760
      %v783 = vpop.f32.mrf.mxu0
      %v784 = vadd.f32 0.0, %v783
      %v785 = vpop.f32.mrf.mxu0
      %v786 = vadd.f32 0.0, %v785
      %787 = vmatmul.bf16.gmra.mxu0 %v763
      %v788 = vpop.f32.mrf.mxu0
      %v789 = vadd.f32 0.0, %v788
      %v790 = vpop.f32.mrf.mxu0
      %v791 = vadd.f32 0.0, %v790
      %792 = vmatmul.bf16.gmra.mxu0 %v766
      %v793 = vpop.f32.mrf.mxu0
      %v794 = vadd.f32 0.0, %v793
      %v795 = vpop.f32.mrf.mxu0
      %v796 = vadd.f32 0.0, %v795
      %797 = vmatmul.bf16.gmra.mxu0 %v769
      %v798 = vpop.f32.mrf.mxu0
      %v799 = vadd.f32 0.0, %v798
      %v800 = vpop.f32.mrf.mxu0
      %v801 = vadd.f32 0.0, %v800
      %802 = vdwg.mxu0
      %v803 = vadd.f32 %v728, %v784
      %v804 = vadd.f32 %v730, %v786
      %v805 = vadd.f32 %v733, %v789
      %v806 = vadd.f32 %v735, %v791
      %v807 = vadd.f32 %v738, %v794
      %v808 = vadd.f32 %v740, %v796
      %v809 = vadd.f32 %v743, %v799
      %v810 = vadd.f32 %v745, %v801
      %v811 = vld [vmem:[%s616] sm:$0xff]
      %v812 = vld [vmem:[%s616 + $0x10] sm:$0xff]
      %v813 = vld [vmem:[%s616 + $0x20] sm:$0xff]
      %v814 = vld [vmem:[%s616 + $0x30] sm:$0xff]
      %v815 = vld [vmem:[%s616 + $0x40] sm:$0xff]
      %v816 = vld [vmem:[%s616 + $0x50] sm:$0xff]
      %v817 = vld [vmem:[%s616 + $0x60] sm:$0xff]
      %v818 = vld [vmem:[%s616 + $0x70] sm:$0xff]
      %v819 = vpack.c.bf16 %v812, %v811
      %v820 = vpack.c.bf16 %v814, %v813
      %v821 = vpack.c.bf16 %v816, %v815
      %v822 = vpack.c.bf16 %v818, %v817
      %v824 = vsel %vm594, %v819, 0
      %v827 = vsel %vm594, %v820, 0
      %v830 = vsel %vm594, %v821, 0
      %v833 = vsel %vm594, %v822, 0
      %v836 = vsel %vm670, %v628, 0
      %838 = vmatpush.bf16.msra.mxu0 0
      %839 = vmatpush.bf16.msra.mxu0 0
      %840 = vmatpush.bf16.msra.mxu0 0
      %841 = vmatpush.bf16.msra.mxu0 0
      %842 = vmatpush.bf16.msra.mxu0 0
      %843 = vmatpush.bf16.msra.mxu0 0
      %844 = vmatpush.bf16.msra.mxu0 0
      %845 = vmatpush.bf16.msra.mxu0 %v836
      %846 = vmatmul.bf16.gmra.mxu0 %v824
      %v847 = vpop.f32.mrf.mxu0
      %v848 = vadd.f32 0.0, %v847
      %v849 = vpop.f32.mrf.mxu0
      %v850 = vadd.f32 0.0, %v849
      %851 = vmatmul.bf16.gmra.mxu0 %v827
      %v852 = vpop.f32.mrf.mxu0
      %v853 = vadd.f32 0.0, %v852
      %v854 = vpop.f32.mrf.mxu0
      %v855 = vadd.f32 0.0, %v854
      %856 = vmatmul.bf16.gmra.mxu0 %v830
      %v857 = vpop.f32.mrf.mxu0
      %v858 = vadd.f32 0.0, %v857
      %v859 = vpop.f32.mrf.mxu0
      %v860 = vadd.f32 0.0, %v859
      %861 = vmatmul.bf16.gmra.mxu0 %v833
      %v862 = vpop.f32.mrf.mxu0
      %v863 = vadd.f32 0.0, %v862
      %v864 = vpop.f32.mrf.mxu0
      %v865 = vadd.f32 0.0, %v864
      %866 = vdwg.mxu0
      %v867 = vadd.f32 %v803, %v848
      %v868 = vadd.f32 %v804, %v850
      %v869 = vadd.f32 %v805, %v853
      %v870 = vadd.f32 %v806, %v855
      %v871 = vadd.f32 %v807, %v858
      %v872 = vadd.f32 %v808, %v860
      %v873 = vadd.f32 %v809, %v863
      %v874 = vadd.f32 %v810, %v865
      %v875 = vld [vmem:[%s616 + $0x1] sm:$0xff]
      %v876 = vld [vmem:[%s616 + $0x11] sm:$0xff]
      %v877 = vld [vmem:[%s616 + $0x21] sm:$0xff]
      %v878 = vld [vmem:[%s616 + $0x31] sm:$0xff]
      %v879 = vld [vmem:[%s616 + $0x41] sm:$0xff]
      %v880 = vld [vmem:[%s616 + $0x51] sm:$0xff]
      %v881 = vld [vmem:[%s616 + $0x61] sm:$0xff]
      %v882 = vld [vmem:[%s616 + $0x71] sm:$0xff]
      %v883 = vpack.c.bf16 %v876, %v875
      %v884 = vpack.c.bf16 %v878, %v877
      %v885 = vpack.c.bf16 %v880, %v879
      %v886 = vpack.c.bf16 %v882, %v881
      %v888 = vsel %vm594, %v883, 0
      %v891 = vsel %vm594, %v884, 0
      %v894 = vsel %vm594, %v885, 0
      %v897 = vsel %vm594, %v886, 0
      %v900 = vsel %vm670, %v629, 0
      %902 = vmatpush.bf16.msra.mxu0 0
      %903 = vmatpush.bf16.msra.mxu0 0
      %904 = vmatpush.bf16.msra.mxu0 0
      %905 = vmatpush.bf16.msra.mxu0 0
      %906 = vmatpush.bf16.msra.mxu0 0
      %907 = vmatpush.bf16.msra.mxu0 0
      %908 = vmatpush.bf16.msra.mxu0 0
      %909 = vmatpush.bf16.msra.mxu0 %v900
      %910 = vmatmul.bf16.gmra.mxu0 %v888
      %v911 = vpop.f32.mrf.mxu0
      %v912 = vadd.f32 0.0, %v911
      %v913 = vpop.f32.mrf.mxu0
      %v914 = vadd.f32 0.0, %v913
      %915 = vmatmul.bf16.gmra.mxu0 %v891
      %v916 = vpop.f32.mrf.mxu0
      %v917 = vadd.f32 0.0, %v916
      %v918 = vpop.f32.mrf.mxu0
      %v919 = vadd.f32 0.0, %v918
      %920 = vmatmul.bf16.gmra.mxu0 %v894
      %v921 = vpop.f32.mrf.mxu0
      %v922 = vadd.f32 0.0, %v921
      %v923 = vpop.f32.mrf.mxu0
      %v924 = vadd.f32 0.0, %v923
      %925 = vmatmul.bf16.gmra.mxu0 %v897
      %v926 = vpop.f32.mrf.mxu0
      %v927 = vadd.f32 0.0, %v926
      %v928 = vpop.f32.mrf.mxu0
      %v929 = vadd.f32 0.0, %v928
      %930 = vdwg.mxu0
      %v931 = vadd.f32 %v867, %v912
      %v932 = vadd.f32 %v868, %v914
      %v933 = vadd.f32 %v869, %v917
      %v934 = vadd.f32 %v870, %v919
      %v935 = vadd.f32 %v871, %v922
      %v936 = vadd.f32 %v872, %v924
      %v937 = vadd.f32 %v873, %v927
      %v938 = vadd.f32 %v874, %v929
      %v939 = vld [vmem:[%s616 + $0x2] sm:$0xff]
      %v940 = vld [vmem:[%s616 + $0x12] sm:$0xff]
      %v941 = vld [vmem:[%s616 + $0x22] sm:$0xff]
      %v942 = vld [vmem:[%s616 + $0x32] sm:$0xff]
      %v943 = vld [vmem:[%s616 + $0x42] sm:$0xff]
      %v944 = vld [vmem:[%s616 + $0x52] sm:$0xff]
      %v945 = vld [vmem:[%s616 + $0x62] sm:$0xff]
      %v946 = vld [vmem:[%s616 + $0x72] sm:$0xff]
      %v947 = vpack.c.bf16 %v940, %v939
      %v948 = vpack.c.bf16 %v942, %v941
      %v949 = vpack.c.bf16 %v944, %v943
      %v950 = vpack.c.bf16 %v946, %v945
      %v952 = vsel %vm594, %v947, 0
      %v955 = vsel %vm594, %v948, 0
      %v958 = vsel %vm594, %v949, 0
      %v961 = vsel %vm594, %v950, 0
      %v964 = vsel %vm670, %v630, 0
      %966 = vmatpush.bf16.msra.mxu0 0
      %967 = vmatpush.bf16.msra.mxu0 0
      %968 = vmatpush.bf16.msra.mxu0 0
      %969 = vmatpush.bf16.msra.mxu0 0
      %970 = vmatpush.bf16.msra.mxu0 0
      %971 = vmatpush.bf16.msra.mxu0 0
      %972 = vmatpush.bf16.msra.mxu0 0
      %973 = vmatpush.bf16.msra.mxu0 %v964
      %974 = vmatmul.bf16.gmra.mxu0 %v952
      %v975 = vpop.f32.mrf.mxu0
      %v976 = vadd.f32 0.0, %v975
      %v977 = vpop.f32.mrf.mxu0
      %v978 = vadd.f32 0.0, %v977
      %979 = vmatmul.bf16.gmra.mxu0 %v955
      %v980 = vpop.f32.mrf.mxu0
      %v981 = vadd.f32 0.0, %v980
      %v982 = vpop.f32.mrf.mxu0
      %v983 = vadd.f32 0.0, %v982
      %984 = vmatmul.bf16.gmra.mxu0 %v958
      %v985 = vpop.f32.mrf.mxu0
      %v986 = vadd.f32 0.0, %v985
      %v987 = vpop.f32.mrf.mxu0
      %v988 = vadd.f32 0.0, %v987
      %989 = vmatmul.bf16.gmra.mxu0 %v961
      %v990 = vpop.f32.mrf.mxu0
      %v991 = vadd.f32 0.0, %v990
      %v992 = vpop.f32.mrf.mxu0
      %v993 = vadd.f32 0.0, %v992
      %994 = vdwg.mxu0
      %v995 = vadd.f32 %v931, %v976
      %v996 = vadd.f32 %v932, %v978
      %v997 = vadd.f32 %v933, %v981
      %v998 = vadd.f32 %v934, %v983
      %v999 = vadd.f32 %v935, %v986
      %v1000 = vadd.f32 %v936, %v988
      %v1001 = vadd.f32 %v937, %v991
      %v1002 = vadd.f32 %v938, %v993
      %s1003 = scalar_lea.vmem [#allocation2], 32
      %v1004 = vld [vmem:[%s1003] sm:$0xff]
      %v1005 = vld [vmem:[%s1003 + $0x10] sm:$0xff]
      %v1006 = vld [vmem:[%s1003 + $0x20] sm:$0xff]
      %v1007 = vld [vmem:[%s1003 + $0x30] sm:$0xff]
      %v1008 = vld [vmem:[%s1003 + $0x40] sm:$0xff]
      %v1009 = vld [vmem:[%s1003 + $0x50] sm:$0xff]
      %v1010 = vld [vmem:[%s1003 + $0x60] sm:$0xff]
      %v1011 = vld [vmem:[%s1003 + $0x70] sm:$0xff]
      %v1012 = vpack.c.bf16 %v1005, %v1004
      %v1013 = vpack.c.bf16 %v1007, %v1006
      %v1014 = vpack.c.bf16 %v1009, %v1008
      %v1015 = vpack.c.bf16 %v1011, %v1010
      %v1017 = vsel %vm594, %v1012, 0
      %v1020 = vsel %vm594, %v1013, 0
      %v1023 = vsel %vm594, %v1014, 0
      %v1026 = vsel %vm594, %v1015, 0
      %v1029 = vsel %vm670, %v631, 0
      %1031 = vmatpush.bf16.msra.mxu0 0
      %1032 = vmatpush.bf16.msra.mxu0 0
      %1033 = vmatpush.bf16.msra.mxu0 0
      %1034 = vmatpush.bf16.msra.mxu0 0
      %1035 = vmatpush.bf16.msra.mxu0 0
      %1036 = vmatpush.bf16.msra.mxu0 0
      %1037 = vmatpush.bf16.msra.mxu0 0
      %1038 = vmatpush.bf16.msra.mxu0 %v1029
      %1039 = vmatmul.bf16.gmra.mxu0 %v1017
      %v1040 = vpop.f32.mrf.mxu0
      %v1041 = vadd.f32 0.0, %v1040
      %v1042 = vpop.f32.mrf.mxu0
      %v1043 = vadd.f32 0.0, %v1042
      %1044 = vmatmul.bf16.gmra.mxu0 %v1020
      %v1045 = vpop.f32.mrf.mxu0
      %v1046 = vadd.f32 0.0, %v1045
      %v1047 = vpop.f32.mrf.mxu0
      %v1048 = vadd.f32 0.0, %v1047
      %1049 = vmatmul.bf16.gmra.mxu0 %v1023
      %v1050 = vpop.f32.mrf.mxu0
      %v1051 = vadd.f32 0.0, %v1050
      %v1052 = vpop.f32.mrf.mxu0
      %v1053 = vadd.f32 0.0, %v1052
      %1054 = vmatmul.bf16.gmra.mxu0 %v1026
      %v1055 = vpop.f32.mrf.mxu0
      %v1056 = vadd.f32 0.0, %v1055
      %v1057 = vpop.f32.mrf.mxu0
      %v1058 = vadd.f32 0.0, %v1057
      %1059 = vdwg.mxu0
      %v1060 = vadd.f32 %v995, %v1041
      %v1061 = vadd.f32 %v996, %v1043
      %v1062 = vadd.f32 %v997, %v1046
      %v1063 = vadd.f32 %v998, %v1048
      %v1064 = vadd.f32 %v999, %v1051
      %v1065 = vadd.f32 %v1000, %v1053
      %v1066 = vadd.f32 %v1001, %v1056
      %v1067 = vadd.f32 %v1002, %v1058
      %v1068 = vld [vmem:[%s1003 + $0x1] sm:$0xff]
      %v1069 = vld [vmem:[%s1003 + $0x11] sm:$0xff]
      %v1070 = vld [vmem:[%s1003 + $0x21] sm:$0xff]
      %v1071 = vld [vmem:[%s1003 + $0x31] sm:$0xff]
      %v1072 = vld [vmem:[%s1003 + $0x41] sm:$0xff]
      %v1073 = vld [vmem:[%s1003 + $0x51] sm:$0xff]
      %v1074 = vld [vmem:[%s1003 + $0x61] sm:$0xff]
      %v1075 = vld [vmem:[%s1003 + $0x71] sm:$0xff]
      %v1076 = vpack.c.bf16 %v1069, %v1068
      %v1077 = vpack.c.bf16 %v1071, %v1070
      %v1078 = vpack.c.bf16 %v1073, %v1072
      %v1079 = vpack.c.bf16 %v1075, %v1074
      %v1081 = vsel %vm594, %v1076, 0
      %v1084 = vsel %vm594, %v1077, 0
      %v1087 = vsel %vm594, %v1078, 0
      %v1090 = vsel %vm594, %v1079, 0
      %v1093 = vsel %vm670, %v632, 0
      %1095 = vmatpush.bf16.msra.mxu0 0
      %1096 = vmatpush.bf16.msra.mxu0 0
      %1097 = vmatpush.bf16.msra.mxu0 0
      %1098 = vmatpush.bf16.msra.mxu0 0
      %1099 = vmatpush.bf16.msra.mxu0 0
      %1100 = vmatpush.bf16.msra.mxu0 0
      %1101 = vmatpush.bf16.msra.mxu0 0
      %1102 = vmatpush.bf16.msra.mxu0 %v1093
      %1103 = vmatmul.bf16.gmra.mxu0 %v1081
      %v1104 = vpop.f32.mrf.mxu0
      %v1105 = vadd.f32 0.0, %v1104
      %v1106 = vpop.f32.mrf.mxu0
      %v1107 = vadd.f32 0.0, %v1106
      %1108 = vmatmul.bf16.gmra.mxu0 %v1084
      %v1109 = vpop.f32.mrf.mxu0
      %v1110 = vadd.f32 0.0, %v1109
      %v1111 = vpop.f32.mrf.mxu0
      %v1112 = vadd.f32 0.0, %v1111
      %1113 = vmatmul.bf16.gmra.mxu0 %v1087
      %v1114 = vpop.f32.mrf.mxu0
      %v1115 = vadd.f32 0.0, %v1114
      %v1116 = vpop.f32.mrf.mxu0
      %v1117 = vadd.f32 0.0, %v1116
      %1118 = vmatmul.bf16.gmra.mxu0 %v1090
      %v1119 = vpop.f32.mrf.mxu0
      %v1120 = vadd.f32 0.0, %v1119
      %v1121 = vpop.f32.mrf.mxu0
      %v1122 = vadd.f32 0.0, %v1121
      %1123 = vdwg.mxu0
      %v1124 = vadd.f32 %v1060, %v1105
      %v1125 = vadd.f32 %v1061, %v1107
      %v1126 = vadd.f32 %v1062, %v1110
      %v1127 = vadd.f32 %v1063, %v1112
      %v1128 = vadd.f32 %v1064, %v1115
      %v1129 = vadd.f32 %v1065, %v1117
      %v1130 = vadd.f32 %v1066, %v1120
      %v1131 = vadd.f32 %v1067, %v1122
      %v1132 = vld [vmem:[%s1003 + $0x2] sm:$0xff]
      %v1133 = vld [vmem:[%s1003 + $0x12] sm:$0xff]
      %v1134 = vld [vmem:[%s1003 + $0x22] sm:$0xff]
      %v1135 = vld [vmem:[%s1003 + $0x32] sm:$0xff]
      %v1136 = vld [vmem:[%s1003 + $0x42] sm:$0xff]
      %v1137 = vld [vmem:[%s1003 + $0x52] sm:$0xff]
      %v1138 = vld [vmem:[%s1003 + $0x62] sm:$0xff]
      %v1139 = vld [vmem:[%s1003 + $0x72] sm:$0xff]
      %v1140 = vpack.c.bf16 %v1133, %v1132
      %v1141 = vpack.c.bf16 %v1135, %v1134
      %v1142 = vpack.c.bf16 %v1137, %v1136
      %v1143 = vpack.c.bf16 %v1139, %v1138
      %v1145 = vsel %vm594, %v1140, 0
      %v1148 = vsel %vm594, %v1141, 0
      %v1151 = vsel %vm594, %v1142, 0
      %v1154 = vsel %vm594, %v1143, 0
      %v1157 = vsel %vm670, %v633, 0
      %1159 = vmatpush.bf16.msra.mxu0 0
      %1160 = vmatpush.bf16.msra.mxu0 0
      %1161 = vmatpush.bf16.msra.mxu0 0
      %1162 = vmatpush.bf16.msra.mxu0 0
      %1163 = vmatpush.bf16.msra.mxu0 0
      %1164 = vmatpush.bf16.msra.mxu0 0
      %1165 = vmatpush.bf16.msra.mxu0 0
      %1166 = vmatpush.bf16.msra.mxu0 %v1157
      %1167 = vmatmul.bf16.gmra.mxu0 %v1145
      %v1168 = vpop.f32.mrf.mxu0
      %v1169 = vadd.f32 0.0, %v1168
      %v1170 = vpop.f32.mrf.mxu0
      %v1171 = vadd.f32 0.0, %v1170
      %1172 = vmatmul.bf16.gmra.mxu0 %v1148
      %v1173 = vpop.f32.mrf.mxu0
      %v1174 = vadd.f32 0.0, %v1173
      %v1175 = vpop.f32.mrf.mxu0
      %v1176 = vadd.f32 0.0, %v1175
      %1177 = vmatmul.bf16.gmra.mxu0 %v1151
      %v1178 = vpop.f32.mrf.mxu0
      %v1179 = vadd.f32 0.0, %v1178
      %v1180 = vpop.f32.mrf.mxu0
      %v1181 = vadd.f32 0.0, %v1180
      %1182 = vmatmul.bf16.gmra.mxu0 %v1154
      %v1183 = vpop.f32.mrf.mxu0
      %v1184 = vadd.f32 0.0, %v1183
      %v1185 = vpop.f32.mrf.mxu0
      %v1186 = vadd.f32 0.0, %v1185
      %1187 = vdwg.mxu0
      %v1188 = vadd.f32 %v1124, %v1169
      %v1189 = vadd.f32 %v1125, %v1171
      %v1190 = vadd.f32 %v1126, %v1174
      %v1191 = vadd.f32 %v1127, %v1176
      %v1192 = vadd.f32 %v1128, %v1179
      %v1193 = vadd.f32 %v1129, %v1181
      %v1194 = vadd.f32 %v1130, %v1184
      %v1195 = vadd.f32 %v1131, %v1186
      %v1196 = vld [vmem:[%s456] sm:$0x1]
      %v1198 = vperm.slane %v1196, 0
      %v1200 = vadd.f32 %v1188, %v1198
      %v1201 = vadd.f32 %v1189, %v1198
      %v1202 = vadd.f32 %v1190, %v1198
      %v1203 = vadd.f32 %v1191, %v1198
      %v1204 = vadd.f32 %v1192, %v1198
      %v1205 = vadd.f32 %v1193, %v1198
      %v1206 = vadd.f32 %v1194, %v1198
      %v1207 = vadd.f32 %v1195, %v1198
      %v1208 = vmax.f32 %v1200, 0.0
      %v1209 = vmax.f32 %v1201, 0.0
      %v1210 = vmax.f32 %v1202, 0.0
      %v1211 = vmax.f32 %v1203, 0.0
      %v1212 = vmax.f32 %v1204, 0.0
      %v1213 = vmax.f32 %v1205, 0.0
      %v1214 = vmax.f32 %v1206, 0.0
      %v1215 = vmax.f32 %v1207, 0.0
      %v1216 = vpack.c.bf16 %v1209, %v1208
      %v1217 = vpack.c.bf16 %v1211, %v1210
      %v1218 = vpack.c.bf16 %v1213, %v1212
      %v1219 = vpack.c.bf16 %v1215, %v1214
      %v1220 = vld [vmem:[%s460] sm:$0x3]
      %v1222 = vsel %vm594, %v1216, 0
      %v1225 = vsel %vm594, %v1217, 0
      %v1228 = vsel %vm594, %v1218, 0
      %v1231 = vsel %vm594, %v1219, 0
      %v1234 = vsel %vm670, %v1220, 0
      %1236 = vmatpush.bf16.msra.mxu0 0
      %1237 = vmatpush.bf16.msra.mxu0 0
      %1238 = vmatpush.bf16.msra.mxu0 0
      %1239 = vmatpush.bf16.msra.mxu0 0
      %1240 = vmatpush.bf16.msra.mxu0 0
      %1241 = vmatpush.bf16.msra.mxu0 0
      %1242 = vmatpush.bf16.msra.mxu0 0
      %1243 = vmatpush.bf16.msra.mxu0 %v1234
      %1244 = vmatmul.bf16.gmra.mxu0 %v1222
      %v1245 = vpop.f32.mrf.mxu0
      %v1246 = vadd.f32 0.0, %v1245
      %v1247 = vpop.f32.mrf.mxu0
      %v1248 = vadd.f32 0.0, %v1247
      %1249 = vmatmul.bf16.gmra.mxu0 %v1225
      %v1250 = vpop.f32.mrf.mxu0
      %v1251 = vadd.f32 0.0, %v1250
      %v1252 = vpop.f32.mrf.mxu0
      %v1253 = vadd.f32 0.0, %v1252
      %1254 = vmatmul.bf16.gmra.mxu0 %v1228
      %v1255 = vpop.f32.mrf.mxu0
      %v1256 = vadd.f32 0.0, %v1255
      %v1257 = vpop.f32.mrf.mxu0
      %v1258 = vadd.f32 0.0, %v1257
      %1259 = vmatmul.bf16.gmra.mxu0 %v1231
      %v1260 = vpop.f32.mrf.mxu0
      %v1261 = vadd.f32 0.0, %v1260
      %v1262 = vpop.f32.mrf.mxu0
      %v1263 = vadd.f32 0.0, %v1262
      %1264 = vdwg.mxu0
      %v1265 = vadd.f32 %v491, %v1246
      %v1266 = vadd.f32 %v492, %v1248
      %v1267 = vadd.f32 %v493, %v1251
      %v1268 = vadd.f32 %v494, %v1253
      %v1269 = vadd.f32 %v495, %v1256
      %v1270 = vadd.f32 %v496, %v1258
      %v1271 = vadd.f32 %v497, %v1261
      %v1272 = vadd.f32 %v498, %v1263
      %v1273 = vld [vmem:[%s463] sm:$0x1]
      %v1275 = vperm.slane %v1273, 0
      %v1277 = vadd.f32 %v1265, %v1275
      %v1278 = vadd.f32 %v1266, %v1275
      %v1279 = vadd.f32 %v1267, %v1275
      %v1280 = vadd.f32 %v1268, %v1275
      %v1281 = vadd.f32 %v1269, %v1275
      %v1282 = vadd.f32 %v1270, %v1275
      %v1283 = vadd.f32 %v1271, %v1275
      %v1284 = vadd.f32 %v1272, %v1275
      %1285 = vst.msk [vmem:[%s468] sm:$0xff] %vm540, %v1277
      %1286 = vst.msk [vmem:[%s468 + $0x8] sm:$0xff] %vm540, %v1278
      %1287 = vst.msk [vmem:[%s468 + $0x10] sm:$0xff] %vm540, %v1279
      %1288 = vst.msk [vmem:[%s468 + $0x18] sm:$0xff] %vm540, %v1280
      %1289 = vst.msk [vmem:[%s468 + $0x20] sm:$0xff] %vm540, %v1281
      %1290 = vst.msk [vmem:[%s468 + $0x28] sm:$0xff] %vm540, %v1282
      %1291 = vst.msk [vmem:[%s468 + $0x30] sm:$0xff] %vm540, %v1283
      %1292 = vst.msk [vmem:[%s468 + $0x38] sm:$0xff] %vm540, %v1284
      %p1293 = scmp.lt.s32.totalorder %s24, 1
      %s1294 = scalar_select %p1293, %s24, 1
      %s1295 = smul.addr %s1294, 8
      %s1296 = smul.addr %s1295, 8
      %s1297 = scalar_lea.vmem %s9, %s1296
      // Predicated region
      $region61: #{hourglass_apply.8} parent=55 // pred_check
        %p1298 = pneg %p284
      $region62: #{hourglass_apply.8} parent=55 // pred_check_branch
        %1300 = sbr.rel (%p1298) target = $region64
      $region63: #{hourglass_apply.8} parent=55 // pred_region
        _
      $region64: #{hourglass_apply.8} parent=55 // pred_fallthru
        _
    $region56: #{hourglass_apply.8} parent=5 // pred_fallthru
      _
    %p1301 = scmp.le.s32.totalorder 2, %s15
    // Predicated region
    $region65: #{hourglass_apply.8} parent=5 // pred_check
      %p1302 = pneg %p1301
    $region66: #{hourglass_apply.8} parent=5 // pred_check_branch
      %1304 = sbr.rel (%p1302) target = $region68
    $region67: #{hourglass_apply.8} parent=5 // pred_region
      %s1305 = ssub.s32 %s15, 2
      // Predicated region
      $region69: #{hourglass_apply.8} parent=67 // pred_check
        %p1306 = pneg %p290
      $region70: #{hourglass_apply.8} parent=67 // pred_check_branch
        %1308 = sbr.rel (%p1306) target = $region72
      $region71: #{hourglass_apply.8} parent=67 // pred_region
        %p1309 = scmp.lt.s32.totalorder %s26, 1
        %s1310 = scalar_select %p1309, %s26, 1
        %s1311 = smul.addr %s1310, 8
        %s1312 = smul.addr %s1311, 8
        %s1313 = scalar_lea.vmem %s9, %s1312
      $region72: #{hourglass_apply.8} parent=67 // pred_fallthru
        _
    $region68: #{hourglass_apply.8} parent=5 // pred_fallthru
      _
  $region6: #{hourglass_apply.8} parent=0 // loop_footer
    %s19 = sadd.s32 1, %s15
  $region7: #{hourglass_apply.8} parent=0 // loop_footer_branch
    %14 = sbr.rel target = $region3
  $region8: #{hourglass_apply.8} parent=0 // loop_exit
    _

// kernel: hourglass_apply.10
$region0: #{hourglass_apply.10}
  #allocation0 [shape = 'u32[]', space=smem, size = 0x4, offset = 0x4, fixed_abs, tag = 'smem constant byte address 0x4 - core index']
  #allocation1 [shape = 'u32[72,128]{1,0:T(1,128)}', space=vmem, size = 0x9000, scoped, tag = 'internal scratch']
  #allocation2 [shape = 'f32[6,6,4]{2,1,0:T(8,128)}', space=vmem, size = 0x6000, scoped, tag = 'scratch operand']
  %s0 = inlined_call_operand.vmem [shape: f32[2,16,8], index: 0, kind: input, shape index: {}]
  %s1 = inlined_call_operand.vmem [shape: f32[1,1,8], index: 1, kind: input, shape index: {}]
  %s2 = inlined_call_operand.vmem [shape: f32[1,1,8], index: 2, kind: input, shape index: {}]
  %s3 = inlined_call_operand.vmem [shape: bf16[1,8,4], index: 3, kind: input, shape index: {}]
  %s4 = inlined_call_operand.vmem [shape: f32[1,1,4], index: 4, kind: input, shape index: {}]
  %s5 = inlined_call_operand.vmem [shape: bf16[1,9,4,4], index: 5, kind: input, shape index: {}]
  %s6 = inlined_call_operand.vmem [shape: f32[1,1,4], index: 6, kind: input, shape index: {}]
  %s7 = inlined_call_operand.vmem [shape: bf16[1,4,8], index: 7, kind: input, shape index: {}]
  %s8 = inlined_call_operand.vmem [shape: f32[1,1,8], index: 8, kind: input, shape index: {}]
  %s9 = inlined_call_operand.vmem [shape: f32[2,16,8], index: 9, kind: output, shape index: {}]
  %s10 = sld [smem:[#allocation0]]
  $region73: #{hourglass_apply.10} parent=0
    _
  %s12 = ssub.s32 1, %s10
  %s13 = scalar_select 0, %s12, %s10
  loop: start=0, step=1, limit=4
  $region2: #{hourglass_apply.10} parent=0 // loop_pre_header
    _
  $region3: #{hourglass_apply.10} parent=0 // loop_header
    %s15 = sphi 0, %s19
    %p16 = scmp.ge.s32.totalorder %s15, 4
    %s22 = sphi 0, %s34
    %s23 = sphi 0, %s30
    %s24 = sphi 0, %s22
    %s25 = sphi 0, %s23
    %s26 = sphi 0, %s24
    %s27 = sphi 0, %s25
    %s37 = sphi 0, %s39
    %s40 = sphi 0, %s37
    %s41 = sphi 0, %s40
    %s57 = sphi 0, %s41
    %s63 = sphi 0, %s65
    %s66 = sphi 0, %s63
    %s67 = sphi 0, %s66
    %s83 = sphi 0, %s67
    %s89 = sphi 0, %s91
    %s92 = sphi 0, %s89
    %s93 = sphi 0, %s92
    %s109 = sphi 0, %s93
    %s115 = sphi 0, %s117
    %s118 = sphi 0, %s115
    %s119 = sphi 0, %s118
    %s135 = sphi 0, %s119
    %s141 = sphi 0, %s143
    %s144 = sphi 0, %s141
    %s145 = sphi 0, %s144
    %s161 = sphi 0, %s145
    %s167 = sphi 0, %s169
    %s170 = sphi 0, %s167
    %s171 = sphi 0, %s170
    %s187 = sphi 0, %s171
    %s193 = sphi 0, %s195
    %s196 = sphi 0, %s193
    %s197 = sphi 0, %s196
    %s213 = sphi 0, %s197
    %s219 = sphi 0, %s221
    %s222 = sphi 0, %s219
    %s223 = sphi 0, %s222
    %s239 = sphi 0, %s223
    %s245 = sphi 0, %s247
    %s248 = sphi 0, %s245
    %s249 = sphi 0, %s248
    %s265 = sphi 0, %s249
    %s271 = sphi 0, %s273
    %s274 = sphi 0, %s271
    %s275 = sphi 0, %s274
    %s291 = sphi 0, %s275
  $region4: #{hourglass_apply.10} parent=0 // loop_header_branch
    %18 = sbr.rel (%p16) target = $region8
  $region5: #{hourglass_apply.10} parent=0 // loop_body
    %s20 = ssub.s32 %s15, 1
    %s21 = ssub.s32 %s15, 2
    %s28 = sadd.s32 1, %s23
    %p29 = scmp.ge.s32.totalorder %s28, 1
    %s30 = scalar_select %p29, 0, %s28
    %s31 = sadd.s32 1, %s22
    %s32 = scalar_select %p29, %s31, %s22
    %p33 = scmp.ge.s32.totalorder %s32, 2
    %s34 = scalar_select %p33, 0, %s32
    %s35 = ssub.s32 %s22, %s34
    %p36 = scmp.eq.s32.totalorder %s35, 0
    %s38 = sadd.s32 %s37, 1
    %s39 = scalar_select %p36, %s37, %s38
    %p42 = pneg %p36
    %p43 = scmp.eq.s32.totalorder %s15, 1
    %p44 = por %p42, %p43
    %p45 = scmp.ne.s32.totalorder %s37, %s40
    %p46 = scmp.eq.s32.totalorder %s15, 0
    %p47 = por %p45, %p46
    %p48 = scmp.ne.s32.totalorder %s37, %s40
    %p49 = scmp.eq.s32.totalorder %s20, 1
    %p50 = por %p48, %p49
    %p51 = scmp.ne.s32.totalorder %s40, %s41
    %p52 = scmp.eq.s32.totalorder %s20, 0
    %p53 = por %p51, %p52
    %p54 = scmp.ne.s32.totalorder %s40, %s41
    %p55 = scmp.eq.s32.totalorder %s21, 1
    %p56 = por %p54, %p55
    %p58 = scmp.ne.s32.totalorder %s41, %s57
    %p59 = scmp.eq.s32.totalorder %s21, 0
    %p60 = por %p58, %p59
    %s61 = ssub.s32 %s23, %s30
    %p62 = scmp.eq.s32.totalorder %s61, 0
    %s64 = sadd.s32 %s63, 1
    %s65 = scalar_select %p62, %s63, %s64
    %p68 = pneg %p62
    %p69 = scmp.eq.s32.totalorder %s15, 1
    %p70 = por %p68, %p69
    %p71 = scmp.ne.s32.totalorder %s63, %s66
    %p72 = scmp.eq.s32.totalorder %s15, 0
    %p73 = por %p71, %p72
    %p74 = scmp.ne.s32.totalorder %s63, %s66
    %p75 = scmp.eq.s32.totalorder %s20, 1
    %p76 = por %p74, %p75
    %p77 = scmp.ne.s32.totalorder %s66, %s67
    %p78 = scmp.eq.s32.totalorder %s20, 0
    %p79 = por %p77, %p78
    %p80 = scmp.ne.s32.totalorder %s66, %s67
    %p81 = scmp.eq.s32.totalorder %s21, 1
    %p82 = por %p80, %p81
    %p84 = scmp.ne.s32.totalorder %s67, %s83
    %p85 = scmp.eq.s32.totalorder %s21, 0
    %p86 = por %p84, %p85
    %s87 = ssub.s32 %s23, %s30
    %p88 = scmp.eq.s32.totalorder %s87, 0
    %s90 = sadd.s32 %s89, 1
    %s91 = scalar_select %p88, %s89, %s90
    %p94 = pneg %p88
    %p95 = scmp.eq.s32.totalorder %s15, 1
    %p96 = por %p94, %p95
    %p97 = scmp.ne.s32.totalorder %s89, %s92
    %p98 = scmp.eq.s32.totalorder %s15, 0
    %p99 = por %p97, %p98
    %p100 = scmp.ne.s32.totalorder %s89, %s92
    %p101 = scmp.eq.s32.totalorder %s20, 1
    %p102 = por %p100, %p101
    %p103 = scmp.ne.s32.totalorder %s92, %s93
    %p104 = scmp.eq.s32.totalorder %s20, 0
    %p105 = por %p103, %p104
    %p106 = scmp.ne.s32.totalorder %s92, %s93
    %p107 = scmp.eq.s32.totalorder %s21, 1
    %p108 = por %p106, %p107
    %p110 = scmp.ne.s32.totalorder %s93, %s109
    %p111 = scmp.eq.s32.totalorder %s21, 0
    %p112 = por %p110, %p111
    %s113 = ssub.s32 %s23, %s30
    %p114 = scmp.eq.s32.totalorder %s113, 0
    %s116 = sadd.s32 %s115, 1
    %s117 = scalar_select %p114, %s115, %s116
    %p120 = pneg %p114
    %p121 = scmp.eq.s32.totalorder %s15, 1
    %p122 = por %p120, %p121
    %p123 = scmp.ne.s32.totalorder %s115, %s118
    %p124 = scmp.eq.s32.totalorder %s15, 0
    %p125 = por %p123, %p124
    %p126 = scmp.ne.s32.totalorder %s115, %s118
    %p127 = scmp.eq.s32.totalorder %s20, 1
    %p128 = por %p126, %p127
    %p129 = scmp.ne.s32.totalorder %s118, %s119
    %p130 = scmp.eq.s32.totalorder %s20, 0
    %p131 = por %p129, %p130
    %p132 = scmp.ne.s32.totalorder %s118, %s119
    %p133 = scmp.eq.s32.totalorder %s21, 1
    %p134 = por %p132, %p133
    %p136 = scmp.ne.s32.totalorder %s119, %s135
    %p137 = scmp.eq.s32.totalorder %s21, 0
    %p138 = por %p136, %p137
    %s139 = ssub.s32 %s23, %s30
    %p140 = scmp.eq.s32.totalorder %s139, 0
    %s142 = sadd.s32 %s141, 1
    %s143 = scalar_select %p140, %s141, %s142
    %p146 = pneg %p140
    %p147 = scmp.eq.s32.totalorder %s15, 1
    %p148 = por %p146, %p147
    %p149 = scmp.ne.s32.totalorder %s141, %s144
    %p150 = scmp.eq.s32.totalorder %s15, 0
    %p151 = por %p149, %p150
    %p152 = scmp.ne.s32.totalorder %s141, %s144
    %p153 = scmp.eq.s32.totalorder %s20, 1
    %p154 = por %p152, %p153
    %p155 = scmp.ne.s32.totalorder %s144, %s145
    %p156 = scmp.eq.s32.totalorder %s20, 0
    %p157 = por %p155, %p156
    %p158 = scmp.ne.s32.totalorder %s144, %s145
    %p159 = scmp.eq.s32.totalorder %s21, 1
    %p160 = por %p158, %p159
    %p162 = scmp.ne.s32.totalorder %s145, %s161
    %p163 = scmp.eq.s32.totalorder %s21, 0
    %p164 = por %p162, %p163
    %s165 = ssub.s32 %s23, %s30
    %p166 = scmp.eq.s32.totalorder %s165, 0
    %s168 = sadd.s32 %s167, 1
    %s169 = scalar_select %p166, %s167, %s168
    %p172 = pneg %p166
    %p173 = scmp.eq.s32.totalorder %s15, 1
    %p174 = por %p172, %p173
    %p175 = scmp.ne.s32.totalorder %s167, %s170
    %p176 = scmp.eq.s32.totalorder %s15, 0
    %p177 = por %p175, %p176
    %p178 = scmp.ne.s32.totalorder %s167, %s170
    %p179 = scmp.eq.s32.totalorder %s20, 1
    %p180 = por %p178, %p179
    %p181 = scmp.ne.s32.totalorder %s170, %s171
    %p182 = scmp.eq.s32.totalorder %s20, 0
    %p183 = por %p181, %p182
    %p184 = scmp.ne.s32.totalorder %s170, %s171
    %p185 = scmp.eq.s32.totalorder %s21, 1
    %p186 = por %p184, %p185
    %p188 = scmp.ne.s32.totalorder %s171, %s187
    %p189 = scmp.eq.s32.totalorder %s21, 0
    %p190 = por %p188, %p189
    %s191 = ssub.s32 %s23, %s30
    %p192 = scmp.eq.s32.totalorder %s191, 0
    %s194 = sadd.s32 %s193, 1
    %s195 = scalar_select %p192, %s193, %s194
    %p198 = pneg %p192
    %p199 = scmp.eq.s32.totalorder %s15, 1
    %p200 = por %p198, %p199
    %p201 = scmp.ne.s32.totalorder %s193, %s196
    %p202 = scmp.eq.s32.totalorder %s15, 0
    %p203 = por %p201, %p202
    %p204 = scmp.ne.s32.totalorder %s193, %s196
    %p205 = scmp.eq.s32.totalorder %s20, 1
    %p206 = por %p204, %p205
    %p207 = scmp.ne.s32.totalorder %s196, %s197
    %p208 = scmp.eq.s32.totalorder %s20, 0
    %p209 = por %p207, %p208
    %p210 = scmp.ne.s32.totalorder %s196, %s197
    %p211 = scmp.eq.s32.totalorder %s21, 1
    %p212 = por %p210, %p211
    %p214 = scmp.ne.s32.totalorder %s197, %s213
    %p215 = scmp.eq.s32.totalorder %s21, 0
    %p216 = por %p214, %p215
    %s217 = ssub.s32 %s23, %s30
    %p218 = scmp.eq.s32.totalorder %s217, 0
    %s220 = sadd.s32 %s219, 1
    %s221 = scalar_select %p218, %s219, %s220
    %p224 = pneg %p218
    %p225 = scmp.eq.s32.totalorder %s15, 1
    %p226 = por %p224, %p225
    %p227 = scmp.ne.s32.totalorder %s219, %s222
    %p228 = scmp.eq.s32.totalorder %s15, 0
    %p229 = por %p227, %p228
    %p230 = scmp.ne.s32.totalorder %s219, %s222
    %p231 = scmp.eq.s32.totalorder %s20, 1
    %p232 = por %p230, %p231
    %p233 = scmp.ne.s32.totalorder %s222, %s223
    %p234 = scmp.eq.s32.totalorder %s20, 0
    %p235 = por %p233, %p234
    %p236 = scmp.ne.s32.totalorder %s222, %s223
    %p237 = scmp.eq.s32.totalorder %s21, 1
    %p238 = por %p236, %p237
    %p240 = scmp.ne.s32.totalorder %s223, %s239
    %p241 = scmp.eq.s32.totalorder %s21, 0
    %p242 = por %p240, %p241
    %s243 = ssub.s32 %s23, %s30
    %p244 = scmp.eq.s32.totalorder %s243, 0
    %s246 = sadd.s32 %s245, 1
    %s247 = scalar_select %p244, %s245, %s246
    %p250 = pneg %p244
    %p251 = scmp.eq.s32.totalorder %s15, 1
    %p252 = por %p250, %p251
    %p253 = scmp.ne.s32.totalorder %s245, %s248
    %p254 = scmp.eq.s32.totalorder %s15, 0
    %p255 = por %p253, %p254
    %p256 = scmp.ne.s32.totalorder %s245, %s248
    %p257 = scmp.eq.s32.totalorder %s20, 1
    %p258 = por %p256, %p257
    %p259 = scmp.ne.s32.totalorder %s248, %s249
    %p260 = scmp.eq.s32.totalorder %s20, 0
    %p261 = por %p259, %p260
    %p262 = scmp.ne.s32.totalorder %s248, %s249
    %p263 = scmp.eq.s32.totalorder %s21, 1
    %p264 = por %p262, %p263
    %p266 = scmp.ne.s32.totalorder %s249, %s265
    %p267 = scmp.eq.s32.totalorder %s21, 0
    %p268 = por %p266, %p267
    %s269 = ssub.s32 %s22, %s34
    %p270 = scmp.eq.s32.totalorder %s269, 0
    %s272 = sadd.s32 %s271, 1
    %s273 = scalar_select %p270, %s271, %s272
    %p276 = pneg %p270
    %p277 = scmp.eq.s32.totalorder %s15, 1
    %p278 = por %p276, %p277
    %p279 = scmp.ne.s32.totalorder %s271, %s274
    %p280 = scmp.eq.s32.totalorder %s15, 0
    %p281 = por %p279, %p280
    %p282 = scmp.ne.s32.totalorder %s271, %s274
    %p283 = scmp.eq.s32.totalorder %s20, 1
    %p284 = por %p282, %p283
    %p285 = scmp.ne.s32.totalorder %s274, %s275
    %p286 = scmp.eq.s32.totalorder %s20, 0
    %p287 = por %p285, %p286
    %p288 = scmp.ne.s32.totalorder %s274, %s275
    %p289 = scmp.eq.s32.totalorder %s21, 1
    %p290 = por %p288, %p289
    %p292 = scmp.ne.s32.totalorder %s275, %s291
    %p293 = scmp.eq.s32.totalorder %s21, 0
    %p294 = por %p292, %p293
    %p295 = scmp.le.s32.totalorder 1, %s15
    %p296 = scmp.lt.s32.totalorder %s15, 3
    %p297 = pnand %p295, %p296
    %p298 = pneg %p297
    // Predicated region
    $region9: #{hourglass_apply.10} parent=5 // pred_check
      _
    $region10: #{hourglass_apply.10} parent=5 // pred_check_branch
      %300 = sbr.rel (%p297) target = $region12
    $region11: #{hourglass_apply.10} parent=5 // pred_region
      %s301 = ssub.s32 %s15, 1
      // Predicated region
      $region13: #{hourglass_apply.10} parent=11 // pred_check
        %p302 = pneg %p79
      $region14: #{hourglass_apply.10} parent=11 // pred_check_branch
        %304 = sbr.rel (%p302) target = $region16
      $region15: #{hourglass_apply.10} parent=11 // pred_region
        %p305 = scmp.lt.s32.totalorder %s25, 0
        %s306 = scalar_select %p305, %s25, 0
        %s307 = scalar_lea.vmem %s1, %s306
      $region16: #{hourglass_apply.10} parent=11 // pred_fallthru
        _
      // Predicated region
      $region17: #{hourglass_apply.10} parent=11 // pred_check
        %p308 = pneg %p105
      $region18: #{hourglass_apply.10} parent=11 // pred_check_branch
        %310 = sbr.rel (%p308) target = $region20
      $region19: #{hourglass_apply.10} parent=11 // pred_region
        %p311 = scmp.lt.s32.totalorder %s25, 0
        %s312 = scalar_select %p311, %s25, 0
        %s313 = scalar_lea.vmem %s2, %s312
      $region20: #{hourglass_apply.10} parent=11 // pred_fallthru
        _
      // Predicated region
      $region21: #{hourglass_apply.10} parent=11 // pred_check
        %p314 = pneg %p131
      $region22: #{hourglass_apply.10} parent=11 // pred_check_branch
        %316 = sbr.rel (%p314) target = $region24
      $region23: #{hourglass_apply.10} parent=11 // pred_region
        %p317 = scmp.lt.s32.totalorder %s25, 0
        %s318 = scalar_select %p317, %s25, 0
        %s319 = smul.addr %s318, 4
        %s320 = scalar_lea.vmem %s3, %s319
      $region24: #{hourglass_apply.10} parent=11 // pred_fallthru
        _
      // Predicated region
      $region25: #{hourglass_apply.10} parent=11 // pred_check
        %p321 = pneg %p157
      $region26: #{hourglass_apply.10} parent=11 // pred_check_branch
        %323 = sbr.rel (%p321) target = $region28
      $region27: #{hourglass_apply.10} parent=11 // pred_region
        %p324 = scmp.lt.s32.totalorder %s25, 0
        %s325 = scalar_select %p324, %s25, 0
        %s326 = scalar_lea.vmem %s4, %s325
      $region28: #{hourglass_apply.10} parent=11 // pred_fallthru
        _
      // Predicated region
      $region29: #{hourglass_apply.10} parent=11 // pred_check
        %p327 = pneg %p183
      $region30: #{hourglass_apply.10} parent=11 // pred_check_branch
        %329 = sbr.rel (%p327) target = $region32
      $region31: #{hourglass_apply.10} parent=11 // pred_region
        %p330 = scmp.lt.s32.totalorder %s25, 0
        %s331 = scalar_select %p330, %s25, 0
        %s332 = smul.addr %s331, 9
        %s333 = smul.addr %s332, 2
        %s334 = scalar_lea.vmem %s5, %s333
      $region32: #{hourglass_apply.10} parent=11 // pred_fallthru
        _
      // Predicated region
      $region33: #{hourglass_apply.10} parent=11 // pred_check
        %p335 = pneg %p209
      $region34: #{hourglass_apply.10} parent=11 // pred_check_branch
        %337 = sbr.rel (%p335) target = $region36
      $region35: #{hourglass_apply.10} parent=11 // pred_region
        %p338 = scmp.lt.s32.totalorder %s25, 0
        %s339 = scalar_select %p338, %s25, 0
        %s340 = scalar_lea.vmem %s6, %s339
      $region36: #{hourglass_apply.10} parent=11 // pred_fallthru
        _
      // Predicated region
      $region37: #{hourglass_apply.10} parent=11 // pred_check
        %p341 = pneg %p235
      $region38: #{hourglass_apply.10} parent=11 // pred_check_branch
        %343 = sbr.rel (%p341) target = $region40
      $region39: #{hourglass_apply.10} parent=11 // pred_region
        %p344 = scmp.lt.s32.totalorder %s25, 0
        %s345 = scalar_select %p344, %s25, 0
        %s346 = smul.addr %s345, 2
        %s347 = scalar_lea.vmem %s7, %s346
      $region40: #{hourglass_apply.10} parent=11 // pred_fallthru
        _
      // Predicated region
      $region41: #{hourglass_apply.10} parent=11 // pred_check
        %p348 = pneg %p261
      $region42: #{hourglass_apply.10} parent=11 // pred_check_branch
        %350 = sbr.rel (%p348) target = $region44
      $region43: #{hourglass_apply.10} parent=11 // pred_region
        %p351 = scmp.lt.s32.totalorder %s25, 0
        %s352 = scalar_select %p351, %s25, 0
        %s353 = scalar_lea.vmem %s8, %s352
      $region44: #{hourglass_apply.10} parent=11 // pred_fallthru
        _
    $region12: #{hourglass_apply.10} parent=5 // pred_fallthru
      _
    %p354 = scmp.lt.s32.totalorder %s15, 2
    // Predicated region
    $region45: #{hourglass_apply.10} parent=5 // pred_check
      %p355 = pneg %p354
    $region46: #{hourglass_apply.10} parent=5 // pred_check_branch
      %357 = sbr.rel (%p355) target = $region48
    $region47: #{hourglass_apply.10} parent=5 // pred_region
      // Predicated region
      $region49: #{hourglass_apply.10} parent=47 // pred_check
        %p358 = pneg %p47
      $region50: #{hourglass_apply.10} parent=47 // pred_check_branch
        %360 = sbr.rel (%p358) target = $region52
      $region51: #{hourglass_apply.10} parent=47 // pred_region
        %p361 = scmp.lt.s32.totalorder %s22, 1
        %s362 = scalar_select %p361, %s22, 1
        %s363 = smul.addr %s362, 2
        %s364 = smul.addr %s363, 8
        %s365 = scalar_lea.vmem %s0, %s364
      $region52: #{hourglass_apply.10} parent=47 // pred_fallthru
        _
    $region48: #{hourglass_apply.10} parent=5 // pred_fallthru
      _
    %p366 = scmp.le.s32.totalorder 1, %s15
    %p367 = scmp.lt.s32.totalorder %s15, 3
    %p368 = pnand %p366, %p367
    %p369 = pneg %p368
    // Predicated region
    $region53: #{hourglass_apply.10} parent=5 // pred_check
      _
    $region54: #{hourglass_apply.10} parent=5 // pred_check_branch
      %371 = sbr.rel (%p368) target = $region56
    $region55: #{hourglass_apply.10} parent=5 // pred_region
      %s372 = ssub.s32 %s15, 1
      %p373 = scmp.lt.s32.totalorder %s24, 1
      %s374 = scalar_select %p373, %s24, 1
      %s375 = smul.addr %s374, 2
      %s376 = smul.addr %s375, 8
      %s377 = scalar_lea.vmem %s0, %s376
      %p378 = pneg %p53
      %p379 = pneg %p50
      %p380 = scmp.lt.s32.totalorder %s25, 0
      %s381 = scalar_select %p380, %s25, 0
      %s382 = scalar_lea.vmem %s1, %s381
      %p383 = pneg %p79
      %p384 = pneg %p76
      %p385 = scmp.lt.s32.totalorder %s25, 0
      %s386 = scalar_select %p385, %s25, 0
      %s387 = scalar_lea.vmem %s2, %s386
      %p388 = pneg %p105
      %p389 = pneg %p102
      %p390 = scmp.lt.s32.totalorder %s25, 0
      %s391 = scalar_select %p390, %s25, 0
      %s392 = smul.addr %s391, 4
      %s393 = scalar_lea.vmem %s3, %s392
      %p394 = pneg %p131
      %p395 = pneg %p128
      %p396 = scmp.lt.s32.totalorder %s25, 0
      %s397 = scalar_select %p396, %s25, 0
      %s398 = scalar_lea.vmem %s4, %s397
      %p399 = pneg %p157
      %p400 = pneg %p154
      %p401 = scmp.lt.s32.totalorder %s25, 0
      %s402 = scalar_select %p401, %s25, 0
      %s403 = smul.addr %s402, 9
      %s404 = smul.addr %s403, 2
      %s405 = scalar_lea.vmem %s5, %s404
      %p406 = pneg %p183
      %p407 = pneg %p180
      %p408 = scmp.lt.s32.totalorder %s25, 0
      %s409 = scalar_select %p408, %s25, 0
      %s410 = scalar_lea.vmem %s6, %s409
      %p411 = pneg %p209
      %p412 = pneg %p206
      %p413 = scmp.lt.s32.totalorder %s25, 0
      %s414 = scalar_select %p413, %s25, 0
      %s415 = smul.addr %s414, 2
      %s416 = scalar_lea.vmem %s7, %s415
      %p417 = pneg %p235
      %p418 = pneg %p232
      %p419 = scmp.lt.s32.totalorder %s25, 0
      %s420 = scalar_select %p419, %s25, 0
      %s421 = scalar_lea.vmem %s8, %s420
      %p422 = pneg %p261
      %p423 = pneg %p258
      %p424 = pneg %p287
      %p425 = pneg %p284
      %p426 = scmp.lt.s32.totalorder %s24, 1
      %s427 = scalar_select %p426, %s24, 1
      %s428 = smul.addr %s427, 2
      %s429 = smul.addr %s428, 8
      %s430 = scalar_lea.vmem %s9, %s429
      %p431 = scmp.lt.s32.totalorder %s24, 1
      %s432 = scalar_select %p431, %s24, 1
      %s433 = smul.addr %s432, 2
      %s434 = smul.addr %s433, 8
      %s435 = scalar_lea.vmem %s0, %s434
      %p436 = scmp.lt.s32.totalorder %s25, 0
      %s437 = scalar_select %p436, %s25, 0
      %s438 = scalar_lea.vmem %s1, %s437
      %p439 = scmp.lt.s32.totalorder %s25, 0
      %s440 = scalar_select %p439, %s25, 0
      %s441 = scalar_lea.vmem %s2, %s440
      %p442 = scmp.lt.s32.totalorder %s25, 0
      %s443 = scalar_select %p442, %s25, 0
      %s444 = smul.addr %s443, 4
      %s445 = scalar_lea.vmem %s3, %s444
      %p446 = scmp.lt.s32.totalorder %s25, 0
      %s447 = scalar_select %p446, %s25, 0
      %s448 = scalar_lea.vmem %s4, %s447
      %p449 = scmp.lt.s32.totalorder %s25, 0
      %s450 = scalar_select %p449, %s25, 0
      %s451 = smul.addr %s450, 9
      %s452 = smul.addr %s451, 2
      %s453 = scalar_lea.vmem %s5, %s452
      %p454 = scmp.lt.s32.totalorder %s25, 0
      %s455 = scalar_select %p454, %s25, 0
      %s456 = scalar_lea.vmem %s6, %s455
      %p457 = scmp.lt.s32.totalorder %s25, 0
      %s458 = scalar_select %p457, %s25, 0
      %s459 = smul.addr %s458, 2
      %s460 = scalar_lea.vmem %s7, %s459
      %p461 = scmp.lt.s32.totalorder %s25, 0
      %s462 = scalar_select %p461, %s25, 0
      %s463 = scalar_lea.vmem %s8, %s462
      %p464 = scmp.lt.s32.totalorder %s24, 1
      %s465 = scalar_select %p464, %s24, 1
      %s466 = smul.addr %s465, 2
      %s467 = smul.addr %s466, 8
      %s468 = scalar_lea.vmem %s9, %s467
      %p470 = scmp.eq.s32.totalorder %s25, 0
      // Predicated region
      $region57: #{hourglass_apply.10} parent=55 // pred_check
        %p471 = pneg %p470
      $region58: #{hourglass_apply.10} parent=55 // pred_check_branch
        %473 = sbr.rel (%p471) target = $region60
      $region59: #{hourglass_apply.10} parent=55 // pred_region
        %v474 = vld [vmem:[%s435] sm:$0xff]
        %v475 = vld [vmem:[%s435 + $0x8] sm:$0xff]
        %vm476 = vcmask 64512
        %477 = vst.msk [vmem:[%s468] sm:$0xff] %vm476, %v474
        %478 = vst.msk [vmem:[%s468 + $0x8] sm:$0xff] %vm476, %v475
      $region60: #{hourglass_apply.10} parent=55 // pred_fallthru
        _
      %v479 = vld [vmem:[%s468] sm:$0xff]
      %v480 = vld [vmem:[%s468 + $0x8] sm:$0xff]
      %v481 = vld [vmem:[%s438] sm:$0x1]
      %v483 = vperm.slane %v481, 0
      %v485 = vmul.f32 %v479, %v483
      %v486 = vmul.f32 %v480, %v483
      %v487 = vld [vmem:[%s441] sm:$0x1]
      %v489 = vperm.slane %v487, 0
      %v491 = vadd.f32 %v485, %v489
      %v492 = vadd.f32 %v486, %v489
      %v493 = vmax.f32 %v491, 0.0
      %v494 = vmax.f32 %v492, 0.0
      %v495 = vpack.c.bf16 %v494, %v493
      %v496 = vld [vmem:[%s445] sm:$0xf]
      %v497 = vld [vmem:[%s448] sm:$0x1]
      %v499 = vperm.slane %v497, 0
      %vm501 = vcmask 64512
      %v503 = vsel %vm501, %v495, 0
      %vm505 = vcmask 1043456
      %v507 = vsel %vm505, %v496, 0
      %509 = vmatpush.bf16.msra.mxu0 0
      %510 = vmatpush.bf16.msra.mxu0 0
      %511 = vmatpush.bf16.msra.mxu0 0
      %512 = vmatpush.bf16.msra.mxu0 0
      %513 = vmatpush.bf16.msra.mxu0 0
      %514 = vmatpush.bf16.msra.mxu0 0
      %515 = vmatpush.bf16.msra.mxu0 0
      %516 = vmatpush.bf16.msra.mxu0 %v507
      %517 = vmatmul.bf16.gmra.mxu0 %v503
      %v518 = vpop.f32.mrf.mxu0
      %v519 = vadd.f32 %v499, %v518
      %v520 = vpop.f32.mrf.mxu0
      %v521 = vadd.f32 %v499, %v520
      %522 = vdwg.mxu0
      %v523 = vmax.f32 %v519, 0.0
      %v524 = vmax.f32 %v521, 0.0
      %vm525 = vcmask 29696
      %526 = vst.msk [vmem:[#allocation2] sm:$0x3f] %vm525, 0.0
      %527 = vst.msk [vmem:[#allocation2 + $0x8] sm:$0x3f] %vm525, 0.0
      %528 = vst.msk [vmem:[#allocation2 + $0x10] sm:$0x3f] %vm525, 0.0
      %529 = vst.msk [vmem:[#allocation2 + $0x18] sm:$0x3f] %vm525, 0.0
      %530 = vst.msk [vmem:[#allocation2 + $0x20] sm:$0x3f] %vm525, 0.0
      %531 = vst.msk [vmem:[#allocation2 + $0x28] sm:$0x3f] %vm525, 0.0
      %v534 = vrot.slane %v523, 4
      %v535 = vrot.slane %v524, 4
      %s538 = scalar_lea.vmem [#allocation2], 8
      %vm539 = vcmask 27648
      %540 = vst.msk [vmem:[%s538 + $0x1] sm:$0xf] %vm539, %v523
      %541 = vst.msk [vmem:[%s538 + $0x9] sm:$0xf] %vm539, %v534
      %542 = vst.msk [vmem:[%s538 + $0x11] sm:$0xf] %vm539, %v524
      %543 = vst.msk [vmem:[%s538 + $0x19] sm:$0xf] %vm539, %v535
      %v544 = vld [vmem:[%s453] sm:$0x3]
      %v545 = vld [vmem:[%s453 + $0x2] sm:$0x3]
      %v546 = vld [vmem:[%s453 + $0x4] sm:$0x3]
      %v547 = vld [vmem:[%s453 + $0x6] sm:$0x3]
      %v548 = vld [vmem:[%s453 + $0x8] sm:$0x3]
      %v549 = vld [vmem:[%s453 + $0xa] sm:$0x3]
      %v550 = vld [vmem:[%s453 + $0xc] sm:$0x3]
      %v551 = vld [vmem:[%s453 + $0xe] sm:$0x3]
      %v552 = vld [vmem:[%s453 + $0x10] sm:$0x3]
      %v553 = vld [vmem:[#allocation2] sm:$0xf]
      %v554 = vld [vmem:[#allocation2 + $0x8] sm:$0xf]
      %v555 = vld [vmem:[#allocation2 + $0x10] sm:$0xf]
      %v556 = vld [vmem:[#allocation2 + $0x18] sm:$0xf]
      %561 = vst [vmem:[#allocation1] ss:$2 sm:$0xff] %v553
      %s562 = scalar_lea.vmem [#allocation1], 1
      %563 = vst [vmem:[%s562] ss:$2 sm:$0xff] %v554
      %s564 = scalar_lea.vmem [#allocation1], 16
      %565 = vst [vmem:[%s564] ss:$2 sm:$0xff] %v555
      %s566 = scalar_lea.vmem [#allocation1], 17
      %567 = vst [vmem:[%s566] ss:$2 sm:$0xff] %v556
      %v568 = vld.sshfl [vmem:[#allocation1] sm:$0xff pattern:$0x75316420]
      %v569 = vld.sshfl [vmem:[#allocation1 + $0x10] sm:$0xff pattern:$0x75316420]
      %v572 = vpack.c.bf16 %v569, %v568
      %v573 = vld [vmem:[#allocation2 + $0x1] sm:$0xf]
      %v574 = vld [vmem:[#allocation2 + $0x9] sm:$0xf]
      %v575 = vld [vmem:[#allocation2 + $0x11] sm:$0xf]
      %v576 = vld [vmem:[#allocation2 + $0x19] sm:$0xf]
      %581 = vst [vmem:[#allocation1] ss:$2 sm:$0xff] %v573
      %s582 = scalar_lea.vmem [#allocation1], 1
      %583 = vst [vmem:[%s582] ss:$2 sm:$0xff] %v574
      %s584 = scalar_lea.vmem [#allocation1], 16
      %585 = vst [vmem:[%s584] ss:$2 sm:$0xff] %v575
      %s586 = scalar_lea.vmem [#allocation1], 17
      %587 = vst [vmem:[%s586] ss:$2 sm:$0xff] %v576
      %v588 = vld.sshfl [vmem:[#allocation1] sm:$0xff pattern:$0x75316420]
      %v589 = vld.sshfl [vmem:[#allocation1 + $0x10] sm:$0xff pattern:$0x75316420]
      %v592 = vpack.c.bf16 %v589, %v588
      %vm593 = vcmask 31744
      %v595 = vsel %vm593, %v592, 0
      %vm597 = vcmask 1041408
      %v599 = vsel %vm597, %v545, 0
      %601 = vmatpush.bf16.msra.mxu0 0
      %602 = vmatpush.bf16.msra.mxu0 0
      %603 = vmatpush.bf16.msra.mxu0 0
      %604 = vmatpush.bf16.msra.mxu0 0
      %605 = vmatpush.bf16.msra.mxu0 0
      %606 = vmatpush.bf16.msra.mxu0 0
      %607 = vmatpush.bf16.msra.mxu0 0
      %608 = vmatpush.bf16.msra.mxu0 %v599
      %609 = vmatmul.bf16.gmra.mxu0 %v595
      %v610 = vpop.f32.mrf.mxu0
      %v611 = vadd.f32 0.0, %v610
      %v612 = vpop.f32.mrf.mxu0
      %v613 = vadd.f32 0.0, %v612
      %614 = vdwg.mxu0
      %v616 = vsel %vm593, %v572, 0
      %v619 = vsel %vm597, %v544, 0
      %621 = vmatpush.bf16.msra.mxu0 0
      %622 = vmatpush.bf16.msra.mxu0 0
      %623 = vmatpush.bf16.msra.mxu0 0
      %624 = vmatpush.bf16.msra.mxu0 0
      %625 = vmatpush.bf16.msra.mxu0 0
      %626 = vmatpush.bf16.msra.mxu0 0
      %627 = vmatpush.bf16.msra.mxu0 0
      %628 = vmatpush.bf16.msra.mxu0 %v619
      %629 = vmatmul.bf16.gmra.mxu0 %v616
      %v630 = vpop.f32.mrf.mxu0
      %v631 = vadd.f32 %v611, %v630
      %v632 = vpop.f32.mrf.mxu0
      %v633 = vadd.f32 %v613, %v632
      %634 = vdwg.mxu0
      %v635 = vld [vmem:[#allocation2 + $0x2] sm:$0xf]
      %v636 = vld [vmem:[#allocation2 + $0xa] sm:$0xf]
      %v637 = vld [vmem:[#allocation2 + $0x12] sm:$0xf]
      %v638 = vld [vmem:[#allocation2 + $0x1a] sm:$0xf]
      %643 = vst [vmem:[#allocation1] ss:$2 sm:$0xff] %v635
      %s644 = scalar_lea.vmem [#allocation1], 1
      %645 = vst [vmem:[%s644] ss:$2 sm:$0xff] %v636
      %s646 = scalar_lea.vmem [#allocation1], 16
      %647 = vst [vmem:[%s646] ss:$2 sm:$0xff] %v637
      %s648 = scalar_lea.vmem [#allocation1], 17
      %649 = vst [vmem:[%s648] ss:$2 sm:$0xff] %v638
      %v650 = vld.sshfl [vmem:[#allocation1] sm:$0xff pattern:$0x75316420]
      %v651 = vld.sshfl [vmem:[#allocation1 + $0x10] sm:$0xff pattern:$0x75316420]
      %v654 = vpack.c.bf16 %v651, %v650
      %v656 = vsel %vm593, %v654, 0
      %v659 = vsel %vm597, %v546, 0
      %661 = vmatpush.bf16.msra.mxu0 0
      %662 = vmatpush.bf16.msra.mxu0 0
      %663 = vmatpush.bf16.msra.mxu0 0
      %664 = vmatpush.bf16.msra.mxu0 0
      %665 = vmatpush.bf16.msra.mxu0 0
      %666 = vmatpush.bf16.msra.mxu0 0
      %667 = vmatpush.bf16.msra.mxu0 0
      %668 = vmatpush.bf16.msra.mxu0 %v659
      %669 = vmatmul.bf16.gmra.mxu0 %v656
      %v670 = vpop.f32.mrf.mxu0
      %v671 = vadd.f32 0.0, %v670
      %v672 = vpop.f32.mrf.mxu0
      %v673 = vadd.f32 0.0, %v672
      %674 = vdwg.mxu0
      %v675 = vadd.f32 %v631, %v671
      %v676 = vadd.f32 %v633, %v673
      %v677 = vld [vmem:[%s538] sm:$0xf]
      %v678 = vld [vmem:[%s538 + $0x8] sm:$0xf]
      %v679 = vld [vmem:[%s538 + $0x10] sm:$0xf]
      %v680 = vld [vmem:[%s538 + $0x18] sm:$0xf]
      %685 = vst [vmem:[#allocation1] ss:$2 sm:$0xff] %v677
      %s686 = scalar_lea.vmem [#allocation1], 1
      %687 = vst [vmem:[%s686] ss:$2 sm:$0xff] %v678
      %s688 = scalar_lea.vmem [#allocation1], 16
      %689 = vst [vmem:[%s688] ss:$2 sm:$0xff] %v679
      %s690 = scalar_lea.vmem [#allocation1], 17
      %691 = vst [vmem:[%s690] ss:$2 sm:$0xff] %v680
      %v692 = vld.sshfl [vmem:[#allocation1] sm:$0xff pattern:$0x75316420]
      %v693 = vld.sshfl [vmem:[#allocation1 + $0x10] sm:$0xff pattern:$0x75316420]
      %v696 = vpack.c.bf16 %v693, %v692
      %v698 = vsel %vm593, %v696, 0
      %v701 = vsel %vm597, %v547, 0
      %703 = vmatpush.bf16.msra.mxu0 0
      %704 = vmatpush.bf16.msra.mxu0 0
      %705 = vmatpush.bf16.msra.mxu0 0
      %706 = vmatpush.bf16.msra.mxu0 0
      %707 = vmatpush.bf16.msra.mxu0 0
      %708 = vmatpush.bf16.msra.mxu0 0
      %709 = vmatpush.bf16.msra.mxu0 0
      %710 = vmatpush.bf16.msra.mxu0 %v701
      %711 = vmatmul.bf16.gmra.mxu0 %v698
      %v712 = vpop.f32.mrf.mxu0
      %v713 = vadd.f32 0.0, %v712
      %v714 = vpop.f32.mrf.mxu0
      %v715 = vadd.f32 0.0, %v714
      %716 = vdwg.mxu0
      %v717 = vadd.f32 %v675, %v713
      %v718 = vadd.f32 %v676, %v715
      %v719 = vld [vmem:[%s538 + $0x1] sm:$0xf]
      %v720 = vld [vmem:[%s538 + $0x9] sm:$0xf]
      %v721 = vld [vmem:[%s538 + $0x11] sm:$0xf]
      %v722 = vld [vmem:[%s538 + $0x19] sm:$0xf]
      %727 = vst [vmem:[#allocation1] ss:$2 sm:$0xff] %v719
      %s728 = scalar_lea.vmem [#allocation1], 1
      %729 = vst [vmem:[%s728] ss:$2 sm:$0xff] %v720
      %s730 = scalar_lea.vmem [#allocation1], 16
      %731 = vst [vmem:[%s730] ss:$2 sm:$0xff] %v721
      %s732 = scalar_lea.vmem [#allocation1], 17
      %733 = vst [vmem:[%s732] ss:$2 sm:$0xff] %v722
      %v734 = vld.sshfl [vmem:[#allocation1] sm:$0xff pattern:$0x75316420]
      %v735 = vld.sshfl [vmem:[#allocation1 + $0x10] sm:$0xff pattern:$0x75316420]
      %v738 = vpack.c.bf16 %v735, %v734
      %v740 = vsel %vm593, %v738, 0
      %v743 = vsel %vm597, %v548, 0
      %745 = vmatpush.bf16.msra.mxu0 0
      %746 = vmatpush.bf16.msra.mxu0 0
      %747 = vmatpush.bf16.msra.mxu0 0
      %748 = vmatpush.bf16.msra.mxu0 0
      %749 = vmatpush.bf16.msra.mxu0 0
      %750 = vmatpush.bf16.msra.mxu0 0
      %751 = vmatpush.bf16.msra.mxu0 0
      %752 = vmatpush.bf16.msra.mxu0 %v743
      %753 = vmatmul.bf16.gmra.mxu0 %v740
      %v754 = vpop.f32.mrf.mxu0
      %v755 = vadd.f32 0.0, %v754
      %v756 = vpop.f32.mrf.mxu0
      %v757 = vadd.f32 0.0, %v756
      %758 = vdwg.mxu0
      %v759 = vadd.f32 %v717, %v755
      %v760 = vadd.f32 %v718, %v757
      %v761 = vld [vmem:[%s538 + $0x2] sm:$0xf]
      %v762 = vld [vmem:[%s538 + $0xa] sm:$0xf]
      %v763 = vld [vmem:[%s538 + $0x12] sm:$0xf]
      %v764 = vld [vmem:[%s538 + $0x1a] sm:$0xf]
      %769 = vst [vmem:[#allocation1] ss:$2 sm:$0xff] %v761
      %s770 = scalar_lea.vmem [#allocation1], 1
      %771 = vst [vmem:[%s770] ss:$2 sm:$0xff] %v762
      %s772 = scalar_lea.vmem [#allocation1], 16
      %773 = vst [vmem:[%s772] ss:$2 sm:$0xff] %v763
      %s774 = scalar_lea.vmem [#allocation1], 17
      %775 = vst [vmem:[%s774] ss:$2 sm:$0xff] %v764
      %v776 = vld.sshfl [vmem:[#allocation1] sm:$0xff pattern:$0x75316420]
      %v777 = vld.sshfl [vmem:[#allocation1 + $0x10] sm:$0xff pattern:$0x75316420]
      %v780 = vpack.c.bf16 %v777, %v776
      %v782 = vsel %vm593, %v780, 0
      %v785 = vsel %vm597, %v549, 0
      %787 = vmatpush.bf16.msra.mxu0 0
      %788 = vmatpush.bf16.msra.mxu0 0
      %789 = vmatpush.bf16.msra.mxu0 0
      %790 = vmatpush.bf16.msra.mxu0 0
      %791 = vmatpush.bf16.msra.mxu0 0
      %792 = vmatpush.bf16.msra.mxu0 0
      %793 = vmatpush.bf16.msra.mxu0 0
      %794 = vmatpush.bf16.msra.mxu0 %v785
      %795 = vmatmul.bf16.gmra.mxu0 %v782
      %v796 = vpop.f32.mrf.mxu0
      %v797 = vadd.f32 0.0, %v796
      %v798 = vpop.f32.mrf.mxu0
      %v799 = vadd.f32 0.0, %v798
      %800 = vdwg.mxu0
      %v801 = vadd.f32 %v759, %v797
      %v802 = vadd.f32 %v760, %v799
      %s803 = scalar_lea.vmem [#allocation2], 16
      %v804 = vld [vmem:[%s803] sm:$0xf]
      %v805 = vld [vmem:[%s803 + $0x8] sm:$0xf]
      %v806 = vld [vmem:[%s803 + $0x10] sm:$0xf]
      %v807 = vld [vmem:[%s803 + $0x18] sm:$0xf]
      %812 = vst [vmem:[#allocation1] ss:$2 sm:$0xff] %v804
      %s813 = scalar_lea.vmem [#allocation1], 1
      %814 = vst [vmem:[%s813] ss:$2 sm:$0xff] %v805
      %s815 = scalar_lea.vmem [#allocation1], 16
      %816 = vst [vmem:[%s815] ss:$2 sm:$0xff] %v806
      %s817 = scalar_lea.vmem [#allocation1], 17
      %818 = vst [vmem:[%s817] ss:$2 sm:$0xff] %v807
      %v819 = vld.sshfl [vmem:[#allocation1] sm:$0xff pattern:$0x75316420]
      %v820 = vld.sshfl [vmem:[#allocation1 + $0x10] sm:$0xff pattern:$0x75316420]
      %v823 = vpack.c.bf16 %v820, %v819
      %v825 = vsel %vm593, %v823, 0
      %v828 = vsel %vm597, %v550, 0
      %830 = vmatpush.bf16.msra.mxu0 0
      %831 = vmatpush.bf16.msra.mxu0 0
      %832 = vmatpush.bf16.msra.mxu0 0
      %833 = vmatpush.bf16.msra.mxu0 0
      %834 = vmatpush.bf16.msra.mxu0 0
      %835 = vmatpush.bf16.msra.mxu0 0
      %836 = vmatpush.bf16.msra.mxu0 0
      %837 = vmatpush.bf16.msra.mxu0 %v828
      %838 = vmatmul.bf16.gmra.mxu0 %v825
      %v839 = vpop.f32.mrf.mxu0
      %v840 = vadd.f32 0.0, %v839
      %v841 = vpop.f32.mrf.mxu0
      %v842 = vadd.f32 0.0, %v841
      %843 = vdwg.mxu0
      %v844 = vadd.f32 %v801, %v840
      %v845 = vadd.f32 %v802, %v842
      %v846 = vld [vmem:[%s803 + $0x1] sm:$0xf]
      %v847 = vld [vmem:[%s803 + $0x9] sm:$0xf]
      %v848 = vld [vmem:[%s803 + $0x11] sm:$0xf]
      %v849 = vld [vmem:[%s803 + $0x19] sm:$0xf]
      %854 = vst [vmem:[#allocation1] ss:$2 sm:$0xff] %v846
      %s855 = scalar_lea.vmem [#allocation1], 1
      %856 = vst [vmem:[%s855] ss:$2 sm:$0xff] %v847
      %s857 = scalar_lea.vmem [#allocation1], 16
      %858 = vst [vmem:[%s857] ss:$2 sm:$0xff] %v848
      %s859 = scalar_lea.vmem [#allocation1], 17
      %860 = vst [vmem:[%s859] ss:$2 sm:$0xff] %v849
      %v861 = vld.sshfl [vmem:[#allocation1] sm:$0xff pattern:$0x75316420]
      %v862 = vld.sshfl [vmem:[#allocation1 + $0x10] sm:$0xff pattern:$0x75316420]
      %v865 = vpack.c.bf16 %v862, %v861
      %v867 = vsel %vm593, %v865, 0
      %v870 = vsel %vm597, %v551, 0
      %872 = vmatpush.bf16.msra.mxu0 0
      %873 = vmatpush.bf16.msra.mxu0 0
      %874 = vmatpush.bf16.msra.mxu0 0
      %875 = vmatpush.bf16.msra.mxu0 0
      %876 = vmatpush.bf16.msra.mxu0 0
      %877 = vmatpush.bf16.msra.mxu0 0
      %878 = vmatpush.bf16.msra.mxu0 0
      %879 = vmatpush.bf16.msra.mxu0 %v870
      %880 = vmatmul.bf16.gmra.mxu0 %v867
      %v881 = vpop.f32.mrf.mxu0
      %v882 = vadd.f32 0.0, %v881
      %v883 = vpop.f32.mrf.mxu0
      %v884 = vadd.f32 0.0, %v883
      %885 = vdwg.mxu0
      %v886 = vadd.f32 %v844, %v882
      %v887 = vadd.f32 %v845, %v884
      %v888 = vld [vmem:[%s803 + $0x2] sm:$0xf]
      %v889 = vld [vmem:[%s803 + $0xa] sm:$0xf]
      %v890 = vld [vmem:[%s803 + $0x12] sm:$0xf]
      %v891 = vld [vmem:[%s803 + $0x1a] sm:$0xf]
      %896 = vst [vmem:[#allocation1] ss:$2 sm:$0xff] %v888
      %s897 = scalar_lea.vmem [#allocation1], 1
      %898 = vst [vmem:[%s897] ss:$2 sm:$0xff] %v889
      %s899 = scalar_lea.vmem [#allocation1], 16
      %900 = vst [vmem:[%s899] ss:$2 sm:$0xff] %v890
      %s901 = scalar_lea.vmem [#allocation1], 17
      %902 = vst [vmem:[%s901] ss:$2 sm:$0xff] %v891
      %v903 = vld.sshfl [vmem:[#allocation1] sm:$0xff pattern:$0x75316420]
      %v904 = vld.sshfl [vmem:[#allocation1 + $0x10] sm:$0xff pattern:$0x75316420]
      %v907 = vpack.c.bf16 %v904, %v903
      %v909 = vsel %vm593, %v907, 0
      %v912 = vsel %vm597, %v552, 0
      %914 = vmatpush.bf16.msra.mxu0 0
      %915 = vmatpush.bf16.msra.mxu0 0
      %916 = vmatpush.bf16.msra.mxu0 0
      %917 = vmatpush.bf16.msra.mxu0 0
      %918 = vmatpush.bf16.msra.mxu0 0
      %919 = vmatpush.bf16.msra.mxu0 0
      %920 = vmatpush.bf16.msra.mxu0 0
      %921 = vmatpush.bf16.msra.mxu0 %v912
      %922 = vmatmul.bf16.gmra.mxu0 %v909
      %v923 = vpop.f32.mrf.mxu0
      %v924 = vadd.f32 0.0, %v923
      %v925 = vpop.f32.mrf.mxu0
      %v926 = vadd.f32 0.0, %v925
      %927 = vdwg.mxu0
      %v928 = vadd.f32 %v886, %v924
      %v929 = vadd.f32 %v887, %v926
      %v930 = vld [vmem:[%s456] sm:$0x1]
      %v932 = vperm.slane %v930, 0
      %v934 = vadd.f32 %v928, %v932
      %v935 = vadd.f32 %v929, %v932
      %v936 = vmax.f32 %v934, 0.0
      %v937 = vmax.f32 %v935, 0.0
      %v938 = vpack.c.bf16 %v937, %v936
      %v939 = vld [vmem:[%s460] sm:$0x3]
      %v941 = vsel %vm593, %v938, 0
      %v944 = vsel %vm597, %v939, 0
      %946 = vmatpush.bf16.msra.mxu0 0
      %947 = vmatpush.bf16.msra.mxu0 0
      %948 = vmatpush.bf16.msra.mxu0 0
      %949 = vmatpush.bf16.msra.mxu0 0
      %950 = vmatpush.bf16.msra.mxu0 0
      %951 = vmatpush.bf16.msra.mxu0 0
      %952 = vmatpush.bf16.msra.mxu0 0
      %953 = vmatpush.bf16.msra.mxu0 %v944
      %954 = vmatmul.bf16.gmra.mxu0 %v941
      %v955 = vpop.f32.mrf.mxu0
      %v956 = vadd.f32 0.0, %v955
      %v957 = vpop.f32.mrf.mxu0
      %v958 = vadd.f32 0.0, %v957
      %959 = vdwg.mxu0
      %v960 = vadd.f32 %v479, %v956
      %v961 = vadd.f32 %v480, %v958
      %v962 = vld [vmem:[%s463] sm:$0x1]
      %v964 = vperm.slane %v962, 0
      %v966 = vadd.f32 %v960, %v964
      %v967 = vadd.f32 %v961, %v964
      %968 = vst.msk [vmem:[%s468] sm:$0xff] %vm501, %v966
      %969 = vst.msk [vmem:[%s468 + $0x8] sm:$0xff] %vm501, %v967
      %p970 = scmp.lt.s32.totalorder %s24, 1
      %s971 = scalar_select %p970, %s24, 1
      %s972 = smul.addr %s971, 2
      %s973 = smul.addr %s972, 8
      %s974 = scalar_lea.vmem %s9, %s973
      // Predicated region
      $region61: #{hourglass_apply.10} parent=55 // pred_check
        %p975 = pneg %p284
      $region62: #{hourglass_apply.10} parent=55 // pred_check_branch
        %977 = sbr.rel (%p975) target = $region64
      $region63: #{hourglass_apply.10} parent=55 // pred_region
        _
      $region64: #{hourglass_apply.10} parent=55 // pred_fallthru
        _
    $region56: #{hourglass_apply.10} parent=5 // pred_fallthru
      _
    %p978 = scmp.le.s32.totalorder 2, %s15
    // Predicated region
    $region65: #{hourglass_apply.10} parent=5 // pred_check
      %p979 = pneg %p978
    $region66: #{hourglass_apply.10} parent=5 // pred_check_branch
      %981 = sbr.rel (%p979) target = $region68
    $region67: #{hourglass_apply.10} parent=5 // pred_region
      %s982 = ssub.s32 %s15, 2
      // Predicated region
      $region69: #{hourglass_apply.10} parent=67 // pred_check
        %p983 = pneg %p290
      $region70: #{hourglass_apply.10} parent=67 // pred_check_branch
        %985 = sbr.rel (%p983) target = $region72
      $region71: #{hourglass_apply.10} parent=67 // pred_region
        %p986 = scmp.lt.s32.totalorder %s26, 1
        %s987 = scalar_select %p986, %s26, 1
        %s988 = smul.addr %s987, 2
        %s989 = smul.addr %s988, 8
        %s990 = scalar_lea.vmem %s9, %s989
      $region72: #{hourglass_apply.10} parent=67 // pred_fallthru
        _
    $region68: #{hourglass_apply.10} parent=5 // pred_fallthru
      _
  $region6: #{hourglass_apply.10} parent=0 // loop_footer
    %s19 = sadd.s32 1, %s15
  $region7: #{hourglass_apply.10} parent=0 // loop_footer_branch
    %14 = sbr.rel target = $region3
  $region8: #{hourglass_apply.10} parent=0 // loop_exit
    _

// kernel: hourglass_apply.7
$region0: #{hourglass_apply.7}
  #allocation0 [shape = 'u32[]', space=smem, size = 0x4, offset = 0x4, fixed_abs, tag = 'smem constant byte address 0x4 - core index']
  #allocation1 [shape = 'u32[72,128]{1,0:T(1,128)}', space=vmem, size = 0x9000, scoped, tag = 'internal scratch']
  #allocation2 [shape = 'f32[18,18,4]{2,1,0:T(8,128)}', space=vmem, size = 0x36000, scoped, tag = 'scratch operand']
  %s0 = inlined_call_operand.vmem [shape: f32[2,256,8], index: 0, kind: input, shape index: {}]
  %s1 = inlined_call_operand.vmem [shape: f32[1,1,8], index: 1, kind: input, shape index: {}]
  %s2 = inlined_call_operand.vmem [shape: f32[1,1,8], index: 2, kind: input, shape index: {}]
  %s3 = inlined_call_operand.vmem [shape: bf16[1,8,4], index: 3, kind: input, shape index: {}]
  %s4 = inlined_call_operand.vmem [shape: f32[1,1,4], index: 4, kind: input, shape index: {}]
  %s5 = inlined_call_operand.vmem [shape: bf16[1,9,4,4], index: 5, kind: input, shape index: {}]
  %s6 = inlined_call_operand.vmem [shape: f32[1,1,4], index: 6, kind: input, shape index: {}]
  %s7 = inlined_call_operand.vmem [shape: bf16[1,4,8], index: 7, kind: input, shape index: {}]
  %s8 = inlined_call_operand.vmem [shape: f32[1,1,8], index: 8, kind: input, shape index: {}]
  %s9 = inlined_call_operand.vmem [shape: f32[2,256,8], index: 9, kind: output, shape index: {}]
  %s10 = sld [smem:[#allocation0]]
  $region73: #{hourglass_apply.7} parent=0
    _
  %s12 = ssub.s32 1, %s10
  %s13 = scalar_select 0, %s12, %s10
  loop: start=0, step=1, limit=4
  $region2: #{hourglass_apply.7} parent=0 // loop_pre_header
    _
  $region3: #{hourglass_apply.7} parent=0 // loop_header
    %s15 = sphi 0, %s19
    %p16 = scmp.ge.s32.totalorder %s15, 4
    %s22 = sphi 0, %s34
    %s23 = sphi 0, %s30
    %s24 = sphi 0, %s22
    %s25 = sphi 0, %s23
    %s26 = sphi 0, %s24
    %s27 = sphi 0, %s25
    %s37 = sphi 0, %s39
    %s40 = sphi 0, %s37
    %s41 = sphi 0, %s40
    %s57 = sphi 0, %s41
    %s63 = sphi 0, %s65
    %s66 = sphi 0, %s63
    %s67 = sphi 0, %s66
    %s83 = sphi 0, %s67
    %s89 = sphi 0, %s91
    %s92 = sphi 0, %s89
    %s93 = sphi 0, %s92
    %s109 = sphi 0, %s93
    %s115 = sphi 0, %s117
    %s118 = sphi 0, %s115
    %s119 = sphi 0, %s118
    %s135 = sphi 0, %s119
    %s141 = sphi 0, %s143
    %s144 = sphi 0, %s141
    %s145 = sphi 0, %s144
    %s161 = sphi 0, %s145
    %s167 = sphi 0, %s169
    %s170 = sphi 0, %s167
    %s171 = sphi 0, %s170
    %s187 = sphi 0, %s171
    %s193 = sphi 0, %s195
    %s196 = sphi 0, %s193
    %s197 = sphi 0, %s196
    %s213 = sphi 0, %s197
    %s219 = sphi 0, %s221
    %s222 = sphi 0, %s219
    %s223 = sphi 0, %s222
    %s239 = sphi 0, %s223
    %s245 = sphi 0, %s247
    %s248 = sphi 0, %s245
    %s249 = sphi 0, %s248
    %s265 = sphi 0, %s249
    %s271 = sphi 0, %s273
    %s274 = sphi 0, %s271
    %s275 = sphi 0, %s274
    %s291 = sphi 0, %s275
  $region4: #{hourglass_apply.7} parent=0 // loop_header_branch
    %18 = sbr.rel (%p16) target = $region8
  $region5: #{hourglass_apply.7} parent=0 // loop_body
    %s20 = ssub.s32 %s15, 1
    %s21 = ssub.s32 %s15, 2
    %s28 = sadd.s32 1, %s23
    %p29 = scmp.ge.s32.totalorder %s28, 1
    %s30 = scalar_select %p29, 0, %s28
    %s31 = sadd.s32 1, %s22
    %s32 = scalar_select %p29, %s31, %s22
    %p33 = scmp.ge.s32.totalorder %s32, 2
    %s34 = scalar_select %p33, 0, %s32
    %s35 = ssub.s32 %s22, %s34
    %p36 = scmp.eq.s32.totalorder %s35, 0
    %s38 = sadd.s32 %s37, 1
    %s39 = scalar_select %p36, %s37, %s38
    %p42 = pneg %p36
    %p43 = scmp.eq.s32.totalorder %s15, 1
    %p44 = por %p42, %p43
    %p45 = scmp.ne.s32.totalorder %s37, %s40
    %p46 = scmp.eq.s32.totalorder %s15, 0
    %p47 = por %p45, %p46
    %p48 = scmp.ne.s32.totalorder %s37, %s40
    %p49 = scmp.eq.s32.totalorder %s20, 1
    %p50 = por %p48, %p49
    %p51 = scmp.ne.s32.totalorder %s40, %s41
    %p52 = scmp.eq.s32.totalorder %s20, 0
    %p53 = por %p51, %p52
    %p54 = scmp.ne.s32.totalorder %s40, %s41
    %p55 = scmp.eq.s32.totalorder %s21, 1
    %p56 = por %p54, %p55
    %p58 = scmp.ne.s32.totalorder %s41, %s57
    %p59 = scmp.eq.s32.totalorder %s21, 0
    %p60 = por %p58, %p59
    %s61 = ssub.s32 %s23, %s30
    %p62 = scmp.eq.s32.totalorder %s61, 0
    %s64 = sadd.s32 %s63, 1
    %s65 = scalar_select %p62, %s63, %s64
    %p68 = pneg %p62
    %p69 = scmp.eq.s32.totalorder %s15, 1
    %p70 = por %p68, %p69
    %p71 = scmp.ne.s32.totalorder %s63, %s66
    %p72 = scmp.eq.s32.totalorder %s15, 0
    %p73 = por %p71, %p72
    %p74 = scmp.ne.s32.totalorder %s63, %s66
    %p75 = scmp.eq.s32.totalorder %s20, 1
    %p76 = por %p74, %p75
    %p77 = scmp.ne.s32.totalorder %s66, %s67
    %p78 = scmp.eq.s32.totalorder %s20, 0
    %p79 = por %p77, %p78
    %p80 = scmp.ne.s32.totalorder %s66, %s67
    %p81 = scmp.eq.s32.totalorder %s21, 1
    %p82 = por %p80, %p81
    %p84 = scmp.ne.s32.totalorder %s67, %s83
    %p85 = scmp.eq.s32.totalorder %s21, 0
    %p86 = por %p84, %p85
    %s87 = ssub.s32 %s23, %s30
    %p88 = scmp.eq.s32.totalorder %s87, 0
    %s90 = sadd.s32 %s89, 1
    %s91 = scalar_select %p88, %s89, %s90
    %p94 = pneg %p88
    %p95 = scmp.eq.s32.totalorder %s15, 1
    %p96 = por %p94, %p95
    %p97 = scmp.ne.s32.totalorder %s89, %s92
    %p98 = scmp.eq.s32.totalorder %s15, 0
    %p99 = por %p97, %p98
    %p100 = scmp.ne.s32.totalorder %s89, %s92
    %p101 = scmp.eq.s32.totalorder %s20, 1
    %p102 = por %p100, %p101
    %p103 = scmp.ne.s32.totalorder %s92, %s93
    %p104 = scmp.eq.s32.totalorder %s20, 0
    %p105 = por %p103, %p104
    %p106 = scmp.ne.s32.totalorder %s92, %s93
    %p107 = scmp.eq.s32.totalorder %s21, 1
    %p108 = por %p106, %p107
    %p110 = scmp.ne.s32.totalorder %s93, %s109
    %p111 = scmp.eq.s32.totalorder %s21, 0
    %p112 = por %p110, %p111
    %s113 = ssub.s32 %s23, %s30
    %p114 = scmp.eq.s32.totalorder %s113, 0
    %s116 = sadd.s32 %s115, 1
    %s117 = scalar_select %p114, %s115, %s116
    %p120 = pneg %p114
    %p121 = scmp.eq.s32.totalorder %s15, 1
    %p122 = por %p120, %p121
    %p123 = scmp.ne.s32.totalorder %s115, %s118
    %p124 = scmp.eq.s32.totalorder %s15, 0
    %p125 = por %p123, %p124
    %p126 = scmp.ne.s32.totalorder %s115, %s118
    %p127 = scmp.eq.s32.totalorder %s20, 1
    %p128 = por %p126, %p127
    %p129 = scmp.ne.s32.totalorder %s118, %s119
    %p130 = scmp.eq.s32.totalorder %s20, 0
    %p131 = por %p129, %p130
    %p132 = scmp.ne.s32.totalorder %s118, %s119
    %p133 = scmp.eq.s32.totalorder %s21, 1
    %p134 = por %p132, %p133
    %p136 = scmp.ne.s32.totalorder %s119, %s135
    %p137 = scmp.eq.s32.totalorder %s21, 0
    %p138 = por %p136, %p137
    %s139 = ssub.s32 %s23, %s30
    %p140 = scmp.eq.s32.totalorder %s139, 0
    %s142 = sadd.s32 %s141, 1
    %s143 = scalar_select %p140, %s141, %s142
    %p146 = pneg %p140
    %p147 = scmp.eq.s32.totalorder %s15, 1
    %p148 = por %p146, %p147
    %p149 = scmp.ne.s32.totalorder %s141, %s144
    %p150 = scmp.eq.s32.totalorder %s15, 0
    %p151 = por %p149, %p150
    %p152 = scmp.ne.s32.totalorder %s141, %s144
    %p153 = scmp.eq.s32.totalorder %s20, 1
    %p154 = por %p152, %p153
    %p155 = scmp.ne.s32.totalorder %s144, %s145
    %p156 = scmp.eq.s32.totalorder %s20, 0
    %p157 = por %p155, %p156
    %p158 = scmp.ne.s32.totalorder %s144, %s145
    %p159 = scmp.eq.s32.totalorder %s21, 1
    %p160 = por %p158, %p159
    %p162 = scmp.ne.s32.totalorder %s145, %s161
    %p163 = scmp.eq.s32.totalorder %s21, 0
    %p164 = por %p162, %p163
    %s165 = ssub.s32 %s23, %s30
    %p166 = scmp.eq.s32.totalorder %s165, 0
    %s168 = sadd.s32 %s167, 1
    %s169 = scalar_select %p166, %s167, %s168
    %p172 = pneg %p166
    %p173 = scmp.eq.s32.totalorder %s15, 1
    %p174 = por %p172, %p173
    %p175 = scmp.ne.s32.totalorder %s167, %s170
    %p176 = scmp.eq.s32.totalorder %s15, 0
    %p177 = por %p175, %p176
    %p178 = scmp.ne.s32.totalorder %s167, %s170
    %p179 = scmp.eq.s32.totalorder %s20, 1
    %p180 = por %p178, %p179
    %p181 = scmp.ne.s32.totalorder %s170, %s171
    %p182 = scmp.eq.s32.totalorder %s20, 0
    %p183 = por %p181, %p182
    %p184 = scmp.ne.s32.totalorder %s170, %s171
    %p185 = scmp.eq.s32.totalorder %s21, 1
    %p186 = por %p184, %p185
    %p188 = scmp.ne.s32.totalorder %s171, %s187
    %p189 = scmp.eq.s32.totalorder %s21, 0
    %p190 = por %p188, %p189
    %s191 = ssub.s32 %s23, %s30
    %p192 = scmp.eq.s32.totalorder %s191, 0
    %s194 = sadd.s32 %s193, 1
    %s195 = scalar_select %p192, %s193, %s194
    %p198 = pneg %p192
    %p199 = scmp.eq.s32.totalorder %s15, 1
    %p200 = por %p198, %p199
    %p201 = scmp.ne.s32.totalorder %s193, %s196
    %p202 = scmp.eq.s32.totalorder %s15, 0
    %p203 = por %p201, %p202
    %p204 = scmp.ne.s32.totalorder %s193, %s196
    %p205 = scmp.eq.s32.totalorder %s20, 1
    %p206 = por %p204, %p205
    %p207 = scmp.ne.s32.totalorder %s196, %s197
    %p208 = scmp.eq.s32.totalorder %s20, 0
    %p209 = por %p207, %p208
    %p210 = scmp.ne.s32.totalorder %s196, %s197
    %p211 = scmp.eq.s32.totalorder %s21, 1
    %p212 = por %p210, %p211
    %p214 = scmp.ne.s32.totalorder %s197, %s213
    %p215 = scmp.eq.s32.totalorder %s21, 0
    %p216 = por %p214, %p215
    %s217 = ssub.s32 %s23, %s30
    %p218 = scmp.eq.s32.totalorder %s217, 0
    %s220 = sadd.s32 %s219, 1
    %s221 = scalar_select %p218, %s219, %s220
    %p224 = pneg %p218
    %p225 = scmp.eq.s32.totalorder %s15, 1
    %p226 = por %p224, %p225
    %p227 = scmp.ne.s32.totalorder %s219, %s222
    %p228 = scmp.eq.s32.totalorder %s15, 0
    %p229 = por %p227, %p228
    %p230 = scmp.ne.s32.totalorder %s219, %s222
    %p231 = scmp.eq.s32.totalorder %s20, 1
    %p232 = por %p230, %p231
    %p233 = scmp.ne.s32.totalorder %s222, %s223
    %p234 = scmp.eq.s32.totalorder %s20, 0
    %p235 = por %p233, %p234
    %p236 = scmp.ne.s32.totalorder %s222, %s223
    %p237 = scmp.eq.s32.totalorder %s21, 1
    %p238 = por %p236, %p237
    %p240 = scmp.ne.s32.totalorder %s223, %s239
    %p241 = scmp.eq.s32.totalorder %s21, 0
    %p242 = por %p240, %p241
    %s243 = ssub.s32 %s23, %s30
    %p244 = scmp.eq.s32.totalorder %s243, 0
    %s246 = sadd.s32 %s245, 1
    %s247 = scalar_select %p244, %s245, %s246
    %p250 = pneg %p244
    %p251 = scmp.eq.s32.totalorder %s15, 1
    %p252 = por %p250, %p251
    %p253 = scmp.ne.s32.totalorder %s245, %s248
    %p254 = scmp.eq.s32.totalorder %s15, 0
    %p255 = por %p253, %p254
    %p256 = scmp.ne.s32.totalorder %s245, %s248
    %p257 = scmp.eq.s32.totalorder %s20, 1
    %p258 = por %p256, %p257
    %p259 = scmp.ne.s32.totalorder %s248, %s249
    %p260 = scmp.eq.s32.totalorder %s20, 0
    %p261 = por %p259, %p260
    %p262 = scmp.ne.s32.totalorder %s248, %s249
    %p263 = scmp.eq.s32.totalorder %s21, 1
    %p264 = por %p262, %p263
    %p266 = scmp.ne.s32.totalorder %s249, %s265
    %p267 = scmp.eq.s32.totalorder %s21, 0
    %p268 = por %p266, %p267
    %s269 = ssub.s32 %s22, %s34
    %p270 = scmp.eq.s32.totalorder %s269, 0
    %s272 = sadd.s32 %s271, 1
    %s273 = scalar_select %p270, %s271, %s272
    %p276 = pneg %p270
    %p277 = scmp.eq.s32.totalorder %s15, 1
    %p278 = por %p276, %p277
    %p279 = scmp.ne.s32.totalorder %s271, %s274
    %p280 = scmp.eq.s32.totalorder %s15, 0
    %p281 = por %p279, %p280
    %p282 = scmp.ne.s32.totalorder %s271, %s274
    %p283 = scmp.eq.s32.totalorder %s20, 1
    %p284 = por %p282, %p283
    %p285 = scmp.ne.s32.totalorder %s274, %s275
    %p286 = scmp.eq.s32.totalorder %s20, 0
    %p287 = por %p285, %p286
    %p288 = scmp.ne.s32.totalorder %s274, %s275
    %p289 = scmp.eq.s32.totalorder %s21, 1
    %p290 = por %p288, %p289
    %p292 = scmp.ne.s32.totalorder %s275, %s291
    %p293 = scmp.eq.s32.totalorder %s21, 0
    %p294 = por %p292, %p293
    %p295 = scmp.le.s32.totalorder 1, %s15
    %p296 = scmp.lt.s32.totalorder %s15, 3
    %p297 = pnand %p295, %p296
    %p298 = pneg %p297
    // Predicated region
    $region9: #{hourglass_apply.7} parent=5 // pred_check
      _
    $region10: #{hourglass_apply.7} parent=5 // pred_check_branch
      %300 = sbr.rel (%p297) target = $region12
    $region11: #{hourglass_apply.7} parent=5 // pred_region
      %s301 = ssub.s32 %s15, 1
      // Predicated region
      $region13: #{hourglass_apply.7} parent=11 // pred_check
        %p302 = pneg %p79
      $region14: #{hourglass_apply.7} parent=11 // pred_check_branch
        %304 = sbr.rel (%p302) target = $region16
      $region15: #{hourglass_apply.7} parent=11 // pred_region
        %p305 = scmp.lt.s32.totalorder %s25, 0
        %s306 = scalar_select %p305, %s25, 0
        %s307 = scalar_lea.vmem %s1, %s306
      $region16: #{hourglass_apply.7} parent=11 // pred_fallthru
        _
      // Predicated region
      $region17: #{hourglass_apply.7} parent=11 // pred_check
        %p308 = pneg %p105
      $region18: #{hourglass_apply.7} parent=11 // pred_check_branch
        %310 = sbr.rel (%p308) target = $region20
      $region19: #{hourglass_apply.7} parent=11 // pred_region
        %p311 = scmp.lt.s32.totalorder %s25, 0
        %s312 = scalar_select %p311, %s25, 0
        %s313 = scalar_lea.vmem %s2, %s312
      $region20: #{hourglass_apply.7} parent=11 // pred_fallthru
        _
      // Predicated region
      $region21: #{hourglass_apply.7} parent=11 // pred_check
        %p314 = pneg %p131
      $region22: #{hourglass_apply.7} parent=11 // pred_check_branch
        %316 = sbr.rel (%p314) target = $region24
      $region23: #{hourglass_apply.7} parent=11 // pred_region
        %p317 = scmp.lt.s32.totalorder %s25, 0
        %s318 = scalar_select %p317, %s25, 0
        %s319 = smul.addr %s318, 4
        %s320 = scalar_lea.vmem %s3, %s319
      $region24: #{hourglass_apply.7} parent=11 // pred_fallthru
        _
      // Predicated region
      $region25: #{hourglass_apply.7} parent=11 // pred_check
        %p321 = pneg %p157
      $region26: #{hourglass_apply.7} parent=11 // pred_check_branch
        %323 = sbr.rel (%p321) target = $region28
      $region27: #{hourglass_apply.7} parent=11 // pred_region
        %p324 = scmp.lt.s32.totalorder %s25, 0
        %s325 = scalar_select %p324, %s25, 0
        %s326 = scalar_lea.vmem %s4, %s325
      $region28: #{hourglass_apply.7} parent=11 // pred_fallthru
        _
      // Predicated region
      $region29: #{hourglass_apply.7} parent=11 // pred_check
        %p327 = pneg %p183
      $region30: #{hourglass_apply.7} parent=11 // pred_check_branch
        %329 = sbr.rel (%p327) target = $region32
      $region31: #{hourglass_apply.7} parent=11 // pred_region
        %p330 = scmp.lt.s32.totalorder %s25, 0
        %s331 = scalar_select %p330, %s25, 0
        %s332 = smul.addr %s331, 9
        %s333 = smul.addr %s332, 2
        %s334 = scalar_lea.vmem %s5, %s333
      $region32: #{hourglass_apply.7} parent=11 // pred_fallthru
        _
      // Predicated region
      $region33: #{hourglass_apply.7} parent=11 // pred_check
        %p335 = pneg %p209
      $region34: #{hourglass_apply.7} parent=11 // pred_check_branch
        %337 = sbr.rel (%p335) target = $region36
      $region35: #{hourglass_apply.7} parent=11 // pred_region
        %p338 = scmp.lt.s32.totalorder %s25, 0
        %s339 = scalar_select %p338, %s25, 0
        %s340 = scalar_lea.vmem %s6, %s339
      $region36: #{hourglass_apply.7} parent=11 // pred_fallthru
        _
      // Predicated region
      $region37: #{hourglass_apply.7} parent=11 // pred_check
        %p341 = pneg %p235
      $region38: #{hourglass_apply.7} parent=11 // pred_check_branch
        %343 = sbr.rel (%p341) target = $region40
      $region39: #{hourglass_apply.7} parent=11 // pred_region
        %p344 = scmp.lt.s32.totalorder %s25, 0
        %s345 = scalar_select %p344, %s25, 0
        %s346 = smul.addr %s345, 2
        %s347 = scalar_lea.vmem %s7, %s346
      $region40: #{hourglass_apply.7} parent=11 // pred_fallthru
        _
      // Predicated region
      $region41: #{hourglass_apply.7} parent=11 // pred_check
        %p348 = pneg %p261
      $region42: #{hourglass_apply.7} parent=11 // pred_check_branch
        %350 = sbr.rel (%p348) target = $region44
      $region43: #{hourglass_apply.7} parent=11 // pred_region
        %p351 = scmp.lt.s32.totalorder %s25, 0
        %s352 = scalar_select %p351, %s25, 0
        %s353 = scalar_lea.vmem %s8, %s352
      $region44: #{hourglass_apply.7} parent=11 // pred_fallthru
        _
    $region12: #{hourglass_apply.7} parent=5 // pred_fallthru
      _
    %p354 = scmp.lt.s32.totalorder %s15, 2
    // Predicated region
    $region45: #{hourglass_apply.7} parent=5 // pred_check
      %p355 = pneg %p354
    $region46: #{hourglass_apply.7} parent=5 // pred_check_branch
      %357 = sbr.rel (%p355) target = $region48
    $region47: #{hourglass_apply.7} parent=5 // pred_region
      // Predicated region
      $region49: #{hourglass_apply.7} parent=47 // pred_check
        %p358 = pneg %p47
      $region50: #{hourglass_apply.7} parent=47 // pred_check_branch
        %360 = sbr.rel (%p358) target = $region52
      $region51: #{hourglass_apply.7} parent=47 // pred_region
        %p361 = scmp.lt.s32.totalorder %s22, 1
        %s362 = scalar_select %p361, %s22, 1
        %s363 = smul.addr %s362, 32
        %s364 = smul.addr %s363, 8
        %s365 = scalar_lea.vmem %s0, %s364
      $region52: #{hourglass_apply.7} parent=47 // pred_fallthru
        _
    $region48: #{hourglass_apply.7} parent=5 // pred_fallthru
      _
    %p366 = scmp.le.s32.totalorder 1, %s15
    %p367 = scmp.lt.s32.totalorder %s15, 3
    %p368 = pnand %p366, %p367
    %p369 = pneg %p368
    // Predicated region
    $region53: #{hourglass_apply.7} parent=5 // pred_check
      _
    $region54: #{hourglass_apply.7} parent=5 // pred_check_branch
      %371 = sbr.rel (%p368) target = $region56
    $region55: #{hourglass_apply.7} parent=5 // pred_region
      %s372 = ssub.s32 %s15, 1
      %p373 = scmp.lt.s32.totalorder %s24, 1
      %s374 = scalar_select %p373, %s24, 1
      %s375 = smul.addr %s374, 32
      %s376 = smul.addr %s375, 8
      %s377 = scalar_lea.vmem %s0, %s376
      %p378 = pneg %p53
      %p379 = pneg %p50
      %p380 = scmp.lt.s32.totalorder %s25, 0
      %s381 = scalar_select %p380, %s25, 0
      %s382 = scalar_lea.vmem %s1, %s381
      %p383 = pneg %p79
      %p384 = pneg %p76
      %p385 = scmp.lt.s32.totalorder %s25, 0
      %s386 = scalar_select %p385, %s25, 0
      %s387 = scalar_lea.vmem %s2, %s386
      %p388 = pneg %p105
      %p389 = pneg %p102
      %p390 = scmp.lt.s32.totalorder %s25, 0
      %s391 = scalar_select %p390, %s25, 0
      %s392 = smul.addr %s391, 4
      %s393 = scalar_lea.vmem %s3, %s392
      %p394 = pneg %p131
      %p395 = pneg %p128
      %p396 = scmp.lt.s32.totalorder %s25, 0
      %s397 = scalar_select %p396, %s25, 0
      %s398 = scalar_lea.vmem %s4, %s397
      %p399 = pneg %p157
      %p400 = pneg %p154
      %p401 = scmp.lt.s32.totalorder %s25, 0
      %s402 = scalar_select %p401, %s25, 0
      %s403 = smul.addr %s402, 9
      %s404 = smul.addr %s403, 2
      %s405 = scalar_lea.vmem %s5, %s404
      %p406 = pneg %p183
      %p407 = pneg %p180
      %p408 = scmp.lt.s32.totalorder %s25, 0
      %s409 = scalar_select %p408, %s25, 0
      %s410 = scalar_lea.vmem %s6, %s409
      %p411 = pneg %p209
      %p412 = pneg %p206
      %p413 = scmp.lt.s32.totalorder %s25, 0
      %s414 = scalar_select %p413, %s25, 0
      %s415 = smul.addr %s414, 2
      %s416 = scalar_lea.vmem %s7, %s415
      %p417 = pneg %p235
      %p418 = pneg %p232
      %p419 = scmp.lt.s32.totalorder %s25, 0
      %s420 = scalar_select %p419, %s25, 0
      %s421 = scalar_lea.vmem %s8, %s420
      %p422 = pneg %p261
      %p423 = pneg %p258
      %p424 = pneg %p287
      %p425 = pneg %p284
      %p426 = scmp.lt.s32.totalorder %s24, 1
      %s427 = scalar_select %p426, %s24, 1
      %s428 = smul.addr %s427, 32
      %s429 = smul.addr %s428, 8
      %s430 = scalar_lea.vmem %s9, %s429
      %p431 = scmp.lt.s32.totalorder %s24, 1
      %s432 = scalar_select %p431, %s24, 1
      %s433 = smul.addr %s432, 32
      %s434 = smul.addr %s433, 8
      %s435 = scalar_lea.vmem %s0, %s434
      %p436 = scmp.lt.s32.totalorder %s25, 0
      %s437 = scalar_select %p436, %s25, 0
      %s438 = scalar_lea.vmem %s1, %s437
      %p439 = scmp.lt.s32.totalorder %s25, 0
      %s440 = scalar_select %p439, %s25, 0
      %s441 = scalar_lea.vmem %s2, %s440
      %p442 = scmp.lt.s32.totalorder %s25, 0
      %s443 = scalar_select %p442, %s25, 0
      %s444 = smul.addr %s443, 4
      %s445 = scalar_lea.vmem %s3, %s444
      %p446 = scmp.lt.s32.totalorder %s25, 0
      %s447 = scalar_select %p446, %s25, 0
      %s448 = scalar_lea.vmem %s4, %s447
      %p449 = scmp.lt.s32.totalorder %s25, 0
      %s450 = scalar_select %p449, %s25, 0
      %s451 = smul.addr %s450, 9
      %s452 = smul.addr %s451, 2
      %s453 = scalar_lea.vmem %s5, %s452
      %p454 = scmp.lt.s32.totalorder %s25, 0
      %s455 = scalar_select %p454, %s25, 0
      %s456 = scalar_lea.vmem %s6, %s455
      %p457 = scmp.lt.s32.totalorder %s25, 0
      %s458 = scalar_select %p457, %s25, 0
      %s459 = smul.addr %s458, 2
      %s460 = scalar_lea.vmem %s7, %s459
      %p461 = scmp.lt.s32.totalorder %s25, 0
      %s462 = scalar_select %p461, %s25, 0
      %s463 = scalar_lea.vmem %s8, %s462
      %p464 = scmp.lt.s32.totalorder %s24, 1
      %s465 = scalar_select %p464, %s24, 1
      %s466 = smul.addr %s465, 32
      %s467 = smul.addr %s466, 8
      %s468 = scalar_lea.vmem %s9, %s467
      %p470 = scmp.eq.s32.totalorder %s25, 0
      // Predicated region
      $region57: #{hourglass_apply.7} parent=55 // pred_check
        %p471 = pneg %p470
      $region58: #{hourglass_apply.7} parent=55 // pred_check_branch
        %473 = sbr.rel (%p471) target = $region60
      $region59: #{hourglass_apply.7} parent=55 // pred_region
        %v474 = vld [vmem:[%s435] sm:$0xff]
        %v475 = vld [vmem:[%s435 + $0x8] sm:$0xff]
        %v476 = vld [vmem:[%s435 + $0x10] sm:$0xff]
        %v477 = vld [vmem:[%s435 + $0x18] sm:$0xff]
        %v478 = vld [vmem:[%s435 + $0x20] sm:$0xff]
        %v479 = vld [vmem:[%s435 + $0x28] sm:$0xff]
        %v480 = vld [vmem:[%s435 + $0x30] sm:$0xff]
        %v481 = vld [vmem:[%s435 + $0x38] sm:$0xff]
        %v482 = vld [vmem:[%s435 + $0x40] sm:$0xff]
        %v483 = vld [vmem:[%s435 + $0x48] sm:$0xff]
        %v484 = vld [vmem:[%s435 + $0x50] sm:$0xff]
        %v485 = vld [vmem:[%s435 + $0x58] sm:$0xff]
        %v486 = vld [vmem:[%s435 + $0x60] sm:$0xff]
        %v487 = vld [vmem:[%s435 + $0x68] sm:$0xff]
        %v488 = vld [vmem:[%s435 + $0x70] sm:$0xff]
        %v489 = vld [vmem:[%s435 + $0x78] sm:$0xff]
        %v490 = vld [vmem:[%s435 + $0x80] sm:$0xff]
        %v491 = vld [vmem:[%s435 + $0x88] sm:$0xff]
        %v492 = vld [vmem:[%s435 + $0x90] sm:$0xff]
        %v493 = vld [vmem:[%s435 + $0x98] sm:$0xff]
        %v494 = vld [vmem:[%s435 + $0xa0] sm:$0xff]
        %v495 = vld [vmem:[%s435 + $0xa8] sm:$0xff]
        %v496 = vld [vmem:[%s435 + $0xb0] sm:$0xff]
        %v497 = vld [vmem:[%s435 + $0xb8] sm:$0xff]
        %v498 = vld [vmem:[%s435 + $0xc0] sm:$0xff]
        %v499 = vld [vmem:[%s435 + $0xc8] sm:$0xff]
        %v500 = vld [vmem:[%s435 + $0xd0] sm:$0xff]
        %v501 = vld [vmem:[%s435 + $0xd8] sm:$0xff]
        %v502 = vld [vmem:[%s435 + $0xe0] sm:$0xff]
        %v503 = vld [vmem:[%s435 + $0xe8] sm:$0xff]
        %v504 = vld [vmem:[%s435 + $0xf0] sm:$0xff]
        %v505 = vld [vmem:[%s435 + $0xf8] sm:$0xff]
        %vm506 = vcmask 64512
        %507 = vst.msk [vmem:[%s468] sm:$0xff] %vm506, %v474
        %508 = vst.msk [vmem:[%s468 + $0x8] sm:$0xff] %vm506, %v475
        %509 = vst.msk [vmem:[%s468 + $0x10] sm:$0xff] %vm506, %v476
        %510 = vst.msk [vmem:[%s468 + $0x18] sm:$0xff] %vm506, %v477
        %511 = vst.msk [vmem:[%s468 + $0x20] sm:$0xff] %vm506, %v478
        %512 = vst.msk [vmem:[%s468 + $0x28] sm:$0xff] %vm506, %v479
        %513 = vst.msk [vmem:[%s468 + $0x30] sm:$0xff] %vm506, %v480
        %514 = vst.msk [vmem:[%s468 + $0x38] sm:$0xff] %vm506, %v481
        %515 = vst.msk [vmem:[%s468 + $0x40] sm:$0xff] %vm506, %v482
        %516 = vst.msk [vmem:[%s468 + $0x48] sm:$0xff] %vm506, %v483
        %517 = vst.msk [vmem:[%s468 + $0x50] sm:$0xff] %vm506, %v484
        %518 = vst.msk [vmem:[%s468 + $0x58] sm:$0xff] %vm506, %v485
        %519 = vst.msk [vmem:[%s468 + $0x60] sm:$0xff] %vm506, %v486
        %520 = vst.msk [vmem:[%s468 + $0x68] sm:$0xff] %vm506, %v487
        %521 = vst.msk [vmem:[%s468 + $0x70] sm:$0xff] %vm506, %v488
        %522 = vst.msk [vmem:[%s468 + $0x78] sm:$0xff] %vm506, %v489
        %523 = vst.msk [vmem:[%s468 + $0x80] sm:$0xff] %vm506, %v490
        %524 = vst.msk [vmem:[%s468 + $0x88] sm:$0xff] %vm506, %v491
        %525 = vst.msk [vmem:[%s468 + $0x90] sm:$0xff] %vm506, %v492
        %526 = vst.msk [vmem:[%s468 + $0x98] sm:$0xff] %vm506, %v493
        %527 = vst.msk [vmem:[%s468 + $0xa0] sm:$0xff] %vm506, %v494
        %528 = vst.msk [vmem:[%s468 + $0xa8] sm:$0xff] %vm506, %v495
        %529 = vst.msk [vmem:[%s468 + $0xb0] sm:$0xff] %vm506, %v496
        %530 = vst.msk [vmem:[%s468 + $0xb8] sm:$0xff] %vm506, %v497
        %531 = vst.msk [vmem:[%s468 + $0xc0] sm:$0xff] %vm506, %v498
        %532 = vst.msk [vmem:[%s468 + $0xc8] sm:$0xff] %vm506, %v499
        %533 = vst.msk [vmem:[%s468 + $0xd0] sm:$0xff] %vm506, %v500
        %534 = vst.msk [vmem:[%s468 + $0xd8] sm:$0xff] %vm506, %v501
        %535 = vst.msk [vmem:[%s468 + $0xe0] sm:$0xff] %vm506, %v502
        %536 = vst.msk [vmem:[%s468 + $0xe8] sm:$0xff] %vm506, %v503
        %537 = vst.msk [vmem:[%s468 + $0xf0] sm:$0xff] %vm506, %v504
        %538 = vst.msk [vmem:[%s468 + $0xf8] sm:$0xff] %vm506, %v505
      $region60: #{hourglass_apply.7} parent=55 // pred_fallthru
        _
      %v539 = vld [vmem:[%s468] sm:$0xff]
      %v540 = vld [vmem:[%s468 + $0x8] sm:$0xff]
      %v541 = vld [vmem:[%s468 + $0x10] sm:$0xff]
      %v542 = vld [vmem:[%s468 + $0x18] sm:$0xff]
      %v543 = vld [vmem:[%s468 + $0x20] sm:$0xff]
      %v544 = vld [vmem:[%s468 + $0x28] sm:$0xff]
      %v545 = vld [vmem:[%s468 + $0x30] sm:$0xff]
      %v546 = vld [vmem:[%s468 + $0x38] sm:$0xff]
      %v547 = vld [vmem:[%s468 + $0x40] sm:$0xff]
      %v548 = vld [vmem:[%s468 + $0x48] sm:$0xff]
      %v549 = vld [vmem:[%s468 + $0x50] sm:$0xff]
      %v550 = vld [vmem:[%s468 + $0x58] sm:$0xff]
      %v551 = vld [vmem:[%s468 + $0x60] sm:$0xff]
      %v552 = vld [vmem:[%s468 + $0x68] sm:$0xff]
      %v553 = vld [vmem:[%s468 + $0x70] sm:$0xff]
      %v554 = vld [vmem:[%s468 + $0x78] sm:$0xff]
      %v555 = vld [vmem:[%s468 + $0x80] sm:$0xff]
      %v556 = vld [vmem:[%s468 + $0x88] sm:$0xff]
      %v557 = vld [vmem:[%s468 + $0x90] sm:$0xff]
      %v558 = vld [vmem:[%s468 + $0x98] sm:$0xff]
      %v559 = vld [vmem:[%s468 + $0xa0] sm:$0xff]
      %v560 = vld [vmem:[%s468 + $0xa8] sm:$0xff]
      %v561 = vld [vmem:[%s468 + $0xb0] sm:$0xff]
      %v562 = vld [vmem:[%s468 + $0xb8] sm:$0xff]
      %v563 = vld [vmem:[%s468 + $0xc0] sm:$0xff]
      %v564 = vld [vmem:[%s468 + $0xc8] sm:$0xff]
      %v565 = vld [vmem:[%s468 + $0xd0] sm:$0xff]
      %v566 = vld [vmem:[%s468 + $0xd8] sm:$0xff]
      %v567 = vld [vmem:[%s468 + $0xe0] sm:$0xff]
      %v568 = vld [vmem:[%s468 + $0xe8] sm:$0xff]
      %v569 = vld [vmem:[%s468 + $0xf0] sm:$0xff]
      %v570 = vld [vmem:[%s468 + $0xf8] sm:$0xff]
      %v571 = vld [vmem:[%s438] sm:$0x1]
      %v573 = vperm.slane %v571, 0
      %v575 = vmul.f32 %v539, %v573
      %v576 = vmul.f32 %v540, %v573
      %v577 = vmul.f32 %v541, %v573
      %v578 = vmul.f32 %v542, %v573
      %v579 = vmul.f32 %v543, %v573
      %v580 = vmul.f32 %v544, %v573
      %v581 = vmul.f32 %v545, %v573
      %v582 = vmul.f32 %v546, %v573
      %v583 = vmul.f32 %v547, %v573
      %v584 = vmul.f32 %v548, %v573
      %v585 = vmul.f32 %v549, %v573
      %v586 = vmul.f32 %v550, %v573
      %v587 = vmul.f32 %v551, %v573
      %v588 = vmul.f32 %v552, %v573
      %v589 = vmul.f32 %v553, %v573
      %v590 = vmul.f32 %v554, %v573
      %v591 = vmul.f32 %v555, %v573
      %v592 = vmul.f32 %v556, %v573
      %v593 = vmul.f32 %v557, %v573
      %v594 = vmul.f32 %v558, %v573
      %v595 = vmul.f32 %v559, %v573
      %v596 = vmul.f32 %v560, %v573
      %v597 = vmul.f32 %v561, %v573
      %v598 = vmul.f32 %v562, %v573
      %v599 = vmul.f32 %v563, %v573
      %v600 = vmul.f32 %v564, %v573
      %v601 = vmul.f32 %v565, %v573
      %v602 = vmul.f32 %v566, %v573
      %v603 = vmul.f32 %v567, %v573
      %v604 = vmul.f32 %v568, %v573
      %v605 = vmul.f32 %v569, %v573
      %v606 = vmul.f32 %v570, %v573
      %v607 = vld [vmem:[%s441] sm:$0x1]
      %v609 = vperm.slane %v607, 0
      %v611 = vadd.f32 %v575, %v609
      %v612 = vadd.f32 %v576, %v609
      %v613 = vadd.f32 %v577, %v609
      %v614 = vadd.f32 %v578, %v609
      %v615 = vadd.f32 %v579, %v609
      %v616 = vadd.f32 %v580, %v609
      %v617 = vadd.f32 %v581, %v609
      %v618 = vadd.f32 %v582, %v609
      %v619 = vadd.f32 %v583, %v609
      %v620 = vadd.f32 %v584, %v609
      %v621 = vadd.f32 %v585, %v609
      %v622 = vadd.f32 %v586, %v609
      %v623 = vadd.f32 %v587, %v609
      %v624 = vadd.f32 %v588, %v609
      %v625 = vadd.f32 %v589, %v609
      %v626 = vadd.f32 %v590, %v609
      %v627 = vadd.f32 %v591, %v609
      %v628 = vadd.f32 %v592, %v609
      %v629 = vadd.f32 %v593, %v609
      %v630 = vadd.f32 %v594, %v609
      %v631 = vadd.f32 %v595, %v609
      %v632 = vadd.f32 %v596, %v609
      %v633 = vadd.f32 %v597, %v609
      %v634 = vadd.f32 %v598, %v609
      %v635 = vadd.f32 %v599, %v609
      %v636 = vadd.f32 %v600, %v609
      %v637 = vadd.f32 %v601, %v609
      %v638 = vadd.f32 %v602, %v609
      %v639 = vadd.f32 %v603, %v609
      %v640 = vadd.f32 %v604, %v609
      %v641 = vadd.f32 %v605, %v609
      %v642 = vadd.f32 %v606, %v609
      %v643 = vmax.f32 %v611, 0.0
      %v644 = vmax.f32 %v612, 0.0
      %v645 = vmax.f32 %v613, 0.0
      %v646 = vmax.f32 %v614, 0.0
      %v647 = vmax.f32 %v615, 0.0
      %v648 = vmax.f32 %v616, 0.0
      %v649 = vmax.f32 %v617, 0.0
      %v650 = vmax.f32 %v618, 0.0
      %v651 = vmax.f32 %v619, 0.0
      %v652 = vmax.f32 %v620, 0.0
      %v653 = vmax.f32 %v621, 0.0
      %v654 = vmax.f32 %v622, 0.0
      %v655 = vmax.f32 %v623, 0.0
      %v656 = vmax.f32 %v624, 0.0
      %v657 = vmax.f32 %v625, 0.0
      %v658 = vmax.f32 %v626, 0.0
      %v659 = vmax.f32 %v627, 0.0
      %v660 = vmax.f32 %v628, 0.0
      %v661 = vmax.f32 %v629, 0.0
      %v662 = vmax.f32 %v630, 0.0
      %v663 = vmax.f32 %v631, 0.0
      %v664 = vmax.f32 %v632, 0.0
      %v665 = vmax.f32 %v633, 0.0
      %v666 = vmax.f32 %v634, 0.0
      %v667 = vmax.f32 %v635, 0.0
      %v668 = vmax.f32 %v636, 0.0
      %v669 = vmax.f32 %v637, 0.0
      %v670 = vmax.f32 %v638, 0.0
      %v671 = vmax.f32 %v639, 0.0
      %v672 = vmax.f32 %v640, 0.0
      %v673 = vmax.f32 %v641, 0.0
      %v674 = vmax.f32 %v642, 0.0
      %v675 = vpack.c.bf16 %v644, %v643
      %v676 = vpack.c.bf16 %v646, %v645
      %v677 = vpack.c.bf16 %v648, %v647
      %v678 = vpack.c.bf16 %v650, %v649
      %v679 = vpack.c.bf16 %v652, %v651
      %v680 = vpack.c.bf16 %v654, %v653
      %v681 = vpack.c.bf16 %v656, %v655
      %v682 = vpack.c.bf16 %v658, %v657
      %v683 = vpack.c.bf16 %v660, %v659
      %v684 = vpack.c.bf16 %v662, %v661
      %v685 = vpack.c.bf16 %v664, %v663
      %v686 = vpack.c.bf16 %v666, %v665
      %v687 = vpack.c.bf16 %v668, %v667
      %v688 = vpack.c.bf16 %v670, %v669
      %v689 = vpack.c.bf16 %v672, %v671
      %v690 = vpack.c.bf16 %v674, %v673
      %v691 = vld [vmem:[%s445] sm:$0xf]
      %v692 = vld [vmem:[%s448] sm:$0x1]
      %v694 = vperm.slane %v692, 0
      %vm696 = vcmask 64512
      %v698 = vsel %vm696, %v675, 0
      %v701 = vsel %vm696, %v676, 0
      %v704 = vsel %vm696, %v677, 0
      %v707 = vsel %vm696, %v678, 0
      %v710 = vsel %vm696, %v679, 0
      %v713 = vsel %vm696, %v680, 0
      %v716 = vsel %vm696, %v681, 0
      %v719 = vsel %vm696, %v682, 0
      %v722 = vsel %vm696, %v683, 0
      %v725 = vsel %vm696, %v684, 0
      %v728 = vsel %vm696, %v685, 0
      %v731 = vsel %vm696, %v686, 0
      %v734 = vsel %vm696, %v687, 0
      %v737 = vsel %vm696, %v688, 0
      %v740 = vsel %vm696, %v689, 0
      %v743 = vsel %vm696, %v690, 0
      %vm745 = vcmask 1043456
      %v747 = vsel %vm745, %v691, 0
      %749 = vmatpush.bf16.msra.mxu0 0
      %750 = vmatpush.bf16.msra.mxu0 0
      %751 = vmatpush.bf16.msra.mxu0 0
      %752 = vmatpush.bf16.msra.mxu0 0
      %753 = vmatpush.bf16.msra.mxu0 0
      %754 = vmatpush.bf16.msra.mxu0 0
      %755 = vmatpush.bf16.msra.mxu0 0
      %756 = vmatpush.bf16.msra.mxu0 %v747
      %757 = vmatmul.bf16.gmra.mxu0 %v698
      %v758 = vpop.f32.mrf.mxu0
      %v759 = vadd.f32 %v694, %v758
      %v760 = vpop.f32.mrf.mxu0
      %v761 = vadd.f32 %v694, %v760
      %762 = vmatmul.bf16.gmra.mxu0 %v701
      %v763 = vpop.f32.mrf.mxu0
      %v764 = vadd.f32 %v694, %v763
      %v765 = vpop.f32.mrf.mxu0
      %v766 = vadd.f32 %v694, %v765
      %767 = vmatmul.bf16.gmra.mxu0 %v704
      %v768 = vpop.f32.mrf.mxu0
      %v769 = vadd.f32 %v694, %v768
      %v770 = vpop.f32.mrf.mxu0
      %v771 = vadd.f32 %v694, %v770
      %772 = vmatmul.bf16.gmra.mxu0 %v707
      %v773 = vpop.f32.mrf.mxu0
      %v774 = vadd.f32 %v694, %v773
      %v775 = vpop.f32.mrf.mxu0
      %v776 = vadd.f32 %v694, %v775
      %777 = vmatmul.bf16.gmra.mxu0 %v710
      %v778 = vpop.f32.mrf.mxu0
      %v779 = vadd.f32 %v694, %v778
      %v780 = vpop.f32.mrf.mxu0
      %v781 = vadd.f32 %v694, %v780
      %782 = vmatmul.bf16.gmra.mxu0 %v713
      %v783 = vpop.f32.mrf.mxu0
      %v784 = vadd.f32 %v694, %v783
      %v785 = vpop.f32.mrf.mxu0
      %v786 = vadd.f32 %v694, %v785
      %787 = vmatmul.bf16.gmra.mxu0 %v716
      %v788 = vpop.f32.mrf.mxu0
      %v789 = vadd.f32 %v694, %v788
      %v790 = vpop.f32.mrf.mxu0
      %v791 = vadd.f32 %v694, %v790
      %792 = vmatmul.bf16.gmra.mxu0 %v719
      %v793 = vpop.f32.mrf.mxu0
      %v794 = vadd.f32 %v694, %v793
      %v795 = vpop.f32.mrf.mxu0
      %v796 = vadd.f32 %v694, %v795
      %797 = vmatmul.bf16.gmra.mxu0 %v722
      %v798 = vpop.f32.mrf.mxu0
      %v799 = vadd.f32 %v694, %v798
      %v800 = vpop.f32.mrf.mxu0
      %v801 = vadd.f32 %v694, %v800
      %802 = vmatmul.bf16.gmra.mxu0 %v725
      %v803 = vpop.f32.mrf.mxu0
      %v804 = vadd.f32 %v694, %v803
      %v805 = vpop.f32.mrf.mxu0
      %v806 = vadd.f32 %v694, %v805
      %807 = vmatmul.bf16.gmra.mxu0 %v728
      %v808 = vpop.f32.mrf.mxu0
      %v809 = vadd.f32 %v694, %v808
      %v810 = vpop.f32.mrf.mxu0
      %v811 = vadd.f32 %v694, %v810
      %812 = vmatmul.bf16.gmra.mxu0 %v731
      %v813 = vpop.f32.mrf.mxu0
      %v814 = vadd.f32 %v694, %v813
      %v815 = vpop.f32.mrf.mxu0
      %v816 = vadd.f32 %v694, %v815
      %817 = vmatmul.bf16.gmra.mxu0 %v734
      %v818 = vpop.f32.mrf.mxu0
      %v819 = vadd.f32 %v694, %v818
      %v820 = vpop.f32.mrf.mxu0
      %v821 = vadd.f32 %v694, %v820
      %822 = vmatmul.bf16.gmra.mxu0 %v737
      %v823 = vpop.f32.mrf.mxu0
      %v824 = vadd.f32 %v694, %v823
      %v825 = vpop.f32.mrf.mxu0
      %v826 = vadd.f32 %v694, %v825
      %827 = vmatmul.bf16.gmra.mxu0 %v740
      %v828 = vpop.f32.mrf.mxu0
      %v829 = vadd.f32 %v694, %v828
      %v830 = vpop.f32.mrf.mxu0
      %v831 = vadd.f32 %v694, %v830
      %832 = vmatmul.bf16.gmra.mxu0 %v743
      %v833 = vpop.f32.mrf.mxu0
      %v834 = vadd.f32 %v694, %v833
      %v835 = vpop.f32.mrf.mxu0
      %v836 = vadd.f32 %v694, %v835
      %837 = vdwg.mxu0
      %v838 = vmax.f32 %v759, 0.0
      %v839 = vmax.f32 %v761, 0.0
      %v840 = vmax.f32 %v764, 0.0
      %v841 = vmax.f32 %v766, 0.0
      %v842 = vmax.f32 %v769, 0.0
      %v843 = vmax.f32 %v771, 0.0
      %v844 = vmax.f32 %v774, 0.0
      %v845 = vmax.f32 %v776, 0.0
      %v846 = vmax.f32 %v779, 0.0
      %v847 = vmax.f32 %v781, 0.0
      %v848 = vmax.f32 %v784, 0.0
      %v849 = vmax.f32 %v786, 0.0
      %v850 = vmax.f32 %v789, 0.0
      %v851 = vmax.f32 %v791, 0.0
      %v852 = vmax.f32 %v794, 0.0
      %v853 = vmax.f32 %v796, 0.0
      %v854 = vmax.f32 %v799, 0.0
      %v855 = vmax.f32 %v801, 0.0
      %v856 = vmax.f32 %v804, 0.0
      %v857 = vmax.f32 %v806, 0.0
      %v858 = vmax.f32 %v809, 0.0
      %v859 = vmax.f32 %v811, 0.0
      %v860 = vmax.f32 %v814, 0.0
      %v861 = vmax.f32 %v816, 0.0
      %v862 = vmax.f32 %v819, 0.0
      %v863 = vmax.f32 %v821, 0.0
      %v864 = vmax.f32 %v824, 0.0
      %v865 = vmax.f32 %v826, 0.0
      %v866 = vmax.f32 %v829, 0.0
      %v867 = vmax.f32 %v831, 0.0
      %v868 = vmax.f32 %v834, 0.0
      %v869 = vmax.f32 %v836, 0.0
      %vm870 = vcmask 31744
      %871 = vst.msk [vmem:[#allocation2] sm:$0xff] %vm870, 0.0
      %872 = vst.msk [vmem:[#allocation2 + $0x8] sm:$0xff] %vm870, 0.0
      %vm873 = vcmask 25600
      %874 = vst.msk [vmem:[#allocation2 + $0x10] sm:$0x3] %vm873, 0.0
      %875 = vst.msk [vmem:[#allocation2 + $0x18] sm:$0xff] %vm870, 0.0
      %876 = vst.msk [vmem:[#allocation2 + $0x20] sm:$0xff] %vm870, 0.0
      %877 = vst.msk [vmem:[#allocation2 + $0x28] sm:$0x3] %vm873, 0.0
      %878 = vst.msk [vmem:[#allocation2 + $0x30] sm:$0xff] %vm870, 0.0
      %879 = vst.msk [vmem:[#allocation2 + $0x38] sm:$0xff] %vm870, 0.0
      %880 = vst.msk [vmem:[#allocation2 + $0x40] sm:$0x3] %vm873, 0.0
      %881 = vst.msk [vmem:[#allocation2 + $0x48] sm:$0xff] %vm870, 0.0
      %882 = vst.msk [vmem:[#allocation2 + $0x50] sm:$0xff] %vm870, 0.0
      %883 = vst.msk [vmem:[#allocation2 + $0x58] sm:$0x3] %vm873, 0.0
      %884 = vst.msk [vmem:[#allocation2 + $0x60] sm:$0xff] %vm870, 0.0
      %885 = vst.msk [vmem:[#allocation2 + $0x68] sm:$0xff] %vm870, 0.0
      %886 = vst.msk [vmem:[#allocation2 + $0x70] sm:$0x3] %vm873, 0.0
      %887 = vst.msk [vmem:[#allocation2 + $0x78] sm:$0xff] %vm870, 0.0
      %888 = vst.msk [vmem:[#allocation2 + $0x80] sm:$0xff] %vm870, 0.0
      %889 = vst.msk [vmem:[#allocation2 + $0x88] sm:$0x3] %vm873, 0.0
      %890 = vst.msk [vmem:[#allocation2 + $0x90] sm:$0xff] %vm870, 0.0
      %891 = vst.msk [vmem:[#allocation2 + $0x98] sm:$0xff] %vm870, 0.0
      %892 = vst.msk [vmem:[#allocation2 + $0xa0] sm:$0x3] %vm873, 0.0
      %893 = vst.msk [vmem:[#allocation2 + $0xa8] sm:$0xff] %vm870, 0.0
      %894 = vst.msk [vmem:[#allocation2 + $0xb0] sm:$0xff] %vm870, 0.0
      %895 = vst.msk [vmem:[#allocation2 + $0xb8] sm:$0x3] %vm873, 0.0
      %896 = vst.msk [vmem:[#allocation2 + $0xc0] sm:$0xff] %vm870, 0.0
      %897 = vst.msk [vmem:[#allocation2 + $0xc8] sm:$0xff] %vm870, 0.0
      %898 = vst.msk [vmem:[#allocation2 + $0xd0] sm:$0x3] %vm873, 0.0
      %899 = vst.msk [vmem:[#allocation2 + $0xd8] sm:$0xff] %vm870, 0.0
      %900 = vst.msk [vmem:[#allocation2 + $0xe0] sm:$0xff] %vm870, 0.0
      %901 = vst.msk [vmem:[#allocation2 + $0xe8] sm:$0x3] %vm873, 0.0
      %902 = vst.msk [vmem:[#allocation2 + $0xf0] sm:$0xff] %vm870, 0.0
      %903 = vst.msk [vmem:[#allocation2 + $0xf8] sm:$0xff] %vm870, 0.0
      %904 = vst.msk [vmem:[#allocation2 + $0x100] sm:$0x3] %vm873, 0.0
      %905 = vst.msk [vmem:[#allocation2 + $0x108] sm:$0xff] %vm870, 0.0
      %906 = vst.msk [vmem:[#allocation2 + $0x110] sm:$0xff] %vm870, 0.0
      %907 = vst.msk [vmem:[#allocation2 + $0x118] sm:$0x3] %vm873, 0.0
      %908 = vst.msk [vmem:[#allocation2 + $0x120] sm:$0xff] %vm870, 0.0
      %909 = vst.msk [vmem:[#allocation2 + $0x128] sm:$0xff] %vm870, 0.0
      %910 = vst.msk [vmem:[#allocation2 + $0x130] sm:$0x3] %vm873, 0.0
      %911 = vst.msk [vmem:[#allocation2 + $0x138] sm:$0xff] %vm870, 0.0
      %912 = vst.msk [vmem:[#allocation2 + $0x140] sm:$0xff] %vm870, 0.0
      %913 = vst.msk [vmem:[#allocation2 + $0x148] sm:$0x3] %vm873, 0.0
      %914 = vst.msk [vmem:[#allocation2 + $0x150] sm:$0xff] %vm870, 0.0
      %915 = vst.msk [vmem:[#allocation2 + $0x158] sm:$0xff] %vm870, 0.0
      %916 = vst.msk [vmem:[#allocation2 + $0x160] sm:$0x3] %vm873, 0.0
      %917 = vst.msk [vmem:[#allocation2 + $0x168] sm:$0xff] %vm870, 0.0
      %918 = vst.msk [vmem:[#allocation2 + $0x170] sm:$0xff] %vm870, 0.0
      %919 = vst.msk [vmem:[#allocation2 + $0x178] sm:$0x3] %vm873, 0.0
      %920 = vst.msk [vmem:[#allocation2 + $0x180] sm:$0xff] %vm870, 0.0
      %921 = vst.msk [vmem:[#allocation2 + $0x188] sm:$0xff] %vm870, 0.0
      %922 = vst.msk [vmem:[#allocation2 + $0x190] sm:$0x3] %vm873, 0.0
      %923 = vst.msk [vmem:[#allocation2 + $0x198] sm:$0xff] %vm870, 0.0
      %924 = vst.msk [vmem:[#allocation2 + $0x1a0] sm:$0xff] %vm870, 0.0
      %925 = vst.msk [vmem:[#allocation2 + $0x1a8] sm:$0x3] %vm873, 0.0
      %s926 = scalar_lea.vmem [#allocation2], 24
      %927 = vst.msk [vmem:[%s926 + $0x1] sm:$0xff] %vm870, %v838
      %928 = vst.msk [vmem:[%s926 + $0x9] sm:$0xff] %vm870, %v839
      %929 = vst.msk [vmem:[%s926 + $0x19] sm:$0xff] %vm870, %v840
      %930 = vst.msk [vmem:[%s926 + $0x21] sm:$0xff] %vm870, %v841
      %931 = vst.msk [vmem:[%s926 + $0x31] sm:$0xff] %vm870, %v842
      %932 = vst.msk [vmem:[%s926 + $0x39] sm:$0xff] %vm870, %v843
      %933 = vst.msk [vmem:[%s926 + $0x49] sm:$0xff] %vm870, %v844
      %934 = vst.msk [vmem:[%s926 + $0x51] sm:$0xff] %vm870, %v845
      %935 = vst.msk [vmem:[%s926 + $0x61] sm:$0xff] %vm870, %v846
      %936 = vst.msk [vmem:[%s926 + $0x69] sm:$0xff] %vm870, %v847
      %937 = vst.msk [vmem:[%s926 + $0x79] sm:$0xff] %vm870, %v848
      %938 = vst.msk [vmem:[%s926 + $0x81] sm:$0xff] %vm870, %v849
      %939 = vst.msk [vmem:[%s926 + $0x91] sm:$0xff] %vm870, %v850
      %940 = vst.msk [vmem:[%s926 + $0x99] sm:$0xff] %vm870, %v851
      %941 = vst.msk [vmem:[%s926 + $0xa9] sm:$0xff] %vm870, %v852
      %942 = vst.msk [vmem:[%s926 + $0xb1] sm:$0xff] %vm870, %v853
      %943 = vst.msk [vmem:[%s926 + $0xc1] sm:$0xff] %vm870, %v854
      %944 = vst.msk [vmem:[%s926 + $0xc9] sm:$0xff] %vm870, %v855
      %945 = vst.msk [vmem:[%s926 + $0xd9] sm:$0xff] %vm870, %v856
      %946 = vst.msk [vmem:[%s926 + $0xe1] sm:$0xff] %vm870, %v857
      %947 = vst.msk [vmem:[%s926 + $0xf1] sm:$0xff] %vm870, %v858
      %948 = vst.msk [vmem:[%s926 + $0xf9] sm:$0xff] %vm870, %v859
      %949 = vst.msk [vmem:[%s926 + $0x109] sm:$0xff] %vm870, %v860
      %950 = vst.msk [vmem:[%s926 + $0x111] sm:$0xff] %vm870, %v861
      %951 = vst.msk [vmem:[%s926 + $0x121] sm:$0xff] %vm870, %v862
      %952 = vst.msk [vmem:[%s926 + $0x129] sm:$0xff] %vm870, %v863
      %953 = vst.msk [vmem:[%s926 + $0x139] sm:$0xff] %vm870, %v864
      %954 = vst.msk [vmem:[%s926 + $0x141] sm:$0xff] %vm870, %v865
      %955 = vst.msk [vmem:[%s926 + $0x151] sm:$0xff] %vm870, %v866
      %956 = vst.msk [vmem:[%s926 + $0x159] sm:$0xff] %vm870, %v867
      %957 = vst.msk [vmem:[%s926 + $0x169] sm:$0xff] %vm870, %v868
      %958 = vst.msk [vmem:[%s926 + $0x171] sm:$0xff] %vm870, %v869
      %v959 = vld [vmem:[%s453] sm:$0x3]
      %v960 = vld [vmem:[%s453 + $0x2] sm:$0x3]
      %v961 = vld [vmem:[%s453 + $0x4] sm:$0x3]
      %v962 = vld [vmem:[%s453 + $0x6] sm:$0x3]
      %v963 = vld [vmem:[%s453 + $0x8] sm:$0x3]
      %v964 = vld [vmem:[%s453 + $0xa] sm:$0x3]
      %v965 = vld [vmem:[%s453 + $0xc] sm:$0x3]
      %v966 = vld [vmem:[%s453 + $0xe] sm:$0x3]
      %v967 = vld [vmem:[%s453 + $0x10] sm:$0x3]
      %v968 = vld [vmem:[#allocation2] sm:$0xff]
      %v969 = vld [vmem:[#allocation2 + $0x8] sm:$0xff]
      %v970 = vld [vmem:[#allocation2 + $0x18] sm:$0xff]
      %v971 = vld [vmem:[#allocation2 + $0x20] sm:$0xff]
      %v972 = vld [vmem:[#allocation2 + $0x30] sm:$0xff]
      %v973 = vld [vmem:[#allocation2 + $0x38] sm:$0xff]
      %v974 = vld [vmem:[#allocation2 + $0x48] sm:$0xff]
      %v975 = vld [vmem:[#allocation2 + $0x50] sm:$0xff]
      %v976 = vld [vmem:[#allocation2 + $0x60] sm:$0xff]
      %v977 = vld [vmem:[#allocation2 + $0x68] sm:$0xff]
      %v978 = vld [vmem:[#allocation2 + $0x78] sm:$0xff]
      %v979 = vld [vmem:[#allocation2 + $0x80] sm:$0xff]
      %v980 = vld [vmem:[#allocation2 + $0x90] sm:$0xff]
      %v981 = vld [vmem:[#allocation2 + $0x98] sm:$0xff]
      %v982 = vld [vmem:[#allocation2 + $0xa8] sm:$0xff]
      %v983 = vld [vmem:[#allocation2 + $0xb0] sm:$0xff]
      %v984 = vld [vmem:[#allocation2 + $0xc0] sm:$0xff]
      %v985 = vld [vmem:[#allocation2 + $0xc8] sm:$0xff]
      %v986 = vld [vmem:[#allocation2 + $0xd8] sm:$0xff]
      %v987 = vld [vmem:[#allocation2 + $0xe0] sm:$0xff]
      %v988 = vld [vmem:[#allocation2 + $0xf0] sm:$0xff]
      %v989 = vld [vmem:[#allocation2 + $0xf8] sm:$0xff]
      %v990 = vld [vmem:[#allocation2 + $0x108] sm:$0xff]
      %v991 = vld [vmem:[#allocation2 + $0x110] sm:$0xff]
      %v992 = vld [vmem:[#allocation2 + $0x120] sm:$0xff]
      %v993 = vld [vmem:[#allocation2 + $0x128] sm:$0xff]
      %v994 = vld [vmem:[#allocation2 + $0x138] sm:$0xff]
      %v995 = vld [vmem:[#allocation2 + $0x140] sm:$0xff]
      %v996 = vld [vmem:[#allocation2 + $0x150] sm:$0xff]
      %v997 = vld [vmem:[#allocation2 + $0x158] sm:$0xff]
      %v998 = vld [vmem:[#allocation2 + $0x168] sm:$0xff]
      %v999 = vld [vmem:[#allocation2 + $0x170] sm:$0xff]
      %v1000 = vpack.c.bf16 %v969, %v968
      %v1001 = vpack.c.bf16 %v971, %v970
      %v1002 = vpack.c.bf16 %v973, %v972
      %v1003 = vpack.c.bf16 %v975, %v974
      %v1004 = vpack.c.bf16 %v977, %v976
      %v1005 = vpack.c.bf16 %v979, %v978
      %v1006 = vpack.c.bf16 %v981, %v980
      %v1007 = vpack.c.bf16 %v983, %v982
      %v1008 = vpack.c.bf16 %v985, %v984
      %v1009 = vpack.c.bf16 %v987, %v986
      %v1010 = vpack.c.bf16 %v989, %v988
      %v1011 = vpack.c.bf16 %v991, %v990
      %v1012 = vpack.c.bf16 %v993, %v992
      %v1013 = vpack.c.bf16 %v995, %v994
      %v1014 = vpack.c.bf16 %v997, %v996
      %v1015 = vpack.c.bf16 %v999, %v998
      %v1016 = vld [vmem:[#allocation2 + $0x1] sm:$0xff]
      %v1017 = vld [vmem:[#allocation2 + $0x9] sm:$0xff]
      %v1018 = vld [vmem:[#allocation2 + $0x19] sm:$0xff]
      %v1019 = vld [vmem:[#allocation2 + $0x21] sm:$0xff]
      %v1020 = vld [vmem:[#allocation2 + $0x31] sm:$0xff]
      %v1021 = vld [vmem:[#allocation2 + $0x39] sm:$0xff]
      %v1022 = vld [vmem:[#allocation2 + $0x49] sm:$0xff]
      %v1023 = vld [vmem:[#allocation2 + $0x51] sm:$0xff]
      %v1024 = vld [vmem:[#allocation2 + $0x61] sm:$0xff]
      %v1025 = vld [vmem:[#allocation2 + $0x69] sm:$0xff]
      %v1026 = vld [vmem:[#allocation2 + $0x79] sm:$0xff]
      %v1027 = vld [vmem:[#allocation2 + $0x81] sm:$0xff]
      %v1028 = vld [vmem:[#allocation2 + $0x91] sm:$0xff]
      %v1029 = vld [vmem:[#allocation2 + $0x99] sm:$0xff]
      %v1030 = vld [vmem:[#allocation2 + $0xa9] sm:$0xff]
      %v1031 = vld [vmem:[#allocation2 + $0xb1] sm:$0xff]
      %v1032 = vld [vmem:[#allocation2 + $0xc1] sm:$0xff]
      %v1033 = vld [vmem:[#allocation2 + $0xc9] sm:$0xff]
      %v1034 = vld [vmem:[#allocation2 + $0xd9] sm:$0xff]
      %v1035 = vld [vmem:[#allocation2 + $0xe1] sm:$0xff]
      %v1036 = vld [vmem:[#allocation2 + $0xf1] sm:$0xff]
      %v1037 = vld [vmem:[#allocation2 + $0xf9] sm:$0xff]
      %v1038 = vld [vmem:[#allocation2 + $0x109] sm:$0xff]
      %v1039 = vld [vmem:[#allocation2 + $0x111] sm:$0xff]
      %v1040 = vld [vmem:[#allocation2 + $0x121] sm:$0xff]
      %v1041 = vld [vmem:[#allocation2 + $0x129] sm:$0xff]
      %v1042 = vld [vmem:[#allocation2 + $0x139] sm:$0xff]
      %v1043 = vld [vmem:[#allocation2 + $0x141] sm:$0xff]
      %v1044 = vld [vmem:[#allocation2 + $0x151] sm:$0xff]
      %v1045 = vld [vmem:[#allocation2 + $0x159] sm:$0xff]
      %v1046 = vld [vmem:[#allocation2 + $0x169] sm:$0xff]
      %v1047 = vld [vmem:[#allocation2 + $0x171] sm:$0xff]
      %v1048 = vpack.c.bf16 %v1017, %v1016
      %v1049 = vpack.c.bf16 %v1019, %v1018
      %v1050 = vpack.c.bf16 %v1021, %v1020
      %v1051 = vpack.c.bf16 %v1023, %v1022
      %v1052 = vpack.c.bf16 %v1025, %v1024
      %v1053 = vpack.c.bf16 %v1027, %v1026
      %v1054 = vpack.c.bf16 %v1029, %v1028
      %v1055 = vpack.c.bf16 %v1031, %v1030
      %v1056 = vpack.c.bf16 %v1033, %v1032
      %v1057 = vpack.c.bf16 %v1035, %v1034
      %v1058 = vpack.c.bf16 %v1037, %v1036
      %v1059 = vpack.c.bf16 %v1039, %v1038
      %v1060 = vpack.c.bf16 %v1041, %v1040
      %v1061 = vpack.c.bf16 %v1043, %v1042
      %v1062 = vpack.c.bf16 %v1045, %v1044
      %v1063 = vpack.c.bf16 %v1047, %v1046
      %v1065 = vsel %vm870, %v1048, 0
      %v1068 = vsel %vm870, %v1049, 0
      %v1071 = vsel %vm870, %v1050, 0
      %v1074 = vsel %vm870, %v1051, 0
      %v1077 = vsel %vm870, %v1052, 0
      %v1080 = vsel %vm870, %v1053, 0
      %v1083 = vsel %vm870, %v1054, 0
      %v1086 = vsel %vm870, %v1055, 0
      %v1089 = vsel %vm870, %v1056, 0
      %v1092 = vsel %vm870, %v1057, 0
      %v1095 = vsel %vm870, %v1058, 0
      %v1098 = vsel %vm870, %v1059, 0
      %v1101 = vsel %vm870, %v1060, 0
      %v1104 = vsel %vm870, %v1061, 0
      %v1107 = vsel %vm870, %v1062, 0
      %v1110 = vsel %vm870, %v1063, 0
      %vm1112 = vcmask 1041408
      %v1114 = vsel %vm1112, %v960, 0
      %1116 = vmatpush.bf16.msra.mxu0 0
      %1117 = vmatpush.bf16.msra.mxu0 0
      %1118 = vmatpush.bf16.msra.mxu0 0
      %1119 = vmatpush.bf16.msra.mxu0 0
      %1120 = vmatpush.bf16.msra.mxu0 0
      %1121 = vmatpush.bf16.msra.mxu0 0
      %1122 = vmatpush.bf16.msra.mxu0 0
      %1123 = vmatpush.bf16.msra.mxu0 %v1114
      %1124 = vmatmul.bf16.gmra.mxu0 %v1065
      %v1125 = vpop.f32.mrf.mxu0
      %v1126 = vadd.f32 0.0, %v1125
      %v1127 = vpop.f32.mrf.mxu0
      %v1128 = vadd.f32 0.0, %v1127
      %1129 = vmatmul.bf16.gmra.mxu0 %v1068
      %v1130 = vpop.f32.mrf.mxu0
      %v1131 = vadd.f32 0.0, %v1130
      %v1132 = vpop.f32.mrf.mxu0
      %v1133 = vadd.f32 0.0, %v1132
      %1134 = vmatmul.bf16.gmra.mxu0 %v1071
      %v1135 = vpop.f32.mrf.mxu0
      %v1136 = vadd.f32 0.0, %v1135
      %v1137 = vpop.f32.mrf.mxu0
      %v1138 = vadd.f32 0.0, %v1137
      %1139 = vmatmul.bf16.gmra.mxu0 %v1074
      %v1140 = vpop.f32.mrf.mxu0
      %v1141 = vadd.f32 0.0, %v1140
      %v1142 = vpop.f32.mrf.mxu0
      %v1143 = vadd.f32 0.0, %v1142
      %1144 = vmatmul.bf16.gmra.mxu0 %v1077
      %v1145 = vpop.f32.mrf.mxu0
      %v1146 = vadd.f32 0.0, %v1145
      %v1147 = vpop.f32.mrf.mxu0
      %v1148 = vadd.f32 0.0, %v1147
      %1149 = vmatmul.bf16.gmra.mxu0 %v1080
      %v1150 = vpop.f32.mrf.mxu0
      %v1151 = vadd.f32 0.0, %v1150
      %v1152 = vpop.f32.mrf.mxu0
      %v1153 = vadd.f32 0.0, %v1152
      %1154 = vmatmul.bf16.gmra.mxu0 %v1083
      %v1155 = vpop.f32.mrf.mxu0
      %v1156 = vadd.f32 0.0, %v1155
      %v1157 = vpop.f32.mrf.mxu0
      %v1158 = vadd.f32 0.0, %v1157
      %1159 = vmatmul.bf16.gmra.mxu0 %v1086
      %v1160 = vpop.f32.mrf.mxu0
      %v1161 = vadd.f32 0.0, %v1160
      %v1162 = vpop.f32.mrf.mxu0
      %v1163 = vadd.f32 0.0, %v1162
      %1164 = vmatmul.bf16.gmra.mxu0 %v1089
      %v1165 = vpop.f32.mrf.mxu0
      %v1166 = vadd.f32 0.0, %v1165
      %v1167 = vpop.f32.mrf.mxu0
      %v1168 = vadd.f32 0.0, %v1167
      %1169 = vmatmul.bf16.gmra.mxu0 %v1092
      %v1170 = vpop.f32.mrf.mxu0
      %v1171 = vadd.f32 0.0, %v1170
      %v1172 = vpop.f32.mrf.mxu0
      %v1173 = vadd.f32 0.0, %v1172
      %1174 = vmatmul.bf16.gmra.mxu0 %v1095
      %v1175 = vpop.f32.mrf.mxu0
      %v1176 = vadd.f32 0.0, %v1175
      %v1177 = vpop.f32.mrf.mxu0
      %v1178 = vadd.f32 0.0, %v1177
      %1179 = vmatmul.bf16.gmra.mxu0 %v1098
      %v1180 = vpop.f32.mrf.mxu0
      %v1181 = vadd.f32 0.0, %v1180
      %v1182 = vpop.f32.mrf.mxu0
      %v1183 = vadd.f32 0.0, %v1182
      %1184 = vmatmul.bf16.gmra.mxu0 %v1101
      %v1185 = vpop.f32.mrf.mxu0
      %v1186 = vadd.f32 0.0, %v1185
      %v1187 = vpop.f32.mrf.mxu0
      %v1188 = vadd.f32 0.0, %v1187
      %1189 = vmatmul.bf16.gmra.mxu0 %v1104
      %v1190 = vpop.f32.mrf.mxu0
      %v1191 = vadd.f32 0.0, %v1190
      %v1192 = vpop.f32.mrf.mxu0
      %v1193 = vadd.f32 0.0, %v1192
      %1194 = vmatmul.bf16.gmra.mxu0 %v1107
      %v1195 = vpop.f32.mrf.mxu0
      %v1196 = vadd.f32 0.0, %v1195
      %v1197 = vpop.f32.mrf.mxu0
      %v1198 = vadd.f32 0.0, %v1197
      %1199 = vmatmul.bf16.gmra.mxu0 %v1110
      %v1200 = vpop.f32.mrf.mxu0
      %v1201 = vadd.f32 0.0, %v1200
      %v1202 = vpop.f32.mrf.mxu0
      %v1203 = vadd.f32 0.0, %v1202
      %1204 = vdwg.mxu0
      %v1206 = vsel %vm870, %v1000, 0
      %v1209 = vsel %vm870, %v1001, 0
      %v1212 = vsel %vm870, %v1002, 0
      %v1215 = vsel %vm870, %v1003, 0
      %v1218 = vsel %vm870, %v1004, 0
      %v1221 = vsel %vm870, %v1005, 0
      %v1224 = vsel %vm870, %v1006, 0
      %v1227 = vsel %vm870, %v1007, 0
      %v1230 = vsel %vm870, %v1008, 0
      %v1233 = vsel %vm870, %v1009, 0
      %v1236 = vsel %vm870, %v1010, 0
      %v1239 = vsel %vm870, %v1011, 0
      %v1242 = vsel %vm870, %v1012, 0
      %v1245 = vsel %vm870, %v1013, 0
      %v1248 = vsel %vm870, %v1014, 0
      %v1251 = vsel %vm870, %v1015, 0
      %v1254 = vsel %vm1112, %v959, 0
      %1256 = vmatpush.bf16.msra.mxu0 0
      %1257 = vmatpush.bf16.msra.mxu0 0
      %1258 = vmatpush.bf16.msra.mxu0 0
      %1259 = vmatpush.bf16.msra.mxu0 0
      %1260 = vmatpush.bf16.msra.mxu0 0
      %1261 = vmatpush.bf16.msra.mxu0 0
      %1262 = vmatpush.bf16.msra.mxu0 0
      %1263 = vmatpush.bf16.msra.mxu0 %v1254
      %1264 = vmatmul.bf16.gmra.mxu0 %v1206
      %v1265 = vpop.f32.mrf.mxu0
      %v1266 = vadd.f32 %v1126, %v1265
      %v1267 = vpop.f32.mrf.mxu0
      %v1268 = vadd.f32 %v1128, %v1267
      %1269 = vmatmul.bf16.gmra.mxu0 %v1209
      %v1270 = vpop.f32.mrf.mxu0
      %v1271 = vadd.f32 %v1131, %v1270
      %v1272 = vpop.f32.mrf.mxu0
      %v1273 = vadd.f32 %v1133, %v1272
      %1274 = vmatmul.bf16.gmra.mxu0 %v1212
      %v1275 = vpop.f32.mrf.mxu0
      %v1276 = vadd.f32 %v1136, %v1275
      %v1277 = vpop.f32.mrf.mxu0
      %v1278 = vadd.f32 %v1138, %v1277
      %1279 = vmatmul.bf16.gmra.mxu0 %v1215
      %v1280 = vpop.f32.mrf.mxu0
      %v1281 = vadd.f32 %v1141, %v1280
      %v1282 = vpop.f32.mrf.mxu0
      %v1283 = vadd.f32 %v1143, %v1282
      %1284 = vmatmul.bf16.gmra.mxu0 %v1218
      %v1285 = vpop.f32.mrf.mxu0
      %v1286 = vadd.f32 %v1146, %v1285
      %v1287 = vpop.f32.mrf.mxu0
      %v1288 = vadd.f32 %v1148, %v1287
      %1289 = vmatmul.bf16.gmra.mxu0 %v1221
      %v1290 = vpop.f32.mrf.mxu0
      %v1291 = vadd.f32 %v1151, %v1290
      %v1292 = vpop.f32.mrf.mxu0
      %v1293 = vadd.f32 %v1153, %v1292
      %1294 = vmatmul.bf16.gmra.mxu0 %v1224
      %v1295 = vpop.f32.mrf.mxu0
      %v1296 = vadd.f32 %v1156, %v1295
      %v1297 = vpop.f32.mrf.mxu0
      %v1298 = vadd.f32 %v1158, %v1297
      %1299 = vmatmul.bf16.gmra.mxu0 %v1227
      %v1300 = vpop.f32.mrf.mxu0
      %v1301 = vadd.f32 %v1161, %v1300
      %v1302 = vpop.f32.mrf.mxu0
      %v1303 = vadd.f32 %v1163, %v1302
      %1304 = vmatmul.bf16.gmra.mxu0 %v1230
      %v1305 = vpop.f32.mrf.mxu0
      %v1306 = vadd.f32 %v1166, %v1305
      %v1307 = vpop.f32.mrf.mxu0
      %v1308 = vadd.f32 %v1168, %v1307
      %1309 = vmatmul.bf16.gmra.mxu0 %v1233
      %v1310 = vpop.f32.mrf.mxu0
      %v1311 = vadd.f32 %v1171, %v1310
      %v1312 = vpop.f32.mrf.mxu0
      %v1313 = vadd.f32 %v1173, %v1312
      %1314 = vmatmul.bf16.gmra.mxu0 %v1236
      %v1315 = vpop.f32.mrf.mxu0
      %v1316 = vadd.f32 %v1176, %v1315
      %v1317 = vpop.f32.mrf.mxu0
      %v1318 = vadd.f32 %v1178, %v1317
      %1319 = vmatmul.bf16.gmra.mxu0 %v1239
      %v1320 = vpop.f32.mrf.mxu0
      %v1321 = vadd.f32 %v1181, %v1320
      %v1322 = vpop.f32.mrf.mxu0
      %v1323 = vadd.f32 %v1183, %v1322
      %1324 = vmatmul.bf16.gmra.mxu0 %v1242
      %v1325 = vpop.f32.mrf.mxu0
      %v1326 = vadd.f32 %v1186, %v1325
      %v1327 = vpop.f32.mrf.mxu0
      %v1328 = vadd.f32 %v1188, %v1327
      %1329 = vmatmul.bf16.gmra.mxu0 %v1245
      %v1330 = vpop.f32.mrf.mxu0
      %v1331 = vadd.f32 %v1191, %v1330
      %v1332 = vpop.f32.mrf.mxu0
      %v1333 = vadd.f32 %v1193, %v1332
      %1334 = vmatmul.bf16.gmra.mxu0 %v1248
      %v1335 = vpop.f32.mrf.mxu0
      %v1336 = vadd.f32 %v1196, %v1335
      %v1337 = vpop.f32.mrf.mxu0
      %v1338 = vadd.f32 %v1198, %v1337
      %1339 = vmatmul.bf16.gmra.mxu0 %v1251
      %v1340 = vpop.f32.mrf.mxu0
      %v1341 = vadd.f32 %v1201, %v1340
      %v1342 = vpop.f32.mrf.mxu0
      %v1343 = vadd.f32 %v1203, %v1342
      %1344 = vdwg.mxu0
      %v1345 = vld [vmem:[#allocation2 + $0x2] sm:$0xff]
      %v1346 = vld [vmem:[#allocation2 + $0xa] sm:$0xff]
      %v1347 = vld [vmem:[#allocation2 + $0x1a] sm:$0xff]
      %v1348 = vld [vmem:[#allocation2 + $0x22] sm:$0xff]
      %v1349 = vld [vmem:[#allocation2 + $0x32] sm:$0xff]
      %v1350 = vld [vmem:[#allocation2 + $0x3a] sm:$0xff]
      %v1351 = vld [vmem:[#allocation2 + $0x4a] sm:$0xff]
      %v1352 = vld [vmem:[#allocation2 + $0x52] sm:$0xff]
      %v1353 = vld [vmem:[#allocation2 + $0x62] sm:$0xff]
      %v1354 = vld [vmem:[#allocation2 + $0x6a] sm:$0xff]
      %v1355 = vld [vmem:[#allocation2 + $0x7a] sm:$0xff]
      %v1356 = vld [vmem:[#allocation2 + $0x82] sm:$0xff]
      %v1357 = vld [vmem:[#allocation2 + $0x92] sm:$0xff]
      %v1358 = vld [vmem:[#allocation2 + $0x9a] sm:$0xff]
      %v1359 = vld [vmem:[#allocation2 + $0xaa] sm:$0xff]
      %v1360 = vld [vmem:[#allocation2 + $0xb2] sm:$0xff]
      %v1361 = vld [vmem:[#allocation2 + $0xc2] sm:$0xff]
      %v1362 = vld [vmem:[#allocation2 + $0xca] sm:$0xff]
      %v1363 = vld [vmem:[#allocation2 + $0xda] sm:$0xff]
      %v1364 = vld [vmem:[#allocation2 + $0xe2] sm:$0xff]
      %v1365 = vld [vmem:[#allocation2 + $0xf2] sm:$0xff]
      %v1366 = vld [vmem:[#allocation2 + $0xfa] sm:$0xff]
      %v1367 = vld [vmem:[#allocation2 + $0x10a] sm:$0xff]
      %v1368 = vld [vmem:[#allocation2 + $0x112] sm:$0xff]
      %v1369 = vld [vmem:[#allocation2 + $0x122] sm:$0xff]
      %v1370 = vld [vmem:[#allocation2 + $0x12a] sm:$0xff]
      %v1371 = vld [vmem:[#allocation2 + $0x13a] sm:$0xff]
      %v1372 = vld [vmem:[#allocation2 + $0x142] sm:$0xff]
      %v1373 = vld [vmem:[#allocation2 + $0x152] sm:$0xff]
      %v1374 = vld [vmem:[#allocation2 + $0x15a] sm:$0xff]
      %v1375 = vld [vmem:[#allocation2 + $0x16a] sm:$0xff]
      %v1376 = vld [vmem:[#allocation2 + $0x172] sm:$0xff]
      %v1377 = vpack.c.bf16 %v1346, %v1345
      %v1378 = vpack.c.bf16 %v1348, %v1347
      %v1379 = vpack.c.bf16 %v1350, %v1349
      %v1380 = vpack.c.bf16 %v1352, %v1351
      %v1381 = vpack.c.bf16 %v1354, %v1353
      %v1382 = vpack.c.bf16 %v1356, %v1355
      %v1383 = vpack.c.bf16 %v1358, %v1357
      %v1384 = vpack.c.bf16 %v1360, %v1359
      %v1385 = vpack.c.bf16 %v1362, %v1361
      %v1386 = vpack.c.bf16 %v1364, %v1363
      %v1387 = vpack.c.bf16 %v1366, %v1365
      %v1388 = vpack.c.bf16 %v1368, %v1367
      %v1389 = vpack.c.bf16 %v1370, %v1369
      %v1390 = vpack.c.bf16 %v1372, %v1371
      %v1391 = vpack.c.bf16 %v1374, %v1373
      %v1392 = vpack.c.bf16 %v1376, %v1375
      %v1394 = vsel %vm870, %v1377, 0
      %v1397 = vsel %vm870, %v1378, 0
      %v1400 = vsel %vm870, %v1379, 0
      %v1403 = vsel %vm870, %v1380, 0
      %v1406 = vsel %vm870, %v1381, 0
      %v1409 = vsel %vm870, %v1382, 0
      %v1412 = vsel %vm870, %v1383, 0
      %v1415 = vsel %vm870, %v1384, 0
      %v1418 = vsel %vm870, %v1385, 0
      %v1421 = vsel %vm870, %v1386, 0
      %v1424 = vsel %vm870, %v1387, 0
      %v1427 = vsel %vm870, %v1388, 0
      %v1430 = vsel %vm870, %v1389, 0
      %v1433 = vsel %vm870, %v1390, 0
      %v1436 = vsel %vm870, %v1391, 0
      %v1439 = vsel %vm870, %v1392, 0
      %v1442 = vsel %vm1112, %v961, 0
      %1444 = vmatpush.bf16.msra.mxu0 0
      %1445 = vmatpush.bf16.msra.mxu0 0
      %1446 = vmatpush.bf16.msra.mxu0 0
      %1447 = vmatpush.bf16.msra.mxu0 0
      %1448 = vmatpush.bf16.msra.mxu0 0
      %1449 = vmatpush.bf16.msra.mxu0 0
      %1450 = vmatpush.bf16.msra.mxu0 0
      %1451 = vmatpush.bf16.msra.mxu0 %v1442
      %1452 = vmatmul.bf16.gmra.mxu0 %v1394
      %v1453 = vpop.f32.mrf.mxu0
      %v1454 = vadd.f32 0.0, %v1453
      %v1455 = vpop.f32.mrf.mxu0
      %v1456 = vadd.f32 0.0, %v1455
      %1457 = vmatmul.bf16.gmra.mxu0 %v1397
      %v1458 = vpop.f32.mrf.mxu0
      %v1459 = vadd.f32 0.0, %v1458
      %v1460 = vpop.f32.mrf.mxu0
      %v1461 = vadd.f32 0.0, %v1460
      %1462 = vmatmul.bf16.gmra.mxu0 %v1400
      %v1463 = vpop.f32.mrf.mxu0
      %v1464 = vadd.f32 0.0, %v1463
      %v1465 = vpop.f32.mrf.mxu0
      %v1466 = vadd.f32 0.0, %v1465
      %1467 = vmatmul.bf16.gmra.mxu0 %v1403
      %v1468 = vpop.f32.mrf.mxu0
      %v1469 = vadd.f32 0.0, %v1468
      %v1470 = vpop.f32.mrf.mxu0
      %v1471 = vadd.f32 0.0, %v1470
      %1472 = vmatmul.bf16.gmra.mxu0 %v1406
      %v1473 = vpop.f32.mrf.mxu0
      %v1474 = vadd.f32 0.0, %v1473
      %v1475 = vpop.f32.mrf.mxu0
      %v1476 = vadd.f32 0.0, %v1475
      %1477 = vmatmul.bf16.gmra.mxu0 %v1409
      %v1478 = vpop.f32.mrf.mxu0
      %v1479 = vadd.f32 0.0, %v1478
      %v1480 = vpop.f32.mrf.mxu0
      %v1481 = vadd.f32 0.0, %v1480
      %1482 = vmatmul.bf16.gmra.mxu0 %v1412
      %v1483 = vpop.f32.mrf.mxu0
      %v1484 = vadd.f32 0.0, %v1483
      %v1485 = vpop.f32.mrf.mxu0
      %v1486 = vadd.f32 0.0, %v1485
      %1487 = vmatmul.bf16.gmra.mxu0 %v1415
      %v1488 = vpop.f32.mrf.mxu0
      %v1489 = vadd.f32 0.0, %v1488
      %v1490 = vpop.f32.mrf.mxu0
      %v1491 = vadd.f32 0.0, %v1490
      %1492 = vmatmul.bf16.gmra.mxu0 %v1418
      %v1493 = vpop.f32.mrf.mxu0
      %v1494 = vadd.f32 0.0, %v1493
      %v1495 = vpop.f32.mrf.mxu0
      %v1496 = vadd.f32 0.0, %v1495
      %1497 = vmatmul.bf16.gmra.mxu0 %v1421
      %v1498 = vpop.f32.mrf.mxu0
      %v1499 = vadd.f32 0.0, %v1498
      %v1500 = vpop.f32.mrf.mxu0
      %v1501 = vadd.f32 0.0, %v1500
      %1502 = vmatmul.bf16.gmra.mxu0 %v1424
      %v1503 = vpop.f32.mrf.mxu0
      %v1504 = vadd.f32 0.0, %v1503
      %v1505 = vpop.f32.mrf.mxu0
      %v1506 = vadd.f32 0.0, %v1505
      %1507 = vmatmul.bf16.gmra.mxu0 %v1427
      %v1508 = vpop.f32.mrf.mxu0
      %v1509 = vadd.f32 0.0, %v1508
      %v1510 = vpop.f32.mrf.mxu0
      %v1511 = vadd.f32 0.0, %v1510
      %1512 = vmatmul.bf16.gmra.mxu0 %v1430
      %v1513 = vpop.f32.mrf.mxu0
      %v1514 = vadd.f32 0.0, %v1513
      %v1515 = vpop.f32.mrf.mxu0
      %v1516 = vadd.f32 0.0, %v1515
      %1517 = vmatmul.bf16.gmra.mxu0 %v1433
      %v1518 = vpop.f32.mrf.mxu0
      %v1519 = vadd.f32 0.0, %v1518
      %v1520 = vpop.f32.mrf.mxu0
      %v1521 = vadd.f32 0.0, %v1520
      %1522 = vmatmul.bf16.gmra.mxu0 %v1436
      %v1523 = vpop.f32.mrf.mxu0
      %v1524 = vadd.f32 0.0, %v1523
      %v1525 = vpop.f32.mrf.mxu0
      %v1526 = vadd.f32 0.0, %v1525
      %1527 = vmatmul.bf16.gmra.mxu0 %v1439
      %v1528 = vpop.f32.mrf.mxu0
      %v1529 = vadd.f32 0.0, %v1528
      %v1530 = vpop.f32.mrf.mxu0
      %v1531 = vadd.f32 0.0, %v1530
      %1532 = vdwg.mxu0
      %v1533 = vadd.f32 %v1266, %v1454
      %v1534 = vadd.f32 %v1268, %v1456
      %v1535 = vadd.f32 %v1271, %v1459
      %v1536 = vadd.f32 %v1273, %v1461
      %v1537 = vadd.f32 %v1276, %v1464
      %v1538 = vadd.f32 %v1278, %v1466
      %v1539 = vadd.f32 %v1281, %v1469
      %v1540 = vadd.f32 %v1283, %v1471
      %v1541 = vadd.f32 %v1286, %v1474
      %v1542 = vadd.f32 %v1288, %v1476
      %v1543 = vadd.f32 %v1291, %v1479
      %v1544 = vadd.f32 %v1293, %v1481
      %v1545 = vadd.f32 %v1296, %v1484
      %v1546 = vadd.f32 %v1298, %v1486
      %v1547 = vadd.f32 %v1301, %v1489
      %v1548 = vadd.f32 %v1303, %v1491
      %v1549 = vadd.f32 %v1306, %v1494
      %v1550 = vadd.f32 %v1308, %v1496
      %v1551 = vadd.f32 %v1311, %v1499
      %v1552 = vadd.f32 %v1313, %v1501
      %v1553 = vadd.f32 %v1316, %v1504
      %v1554 = vadd.f32 %v1318, %v1506
      %v1555 = vadd.f32 %v1321, %v1509
      %v1556 = vadd.f32 %v1323, %v1511
      %v1557 = vadd.f32 %v1326, %v1514
      %v1558 = vadd.f32 %v1328, %v1516
      %v1559 = vadd.f32 %v1331, %v1519
      %v1560 = vadd.f32 %v1333, %v1521
      %v1561 = vadd.f32 %v1336, %v1524
      %v1562 = vadd.f32 %v1338, %v1526
      %v1563 = vadd.f32 %v1341, %v1529
      %v1564 = vadd.f32 %v1343, %v1531
      %v1565 = vld [vmem:[%s926] sm:$0xff]
      %v1566 = vld [vmem:[%s926 + $0x8] sm:$0xff]
      %v1567 = vld [vmem:[%s926 + $0x18] sm:$0xff]
      %v1568 = vld [vmem:[%s926 + $0x20] sm:$0xff]
      %v1569 = vld [vmem:[%s926 + $0x30] sm:$0xff]
      %v1570 = vld [vmem:[%s926 + $0x38] sm:$0xff]
      %v1571 = vld [vmem:[%s926 + $0x48] sm:$0xff]
      %v1572 = vld [vmem:[%s926 + $0x50] sm:$0xff]
      %v1573 = vld [vmem:[%s926 + $0x60] sm:$0xff]
      %v1574 = vld [vmem:[%s926 + $0x68] sm:$0xff]
      %v1575 = vld [vmem:[%s926 + $0x78] sm:$0xff]
      %v1576 = vld [vmem:[%s926 + $0x80] sm:$0xff]
      %v1577 = vld [vmem:[%s926 + $0x90] sm:$0xff]
      %v1578 = vld [vmem:[%s926 + $0x98] sm:$0xff]
      %v1579 = vld [vmem:[%s926 + $0xa8] sm:$0xff]
      %v1580 = vld [vmem:[%s926 + $0xb0] sm:$0xff]
      %v1581 = vld [vmem:[%s926 + $0xc0] sm:$0xff]
      %v1582 = vld [vmem:[%s926 + $0xc8] sm:$0xff]
      %v1583 = vld [vmem:[%s926 + $0xd8] sm:$0xff]
      %v1584 = vld [vmem:[%s926 + $0xe0] sm:$0xff]
      %v1585 = vld [vmem:[%s926 + $0xf0] sm:$0xff]
      %v1586 = vld [vmem:[%s926 + $0xf8] sm:$0xff]
      %v1587 = vld [vmem:[%s926 + $0x108] sm:$0xff]
      %v1588 = vld [vmem:[%s926 + $0x110] sm:$0xff]
      %v1589 = vld [vmem:[%s926 + $0x120] sm:$0xff]
      %v1590 = vld [vmem:[%s926 + $0x128] sm:$0xff]
      %v1591 = vld [vmem:[%s926 + $0x138] sm:$0xff]
      %v1592 = vld [vmem:[%s926 + $0x140] sm:$0xff]
      %v1593 = vld [vmem:[%s926 + $0x150] sm:$0xff]
      %v1594 = vld [vmem:[%s926 + $0x158] sm:$0xff]
      %v1595 = vld [vmem:[%s926 + $0x168] sm:$0xff]
      %v1596 = vld [vmem:[%s926 + $0x170] sm:$0xff]
      %v1597 = vpack.c.bf16 %v1566, %v1565
      %v1598 = vpack.c.bf16 %v1568, %v1567
      %v1599 = vpack.c.bf16 %v1570, %v1569
      %v1600 = vpack.c.bf16 %v1572, %v1571
      %v1601 = vpack.c.bf16 %v1574, %v1573
      %v1602 = vpack.c.bf16 %v1576, %v1575
      %v1603 = vpack.c.bf16 %v1578, %v1577
      %v1604 = vpack.c.bf16 %v1580, %v1579
      %v1605 = vpack.c.bf16 %v1582, %v1581
      %v1606 = vpack.c.bf16 %v1584, %v1583
      %v1607 = vpack.c.bf16 %v1586, %v1585
      %v1608 = vpack.c.bf16 %v1588, %v1587
      %v1609 = vpack.c.bf16 %v1590, %v1589
      %v1610 = vpack.c.bf16 %v1592, %v1591
      %v1611 = vpack.c.bf16 %v1594, %v1593
      %v1612 = vpack.c.bf16 %v1596, %v1595
      %v1614 = vsel %vm870, %v1597, 0
      %v1617 = vsel %vm870, %v1598, 0
      %v1620 = vsel %vm870, %v1599, 0
      %v1623 = vsel %vm870, %v1600, 0
      %v1626 = vsel %vm870, %v1601, 0
      %v1629 = vsel %vm870, %v1602, 0
      %v1632 = vsel %vm870, %v1603, 0
      %v1635 = vsel %vm870, %v1604, 0
      %v1638 = vsel %vm870, %v1605, 0
      %v1641 = vsel %vm870, %v1606, 0
      %v1644 = vsel %vm870, %v1607, 0
      %v1647 = vsel %vm870, %v1608, 0
      %v1650 = vsel %vm870, %v1609, 0
      %v1653 = vsel %vm870, %v1610, 0
      %v1656 = vsel %vm870, %v1611, 0
      %v1659 = vsel %vm870, %v1612, 0
      %v1662 = vsel %vm1112, %v962, 0
      %1664 = vmatpush.bf16.msra.mxu0 0
      %1665 = vmatpush.bf16.msra.mxu0 0
      %1666 = vmatpush.bf16.msra.mxu0 0
      %1667 = vmatpush.bf16.msra.mxu0 0
      %1668 = vmatpush.bf16.msra.mxu0 0
      %1669 = vmatpush.bf16.msra.mxu0 0
      %1670 = vmatpush.bf16.msra.mxu0 0
      %1671 = vmatpush.bf16.msra.mxu0 %v1662
      %1672 = vmatmul.bf16.gmra.mxu0 %v1614
      %v1673 = vpop.f32.mrf.mxu0
      %v1674 = vadd.f32 0.0, %v1673
      %v1675 = vpop.f32.mrf.mxu0
      %v1676 = vadd.f32 0.0, %v1675
      %1677 = vmatmul.bf16.gmra.mxu0 %v1617
      %v1678 = vpop.f32.mrf.mxu0
      %v1679 = vadd.f32 0.0, %v1678
      %v1680 = vpop.f32.mrf.mxu0
      %v1681 = vadd.f32 0.0, %v1680
      %1682 = vmatmul.bf16.gmra.mxu0 %v1620
      %v1683 = vpop.f32.mrf.mxu0
      %v1684 = vadd.f32 0.0, %v1683
      %v1685 = vpop.f32.mrf.mxu0
      %v1686 = vadd.f32 0.0, %v1685
      %1687 = vmatmul.bf16.gmra.mxu0 %v1623
      %v1688 = vpop.f32.mrf.mxu0
      %v1689 = vadd.f32 0.0, %v1688
      %v1690 = vpop.f32.mrf.mxu0
      %v1691 = vadd.f32 0.0, %v1690
      %1692 = vmatmul.bf16.gmra.mxu0 %v1626
      %v1693 = vpop.f32.mrf.mxu0
      %v1694 = vadd.f32 0.0, %v1693
      %v1695 = vpop.f32.mrf.mxu0
      %v1696 = vadd.f32 0.0, %v1695
      %1697 = vmatmul.bf16.gmra.mxu0 %v1629
      %v1698 = vpop.f32.mrf.mxu0
      %v1699 = vadd.f32 0.0, %v1698
      %v1700 = vpop.f32.mrf.mxu0
      %v1701 = vadd.f32 0.0, %v1700
      %1702 = vmatmul.bf16.gmra.mxu0 %v1632
      %v1703 = vpop.f32.mrf.mxu0
      %v1704 = vadd.f32 0.0, %v1703
      %v1705 = vpop.f32.mrf.mxu0
      %v1706 = vadd.f32 0.0, %v1705
      %1707 = vmatmul.bf16.gmra.mxu0 %v1635
      %v1708 = vpop.f32.mrf.mxu0
      %v1709 = vadd.f32 0.0, %v1708
      %v1710 = vpop.f32.mrf.mxu0
      %v1711 = vadd.f32 0.0, %v1710
      %1712 = vmatmul.bf16.gmra.mxu0 %v1638
      %v1713 = vpop.f32.mrf.mxu0
      %v1714 = vadd.f32 0.0, %v1713
      %v1715 = vpop.f32.mrf.mxu0
      %v1716 = vadd.f32 0.0, %v1715
      %1717 = vmatmul.bf16.gmra.mxu0 %v1641
      %v1718 = vpop.f32.mrf.mxu0
      %v1719 = vadd.f32 0.0, %v1718
      %v1720 = vpop.f32.mrf.mxu0
      %v1721 = vadd.f32 0.0, %v1720
      %1722 = vmatmul.bf16.gmra.mxu0 %v1644
      %v1723 = vpop.f32.mrf.mxu0
      %v1724 = vadd.f32 0.0, %v1723
      %v1725 = vpop.f32.mrf.mxu0
      %v1726 = vadd.f32 0.0, %v1725
      %1727 = vmatmul.bf16.gmra.mxu0 %v1647
      %v1728 = vpop.f32.mrf.mxu0
      %v1729 = vadd.f32 0.0, %v1728
      %v1730 = vpop.f32.mrf.mxu0
      %v1731 = vadd.f32 0.0, %v1730
      %1732 = vmatmul.bf16.gmra.mxu0 %v1650
      %v1733 = vpop.f32.mrf.mxu0
      %v1734 = vadd.f32 0.0, %v1733
      %v1735 = vpop.f32.mrf.mxu0
      %v1736 = vadd.f32 0.0, %v1735
      %1737 = vmatmul.bf16.gmra.mxu0 %v1653
      %v1738 = vpop.f32.mrf.mxu0
      %v1739 = vadd.f32 0.0, %v1738
      %v1740 = vpop.f32.mrf.mxu0
      %v1741 = vadd.f32 0.0, %v1740
      %1742 = vmatmul.bf16.gmra.mxu0 %v1656
      %v1743 = vpop.f32.mrf.mxu0
      %v1744 = vadd.f32 0.0, %v1743
      %v1745 = vpop.f32.mrf.mxu0
      %v1746 = vadd.f32 0.0, %v1745
      %1747 = vmatmul.bf16.gmra.mxu0 %v1659
      %v1748 = vpop.f32.mrf.mxu0
      %v1749 = vadd.f32 0.0, %v1748
      %v1750 = vpop.f32.mrf.mxu0
      %v1751 = vadd.f32 0.0, %v1750
      %1752 = vdwg.mxu0
      %v1753 = vadd.f32 %v1533, %v1674
      %v1754 = vadd.f32 %v1534, %v1676
      %v1755 = vadd.f32 %v1535, %v1679
      %v1756 = vadd.f32 %v1536, %v1681
      %v1757 = vadd.f32 %v1537, %v1684
      %v1758 = vadd.f32 %v1538, %v1686
      %v1759 = vadd.f32 %v1539, %v1689
      %v1760 = vadd.f32 %v1540, %v1691
      %v1761 = vadd.f32 %v1541, %v1694
      %v1762 = vadd.f32 %v1542, %v1696
      %v1763 = vadd.f32 %v1543, %v1699
      %v1764 = vadd.f32 %v1544, %v1701
      %v1765 = vadd.f32 %v1545, %v1704
      %v1766 = vadd.f32 %v1546, %v1706
      %v1767 = vadd.f32 %v1547, %v1709
      %v1768 = vadd.f32 %v1548, %v1711
      %v1769 = vadd.f32 %v1549, %v1714
      %v1770 = vadd.f32 %v1550, %v1716
      %v1771 = vadd.f32 %v1551, %v1719
      %v1772 = vadd.f32 %v1552, %v1721
      %v1773 = vadd.f32 %v1553, %v1724
      %v1774 = vadd.f32 %v1554, %v1726
      %v1775 = vadd.f32 %v1555, %v1729
      %v1776 = vadd.f32 %v1556, %v1731
      %v1777 = vadd.f32 %v1557, %v1734
      %v1778 = vadd.f32 %v1558, %v1736
      %v1779 = vadd.f32 %v1559, %v1739
      %v1780 = vadd.f32 %v1560, %v1741
      %v1781 = vadd.f32 %v1561, %v1744
      %v1782 = vadd.f32 %v1562, %v1746
      %v1783 = vadd.f32 %v1563, %v1749
      %v1784 = vadd.f32 %v1564, %v1751
      %v1785 = vld [vmem:[%s926 + $0x1] sm:$0xff]
      %v1786 = vld [vmem:[%s926 + $0x9] sm:$0xff]
      %v1787 = vld [vmem:[%s926 + $0x19] sm:$0xff]
      %v1788 = vld [vmem:[%s926 + $0x21] sm:$0xff]
      %v1789 = vld [vmem:[%s926 + $0x31] sm:$0xff]
      %v1790 = vld [vmem:[%s926 + $0x39] sm:$0xff]
      %v1791 = vld [vmem:[%s926 + $0x49] sm:$0xff]
      %v1792 = vld [vmem:[%s926 + $0x51] sm:$0xff]
      %v1793 = vld [vmem:[%s926 + $0x61] sm:$0xff]
      %v1794 = vld [vmem:[%s926 + $0x69] sm:$0xff]
      %v1795 = vld [vmem:[%s926 + $0x79] sm:$0xff]
      %v1796 = vld [vmem:[%s926 + $0x81] sm:$0xff]
      %v1797 = vld [vmem:[%s926 + $0x91] sm:$0xff]
      %v1798 = vld [vmem:[%s926 + $0x99] sm:$0xff]
      %v1799 = vld [vmem:[%s926 + $0xa9] sm:$0xff]
      %v1800 = vld [vmem:[%s926 + $0xb1] sm:$0xff]
      %v1801 = vld [vmem:[%s926 + $0xc1] sm:$0xff]
      %v1802 = vld [vmem:[%s926 + $0xc9] sm:$0xff]
      %v1803 = vld [vmem:[%s926 + $0xd9] sm:$0xff]
      %v1804 = vld [vmem:[%s926 + $0xe1] sm:$0xff]
      %v1805 = vld [vmem:[%s926 + $0xf1] sm:$0xff]
      %v1806 = vld [vmem:[%s926 + $0xf9] sm:$0xff]
      %v1807 = vld [vmem:[%s926 + $0x109] sm:$0xff]
      %v1808 = vld [vmem:[%s926 + $0x111] sm:$0xff]
      %v1809 = vld [vmem:[%s926 + $0x121] sm:$0xff]
      %v1810 = vld [vmem:[%s926 + $0x129] sm:$0xff]
      %v1811 = vld [vmem:[%s926 + $0x139] sm:$0xff]
      %v1812 = vld [vmem:[%s926 + $0x141] sm:$0xff]
      %v1813 = vld [vmem:[%s926 + $0x151] sm:$0xff]
      %v1814 = vld [vmem:[%s926 + $0x159] sm:$0xff]
      %v1815 = vld [vmem:[%s926 + $0x169] sm:$0xff]
      %v1816 = vld [vmem:[%s926 + $0x171] sm:$0xff]
      %v1817 = vpack.c.bf16 %v1786, %v1785
      %v1818 = vpack.c.bf16 %v1788, %v1787
      %v1819 = vpack.c.bf16 %v1790, %v1789
      %v1820 = vpack.c.bf16 %v1792, %v1791
      %v1821 = vpack.c.bf16 %v1794, %v1793
      %v1822 = vpack.c.bf16 %v1796, %v1795
      %v1823 = vpack.c.bf16 %v1798, %v1797
      %v1824 = vpack.c.bf16 %v1800, %v1799
      %v1825 = vpack.c.bf16 %v1802, %v1801
      %v1826 = vpack.c.bf16 %v1804, %v1803
      %v1827 = vpack.c.bf16 %v1806, %v1805
      %v1828 = vpack.c.bf16 %v1808, %v1807
      %v1829 = vpack.c.bf16 %v1810, %v1809
      %v1830 = vpack.c.bf16 %v1812, %v1811
      %v1831 = vpack.c.bf16 %v1814, %v1813
      %v1832 = vpack.c.bf16 %v1816, %v1815
      %v1834 = vsel %vm870, %v1817, 0
      %v1837 = vsel %vm870, %v1818, 0
      %v1840 = vsel %vm870, %v1819, 0
      %v1843 = vsel %vm870, %v1820, 0
      %v1846 = vsel %vm870, %v1821, 0
      %v1849 = vsel %vm870, %v1822, 0
      %v1852 = vsel %vm870, %v1823, 0
      %v1855 = vsel %vm870, %v1824, 0
      %v1858 = vsel %vm870, %v1825, 0
      %v1861 = vsel %vm870, %v1826, 0
      %v1864 = vsel %vm870, %v1827, 0
      %v1867 = vsel %vm870, %v1828, 0
      %v1870 = vsel %vm870, %v1829, 0
      %v1873 = vsel %vm870, %v1830, 0
      %v1876 = vsel %vm870, %v1831, 0
      %v1879 = vsel %vm870, %v1832, 0
      %v1882 = vsel %vm1112, %v963, 0
      %1884 = vmatpush.bf16.msra.mxu0 0
      %1885 = vmatpush.bf16.msra.mxu0 0
      %1886 = vmatpush.bf16.msra.mxu0 0
      %1887 = vmatpush.bf16.msra.mxu0 0
      %1888 = vmatpush.bf16.msra.mxu0 0
      %1889 = vmatpush.bf16.msra.mxu0 0
      %1890 = vmatpush.bf16.msra.mxu0 0
      %1891 = vmatpush.bf16.msra.mxu0 %v1882
      %1892 = vmatmul.bf16.gmra.mxu0 %v1834
      %v1893 = vpop.f32.mrf.mxu0
      %v1894 = vadd.f32 0.0, %v1893
      %v1895 = vpop.f32.mrf.mxu0
      %v1896 = vadd.f32 0.0, %v1895
      %1897 = vmatmul.bf16.gmra.mxu0 %v1837
      %v1898 = vpop.f32.mrf.mxu0
      %v1899 = vadd.f32 0.0, %v1898
      %v1900 = vpop.f32.mrf.mxu0
      %v1901 = vadd.f32 0.0, %v1900
      %1902 = vmatmul.bf16.gmra.mxu0 %v1840
      %v1903 = vpop.f32.mrf.mxu0
      %v1904 = vadd.f32 0.0, %v1903
      %v1905 = vpop.f32.mrf.mxu0
      %v1906 = vadd.f32 0.0, %v1905
      %1907 = vmatmul.bf16.gmra.mxu0 %v1843
      %v1908 = vpop.f32.mrf.mxu0
      %v1909 = vadd.f32 0.0, %v1908
      %v1910 = vpop.f32.mrf.mxu0
      %v1911 = vadd.f32 0.0, %v1910
      %1912 = vmatmul.bf16.gmra.mxu0 %v1846
      %v1913 = vpop.f32.mrf.mxu0
      %v1914 = vadd.f32 0.0, %v1913
      %v1915 = vpop.f32.mrf.mxu0
      %v1916 = vadd.f32 0.0, %v1915
      %1917 = vmatmul.bf16.gmra.mxu0 %v1849
      %v1918 = vpop.f32.mrf.mxu0
      %v1919 = vadd.f32 0.0, %v1918
      %v1920 = vpop.f32.mrf.mxu0
      %v1921 = vadd.f32 0.0, %v1920
      %1922 = vmatmul.bf16.gmra.mxu0 %v1852
      %v1923 = vpop.f32.mrf.mxu0
      %v1924 = vadd.f32 0.0, %v1923
      %v1925 = vpop.f32.mrf.mxu0
      %v1926 = vadd.f32 0.0, %v1925
      %1927 = vmatmul.bf16.gmra.mxu0 %v1855
      %v1928 = vpop.f32.mrf.mxu0
      %v1929 = vadd.f32 0.0, %v1928
      %v1930 = vpop.f32.mrf.mxu0
      %v1931 = vadd.f32 0.0, %v1930
      %1932 = vmatmul.bf16.gmra.mxu0 %v1858
      %v1933 = vpop.f32.mrf.mxu0
      %v1934 = vadd.f32 0.0, %v1933
      %v1935 = vpop.f32.mrf.mxu0
      %v1936 = vadd.f32 0.0, %v1935
      %1937 = vmatmul.bf16.gmra.mxu0 %v1861
      %v1938 = vpop.f32.mrf.mxu0
      %v1939 = vadd.f32 0.0, %v1938
      %v1940 = vpop.f32.mrf.mxu0
      %v1941 = vadd.f32 0.0, %v1940
      %1942 = vmatmul.bf16.gmra.mxu0 %v1864
      %v1943 = vpop.f32.mrf.mxu0
      %v1944 = vadd.f32 0.0, %v1943
      %v1945 = vpop.f32.mrf.mxu0
      %v1946 = vadd.f32 0.0, %v1945
      %1947 = vmatmul.bf16.gmra.mxu0 %v1867
      %v1948 = vpop.f32.mrf.mxu0
      %v1949 = vadd.f32 0.0, %v1948
      %v1950 = vpop.f32.mrf.mxu0
      %v1951 = vadd.f32 0.0, %v1950
      %1952 = vmatmul.bf16.gmra.mxu0 %v1870
      %v1953 = vpop.f32.mrf.mxu0
      %v1954 = vadd.f32 0.0, %v1953
      %v1955 = vpop.f32.mrf.mxu0
      %v1956 = vadd.f32 0.0, %v1955
      %1957 = vmatmul.bf16.gmra.mxu0 %v1873
      %v1958 = vpop.f32.mrf.mxu0
      %v1959 = vadd.f32 0.0, %v1958
      %v1960 = vpop.f32.mrf.mxu0
      %v1961 = vadd.f32 0.0, %v1960
      %1962 = vmatmul.bf16.gmra.mxu0 %v1876
      %v1963 = vpop.f32.mrf.mxu0
      %v1964 = vadd.f32 0.0, %v1963
      %v1965 = vpop.f32.mrf.mxu0
      %v1966 = vadd.f32 0.0, %v1965
      %1967 = vmatmul.bf16.gmra.mxu0 %v1879
      %v1968 = vpop.f32.mrf.mxu0
      %v1969 = vadd.f32 0.0, %v1968
      %v1970 = vpop.f32.mrf.mxu0
      %v1971 = vadd.f32 0.0, %v1970
      %1972 = vdwg.mxu0
      %v1973 = vadd.f32 %v1753, %v1894
      %v1974 = vadd.f32 %v1754, %v1896
      %v1975 = vadd.f32 %v1755, %v1899
      %v1976 = vadd.f32 %v1756, %v1901
      %v1977 = vadd.f32 %v1757, %v1904
      %v1978 = vadd.f32 %v1758, %v1906
      %v1979 = vadd.f32 %v1759, %v1909
      %v1980 = vadd.f32 %v1760, %v1911
      %v1981 = vadd.f32 %v1761, %v1914
      %v1982 = vadd.f32 %v1762, %v1916
      %v1983 = vadd.f32 %v1763, %v1919
      %v1984 = vadd.f32 %v1764, %v1921
      %v1985 = vadd.f32 %v1765, %v1924
      %v1986 = vadd.f32 %v1766, %v1926
      %v1987 = vadd.f32 %v1767, %v1929
      %v1988 = vadd.f32 %v1768, %v1931
      %v1989 = vadd.f32 %v1769, %v1934
      %v1990 = vadd.f32 %v1770, %v1936
      %v1991 = vadd.f32 %v1771, %v1939
      %v1992 = vadd.f32 %v1772, %v1941
      %v1993 = vadd.f32 %v1773, %v1944
      %v1994 = vadd.f32 %v1774, %v1946
      %v1995 = vadd.f32 %v1775, %v1949
      %v1996 = vadd.f32 %v1776, %v1951
      %v1997 = vadd.f32 %v1777, %v1954
      %v1998 = vadd.f32 %v1778, %v1956
      %v1999 = vadd.f32 %v1779, %v1959
      %v2000 = vadd.f32 %v1780, %v1961
      %v2001 = vadd.f32 %v1781, %v1964
      %v2002 = vadd.f32 %v1782, %v1966
      %v2003 = vadd.f32 %v1783, %v1969
      %v2004 = vadd.f32 %v1784, %v1971
      %v2005 = vld [vmem:[%s926 + $0x2] sm:$0xff]
      %v2006 = vld [vmem:[%s926 + $0xa] sm:$0xff]
      %v2007 = vld [vmem:[%s926 + $0x1a] sm:$0xff]
      %v2008 = vld [vmem:[%s926 + $0x22] sm:$0xff]
      %v2009 = vld [vmem:[%s926 + $0x32] sm:$0xff]
      %v2010 = vld [vmem:[%s926 + $0x3a] sm:$0xff]
      %v2011 = vld [vmem:[%s926 + $0x4a] sm:$0xff]
      %v2012 = vld [vmem:[%s926 + $0x52] sm:$0xff]
      %v2013 = vld [vmem:[%s926 + $0x62] sm:$0xff]
      %v2014 = vld [vmem:[%s926 + $0x6a] sm:$0xff]
      %v2015 = vld [vmem:[%s926 + $0x7a] sm:$0xff]
      %v2016 = vld [vmem:[%s926 + $0x82] sm:$0xff]
      %v2017 = vld [vmem:[%s926 + $0x92] sm:$0xff]
      %v2018 = vld [vmem:[%s926 + $0x9a] sm:$0xff]
      %v2019 = vld [vmem:[%s926 + $0xaa] sm:$0xff]
      %v2020 = vld [vmem:[%s926 + $0xb2] sm:$0xff]
      %v2021 = vld [vmem:[%s926 + $0xc2] sm:$0xff]
      %v2022 = vld [vmem:[%s926 + $0xca] sm:$0xff]
      %v2023 = vld [vmem:[%s926 + $0xda] sm:$0xff]
      %v2024 = vld [vmem:[%s926 + $0xe2] sm:$0xff]
      %v2025 = vld [vmem:[%s926 + $0xf2] sm:$0xff]
      %v2026 = vld [vmem:[%s926 + $0xfa] sm:$0xff]
      %v2027 = vld [vmem:[%s926 + $0x10a] sm:$0xff]
      %v2028 = vld [vmem:[%s926 + $0x112] sm:$0xff]
      %v2029 = vld [vmem:[%s926 + $0x122] sm:$0xff]
      %v2030 = vld [vmem:[%s926 + $0x12a] sm:$0xff]
      %v2031 = vld [vmem:[%s926 + $0x13a] sm:$0xff]
      %v2032 = vld [vmem:[%s926 + $0x142] sm:$0xff]
      %v2033 = vld [vmem:[%s926 + $0x152] sm:$0xff]
      %v2034 = vld [vmem:[%s926 + $0x15a] sm:$0xff]
      %v2035 = vld [vmem:[%s926 + $0x16a] sm:$0xff]
      %v2036 = vld [vmem:[%s926 + $0x172] sm:$0xff]
      %v2037 = vpack.c.bf16 %v2006, %v2005
      %v2038 = vpack.c.bf16 %v2008, %v2007
      %v2039 = vpack.c.bf16 %v2010, %v2009
      %v2040 = vpack.c.bf16 %v2012, %v2011
      %v2041 = vpack.c.bf16 %v2014, %v2013
      %v2042 = vpack.c.bf16 %v2016, %v2015
      %v2043 = vpack.c.bf16 %v2018, %v2017
      %v2044 = vpack.c.bf16 %v2020, %v2019
      %v2045 = vpack.c.bf16 %v2022, %v2021
      %v2046 = vpack.c.bf16 %v2024, %v2023
      %v2047 = vpack.c.bf16 %v2026, %v2025
      %v2048 = vpack.c.bf16 %v2028, %v2027
      %v2049 = vpack.c.bf16 %v2030, %v2029
      %v2050 = vpack.c.bf16 %v2032, %v2031
      %v2051 = vpack.c.bf16 %v2034, %v2033
      %v2052 = vpack.c.bf16 %v2036, %v2035
      %v2054 = vsel %vm870, %v2037, 0
      %v2057 = vsel %vm870, %v2038, 0
      %v2060 = vsel %vm870, %v2039, 0
      %v2063 = vsel %vm870, %v2040, 0
      %v2066 = vsel %vm870, %v2041, 0
      %v2069 = vsel %vm870, %v2042, 0
      %v2072 = vsel %vm870, %v2043, 0
      %v2075 = vsel %vm870, %v2044, 0
      %v2078 = vsel %vm870, %v2045, 0
      %v2081 = vsel %vm870, %v2046, 0
      %v2084 = vsel %vm870, %v2047, 0
      %v2087 = vsel %vm870, %v2048, 0
      %v2090 = vsel %vm870, %v2049, 0
      %v2093 = vsel %vm870, %v2050, 0
      %v2096 = vsel %vm870, %v2051, 0
      %v2099 = vsel %vm870, %v2052, 0
      %v2102 = vsel %vm1112, %v964, 0
      %2104 = vmatpush.bf16.msra.mxu0 0
      %2105 = vmatpush.bf16.msra.mxu0 0
      %2106 = vmatpush.bf16.msra.mxu0 0
      %2107 = vmatpush.bf16.msra.mxu0 0
      %2108 = vmatpush.bf16.msra.mxu0 0
      %2109 = vmatpush.bf16.msra.mxu0 0
      %2110 = vmatpush.bf16.msra.mxu0 0
      %2111 = vmatpush.bf16.msra.mxu0 %v2102
      %2112 = vmatmul.bf16.gmra.mxu0 %v2054
      %v2113 = vpop.f32.mrf.mxu0
      %v2114 = vadd.f32 0.0, %v2113
      %v2115 = vpop.f32.mrf.mxu0
      %v2116 = vadd.f32 0.0, %v2115
      %2117 = vmatmul.bf16.gmra.mxu0 %v2057
      %v2118 = vpop.f32.mrf.mxu0
      %v2119 = vadd.f32 0.0, %v2118
      %v2120 = vpop.f32.mrf.mxu0
      %v2121 = vadd.f32 0.0, %v2120
      %2122 = vmatmul.bf16.gmra.mxu0 %v2060
      %v2123 = vpop.f32.mrf.mxu0
      %v2124 = vadd.f32 0.0, %v2123
      %v2125 = vpop.f32.mrf.mxu0
      %v2126 = vadd.f32 0.0, %v2125
      %2127 = vmatmul.bf16.gmra.mxu0 %v2063
      %v2128 = vpop.f32.mrf.mxu0
      %v2129 = vadd.f32 0.0, %v2128
      %v2130 = vpop.f32.mrf.mxu0
      %v2131 = vadd.f32 0.0, %v2130
      %2132 = vmatmul.bf16.gmra.mxu0 %v2066
      %v2133 = vpop.f32.mrf.mxu0
      %v2134 = vadd.f32 0.0, %v2133
      %v2135 = vpop.f32.mrf.mxu0
      %v2136 = vadd.f32 0.0, %v2135
      %2137 = vmatmul.bf16.gmra.mxu0 %v2069
      %v2138 = vpop.f32.mrf.mxu0
      %v2139 = vadd.f32 0.0, %v2138
      %v2140 = vpop.f32.mrf.mxu0
      %v2141 = vadd.f32 0.0, %v2140
      %2142 = vmatmul.bf16.gmra.mxu0 %v2072
      %v2143 = vpop.f32.mrf.mxu0
      %v2144 = vadd.f32 0.0, %v2143
      %v2145 = vpop.f32.mrf.mxu0
      %v2146 = vadd.f32 0.0, %v2145
      %2147 = vmatmul.bf16.gmra.mxu0 %v2075
      %v2148 = vpop.f32.mrf.mxu0
      %v2149 = vadd.f32 0.0, %v2148
      %v2150 = vpop.f32.mrf.mxu0
      %v2151 = vadd.f32 0.0, %v2150
      %2152 = vmatmul.bf16.gmra.mxu0 %v2078
      %v2153 = vpop.f32.mrf.mxu0
      %v2154 = vadd.f32 0.0, %v2153
      %v2155 = vpop.f32.mrf.mxu0
      %v2156 = vadd.f32 0.0, %v2155
      %2157 = vmatmul.bf16.gmra.mxu0 %v2081
      %v2158 = vpop.f32.mrf.mxu0
      %v2159 = vadd.f32 0.0, %v2158
      %v2160 = vpop.f32.mrf.mxu0
      %v2161 = vadd.f32 0.0, %v2160
      %2162 = vmatmul.bf16.gmra.mxu0 %v2084
      %v2163 = vpop.f32.mrf.mxu0
      %v2164 = vadd.f32 0.0, %v2163
      %v2165 = vpop.f32.mrf.mxu0
      %v2166 = vadd.f32 0.0, %v2165
      %2167 = vmatmul.bf16.gmra.mxu0 %v2087
      %v2168 = vpop.f32.mrf.mxu0
      %v2169 = vadd.f32 0.0, %v2168
      %v2170 = vpop.f32.mrf.mxu0
      %v2171 = vadd.f32 0.0, %v2170
      %2172 = vmatmul.bf16.gmra.mxu0 %v2090
      %v2173 = vpop.f32.mrf.mxu0
      %v2174 = vadd.f32 0.0, %v2173
      %v2175 = vpop.f32.mrf.mxu0
      %v2176 = vadd.f32 0.0, %v2175
      %2177 = vmatmul.bf16.gmra.mxu0 %v2093
      %v2178 = vpop.f32.mrf.mxu0
      %v2179 = vadd.f32 0.0, %v2178
      %v2180 = vpop.f32.mrf.mxu0
      %v2181 = vadd.f32 0.0, %v2180
      %2182 = vmatmul.bf16.gmra.mxu0 %v2096
      %v2183 = vpop.f32.mrf.mxu0
      %v2184 = vadd.f32 0.0, %v2183
      %v2185 = vpop.f32.mrf.mxu0
      %v2186 = vadd.f32 0.0, %v2185
      %2187 = vmatmul.bf16.gmra.mxu0 %v2099
      %v2188 = vpop.f32.mrf.mxu0
      %v2189 = vadd.f32 0.0, %v2188
      %v2190 = vpop.f32.mrf.mxu0
      %v2191 = vadd.f32 0.0, %v2190
      %2192 = vdwg.mxu0
      %v2193 = vadd.f32 %v1973, %v2114
      %v2194 = vadd.f32 %v1974, %v2116
      %v2195 = vadd.f32 %v1975, %v2119
      %v2196 = vadd.f32 %v1976, %v2121
      %v2197 = vadd.f32 %v1977, %v2124
      %v2198 = vadd.f32 %v1978, %v2126
      %v2199 = vadd.f32 %v1979, %v2129
      %v2200 = vadd.f32 %v1980, %v2131
      %v2201 = vadd.f32 %v1981, %v2134
      %v2202 = vadd.f32 %v1982, %v2136
      %v2203 = vadd.f32 %v1983, %v2139
      %v2204 = vadd.f32 %v1984, %v2141
      %v2205 = vadd.f32 %v1985, %v2144
      %v2206 = vadd.f32 %v1986, %v2146
      %v2207 = vadd.f32 %v1987, %v2149
      %v2208 = vadd.f32 %v1988, %v2151
      %v2209 = vadd.f32 %v1989, %v2154
      %v2210 = vadd.f32 %v1990, %v2156
      %v2211 = vadd.f32 %v1991, %v2159
      %v2212 = vadd.f32 %v1992, %v2161
      %v2213 = vadd.f32 %v1993, %v2164
      %v2214 = vadd.f32 %v1994, %v2166
      %v2215 = vadd.f32 %v1995, %v2169
      %v2216 = vadd.f32 %v1996, %v2171
      %v2217 = vadd.f32 %v1997, %v2174
      %v2218 = vadd.f32 %v1998, %v2176
      %v2219 = vadd.f32 %v1999, %v2179
      %v2220 = vadd.f32 %v2000, %v2181
      %v2221 = vadd.f32 %v2001, %v2184
      %v2222 = vadd.f32 %v2002, %v2186
      %v2223 = vadd.f32 %v2003, %v2189
      %v2224 = vadd.f32 %v2004, %v2191
      %s2225 = scalar_lea.vmem [#allocation2], 48
      %v2226 = vld [vmem:[%s2225] sm:$0xff]
      %v2227 = vld [vmem:[%s2225 + $0x8] sm:$0xff]
      %v2228 = vld [vmem:[%s2225 + $0x18] sm:$0xff]
      %v2229 = vld [vmem:[%s2225 + $0x20] sm:$0xff]
      %v2230 = vld [vmem:[%s2225 + $0x30] sm:$0xff]
      %v2231 = vld [vmem:[%s2225 + $0x38] sm:$0xff]
      %v2232 = vld [vmem:[%s2225 + $0x48] sm:$0xff]
      %v2233 = vld [vmem:[%s2225 + $0x50] sm:$0xff]
      %v2234 = vld [vmem:[%s2225 + $0x60] sm:$0xff]
      %v2235 = vld [vmem:[%s2225 + $0x68] sm:$0xff]
      %v2236 = vld [vmem:[%s2225 + $0x78] sm:$0xff]
      %v2237 = vld [vmem:[%s2225 + $0x80] sm:$0xff]
      %v2238 = vld [vmem:[%s2225 + $0x90] sm:$0xff]
      %v2239 = vld [vmem:[%s2225 + $0x98] sm:$0xff]
      %v2240 = vld [vmem:[%s2225 + $0xa8] sm:$0xff]
      %v2241 = vld [vmem:[%s2225 + $0xb0] sm:$0xff]
      %v2242 = vld [vmem:[%s2225 + $0xc0] sm:$0xff]
      %v2243 = vld [vmem:[%s2225 + $0xc8] sm:$0xff]
      %v2244 = vld [vmem:[%s2225 + $0xd8] sm:$0xff]
      %v2245 = vld [vmem:[%s2225 + $0xe0] sm:$0xff]
      %v2246 = vld [vmem:[%s2225 + $0xf0] sm:$0xff]
      %v2247 = vld [vmem:[%s2225 + $0xf8] sm:$0xff]
      %v2248 = vld [vmem:[%s2225 + $0x108] sm:$0xff]
      %v2249 = vld [vmem:[%s2225 + $0x110] sm:$0xff]
      %v2250 = vld [vmem:[%s2225 + $0x120] sm:$0xff]
      %v2251 = vld [vmem:[%s2225 + $0x128] sm:$0xff]
      %v2252 = vld [vmem:[%s2225 + $0x138] sm:$0xff]
      %v2253 = vld [vmem:[%s2225 + $0x140] sm:$0xff]
      %v2254 = vld [vmem:[%s2225 + $0x150] sm:$0xff]
      %v2255 = vld [vmem:[%s2225 + $0x158] sm:$0xff]
      %v2256 = vld [vmem:[%s2225 + $0x168] sm:$0xff]
      %v2257 = vld [vmem:[%s2225 + $0x170] sm:$0xff]
      %v2258 = vpack.c.bf16 %v2227, %v2226
      %v2259 = vpack.c.bf16 %v2229, %v2228
      %v2260 = vpack.c.bf16 %v2231, %v2230
      %v2261 = vpack.c.bf16 %v2233, %v2232
      %v2262 = vpack.c.bf16 %v2235, %v2234
      %v2263 = vpack.c.bf16 %v2237, %v2236
      %v2264 = vpack.c.bf16 %v2239, %v2238
      %v2265 = vpack.c.bf16 %v2241, %v2240
      %v2266 = vpack.c.bf16 %v2243, %v2242
      %v2267 = vpack.c.bf16 %v2245, %v2244
      %v2268 = vpack.c.bf16 %v2247, %v2246
      %v2269 = vpack.c.bf16 %v2249, %v2248
      %v2270 = vpack.c.bf16 %v2251, %v2250
      %v2271 = vpack.c.bf16 %v2253, %v2252
      %v2272 = vpack.c.bf16 %v2255, %v2254
      %v2273 = vpack.c.bf16 %v2257, %v2256
      %v2275 = vsel %vm870, %v2258, 0
      %v2278 = vsel %vm870, %v2259, 0
      %v2281 = vsel %vm870, %v2260, 0
      %v2284 = vsel %vm870, %v2261, 0
      %v2287 = vsel %vm870, %v2262, 0
      %v2290 = vsel %vm870, %v2263, 0
      %v2293 = vsel %vm870, %v2264, 0
      %v2296 = vsel %vm870, %v2265, 0
      %v2299 = vsel %vm870, %v2266, 0
      %v2302 = vsel %vm870, %v2267, 0
      %v2305 = vsel %vm870, %v2268, 0
      %v2308 = vsel %vm870, %v2269, 0
      %v2311 = vsel %vm870, %v2270, 0
      %v2314 = vsel %vm870, %v2271, 0
      %v2317 = vsel %vm870, %v2272, 0
      %v2320 = vsel %vm870, %v2273, 0
      %v2323 = vsel %vm1112, %v965, 0
      %2325 = vmatpush.bf16.msra.mxu0 0
      %2326 = vmatpush.bf16.msra.mxu0 0
      %2327 = vmatpush.bf16.msra.mxu0 0
      %2328 = vmatpush.bf16.msra.mxu0 0
      %2329 = vmatpush.bf16.msra.mxu0 0
      %2330 = vmatpush.bf16.msra.mxu0 0
      %2331 = vmatpush.bf16.msra.mxu0 0
      %2332 = vmatpush.bf16.msra.mxu0 %v2323
      %2333 = vmatmul.bf16.gmra.mxu0 %v2275
      %v2334 = vpop.f32.mrf.mxu0
      %v2335 = vadd.f32 0.0, %v2334
      %v2336 = vpop.f32.mrf.mxu0
      %v2337 = vadd.f32 0.0, %v2336
      %2338 = vmatmul.bf16.gmra.mxu0 %v2278
      %v2339 = vpop.f32.mrf.mxu0
      %v2340 = vadd.f32 0.0, %v2339
      %v2341 = vpop.f32.mrf.mxu0
      %v2342 = vadd.f32 0.0, %v2341
      %2343 = vmatmul.bf16.gmra.mxu0 %v2281
      %v2344 = vpop.f32.mrf.mxu0
      %v2345 = vadd.f32 0.0, %v2344
      %v2346 = vpop.f32.mrf.mxu0
      %v2347 = vadd.f32 0.0, %v2346
      %2348 = vmatmul.bf16.gmra.mxu0 %v2284
      %v2349 = vpop.f32.mrf.mxu0
      %v2350 = vadd.f32 0.0, %v2349
      %v2351 = vpop.f32.mrf.mxu0
      %v2352 = vadd.f32 0.0, %v2351
      %2353 = vmatmul.bf16.gmra.mxu0 %v2287
      %v2354 = vpop.f32.mrf.mxu0
      %v2355 = vadd.f32 0.0, %v2354
      %v2356 = vpop.f32.mrf.mxu0
      %v2357 = vadd.f32 0.0, %v2356
      %2358 = vmatmul.bf16.gmra.mxu0 %v2290
      %v2359 = vpop.f32.mrf.mxu0
      %v2360 = vadd.f32 0.0, %v2359
      %v2361 = vpop.f32.mrf.mxu0
      %v2362 = vadd.f32 0.0, %v2361
      %2363 = vmatmul.bf16.gmra.mxu0 %v2293
      %v2364 = vpop.f32.mrf.mxu0
      %v2365 = vadd.f32 0.0, %v2364
      %v2366 = vpop.f32.mrf.mxu0
      %v2367 = vadd.f32 0.0, %v2366
      %2368 = vmatmul.bf16.gmra.mxu0 %v2296
      %v2369 = vpop.f32.mrf.mxu0
      %v2370 = vadd.f32 0.0, %v2369
      %v2371 = vpop.f32.mrf.mxu0
      %v2372 = vadd.f32 0.0, %v2371
      %2373 = vmatmul.bf16.gmra.mxu0 %v2299
      %v2374 = vpop.f32.mrf.mxu0
      %v2375 = vadd.f32 0.0, %v2374
      %v2376 = vpop.f32.mrf.mxu0
      %v2377 = vadd.f32 0.0, %v2376
      %2378 = vmatmul.bf16.gmra.mxu0 %v2302
      %v2379 = vpop.f32.mrf.mxu0
      %v2380 = vadd.f32 0.0, %v2379
      %v2381 = vpop.f32.mrf.mxu0
      %v2382 = vadd.f32 0.0, %v2381
      %2383 = vmatmul.bf16.gmra.mxu0 %v2305
      %v2384 = vpop.f32.mrf.mxu0
      %v2385 = vadd.f32 0.0, %v2384
      %v2386 = vpop.f32.mrf.mxu0
      %v2387 = vadd.f32 0.0, %v2386
      %2388 = vmatmul.bf16.gmra.mxu0 %v2308
      %v2389 = vpop.f32.mrf.mxu0
      %v2390 = vadd.f32 0.0, %v2389
      %v2391 = vpop.f32.mrf.mxu0
      %v2392 = vadd.f32 0.0, %v2391
      %2393 = vmatmul.bf16.gmra.mxu0 %v2311
      %v2394 = vpop.f32.mrf.mxu0
      %v2395 = vadd.f32 0.0, %v2394
      %v2396 = vpop.f32.mrf.mxu0
      %v2397 = vadd.f32 0.0, %v2396
      %2398 = vmatmul.bf16.gmra.mxu0 %v2314
      %v2399 = vpop.f32.mrf.mxu0
      %v2400 = vadd.f32 0.0, %v2399
      %v2401 = vpop.f32.mrf.mxu0
      %v2402 = vadd.f32 0.0, %v2401
      %2403 = vmatmul.bf16.gmra.mxu0 %v2317
      %v2404 = vpop.f32.mrf.mxu0
      %v2405 = vadd.f32 0.0, %v2404
      %v2406 = vpop.f32.mrf.mxu0
      %v2407 = vadd.f32 0.0, %v2406
      %2408 = vmatmul.bf16.gmra.mxu0 %v2320
      %v2409 = vpop.f32.mrf.mxu0
      %v2410 = vadd.f32 0.0, %v2409
      %v2411 = vpop.f32.mrf.mxu0
      %v2412 = vadd.f32 0.0, %v2411
      %2413 = vdwg.mxu0
      %v2414 = vadd.f32 %v2193, %v2335
      %v2415 = vadd.f32 %v2194, %v2337
      %v2416 = vadd.f32 %v2195, %v2340
      %v2417 = vadd.f32 %v2196, %v2342
      %v2418 = vadd.f32 %v2197, %v2345
      %v2419 = vadd.f32 %v2198, %v2347
      %v2420 = vadd.f32 %v2199, %v2350
      %v2421 = vadd.f32 %v2200, %v2352
      %v2422 = vadd.f32 %v2201, %v2355
      %v2423 = vadd.f32 %v2202, %v2357
      %v2424 = vadd.f32 %v2203, %v2360
      %v2425 = vadd.f32 %v2204, %v2362
      %v2426 = vadd.f32 %v2205, %v2365
      %v2427 = vadd.f32 %v2206, %v2367
      %v2428 = vadd.f32 %v2207, %v2370
      %v2429 = vadd.f32 %v2208, %v2372
      %v2430 = vadd.f32 %v2209, %v2375
      %v2431 = vadd.f32 %v2210, %v2377
      %v2432 = vadd.f32 %v2211, %v2380
      %v2433 = vadd.f32 %v2212, %v2382
      %v2434 = vadd.f32 %v2213, %v2385
      %v2435 = vadd.f32 %v2214, %v2387
      %v2436 = vadd.f32 %v2215, %v2390
      %v2437 = vadd.f32 %v2216, %v2392
      %v2438 = vadd.f32 %v2217, %v2395
      %v2439 = vadd.f32 %v2218, %v2397
      %v2440 = vadd.f32 %v2219, %v2400
      %v2441 = vadd.f32 %v2220, %v2402
      %v2442 = vadd.f32 %v2221, %v2405
      %v2443 = vadd.f32 %v2222, %v2407
      %v2444 = vadd.f32 %v2223, %v2410
      %v2445 = vadd.f32 %v2224, %v2412
      %v2446 = vld [vmem:[%s2225 + $0x1] sm:$0xff]
      %v2447 = vld [vmem:[%s2225 + $0x9] sm:$0xff]
      %v2448 = vld [vmem:[%s2225 + $0x19] sm:$0xff]
      %v2449 = vld [vmem:[%s2225 + $0x21] sm:$0xff]
      %v2450 = vld [vmem:[%s2225 + $0x31] sm:$0xff]
      %v2451 = vld [vmem:[%s2225 + $0x39] sm:$0xff]
      %v2452 = vld [vmem:[%s2225 + $0x49] sm:$0xff]
      %v2453 = vld [vmem:[%s2225 + $0x51] sm:$0xff]
      %v2454 = vld [vmem:[%s2225 + $0x61] sm:$0xff]
      %v2455 = vld [vmem:[%s2225 + $0x69] sm:$0xff]
      %v2456 = vld [vmem:[%s2225 + $0x79] sm:$0xff]
      %v2457 = vld [vmem:[%s2225 + $0x81] sm:$0xff]
      %v2458 = vld [vmem:[%s2225 + $0x91] sm:$0xff]
      %v2459 = vld [vmem:[%s2225 + $0x99] sm:$0xff]
      %v2460 = vld [vmem:[%s2225 + $0xa9] sm:$0xff]
      %v2461 = vld [vmem:[%s2225 + $0xb1] sm:$0xff]
      %v2462 = vld [vmem:[%s2225 + $0xc1] sm:$0xff]
      %v2463 = vld [vmem:[%s2225 + $0xc9] sm:$0xff]
      %v2464 = vld [vmem:[%s2225 + $0xd9] sm:$0xff]
      %v2465 = vld [vmem:[%s2225 + $0xe1] sm:$0xff]
      %v2466 = vld [vmem:[%s2225 + $0xf1] sm:$0xff]
      %v2467 = vld [vmem:[%s2225 + $0xf9] sm:$0xff]
      %v2468 = vld [vmem:[%s2225 + $0x109] sm:$0xff]
      %v2469 = vld [vmem:[%s2225 + $0x111] sm:$0xff]
      %v2470 = vld [vmem:[%s2225 + $0x121] sm:$0xff]
      %v2471 = vld [vmem:[%s2225 + $0x129] sm:$0xff]
      %v2472 = vld [vmem:[%s2225 + $0x139] sm:$0xff]
      %v2473 = vld [vmem:[%s2225 + $0x141] sm:$0xff]
      %v2474 = vld [vmem:[%s2225 + $0x151] sm:$0xff]
      %v2475 = vld [vmem:[%s2225 + $0x159] sm:$0xff]
      %v2476 = vld [vmem:[%s2225 + $0x169] sm:$0xff]
      %v2477 = vld [vmem:[%s2225 + $0x171] sm:$0xff]
      %v2478 = vpack.c.bf16 %v2447, %v2446
      %v2479 = vpack.c.bf16 %v2449, %v2448
      %v2480 = vpack.c.bf16 %v2451, %v2450
      %v2481 = vpack.c.bf16 %v2453, %v2452
      %v2482 = vpack.c.bf16 %v2455, %v2454
      %v2483 = vpack.c.bf16 %v2457, %v2456
      %v2484 = vpack.c.bf16 %v2459, %v2458
      %v2485 = vpack.c.bf16 %v2461, %v2460
      %v2486 = vpack.c.bf16 %v2463, %v2462
      %v2487 = vpack.c.bf16 %v2465, %v2464
      %v2488 = vpack.c.bf16 %v2467, %v2466
      %v2489 = vpack.c.bf16 %v2469, %v2468
      %v2490 = vpack.c.bf16 %v2471, %v2470
      %v2491 = vpack.c.bf16 %v2473, %v2472
      %v2492 = vpack.c.bf16 %v2475, %v2474
      %v2493 = vpack.c.bf16 %v2477, %v2476
      %v2495 = vsel %vm870, %v2478, 0
      %v2498 = vsel %vm870, %v2479, 0
      %v2501 = vsel %vm870, %v2480, 0
      %v2504 = vsel %vm870, %v2481, 0
      %v2507 = vsel %vm870, %v2482, 0
      %v2510 = vsel %vm870, %v2483, 0
      %v2513 = vsel %vm870, %v2484, 0
      %v2516 = vsel %vm870, %v2485, 0
      %v2519 = vsel %vm870, %v2486, 0
      %v2522 = vsel %vm870, %v2487, 0
      %v2525 = vsel %vm870, %v2488, 0
      %v2528 = vsel %vm870, %v2489, 0
      %v2531 = vsel %vm870, %v2490, 0
      %v2534 = vsel %vm870, %v2491, 0
      %v2537 = vsel %vm870, %v2492, 0
      %v2540 = vsel %vm870, %v2493, 0
      %v2543 = vsel %vm1112, %v966, 0
      %2545 = vmatpush.bf16.msra.mxu0 0
      %2546 = vmatpush.bf16.msra.mxu0 0
      %2547 = vmatpush.bf16.msra.mxu0 0
      %2548 = vmatpush.bf16.msra.mxu0 0
      %2549 = vmatpush.bf16.msra.mxu0 0
      %2550 = vmatpush.bf16.msra.mxu0 0
      %2551 = vmatpush.bf16.msra.mxu0 0
      %2552 = vmatpush.bf16.msra.mxu0 %v2543
      %2553 = vmatmul.bf16.gmra.mxu0 %v2495
      %v2554 = vpop.f32.mrf.mxu0
      %v2555 = vadd.f32 0.0, %v2554
      %v2556 = vpop.f32.mrf.mxu0
      %v2557 = vadd.f32 0.0, %v2556
      %2558 = vmatmul.bf16.gmra.mxu0 %v2498
      %v2559 = vpop.f32.mrf.mxu0
      %v2560 = vadd.f32 0.0, %v2559
      %v2561 = vpop.f32.mrf.mxu0
      %v2562 = vadd.f32 0.0, %v2561
      %2563 = vmatmul.bf16.gmra.mxu0 %v2501
      %v2564 = vpop.f32.mrf.mxu0
      %v2565 = vadd.f32 0.0, %v2564
      %v2566 = vpop.f32.mrf.mxu0
      %v2567 = vadd.f32 0.0, %v2566
      %2568 = vmatmul.bf16.gmra.mxu0 %v2504
      %v2569 = vpop.f32.mrf.mxu0
      %v2570 = vadd.f32 0.0, %v2569
      %v2571 = vpop.f32.mrf.mxu0
      %v2572 = vadd.f32 0.0, %v2571
      %2573 = vmatmul.bf16.gmra.mxu0 %v2507
      %v2574 = vpop.f32.mrf.mxu0
      %v2575 = vadd.f32 0.0, %v2574
      %v2576 = vpop.f32.mrf.mxu0
      %v2577 = vadd.f32 0.0, %v2576
      %2578 = vmatmul.bf16.gmra.mxu0 %v2510
      %v2579 = vpop.f32.mrf.mxu0
      %v2580 = vadd.f32 0.0, %v2579
      %v2581 = vpop.f32.mrf.mxu0
      %v2582 = vadd.f32 0.0, %v2581
      %2583 = vmatmul.bf16.gmra.mxu0 %v2513
      %v2584 = vpop.f32.mrf.mxu0
      %v2585 = vadd.f32 0.0, %v2584
      %v2586 = vpop.f32.mrf.mxu0
      %v2587 = vadd.f32 0.0, %v2586
      %2588 = vmatmul.bf16.gmra.mxu0 %v2516
      %v2589 = vpop.f32.mrf.mxu0
      %v2590 = vadd.f32 0.0, %v2589
      %v2591 = vpop.f32.mrf.mxu0
      %v2592 = vadd.f32 0.0, %v2591
      %2593 = vmatmul.bf16.gmra.mxu0 %v2519
      %v2594 = vpop.f32.mrf.mxu0
      %v2595 = vadd.f32 0.0, %v2594
      %v2596 = vpop.f32.mrf.mxu0
      %v2597 = vadd.f32 0.0, %v2596
      %2598 = vmatmul.bf16.gmra.mxu0 %v2522
      %v2599 = vpop.f32.mrf.mxu0
      %v2600 = vadd.f32 0.0, %v2599
      %v2601 = vpop.f32.mrf.mxu0
      %v2602 = vadd.f32 0.0, %v2601
      %2603 = vmatmul.bf16.gmra.mxu0 %v2525
      %v2604 = vpop.f32.mrf.mxu0
      %v2605 = vadd.f32 0.0, %v2604
      %v2606 = vpop.f32.mrf.mxu0
      %v2607 = vadd.f32 0.0, %v2606
      %2608 = vmatmul.bf16.gmra.mxu0 %v2528
      %v2609 = vpop.f32.mrf.mxu0
      %v2610 = vadd.f32 0.0, %v2609
      %v2611 = vpop.f32.mrf.mxu0
      %v2612 = vadd.f32 0.0, %v2611
      %2613 = vmatmul.bf16.gmra.mxu0 %v2531
      %v2614 = vpop.f32.mrf.mxu0
      %v2615 = vadd.f32 0.0, %v2614
      %v2616 = vpop.f32.mrf.mxu0
      %v2617 = vadd.f32 0.0, %v2616
      %2618 = vmatmul.bf16.gmra.mxu0 %v2534
      %v2619 = vpop.f32.mrf.mxu0
      %v2620 = vadd.f32 0.0, %v2619
      %v2621 = vpop.f32.mrf.mxu0
      %v2622 = vadd.f32 0.0, %v2621
      %2623 = vmatmul.bf16.gmra.mxu0 %v2537
      %v2624 = vpop.f32.mrf.mxu0
      %v2625 = vadd.f32 0.0, %v2624
      %v2626 = vpop.f32.mrf.mxu0
      %v2627 = vadd.f32 0.0, %v2626
      %2628 = vmatmul.bf16.gmra.mxu0 %v2540
      %v2629 = vpop.f32.mrf.mxu0
      %v2630 = vadd.f32 0.0, %v2629
      %v2631 = vpop.f32.mrf.mxu0
      %v2632 = vadd.f32 0.0, %v2631
      %2633 = vdwg.mxu0
      %v2634 = vadd.f32 %v2414, %v2555
      %v2635 = vadd.f32 %v2415, %v2557
      %v2636 = vadd.f32 %v2416, %v2560
      %v2637 = vadd.f32 %v2417, %v2562
      %v2638 = vadd.f32 %v2418, %v2565
      %v2639 = vadd.f32 %v2419, %v2567
      %v2640 = vadd.f32 %v2420, %v2570
      %v2641 = vadd.f32 %v2421, %v2572
      %v2642 = vadd.f32 %v2422, %v2575
      %v2643 = vadd.f32 %v2423, %v2577
      %v2644 = vadd.f32 %v2424, %v2580
      %v2645 = vadd.f32 %v2425, %v2582
      %v2646 = vadd.f32 %v2426, %v2585
      %v2647 = vadd.f32 %v2427, %v2587
      %v2648 = vadd.f32 %v2428, %v2590
      %v2649 = vadd.f32 %v2429, %v2592
      %v2650 = vadd.f32 %v2430, %v2595
      %v2651 = vadd.f32 %v2431, %v2597
      %v2652 = vadd.f32 %v2432, %v2600
      %v2653 = vadd.f32 %v2433, %v2602
      %v2654 = vadd.f32 %v2434, %v2605
      %v2655 = vadd.f32 %v2435, %v2607
      %v2656 = vadd.f32 %v2436, %v2610
      %v2657 = vadd.f32 %v2437, %v2612
      %v2658 = vadd.f32 %v2438, %v2615
      %v2659 = vadd.f32 %v2439, %v2617
      %v2660 = vadd.f32 %v2440, %v2620
      %v2661 = vadd.f32 %v2441, %v2622
      %v2662 = vadd.f32 %v2442, %v2625
      %v2663 = vadd.f32 %v2443, %v2627
      %v2664 = vadd.f32 %v2444, %v2630
      %v2665 = vadd.f32 %v2445, %v2632
      %v2666 = vld [vmem:[%s2225 + $0x2] sm:$0xff]
      %v2667 = vld [vmem:[%s2225 + $0xa] sm:$0xff]
      %v2668 = vld [vmem:[%s2225 + $0x1a] sm:$0xff]
      %v2669 = vld [vmem:[%s2225 + $0x22] sm:$0xff]
      %v2670 = vld [vmem:[%s2225 + $0x32] sm:$0xff]
      %v2671 = vld [vmem:[%s2225 + $0x3a] sm:$0xff]
      %v2672 = vld [vmem:[%s2225 + $0x4a] sm:$0xff]
      %v2673 = vld [vmem:[%s2225 + $0x52] sm:$0xff]
      %v2674 = vld [vmem:[%s2225 + $0x62] sm:$0xff]
      %v2675 = vld [vmem:[%s2225 + $0x6a] sm:$0xff]
      %v2676 = vld [vmem:[%s2225 + $0x7a] sm:$0xff]
      %v2677 = vld [vmem:[%s2225 + $0x82] sm:$0xff]
      %v2678 = vld [vmem:[%s2225 + $0x92] sm:$0xff]
      %v2679 = vld [vmem:[%s2225 + $0x9a] sm:$0xff]
      %v2680 = vld [vmem:[%s2225 + $0xaa] sm:$0xff]
      %v2681 = vld [vmem:[%s2225 + $0xb2] sm:$0xff]
      %v2682 = vld [vmem:[%s2225 + $0xc2] sm:$0xff]
      %v2683 = vld [vmem:[%s2225 + $0xca] sm:$0xff]
      %v2684 = vld [vmem:[%s2225 + $0xda] sm:$0xff]
      %v2685 = vld [vmem:[%s2225 + $0xe2] sm:$0xff]
      %v2686 = vld [vmem:[%s2225 + $0xf2] sm:$0xff]
      %v2687 = vld [vmem:[%s2225 + $0xfa] sm:$0xff]
      %v2688 = vld [vmem:[%s2225 + $0x10a] sm:$0xff]
      %v2689 = vld [vmem:[%s2225 + $0x112] sm:$0xff]
      %v2690 = vld [vmem:[%s2225 + $0x122] sm:$0xff]
      %v2691 = vld [vmem:[%s2225 + $0x12a] sm:$0xff]
      %v2692 = vld [vmem:[%s2225 + $0x13a] sm:$0xff]
      %v2693 = vld [vmem:[%s2225 + $0x142] sm:$0xff]
      %v2694 = vld [vmem:[%s2225 + $0x152] sm:$0xff]
      %v2695 = vld [vmem:[%s2225 + $0x15a] sm:$0xff]
      %v2696 = vld [vmem:[%s2225 + $0x16a] sm:$0xff]
      %v2697 = vld [vmem:[%s2225 + $0x172] sm:$0xff]
      %v2698 = vpack.c.bf16 %v2667, %v2666
      %v2699 = vpack.c.bf16 %v2669, %v2668
      %v2700 = vpack.c.bf16 %v2671, %v2670
      %v2701 = vpack.c.bf16 %v2673, %v2672
      %v2702 = vpack.c.bf16 %v2675, %v2674
      %v2703 = vpack.c.bf16 %v2677, %v2676
      %v2704 = vpack.c.bf16 %v2679, %v2678
      %v2705 = vpack.c.bf16 %v2681, %v2680
      %v2706 = vpack.c.bf16 %v2683, %v2682
      %v2707 = vpack.c.bf16 %v2685, %v2684
      %v2708 = vpack.c.bf16 %v2687, %v2686
      %v2709 = vpack.c.bf16 %v2689, %v2688
      %v2710 = vpack.c.bf16 %v2691, %v2690
      %v2711 = vpack.c.bf16 %v2693, %v2692
      %v2712 = vpack.c.bf16 %v2695, %v2694
      %v2713 = vpack.c.bf16 %v2697, %v2696
      %v2715 = vsel %vm870, %v2698, 0
      %v2718 = vsel %vm870, %v2699, 0
      %v2721 = vsel %vm870, %v2700, 0
      %v2724 = vsel %vm870, %v2701, 0
      %v2727 = vsel %vm870, %v2702, 0
      %v2730 = vsel %vm870, %v2703, 0
      %v2733 = vsel %vm870, %v2704, 0
      %v2736 = vsel %vm870, %v2705, 0
      %v2739 = vsel %vm870, %v2706, 0
      %v2742 = vsel %vm870, %v2707, 0
      %v2745 = vsel %vm870, %v2708, 0
      %v2748 = vsel %vm870, %v2709, 0
      %v2751 = vsel %vm870, %v2710, 0
      %v2754 = vsel %vm870, %v2711, 0
      %v2757 = vsel %vm870, %v2712, 0
      %v2760 = vsel %vm870, %v2713, 0
      %v2763 = vsel %vm1112, %v967, 0
      %2765 = vmatpush.bf16.msra.mxu0 0
      %2766 = vmatpush.bf16.msra.mxu0 0
      %2767 = vmatpush.bf16.msra.mxu0 0
      %2768 = vmatpush.bf16.msra.mxu0 0
      %2769 = vmatpush.bf16.msra.mxu0 0
      %2770 = vmatpush.bf16.msra.mxu0 0
      %2771 = vmatpush.bf16.msra.mxu0 0
      %2772 = vmatpush.bf16.msra.mxu0 %v2763
      %2773 = vmatmul.bf16.gmra.mxu0 %v2715
      %v2774 = vpop.f32.mrf.mxu0
      %v2775 = vadd.f32 0.0, %v2774
      %v2776 = vpop.f32.mrf.mxu0
      %v2777 = vadd.f32 0.0, %v2776
      %2778 = vmatmul.bf16.gmra.mxu0 %v2718
      %v2779 = vpop.f32.mrf.mxu0
      %v2780 = vadd.f32 0.0, %v2779
      %v2781 = vpop.f32.mrf.mxu0
      %v2782 = vadd.f32 0.0, %v2781
      %2783 = vmatmul.bf16.gmra.mxu0 %v2721
      %v2784 = vpop.f32.mrf.mxu0
      %v2785 = vadd.f32 0.0, %v2784
      %v2786 = vpop.f32.mrf.mxu0
      %v2787 = vadd.f32 0.0, %v2786
      %2788 = vmatmul.bf16.gmra.mxu0 %v2724
      %v2789 = vpop.f32.mrf.mxu0
      %v2790 = vadd.f32 0.0, %v2789
      %v2791 = vpop.f32.mrf.mxu0
      %v2792 = vadd.f32 0.0, %v2791
      %2793 = vmatmul.bf16.gmra.mxu0 %v2727
      %v2794 = vpop.f32.mrf.mxu0
      %v2795 = vadd.f32 0.0, %v2794
      %v2796 = vpop.f32.mrf.mxu0
      %v2797 = vadd.f32 0.0, %v2796
      %2798 = vmatmul.bf16.gmra.mxu0 %v2730
      %v2799 = vpop.f32.mrf.mxu0
      %v2800 = vadd.f32 0.0, %v2799
      %v2801 = vpop.f32.mrf.mxu0
      %v2802 = vadd.f32 0.0, %v2801
      %2803 = vmatmul.bf16.gmra.mxu0 %v2733
      %v2804 = vpop.f32.mrf.mxu0
      %v2805 = vadd.f32 0.0, %v2804
      %v2806 = vpop.f32.mrf.mxu0
      %v2807 = vadd.f32 0.0, %v2806
      %2808 = vmatmul.bf16.gmra.mxu0 %v2736
      %v2809 = vpop.f32.mrf.mxu0
      %v2810 = vadd.f32 0.0, %v2809
      %v2811 = vpop.f32.mrf.mxu0
      %v2812 = vadd.f32 0.0, %v2811
      %2813 = vmatmul.bf16.gmra.mxu0 %v2739
      %v2814 = vpop.f32.mrf.mxu0
      %v2815 = vadd.f32 0.0, %v2814
      %v2816 = vpop.f32.mrf.mxu0
      %v2817 = vadd.f32 0.0, %v2816
      %2818 = vmatmul.bf16.gmra.mxu0 %v2742
      %v2819 = vpop.f32.mrf.mxu0
      %v2820 = vadd.f32 0.0, %v2819
      %v2821 = vpop.f32.mrf.mxu0
      %v2822 = vadd.f32 0.0, %v2821
      %2823 = vmatmul.bf16.gmra.mxu0 %v2745
      %v2824 = vpop.f32.mrf.mxu0
      %v2825 = vadd.f32 0.0, %v2824
      %v2826 = vpop.f32.mrf.mxu0
      %v2827 = vadd.f32 0.0, %v2826
      %2828 = vmatmul.bf16.gmra.mxu0 %v2748
      %v2829 = vpop.f32.mrf.mxu0
      %v2830 = vadd.f32 0.0, %v2829
      %v2831 = vpop.f32.mrf.mxu0
      %v2832 = vadd.f32 0.0, %v2831
      %2833 = vmatmul.bf16.gmra.mxu0 %v2751
      %v2834 = vpop.f32.mrf.mxu0
      %v2835 = vadd.f32 0.0, %v2834
      %v2836 = vpop.f32.mrf.mxu0
      %v2837 = vadd.f32 0.0, %v2836
      %2838 = vmatmul.bf16.gmra.mxu0 %v2754
      %v2839 = vpop.f32.mrf.mxu0
      %v2840 = vadd.f32 0.0, %v2839
      %v2841 = vpop.f32.mrf.mxu0
      %v2842 = vadd.f32 0.0, %v2841
      %2843 = vmatmul.bf16.gmra.mxu0 %v2757
      %v2844 = vpop.f32.mrf.mxu0
      %v2845 = vadd.f32 0.0, %v2844
      %v2846 = vpop.f32.mrf.mxu0
      %v2847 = vadd.f32 0.0, %v2846
      %2848 = vmatmul.bf16.gmra.mxu0 %v2760
      %v2849 = vpop.f32.mrf.mxu0
      %v2850 = vadd.f32 0.0, %v2849
      %v2851 = vpop.f32.mrf.mxu0
      %v2852 = vadd.f32 0.0, %v2851
      %2853 = vdwg.mxu0
      %v2854 = vadd.f32 %v2634, %v2775
      %v2855 = vadd.f32 %v2635, %v2777
      %v2856 = vadd.f32 %v2636, %v2780
      %v2857 = vadd.f32 %v2637, %v2782
      %v2858 = vadd.f32 %v2638, %v2785
      %v2859 = vadd.f32 %v2639, %v2787
      %v2860 = vadd.f32 %v2640, %v2790
      %v2861 = vadd.f32 %v2641, %v2792
      %v2862 = vadd.f32 %v2642, %v2795
      %v2863 = vadd.f32 %v2643, %v2797
      %v2864 = vadd.f32 %v2644, %v2800
      %v2865 = vadd.f32 %v2645, %v2802
      %v2866 = vadd.f32 %v2646, %v2805
      %v2867 = vadd.f32 %v2647, %v2807
      %v2868 = vadd.f32 %v2648, %v2810
      %v2869 = vadd.f32 %v2649, %v2812
      %v2870 = vadd.f32 %v2650, %v2815
      %v2871 = vadd.f32 %v2651, %v2817
      %v2872 = vadd.f32 %v2652, %v2820
      %v2873 = vadd.f32 %v2653, %v2822
      %v2874 = vadd.f32 %v2654, %v2825
      %v2875 = vadd.f32 %v2655, %v2827
      %v2876 = vadd.f32 %v2656, %v2830
      %v2877 = vadd.f32 %v2657, %v2832
      %v2878 = vadd.f32 %v2658, %v2835
      %v2879 = vadd.f32 %v2659, %v2837
      %v2880 = vadd.f32 %v2660, %v2840
      %v2881 = vadd.f32 %v2661, %v2842
      %v2882 = vadd.f32 %v2662, %v2845
      %v2883 = vadd.f32 %v2663, %v2847
      %v2884 = vadd.f32 %v2664, %v2850
      %v2885 = vadd.f32 %v2665, %v2852
      %v2886 = vld [vmem:[%s456] sm:$0x1]
      %v2888 = vperm.slane %v2886, 0
      %v2890 = vadd.f32 %v2854, %v2888
      %v2891 = vadd.f32 %v2855, %v2888
      %v2892 = vadd.f32 %v2856, %v2888
      %v2893 = vadd.f32 %v2857, %v2888
      %v2894 = vadd.f32 %v2858, %v2888
      %v2895 = vadd.f32 %v2859, %v2888
      %v2896 = vadd.f32 %v2860, %v2888
      %v2897 = vadd.f32 %v2861, %v2888
      %v2898 = vadd.f32 %v2862, %v2888
      %v2899 = vadd.f32 %v2863, %v2888
      %v2900 = vadd.f32 %v2864, %v2888
      %v2901 = vadd.f32 %v2865, %v2888
      %v2902 = vadd.f32 %v2866, %v2888
      %v2903 = vadd.f32 %v2867, %v2888
      %v2904 = vadd.f32 %v2868, %v2888
      %v2905 = vadd.f32 %v2869, %v2888
      %v2906 = vadd.f32 %v2870, %v2888
      %v2907 = vadd.f32 %v2871, %v2888
      %v2908 = vadd.f32 %v2872, %v2888
      %v2909 = vadd.f32 %v2873, %v2888
      %v2910 = vadd.f32 %v2874, %v2888
      %v2911 = vadd.f32 %v2875, %v2888
      %v2912 = vadd.f32 %v2876, %v2888
      %v2913 = vadd.f32 %v2877, %v2888
      %v2914 = vadd.f32 %v2878, %v2888
      %v2915 = vadd.f32 %v2879, %v2888
      %v2916 = vadd.f32 %v2880, %v2888
      %v2917 = vadd.f32 %v2881, %v2888
      %v2918 = vadd.f32 %v2882, %v2888
      %v2919 = vadd.f32 %v2883, %v2888
      %v2920 = vadd.f32 %v2884, %v2888
      %v2921 = vadd.f32 %v2885, %v2888
      %v2922 = vmax.f32 %v2890, 0.0
      %v2923 = vmax.f32 %v2891, 0.0
      %v2924 = vmax.f32 %v2892, 0.0
      %v2925 = vmax.f32 %v2893, 0.0
      %v2926 = vmax.f32 %v2894, 0.0
      %v2927 = vmax.f32 %v2895, 0.0
      %v2928 = vmax.f32 %v2896, 0.0
      %v2929 = vmax.f32 %v2897, 0.0
      %v2930 = vmax.f32 %v2898, 0.0
      %v2931 = vmax.f32 %v2899, 0.0
      %v2932 = vmax.f32 %v2900, 0.0
      %v2933 = vmax.f32 %v2901, 0.0
      %v2934 = vmax.f32 %v2902, 0.0
      %v2935 = vmax.f32 %v2903, 0.0
      %v2936 = vmax.f32 %v2904, 0.0
      %v2937 = vmax.f32 %v2905, 0.0
      %v2938 = vmax.f32 %v2906, 0.0
      %v2939 = vmax.f32 %v2907, 0.0
      %v2940 = vmax.f32 %v2908, 0.0
      %v2941 = vmax.f32 %v2909, 0.0
      %v2942 = vmax.f32 %v2910, 0.0
      %v2943 = vmax.f32 %v2911, 0.0
      %v2944 = vmax.f32 %v2912, 0.0
      %v2945 = vmax.f32 %v2913, 0.0
      %v2946 = vmax.f32 %v2914, 0.0
      %v2947 = vmax.f32 %v2915, 0.0
      %v2948 = vmax.f32 %v2916, 0.0
      %v2949 = vmax.f32 %v2917, 0.0
      %v2950 = vmax.f32 %v2918, 0.0
      %v2951 = vmax.f32 %v2919, 0.0
      %v2952 = vmax.f32 %v2920, 0.0
      %v2953 = vmax.f32 %v2921, 0.0
      %v2954 = vpack.c.bf16 %v2923, %v2922
      %v2955 = vpack.c.bf16 %v2925, %v2924
      %v2956 = vpack.c.bf16 %v2927, %v2926
      %v2957 = vpack.c.bf16 %v2929, %v2928
      %v2958 = vpack.c.bf16 %v2931, %v2930
      %v2959 = vpack.c.bf16 %v2933, %v2932
      %v2960 = vpack.c.bf16 %v2935, %v2934
      %v2961 = vpack.c.bf16 %v2937, %v2936
      %v2962 = vpack.c.bf16 %v2939, %v2938
      %v2963 = vpack.c.bf16 %v2941, %v2940
      %v2964 = vpack.c.bf16 %v2943, %v2942
      %v2965 = vpack.c.bf16 %v2945, %v2944
      %v2966 = vpack.c.bf16 %v2947, %v2946
      %v2967 = vpack.c.bf16 %v2949, %v2948
      %v2968 = vpack.c.bf16 %v2951, %v2950
      %v2969 = vpack.c.bf16 %v2953, %v2952
      %v2970 = vld [vmem:[%s460] sm:$0x3]
      %v2972 = vsel %vm870, %v2954, 0
      %v2975 = vsel %vm870, %v2955, 0
      %v2978 = vsel %vm870, %v2956, 0
      %v2981 = vsel %vm870, %v2957, 0
      %v2984 = vsel %vm870, %v2958, 0
      %v2987 = vsel %vm870, %v2959, 0
      %v2990 = vsel %vm870, %v2960, 0
      %v2993 = vsel %vm870, %v2961, 0
      %v2996 = vsel %vm870, %v2962, 0
      %v2999 = vsel %vm870, %v2963, 0
      %v3002 = vsel %vm870, %v2964, 0
      %v3005 = vsel %vm870, %v2965, 0
      %v3008 = vsel %vm870, %v2966, 0
      %v3011 = vsel %vm870, %v2967, 0
      %v3014 = vsel %vm870, %v2968, 0
      %v3017 = vsel %vm870, %v2969, 0
      %v3020 = vsel %vm1112, %v2970, 0
      %3022 = vmatpush.bf16.msra.mxu0 0
      %3023 = vmatpush.bf16.msra.mxu0 0
      %3024 = vmatpush.bf16.msra.mxu0 0
      %3025 = vmatpush.bf16.msra.mxu0 0
      %3026 = vmatpush.bf16.msra.mxu0 0
      %3027 = vmatpush.bf16.msra.mxu0 0
      %3028 = vmatpush.bf16.msra.mxu0 0
      %3029 = vmatpush.bf16.msra.mxu0 %v3020
      %3030 = vmatmul.bf16.gmra.mxu0 %v2972
      %v3031 = vpop.f32.mrf.mxu0
      %v3032 = vadd.f32 0.0, %v3031
      %v3033 = vpop.f32.mrf.mxu0
      %v3034 = vadd.f32 0.0, %v3033
      %3035 = vmatmul.bf16.gmra.mxu0 %v2975
      %v3036 = vpop.f32.mrf.mxu0
      %v3037 = vadd.f32 0.0, %v3036
      %v3038 = vpop.f32.mrf.mxu0
      %v3039 = vadd.f32 0.0, %v3038
      %3040 = vmatmul.bf16.gmra.mxu0 %v2978
      %v3041 = vpop.f32.mrf.mxu0
      %v3042 = vadd.f32 0.0, %v3041
      %v3043 = vpop.f32.mrf.mxu0
      %v3044 = vadd.f32 0.0, %v3043
      %3045 = vmatmul.bf16.gmra.mxu0 %v2981
      %v3046 = vpop.f32.mrf.mxu0
      %v3047 = vadd.f32 0.0, %v3046
      %v3048 = vpop.f32.mrf.mxu0
      %v3049 = vadd.f32 0.0, %v3048
      %3050 = vmatmul.bf16.gmra.mxu0 %v2984
      %v3051 = vpop.f32.mrf.mxu0
      %v3052 = vadd.f32 0.0, %v3051
      %v3053 = vpop.f32.mrf.mxu0
      %v3054 = vadd.f32 0.0, %v3053
      %3055 = vmatmul.bf16.gmra.mxu0 %v2987
      %v3056 = vpop.f32.mrf.mxu0
      %v3057 = vadd.f32 0.0, %v3056
      %v3058 = vpop.f32.mrf.mxu0
      %v3059 = vadd.f32 0.0, %v3058
      %3060 = vmatmul.bf16.gmra.mxu0 %v2990
      %v3061 = vpop.f32.mrf.mxu0
      %v3062 = vadd.f32 0.0, %v3061
      %v3063 = vpop.f32.mrf.mxu0
      %v3064 = vadd.f32 0.0, %v3063
      %3065 = vmatmul.bf16.gmra.mxu0 %v2993
      %v3066 = vpop.f32.mrf.mxu0
      %v3067 = vadd.f32 0.0, %v3066
      %v3068 = vpop.f32.mrf.mxu0
      %v3069 = vadd.f32 0.0, %v3068
      %3070 = vmatmul.bf16.gmra.mxu0 %v2996
      %v3071 = vpop.f32.mrf.mxu0
      %v3072 = vadd.f32 0.0, %v3071
      %v3073 = vpop.f32.mrf.mxu0
      %v3074 = vadd.f32 0.0, %v3073
      %3075 = vmatmul.bf16.gmra.mxu0 %v2999
      %v3076 = vpop.f32.mrf.mxu0
      %v3077 = vadd.f32 0.0, %v3076
      %v3078 = vpop.f32.mrf.mxu0
      %v3079 = vadd.f32 0.0, %v3078
      %3080 = vmatmul.bf16.gmra.mxu0 %v3002
      %v3081 = vpop.f32.mrf.mxu0
      %v3082 = vadd.f32 0.0, %v3081
      %v3083 = vpop.f32.mrf.mxu0
      %v3084 = vadd.f32 0.0, %v3083
      %3085 = vmatmul.bf16.gmra.mxu0 %v3005
      %v3086 = vpop.f32.mrf.mxu0
      %v3087 = vadd.f32 0.0, %v3086
      %v3088 = vpop.f32.mrf.mxu0
      %v3089 = vadd.f32 0.0, %v3088
      %3090 = vmatmul.bf16.gmra.mxu0 %v3008
      %v3091 = vpop.f32.mrf.mxu0
      %v3092 = vadd.f32 0.0, %v3091
      %v3093 = vpop.f32.mrf.mxu0
      %v3094 = vadd.f32 0.0, %v3093
      %3095 = vmatmul.bf16.gmra.mxu0 %v3011
      %v3096 = vpop.f32.mrf.mxu0
      %v3097 = vadd.f32 0.0, %v3096
      %v3098 = vpop.f32.mrf.mxu0
      %v3099 = vadd.f32 0.0, %v3098
      %3100 = vmatmul.bf16.gmra.mxu0 %v3014
      %v3101 = vpop.f32.mrf.mxu0
      %v3102 = vadd.f32 0.0, %v3101
      %v3103 = vpop.f32.mrf.mxu0
      %v3104 = vadd.f32 0.0, %v3103
      %3105 = vmatmul.bf16.gmra.mxu0 %v3017
      %v3106 = vpop.f32.mrf.mxu0
      %v3107 = vadd.f32 0.0, %v3106
      %v3108 = vpop.f32.mrf.mxu0
      %v3109 = vadd.f32 0.0, %v3108
      %3110 = vdwg.mxu0
      %v3111 = vadd.f32 %v539, %v3032
      %v3112 = vadd.f32 %v540, %v3034
      %v3113 = vadd.f32 %v541, %v3037
      %v3114 = vadd.f32 %v542, %v3039
      %v3115 = vadd.f32 %v543, %v3042
      %v3116 = vadd.f32 %v544, %v3044
      %v3117 = vadd.f32 %v545, %v3047
      %v3118 = vadd.f32 %v546, %v3049
      %v3119 = vadd.f32 %v547, %v3052
      %v3120 = vadd.f32 %v548, %v3054
      %v3121 = vadd.f32 %v549, %v3057
      %v3122 = vadd.f32 %v550, %v3059
      %v3123 = vadd.f32 %v551, %v3062
      %v3124 = vadd.f32 %v552, %v3064
      %v3125 = vadd.f32 %v553, %v3067
      %v3126 = vadd.f32 %v554, %v3069
      %v3127 = vadd.f32 %v555, %v3072
      %v3128 = vadd.f32 %v556, %v3074
      %v3129 = vadd.f32 %v557, %v3077
      %v3130 = vadd.f32 %v558, %v3079
      %v3131 = vadd.f32 %v559, %v3082
      %v3132 = vadd.f32 %v560, %v3084
      %v3133 = vadd.f32 %v561, %v3087
      %v3134 = vadd.f32 %v562, %v3089
      %v3135 = vadd.f32 %v563, %v3092
      %v3136 = vadd.f32 %v564, %v3094
      %v3137 = vadd.f32 %v565, %v3097
      %v3138 = vadd.f32 %v566, %v3099
      %v3139 = vadd.f32 %v567, %v3102
      %v3140 = vadd.f32 %v568, %v3104
      %v3141 = vadd.f32 %v569, %v3107
      %v3142 = vadd.f32 %v570, %v3109
      %v3143 = vld [vmem:[%s463] sm:$0x1]
      %v3145 = vperm.slane %v3143, 0
      %v3147 = vadd.f32 %v3111, %v3145
      %v3148 = vadd.f32 %v3112, %v3145
      %v3149 = vadd.f32 %v3113, %v3145
      %v3150 = vadd.f32 %v3114, %v3145
      %v3151 = vadd.f32 %v3115, %v3145
      %v3152 = vadd.f32 %v3116, %v3145
      %v3153 = vadd.f32 %v3117, %v3145
      %v3154 = vadd.f32 %v3118, %v3145
      %v3155 = vadd.f32 %v3119, %v3145
      %v3156 = vadd.f32 %v3120, %v3145
      %v3157 = vadd.f32 %v3121, %v3145
      %v3158 = vadd.f32 %v3122, %v3145
      %v3159 = vadd.f32 %v3123, %v3145
      %v3160 = vadd.f32 %v3124, %v3145
      %v3161 = vadd.f32 %v3125, %v3145
      %v3162 = vadd.f32 %v3126, %v3145
      %v3163 = vadd.f32 %v3127, %v3145
      %v3164 = vadd.f32 %v3128, %v3145
      %v3165 = vadd.f32 %v3129, %v3145
      %v3166 = vadd.f32 %v3130, %v3145
      %v3167 = vadd.f32 %v3131, %v3145
      %v3168 = vadd.f32 %v3132, %v3145
      %v3169 = vadd.f32 %v3133, %v3145
      %v3170 = vadd.f32 %v3134, %v3145
      %v3171 = vadd.f32 %v3135, %v3145
      %v3172 = vadd.f32 %v3136, %v3145
      %v3173 = vadd.f32 %v3137, %v3145
      %v3174 = vadd.f32 %v3138, %v3145
      %v3175 = vadd.f32 %v3139, %v3145
      %v3176 = vadd.f32 %v3140, %v3145
      %v3177 = vadd.f32 %v3141, %v3145
      %v3178 = vadd.f32 %v3142, %v3145
      %3179 = vst.msk [vmem:[%s468] sm:$0xff] %vm696, %v3147
      %3180 = vst.msk [vmem:[%s468 + $0x8] sm:$0xff] %vm696, %v3148
      %3181 = vst.msk [vmem:[%s468 + $0x10] sm:$0xff] %vm696, %v3149
      %3182 = vst.msk [vmem:[%s468 + $0x18] sm:$0xff] %vm696, %v3150
      %3183 = vst.msk [vmem:[%s468 + $0x20] sm:$0xff] %vm696, %v3151
      %3184 = vst.msk [vmem:[%s468 + $0x28] sm:$0xff] %vm696, %v3152
      %3185 = vst.msk [vmem:[%s468 + $0x30] sm:$0xff] %vm696, %v3153
      %3186 = vst.msk [vmem:[%s468 + $0x38] sm:$0xff] %vm696, %v3154
      %3187 = vst.msk [vmem:[%s468 + $0x40] sm:$0xff] %vm696, %v3155
      %3188 = vst.msk [vmem:[%s468 + $0x48] sm:$0xff] %vm696, %v3156
      %3189 = vst.msk [vmem:[%s468 + $0x50] sm:$0xff] %vm696, %v3157
      %3190 = vst.msk [vmem:[%s468 + $0x58] sm:$0xff] %vm696, %v3158
      %3191 = vst.msk [vmem:[%s468 + $0x60] sm:$0xff] %vm696, %v3159
      %3192 = vst.msk [vmem:[%s468 + $0x68] sm:$0xff] %vm696, %v3160
      %3193 = vst.msk [vmem:[%s468 + $0x70] sm:$0xff] %vm696, %v3161
      %3194 = vst.msk [vmem:[%s468 + $0x78] sm:$0xff] %vm696, %v3162
      %3195 = vst.msk [vmem:[%s468 + $0x80] sm:$0xff] %vm696, %v3163
      %3196 = vst.msk [vmem:[%s468 + $0x88] sm:$0xff] %vm696, %v3164
      %3197 = vst.msk [vmem:[%s468 + $0x90] sm:$0xff] %vm696, %v3165
      %3198 = vst.msk [vmem:[%s468 + $0x98] sm:$0xff] %vm696, %v3166
      %3199 = vst.msk [vmem:[%s468 + $0xa0] sm:$0xff] %vm696, %v3167
      %3200 = vst.msk [vmem:[%s468 + $0xa8] sm:$0xff] %vm696, %v3168
      %3201 = vst.msk [vmem:[%s468 + $0xb0] sm:$0xff] %vm696, %v3169
      %3202 = vst.msk [vmem:[%s468 + $0xb8] sm:$0xff] %vm696, %v3170
      %3203 = vst.msk [vmem:[%s468 + $0xc0] sm:$0xff] %vm696, %v3171
      %3204 = vst.msk [vmem:[%s468 + $0xc8] sm:$0xff] %vm696, %v3172
      %3205 = vst.msk [vmem:[%s468 + $0xd0] sm:$0xff] %vm696, %v3173
      %3206 = vst.msk [vmem:[%s468 + $0xd8] sm:$0xff] %vm696, %v3174
      %3207 = vst.msk [vmem:[%s468 + $0xe0] sm:$0xff] %vm696, %v3175
      %3208 = vst.msk [vmem:[%s468 + $0xe8] sm:$0xff] %vm696, %v3176
      %3209 = vst.msk [vmem:[%s468 + $0xf0] sm:$0xff] %vm696, %v3177
      %3210 = vst.msk [vmem:[%s468 + $0xf8] sm:$0xff] %vm696, %v3178
      %p3211 = scmp.lt.s32.totalorder %s24, 1
      %s3212 = scalar_select %p3211, %s24, 1
      %s3213 = smul.addr %s3212, 32
      %s3214 = smul.addr %s3213, 8
      %s3215 = scalar_lea.vmem %s9, %s3214
      // Predicated region
      $region61: #{hourglass_apply.7} parent=55 // pred_check
        %p3216 = pneg %p284
      $region62: #{hourglass_apply.7} parent=55 // pred_check_branch
        %3218 = sbr.rel (%p3216) target = $region64
      $region63: #{hourglass_apply.7} parent=55 // pred_region
        _
      $region64: #{hourglass_apply.7} parent=55 // pred_fallthru
        _
    $region56: #{hourglass_apply.7} parent=5 // pred_fallthru
      _
    %p3219 = scmp.le.s32.totalorder 2, %s15
    // Predicated region
    $region65: #{hourglass_apply.7} parent=5 // pred_check
      %p3220 = pneg %p3219
    $region66: #{hourglass_apply.7} parent=5 // pred_check_branch
      %3222 = sbr.rel (%p3220) target = $region68
    $region67: #{hourglass_apply.7} parent=5 // pred_region
      %s3223 = ssub.s32 %s15, 2
      // Predicated region
      $region69: #{hourglass_apply.7} parent=67 // pred_check
        %p3224 = pneg %p290
      $region70: #{hourglass_apply.7} parent=67 // pred_check_branch
        %3226 = sbr.rel (%p3224) target = $region72
      $region71: #{hourglass_apply.7} parent=67 // pred_region
        %p3227 = scmp.lt.s32.totalorder %s26, 1
        %s3228 = scalar_select %p3227, %s26, 1
        %s3229 = smul.addr %s3228, 32
        %s3230 = smul.addr %s3229, 8
        %s3231 = scalar_lea.vmem %s9, %s3230
      $region72: #{hourglass_apply.7} parent=67 // pred_fallthru
        _
    $region68: #{hourglass_apply.7} parent=5 // pred_fallthru
      _
  $region6: #{hourglass_apply.7} parent=0 // loop_footer
    %s19 = sadd.s32 1, %s15
  $region7: #{hourglass_apply.7} parent=0 // loop_footer_branch
    %14 = sbr.rel target = $region3
  $region8: #{hourglass_apply.7} parent=0 // loop_exit
    _

</llo_original>
